<compile_context>
chip_gen: v7x
topology: tpu7x:2x2x1
jax: 0.10.0
libtpu: 0.0.40
codegen_flags: <defaults>
</compile_context>

<pallas_src>
import jax
import jax.numpy as jnp
from jax import lax
from jax.experimental import pallas as pl
from jax.experimental.pallas import tpu as pltpu

# Model hyper-parameters (vocab size for LEAF shakespeare: 79 chars + <UNK>).
VOCAB_SIZE = 80
EMBED_DIM = 128
LSTM_UNITS = 256
VOCAB_PAD = 128          # lane-dense pad: one-hot contraction dim and fc width


def _charrnn_kernel(ids_ref,           # (T*B, 1) int32  token ids, t-major
                    table_ref,         # (128, 4H) f32   emb@W_ih1+b1, reordered, rows V..127 zero
                    whh1_ref,          # (H, 4H)  bf16   layer-1 recurrent weights (reordered)
                    wih2_ref,          # (H, 4H)  bf16   layer-2 input weights (reordered)
                    whh2_ref,          # (H, 4H)  bf16   layer-2 recurrent weights (reordered)
                    b2_ref,            # (1, 4H)  f32    layer-2 fused bias (reordered)
                    wfc_ref,           # (H, 128) bf16   fc weights (vocab padded)
                    bfc_ref,           # (1, 128) f32    fc bias (vocab padded)
                    out_ref,           # (B, 128) f32
                    x1p_scratch):      # (T, B, 4H) f32  VMEM scratch
    T, B, G = x1p_scratch.shape
    H = G // 4
    Vp = table_ref.shape[0]

    # ---- Prologue: fused embedding gather + layer-1 input projection. ----
    # one-hot(ids) @ table  ==  table[ids]  (ids < VOCAB_SIZE < Vp always).
    ids = ids_ref[...]                                                # (T*B, 1)
    iota_v = lax.broadcasted_iota(jnp.int32, (T * B, Vp), 1)
    onehot = (ids == iota_v).astype(jnp.float32)                      # (T*B, Vp)
    x1p_all = jnp.dot(onehot, table_ref[...],
                      preferred_element_type=jnp.float32)             # (T*B, 4H)
    for t in range(T):                                                # static, tile-aligned stores
        x1p_scratch[t] = x1p_all[t * B:(t + 1) * B, :]

    # ---- Resident weights / hoisted broadcasts. ----
    whh1 = whh1_ref[...]
    wih2 = wih2_ref[...]
    whh2 = whh2_ref[...]
    b2 = jnp.broadcast_to(b2_ref[...], (B, G))

    def gates_to_hc(gates, c):
        # gate order (i, f, o, g); sigmoid(x) = 0.5*(tanh(0.5*x)+1) -> one EUP
        # op per gate group, scale/offset on the VPU.
        ifo = 0.5 * (jnp.tanh(0.5 * gates[:, :3 * H]) + 1.0)
        g = jnp.tanh(gates[:, 3 * H:])
        i = ifo[:, :H]
        f = ifo[:, H:2 * H]
        o = ifo[:, 2 * H:]
        c_new = f * c + i * g
        h_new = o * jnp.tanh(c_new)
        return h_new, c_new

    def step(t, carry):
        h1, c1, h2, c2 = carry
        # Layer-2 recurrent contribution depends only on t-1 state: issue its
        # MXU push first so it overlaps layer-1's gate nonlinearities.
        rec2 = jnp.dot(h2.astype(jnp.bfloat16), whh2,
                       preferred_element_type=jnp.float32)
        # Layer 1: input projection (incl. bias) precomputed in the prologue.
        gates1 = x1p_scratch[t] + jnp.dot(h1.astype(jnp.bfloat16), whh1,
                                          preferred_element_type=jnp.float32)
        h1, c1 = gates_to_hc(gates1, c1)
        # Layer 2: add the new-h1 contribution (no concat / fused (2H,4H) weight).
        gates2 = rec2 + jnp.dot(h1.astype(jnp.bfloat16), wih2,
                                preferred_element_type=jnp.float32) + b2
        h2, c2 = gates_to_hc(gates2, c2)
        return (h1, c1, h2, c2)

    zeros_h = jnp.zeros((B, H), jnp.float32)
    unroll = T if T <= 16 else 8      # cap unroll for long sequences (vreg pressure)
    _, _, h2, _ = lax.fori_loop(0, T, step,
                                (zeros_h, zeros_h, zeros_h, zeros_h),
                                unroll=unroll)

    # fc on the last timestep's top-layer hidden state (lane-dense padded width).
    out_ref[...] = (jnp.dot(h2.astype(jnp.bfloat16), wfc_ref[...],
                            preferred_element_type=jnp.float32)
                    + bfc_ref[...])


def prepare_params(params):
    """Offline transforms: gate reorder (i,f,g,o)->(i,f,o,g), layer-1
    input-projection table (HIGHEST precision) padded to 128 rows, separate
    bf16 layer-2 weights, lane-dense fc padding."""
    H, V = LSTM_UNITS, VOCAB_SIZE

    def reorder(w):   # columns (i,f,g,o) -> (i,f,o,g)
        return jnp.concatenate([w[..., :2 * H], w[..., 3 * H:], w[..., 2 * H:3 * H]],
                               axis=-1)

    table = (jnp.dot(params["embedding"], params["w_ih1"],
                     precision=lax.Precision.HIGHEST)
             + params["b1"])                                          # (V, 4H) f32
    table = reorder(table)
    table = jnp.zeros((VOCAB_PAD, 4 * H), jnp.float32).at[:V].set(table)

    wfc = jnp.zeros((H, VOCAB_PAD), jnp.float32).at[:, :V].set(params["w_fc"])
    bfc = jnp.zeros((1, VOCAB_PAD), jnp.float32).at[:, :V].set(params["b_fc"])
    return {
        "table": table,
        "w_hh1": reorder(params["w_hh1"]).astype(jnp.bfloat16),
        "w_ih2": reorder(params["w_ih2"]).astype(jnp.bfloat16),
        "w_hh2": reorder(params["w_hh2"]).astype(jnp.bfloat16),
        "b2":    reorder(params["b2"]),
        "w_fc":  wfc.astype(jnp.bfloat16),
        "b_fc":  bfc,
    }


def charrnn_forward(x_ids, prep):
    """x_ids: (B, T) int32 token ids. Returns (B, VOCAB_SIZE) f32 logits."""
    B, T = x_ids.shape
    # Tiny (T*B, 1) t-major id column; the gather itself happens in-kernel.
    ids_col = x_ids.T.reshape(T * B, 1).astype(jnp.int32)

    vmem = pl.BlockSpec(memory_space=pltpu.MemorySpace.VMEM)
    out = pl.pallas_call(
        _charrnn_kernel,
        out_shape=jax.ShapeDtypeStruct((B, VOCAB_PAD), jnp.float32),
        in_specs=[vmem] * 8,
        out_specs=vmem,
        scratch_shapes=[pltpu.VMEM((T, B, 4 * LSTM_UNITS), jnp.float32)],
        compiler_params=pltpu.CompilerParams(
            vmem_limit_bytes=16 * 1024 * 1024),   # footprint ~2.5 MiB; safe on v7x
    )(ids_col, prep["table"], prep["w_hh1"], prep["w_ih2"], prep["w_hh2"],
      prep["b2"], prep["w_fc"], prep["b_fc"])
    return out[:, :VOCAB_SIZE]


def init_params(key):
    """Deterministic parameter init (shapes match the PyTorch module;
    weights stored pre-transposed as (in, out); b = b_ih + b_hh fused;
    PyTorch gate order (i, f, g, o))."""
    ks = jax.random.split(key, 9)
    scale = 0.05
    H, E, V = LSTM_UNITS, EMBED_DIM, VOCAB_SIZE
    u = lambda k, shp: jax.random.uniform(k, shp, jnp.float32, -scale, scale)
    return {
        "embedding": u(ks[0], (V, E)),
        "w_ih1": u(ks[1], (E, 4 * H)),
        "w_hh1": u(ks[2], (H, 4 * H)),
        "b1":    u(ks[3], (1, 4 * H)),
        "w_ih2": u(ks[4], (H, 4 * H)),
        "w_hh2": u(ks[5], (H, 4 * H)),
        "b2":    u(ks[6], (1, 4 * H)),
        "w_fc":  u(ks[7], (H, V)),
        "b_fc":  u(ks[8], (1, V)),
    }


def reference_forward(x_ids, params):
    """Pure-JAX f32 reference mirroring torch.nn.LSTM semantics (HIGHEST
    precision matmuls so the reference really is f32 ground truth)."""
    H = LSTM_UNITS
    hp = lax.Precision.HIGHEST
    x = jnp.take(params["embedding"], x_ids, axis=0)   # (B, T, E)
    B, T, _ = x.shape

    def cell(x_t, h, c, wih, whh, b):
        g = jnp.dot(x_t, wih, precision=hp) + jnp.dot(h, whh, precision=hp) + b
        i, f, gg, o = (jax.nn.sigmoid(g[:, :H]), jax.nn.sigmoid(g[:, H:2 * H]),
                       jnp.tanh(g[:, 2 * H:3 * H]), jax.nn.sigmoid(g[:, 3 * H:]))
        c = f * c + i * gg
        return o * jnp.tanh(c), c

    h1 = c1 = h2 = c2 = jnp.zeros((B, H), jnp.float32)
    for t in range(T):
        h1, c1 = cell(x[:, t, :], h1, c1, params["w_ih1"], params["w_hh1"], params["b1"])
        h2, c2 = cell(h1, h2, c2, params["w_ih2"], params["w_hh2"], params["b2"])
    return jnp.dot(h2, params["w_fc"], precision=hp) + params["b_fc"]


if __name__ == "__main__":
    key = jax.random.PRNGKey(0)
    k_param, k_data = jax.random.split(key)

    params = init_params(k_param)
    prep = jax.tree_util.tree_map(jax.block_until_ready, prepare_params(params))

    # B >= 8 fills the f32 sublanes / MXU rows (perf review); still small.
    B, T = 8, 8
    x_ids = jax.random.randint(k_data, (B, T), 0, VOCAB_SIZE, dtype=jnp.int32)

    logits = jax.block_until_ready(charrnn_forward(x_ids, prep))
    ref = jax.block_until_ready(reference_forward(x_ids, params))

    assert logits.shape == (B, VOCAB_SIZE)
    # bf16 MXU operands (f32 accumulation / f32 state) -> loosened tolerance
    # vs. the pure-f32 reference.
    assert jnp.allclose(logits, ref, atol=2e-2, rtol=2e-2), float(
        jnp.max(jnp.abs(logits - ref)))
    print("KERNEL_OK")
</pallas_src>

<mosaic_0001>
module attributes {stable_mosaic.version = 11 : i64} {
  func.func @_charrnn_kernel(%arg0: memref<64x1xi32, #tpu.memory_space<vmem>>, %arg1: memref<128x1024xf32, #tpu.memory_space<vmem>>, %arg2: memref<256x1024xbf16, #tpu.memory_space<vmem>>, %arg3: memref<256x1024xbf16, #tpu.memory_space<vmem>>, %arg4: memref<256x1024xbf16, #tpu.memory_space<vmem>>, %arg5: memref<1x1024xf32, #tpu.memory_space<vmem>>, %arg6: memref<256x128xbf16, #tpu.memory_space<vmem>>, %arg7: memref<1x128xf32, #tpu.memory_space<vmem>>, %arg8: memref<8x128xf32, #tpu.memory_space<vmem>>, %arg9: memref<8x8x1024xf32, #tpu.memory_space<vmem>>) attributes {dimension_semantics = [], scalar_prefetch = 0 : i64, scratch_operands = 1 : i64, tpu.core_type = #tpu.core_type<tc>} {
    %c0 = arith.constant 0 : index
    %c0_0 = arith.constant 0 : index
    %0 = vector.load %arg0[%c0, %c0_0] : memref<64x1xi32, #tpu.memory_space<vmem>>, vector<64x1xi32>
    %1 = tpu.iota {dimensions = array<i32: 1>} : vector<64x128xi32>
    %2 = vector.broadcast %0 : vector<64x1xi32> to vector<64x128xi32>
    %3 = arith.cmpi eq, %2, %1 : vector<64x128xi32>
    %4 = arith.extui %3 : vector<64x128xi1> to vector<64x128xi32>
    %5 = arith.sitofp %4 : vector<64x128xi32> to vector<64x128xf32>
    %c0_1 = arith.constant 0 : index
    %c0_2 = arith.constant 0 : index
    %6 = vector.load %arg1[%c0_1, %c0_2] : memref<128x1024xf32, #tpu.memory_space<vmem>>, vector<128x1024xf32>
    %cst = arith.constant dense<0.000000e+00> : vector<64x1024xf32>
    %7 = tpu.matmul %5, %6, %cst {dimension_numbers = #tpu.dot_dimension_numbers<[1], [0], [0], [1], [0, 0, 1, 1], [], []>} : vector<64x128xf32>, vector<128x1024xf32>, vector<64x1024xf32> -> vector<64x1024xf32>
    %8 = vector.extract_strided_slice %7 {offsets = [0, 0], sizes = [8, 1024], strides = [1, 1]} : vector<64x1024xf32> to vector<8x1024xf32>
    %c0_3 = arith.constant 0 : index
    %c0_4 = arith.constant 0 : index
    %c0_5 = arith.constant 0 : index
    %9 = vector.load %arg9[%c0_3, %c0_4, %c0_5] : memref<8x8x1024xf32, #tpu.memory_space<vmem>>, vector<1x8x1024xf32>
    %10 = vector.shape_cast %9 : vector<1x8x1024xf32> to vector<8x1024xf32>
    %11 = vector.shape_cast %8 : vector<8x1024xf32> to vector<1x8x1024xf32>
    tpu.vector_store %arg9[%c0_3, %c0_4, %c0_5], %11 {strides = array<i32>} : memref<8x8x1024xf32, #tpu.memory_space<vmem>>, vector<1x8x1024xf32>,
    %12 = vector.extract_strided_slice %7 {offsets = [8, 0], sizes = [8, 1024], strides = [1, 1]} : vector<64x1024xf32> to vector<8x1024xf32>
    %c1 = arith.constant 1 : index
    %c0_6 = arith.constant 0 : index
    %c0_7 = arith.constant 0 : index
    %13 = vector.load %arg9[%c1, %c0_6, %c0_7] : memref<8x8x1024xf32, #tpu.memory_space<vmem>>, vector<1x8x1024xf32>
    %14 = vector.shape_cast %13 : vector<1x8x1024xf32> to vector<8x1024xf32>
    %15 = vector.shape_cast %12 : vector<8x1024xf32> to vector<1x8x1024xf32>
    tpu.vector_store %arg9[%c1, %c0_6, %c0_7], %15 {strides = array<i32>} : memref<8x8x1024xf32, #tpu.memory_space<vmem>>, vector<1x8x1024xf32>,
    %16 = vector.extract_strided_slice %7 {offsets = [16, 0], sizes = [8, 1024], strides = [1, 1]} : vector<64x1024xf32> to vector<8x1024xf32>
    %c2 = arith.constant 2 : index
    %c0_8 = arith.constant 0 : index
    %c0_9 = arith.constant 0 : index
    %17 = vector.load %arg9[%c2, %c0_8, %c0_9] : memref<8x8x1024xf32, #tpu.memory_space<vmem>>, vector<1x8x1024xf32>
    %18 = vector.shape_cast %17 : vector<1x8x1024xf32> to vector<8x1024xf32>
    %19 = vector.shape_cast %16 : vector<8x1024xf32> to vector<1x8x1024xf32>
    tpu.vector_store %arg9[%c2, %c0_8, %c0_9], %19 {strides = array<i32>} : memref<8x8x1024xf32, #tpu.memory_space<vmem>>, vector<1x8x1024xf32>,
    %20 = vector.extract_strided_slice %7 {offsets = [24, 0], sizes = [8, 1024], strides = [1, 1]} : vector<64x1024xf32> to vector<8x1024xf32>
    %c3 = arith.constant 3 : index
    %c0_10 = arith.constant 0 : index
    %c0_11 = arith.constant 0 : index
    %21 = vector.load %arg9[%c3, %c0_10, %c0_11] : memref<8x8x1024xf32, #tpu.memory_space<vmem>>, vector<1x8x1024xf32>
    %22 = vector.shape_cast %21 : vector<1x8x1024xf32> to vector<8x1024xf32>
    %23 = vector.shape_cast %20 : vector<8x1024xf32> to vector<1x8x1024xf32>
    tpu.vector_store %arg9[%c3, %c0_10, %c0_11], %23 {strides = array<i32>} : memref<8x8x1024xf32, #tpu.memory_space<vmem>>, vector<1x8x1024xf32>,
    %24 = vector.extract_strided_slice %7 {offsets = [32, 0], sizes = [8, 1024], strides = [1, 1]} : vector<64x1024xf32> to vector<8x1024xf32>
    %c4 = arith.constant 4 : index
    %c0_12 = arith.constant 0 : index
    %c0_13 = arith.constant 0 : index
    %25 = vector.load %arg9[%c4, %c0_12, %c0_13] : memref<8x8x1024xf32, #tpu.memory_space<vmem>>, vector<1x8x1024xf32>
    %26 = vector.shape_cast %25 : vector<1x8x1024xf32> to vector<8x1024xf32>
    %27 = vector.shape_cast %24 : vector<8x1024xf32> to vector<1x8x1024xf32>
    tpu.vector_store %arg9[%c4, %c0_12, %c0_13], %27 {strides = array<i32>} : memref<8x8x1024xf32, #tpu.memory_space<vmem>>, vector<1x8x1024xf32>,
    %28 = vector.extract_strided_slice %7 {offsets = [40, 0], sizes = [8, 1024], strides = [1, 1]} : vector<64x1024xf32> to vector<8x1024xf32>
    %c5 = arith.constant 5 : index
    %c0_14 = arith.constant 0 : index
    %c0_15 = arith.constant 0 : index
    %29 = vector.load %arg9[%c5, %c0_14, %c0_15] : memref<8x8x1024xf32, #tpu.memory_space<vmem>>, vector<1x8x1024xf32>
    %30 = vector.shape_cast %29 : vector<1x8x1024xf32> to vector<8x1024xf32>
    %31 = vector.shape_cast %28 : vector<8x1024xf32> to vector<1x8x1024xf32>
    tpu.vector_store %arg9[%c5, %c0_14, %c0_15], %31 {strides = array<i32>} : memref<8x8x1024xf32, #tpu.memory_space<vmem>>, vector<1x8x1024xf32>,
    %32 = vector.extract_strided_slice %7 {offsets = [48, 0], sizes = [8, 1024], strides = [1, 1]} : vector<64x1024xf32> to vector<8x1024xf32>
    %c6 = arith.constant 6 : index
    %c0_16 = arith.constant 0 : index
    %c0_17 = arith.constant 0 : index
    %33 = vector.load %arg9[%c6, %c0_16, %c0_17] : memref<8x8x1024xf32, #tpu.memory_space<vmem>>, vector<1x8x1024xf32>
    %34 = vector.shape_cast %33 : vector<1x8x1024xf32> to vector<8x1024xf32>
    %35 = vector.shape_cast %32 : vector<8x1024xf32> to vector<1x8x1024xf32>
    tpu.vector_store %arg9[%c6, %c0_16, %c0_17], %35 {strides = array<i32>} : memref<8x8x1024xf32, #tpu.memory_space<vmem>>, vector<1x8x1024xf32>,
    %36 = vector.extract_strided_slice %7 {offsets = [56, 0], sizes = [8, 1024], strides = [1, 1]} : vector<64x1024xf32> to vector<8x1024xf32>
    %c7 = arith.constant 7 : index
    %c0_18 = arith.constant 0 : index
    %c0_19 = arith.constant 0 : index
    %37 = vector.load %arg9[%c7, %c0_18, %c0_19] : memref<8x8x1024xf32, #tpu.memory_space<vmem>>, vector<1x8x1024xf32>
    %38 = vector.shape_cast %37 : vector<1x8x1024xf32> to vector<8x1024xf32>
    %39 = vector.shape_cast %36 : vector<8x1024xf32> to vector<1x8x1024xf32>
    tpu.vector_store %arg9[%c7, %c0_18, %c0_19], %39 {strides = array<i32>} : memref<8x8x1024xf32, #tpu.memory_space<vmem>>, vector<1x8x1024xf32>,
    %c0_20 = arith.constant 0 : index
    %c0_21 = arith.constant 0 : index
    %40 = vector.load %arg2[%c0_20, %c0_21] : memref<256x1024xbf16, #tpu.memory_space<vmem>>, vector<256x1024xbf16>
    %c0_22 = arith.constant 0 : index
    %c0_23 = arith.constant 0 : index
    %41 = vector.load %arg3[%c0_22, %c0_23] : memref<256x1024xbf16, #tpu.memory_space<vmem>>, vector<256x1024xbf16>
    %c0_24 = arith.constant 0 : index
    %c0_25 = arith.constant 0 : index
    %42 = vector.load %arg4[%c0_24, %c0_25] : memref<256x1024xbf16, #tpu.memory_space<vmem>>, vector<256x1024xbf16>
    %c0_26 = arith.constant 0 : index
    %c0_27 = arith.constant 0 : index
    %43 = vector.load %arg5[%c0_26, %c0_27] : memref<1x1024xf32, #tpu.memory_space<vmem>>, vector<1x1024xf32>
    %44 = vector.shape_cast %43 : vector<1x1024xf32> to vector<1x1024xf32>
    %45 = vector.broadcast %44 : vector<1x1024xf32> to vector<8x1024xf32>
    %cst_28 = arith.constant 0.000000e+00 : f32
    %46 = vector.broadcast %cst_28 : f32 to vector<8x256xf32>
    %c0_i32 = arith.constant 0 : i32
    %47 = arith.truncf %46 : vector<8x256xf32> to vector<8x256xbf16>
    %cst_29 = arith.constant dense<0.000000e+00> : vector<8x1024xf32>
    %48 = tpu.matmul %47, %42, %cst_29 {dimension_numbers = #tpu.dot_dimension_numbers<[1], [0], [0], [1], [0, 0, 1, 1], [], []>} : vector<8x256xbf16>, vector<256x1024xbf16>, vector<8x1024xf32> -> vector<8x1024xf32>
    %49 = arith.index_cast %c0_i32 : i32 to index
    %c0_30 = arith.constant 0 : index
    %c0_31 = arith.constant 0 : index
    %50 = vector.load %arg9[%49, %c0_30, %c0_31] : memref<8x8x1024xf32, #tpu.memory_space<vmem>>, vector<1x8x1024xf32>
    %51 = vector.shape_cast %50 : vector<1x8x1024xf32> to vector<8x1024xf32>
    %52 = arith.truncf %46 : vector<8x256xf32> to vector<8x256xbf16>
    %cst_32 = arith.constant dense<0.000000e+00> : vector<8x1024xf32>
    %53 = tpu.matmul %52, %40, %cst_32 {dimension_numbers = #tpu.dot_dimension_numbers<[1], [0], [0], [1], [0, 0, 1, 1], [], []>} : vector<8x256xbf16>, vector<256x1024xbf16>, vector<8x1024xf32> -> vector<8x1024xf32>
    %54 = arith.addf %51, %53 : vector<8x1024xf32>
    %55 = vector.extract_strided_slice %54 {offsets = [0, 0], sizes = [8, 768], strides = [1, 1]} : vector<8x1024xf32> to vector<8x768xf32>
    %cst_33 = arith.constant 5.000000e-01 : f32
    %56 = vector.broadcast %cst_33 : f32 to vector<8x768xf32>
    %57 = arith.mulf %56, %55 : vector<8x768xf32>
    %58 = math.tanh %57 : vector<8x768xf32>
    %cst_34 = arith.constant 1.000000e+00 : f32
    %59 = vector.broadcast %cst_34 : f32 to vector<8x768xf32>
    %60 = arith.addf %58, %59 : vector<8x768xf32>
    %cst_35 = arith.constant 5.000000e-01 : f32
    %61 = vector.broadcast %cst_35 : f32 to vector<8x768xf32>
    %62 = arith.mulf %61, %60 : vector<8x768xf32>
    %63 = vector.extract_strided_slice %54 {offsets = [0, 768], sizes = [8, 256], strides = [1, 1]} : vector<8x1024xf32> to vector<8x256xf32>
    %64 = math.tanh %63 : vector<8x256xf32>
    %65 = vector.extract_strided_slice %62 {offsets = [0, 0], sizes = [8, 256], strides = [1, 1]} : vector<8x768xf32> to vector<8x256xf32>
    %66 = vector.extract_strided_slice %62 {offsets = [0, 256], sizes = [8, 256], strides = [1, 1]} : vector<8x768xf32> to vector<8x256xf32>
    %67 = vector.extract_strided_slice %62 {offsets = [0, 512], sizes = [8, 256], strides = [1, 1]} : vector<8x768xf32> to vector<8x256xf32>
    %68 = arith.mulf %66, %46 : vector<8x256xf32>
    %69 = arith.mulf %65, %64 : vector<8x256xf32>
    %70 = arith.addf %68, %69 : vector<8x256xf32>
    %71 = math.tanh %70 : vector<8x256xf32>
    %72 = arith.mulf %67, %71 : vector<8x256xf32>
    %73 = arith.truncf %72 : vector<8x256xf32> to vector<8x256xbf16>
    %cst_36 = arith.constant dense<0.000000e+00> : vector<8x1024xf32>
    %74 = tpu.matmul %73, %41, %cst_36 {dimension_numbers = #tpu.dot_dimension_numbers<[1], [0], [0], [1], [0, 0, 1, 1], [], []>} : vector<8x256xbf16>, vector<256x1024xbf16>, vector<8x1024xf32> -> vector<8x1024xf32>
    %75 = arith.addf %48, %74 : vector<8x1024xf32>
    %76 = arith.addf %75, %45 : vector<8x1024xf32>
    %77 = vector.extract_strided_slice %76 {offsets = [0, 0], sizes = [8, 768], strides = [1, 1]} : vector<8x1024xf32> to vector<8x768xf32>
    %cst_37 = arith.constant 5.000000e-01 : f32
    %78 = vector.broadcast %cst_37 : f32 to vector<8x768xf32>
    %79 = arith.mulf %78, %77 : vector<8x768xf32>
    %80 = math.tanh %79 : vector<8x768xf32>
    %cst_38 = arith.constant 1.000000e+00 : f32
    %81 = vector.broadcast %cst_38 : f32 to vector<8x768xf32>
    %82 = arith.addf %80, %81 : vector<8x768xf32>
    %cst_39 = arith.constant 5.000000e-01 : f32
    %83 = vector.broadcast %cst_39 : f32 to vector<8x768xf32>
    %84 = arith.mulf %83, %82 : vector<8x768xf32>
    %85 = vector.extract_strided_slice %76 {offsets = [0, 768], sizes = [8, 256], strides = [1, 1]} : vector<8x1024xf32> to vector<8x256xf32>
    %86 = math.tanh %85 : vector<8x256xf32>
    %87 = vector.extract_strided_slice %84 {offsets = [0, 0], sizes = [8, 256], strides = [1, 1]} : vector<8x768xf32> to vector<8x256xf32>
    %88 = vector.extract_strided_slice %84 {offsets = [0, 256], sizes = [8, 256], strides = [1, 1]} : vector<8x768xf32> to vector<8x256xf32>
    %89 = vector.extract_strided_slice %84 {offsets = [0, 512], sizes = [8, 256], strides = [1, 1]} : vector<8x768xf32> to vector<8x256xf32>
    %90 = arith.mulf %88, %46 : vector<8x256xf32>
    %91 = arith.mulf %87, %86 : vector<8x256xf32>
    %92 = arith.addf %90, %91 : vector<8x256xf32>
    %93 = math.tanh %92 : vector<8x256xf32>
    %94 = arith.mulf %89, %93 : vector<8x256xf32>
    %c1_i32 = arith.constant 1 : i32
    %95 = arith.truncf %94 : vector<8x256xf32> to vector<8x256xbf16>
    %cst_40 = arith.constant dense<0.000000e+00> : vector<8x1024xf32>
    %96 = tpu.matmul %95, %42, %cst_40 {dimension_numbers = #tpu.dot_dimension_numbers<[1], [0], [0], [1], [0, 0, 1, 1], [], []>} : vector<8x256xbf16>, vector<256x1024xbf16>, vector<8x1024xf32> -> vector<8x1024xf32>
    %97 = arith.index_cast %c1_i32 : i32 to index
    %c0_41 = arith.constant 0 : index
    %c0_42 = arith.constant 0 : index
    %98 = vector.load %arg9[%97, %c0_41, %c0_42] : memref<8x8x1024xf32, #tpu.memory_space<vmem>>, vector<1x8x1024xf32>
    %99 = vector.shape_cast %98 : vector<1x8x1024xf32> to vector<8x1024xf32>
    %100 = arith.truncf %72 : vector<8x256xf32> to vector<8x256xbf16>
    %cst_43 = arith.constant dense<0.000000e+00> : vector<8x1024xf32>
    %101 = tpu.matmul %100, %40, %cst_43 {dimension_numbers = #tpu.dot_dimension_numbers<[1], [0], [0], [1], [0, 0, 1, 1], [], []>} : vector<8x256xbf16>, vector<256x1024xbf16>, vector<8x1024xf32> -> vector<8x1024xf32>
    %102 = arith.addf %99, %101 : vector<8x1024xf32>
    %103 = vector.extract_strided_slice %102 {offsets = [0, 0], sizes = [8, 768], strides = [1, 1]} : vector<8x1024xf32> to vector<8x768xf32>
    %cst_44 = arith.constant 5.000000e-01 : f32
    %104 = vector.broadcast %cst_44 : f32 to vector<8x768xf32>
    %105 = arith.mulf %104, %103 : vector<8x768xf32>
    %106 = math.tanh %105 : vector<8x768xf32>
    %cst_45 = arith.constant 1.000000e+00 : f32
    %107 = vector.broadcast %cst_45 : f32 to vector<8x768xf32>
    %108 = arith.addf %106, %107 : vector<8x768xf32>
    %cst_46 = arith.constant 5.000000e-01 : f32
    %109 = vector.broadcast %cst_46 : f32 to vector<8x768xf32>
    %110 = arith.mulf %109, %108 : vector<8x768xf32>
    %111 = vector.extract_strided_slice %102 {offsets = [0, 768], sizes = [8, 256], strides = [1, 1]} : vector<8x1024xf32> to vector<8x256xf32>
    %112 = math.tanh %111 : vector<8x256xf32>
    %113 = vector.extract_strided_slice %110 {offsets = [0, 0], sizes = [8, 256], strides = [1, 1]} : vector<8x768xf32> to vector<8x256xf32>
    %114 = vector.extract_strided_slice %110 {offsets = [0, 256], sizes = [8, 256], strides = [1, 1]} : vector<8x768xf32> to vector<8x256xf32>
    %115 = vector.extract_strided_slice %110 {offsets = [0, 512], sizes = [8, 256], strides = [1, 1]} : vector<8x768xf32> to vector<8x256xf32>
    %116 = arith.mulf %114, %70 : vector<8x256xf32>
    %117 = arith.mulf %113, %112 : vector<8x256xf32>
    %118 = arith.addf %116, %117 : vector<8x256xf32>
    %119 = math.tanh %118 : vector<8x256xf32>
    %120 = arith.mulf %115, %119 : vector<8x256xf32>
    %121 = arith.truncf %120 : vector<8x256xf32> to vector<8x256xbf16>
    %cst_47 = arith.constant dense<0.000000e+00> : vector<8x1024xf32>
    %122 = tpu.matmul %121, %41, %cst_47 {dimension_numbers = #tpu.dot_dimension_numbers<[1], [0], [0], [1], [0, 0, 1, 1], [], []>} : vector<8x256xbf16>, vector<256x1024xbf16>, vector<8x1024xf32> -> vector<8x1024xf32>
    %123 = arith.addf %96, %122 : vector<8x1024xf32>
    %124 = arith.addf %123, %45 : vector<8x1024xf32>
    %125 = vector.extract_strided_slice %124 {offsets = [0, 0], sizes = [8, 768], strides = [1, 1]} : vector<8x1024xf32> to vector<8x768xf32>
    %cst_48 = arith.constant 5.000000e-01 : f32
    %126 = vector.broadcast %cst_48 : f32 to vector<8x768xf32>
    %127 = arith.mulf %126, %125 : vector<8x768xf32>
    %128 = math.tanh %127 : vector<8x768xf32>
    %cst_49 = arith.constant 1.000000e+00 : f32
    %129 = vector.broadcast %cst_49 : f32 to vector<8x768xf32>
    %130 = arith.addf %128, %129 : vector<8x768xf32>
    %cst_50 = arith.constant 5.000000e-01 : f32
    %131 = vector.broadcast %cst_50 : f32 to vector<8x768xf32>
    %132 = arith.mulf %131, %130 : vector<8x768xf32>
    %133 = vector.extract_strided_slice %124 {offsets = [0, 768], sizes = [8, 256], strides = [1, 1]} : vector<8x1024xf32> to vector<8x256xf32>
    %134 = math.tanh %133 : vector<8x256xf32>
    %135 = vector.extract_strided_slice %132 {offsets = [0, 0], sizes = [8, 256], strides = [1, 1]} : vector<8x768xf32> to vector<8x256xf32>
    %136 = vector.extract_strided_slice %132 {offsets = [0, 256], sizes = [8, 256], strides = [1, 1]} : vector<8x768xf32> to vector<8x256xf32>
    %137 = vector.extract_strided_slice %132 {offsets = [0, 512], sizes = [8, 256], strides = [1, 1]} : vector<8x768xf32> to vector<8x256xf32>
    %138 = arith.mulf %136, %92 : vector<8x256xf32>
    %139 = arith.mulf %135, %134 : vector<8x256xf32>
    %140 = arith.addf %138, %139 : vector<8x256xf32>
    %141 = math.tanh %140 : vector<8x256xf32>
    %142 = arith.mulf %137, %141 : vector<8x256xf32>
    %c2_i32 = arith.constant 2 : i32
    %143 = arith.truncf %142 : vector<8x256xf32> to vector<8x256xbf16>
    %cst_51 = arith.constant dense<0.000000e+00> : vector<8x1024xf32>
    %144 = tpu.matmul %143, %42, %cst_51 {dimension_numbers = #tpu.dot_dimension_numbers<[1], [0], [0], [1], [0, 0, 1, 1], [], []>} : vector<8x256xbf16>, vector<256x1024xbf16>, vector<8x1024xf32> -> vector<8x1024xf32>
    %145 = arith.index_cast %c2_i32 : i32 to index
    %c0_52 = arith.constant 0 : index
    %c0_53 = arith.constant 0 : index
    %146 = vector.load %arg9[%145, %c0_52, %c0_53] : memref<8x8x1024xf32, #tpu.memory_space<vmem>>, vector<1x8x1024xf32>
    %147 = vector.shape_cast %146 : vector<1x8x1024xf32> to vector<8x1024xf32>
    %148 = arith.truncf %120 : vector<8x256xf32> to vector<8x256xbf16>
    %cst_54 = arith.constant dense<0.000000e+00> : vector<8x1024xf32>
    %149 = tpu.matmul %148, %40, %cst_54 {dimension_numbers = #tpu.dot_dimension_numbers<[1], [0], [0], [1], [0, 0, 1, 1], [], []>} : vector<8x256xbf16>, vector<256x1024xbf16>, vector<8x1024xf32> -> vector<8x1024xf32>
    %150 = arith.addf %147, %149 : vector<8x1024xf32>
    %151 = vector.extract_strided_slice %150 {offsets = [0, 0], sizes = [8, 768], strides = [1, 1]} : vector<8x1024xf32> to vector<8x768xf32>
    %cst_55 = arith.constant 5.000000e-01 : f32
    %152 = vector.broadcast %cst_55 : f32 to vector<8x768xf32>
    %153 = arith.mulf %152, %151 : vector<8x768xf32>
    %154 = math.tanh %153 : vector<8x768xf32>
    %cst_56 = arith.constant 1.000000e+00 : f32
    %155 = vector.broadcast %cst_56 : f32 to vector<8x768xf32>
    %156 = arith.addf %154, %155 : vector<8x768xf32>
    %cst_57 = arith.constant 5.000000e-01 : f32
    %157 = vector.broadcast %cst_57 : f32 to vector<8x768xf32>
    %158 = arith.mulf %157, %156 : vector<8x768xf32>
    %159 = vector.extract_strided_slice %150 {offsets = [0, 768], sizes = [8, 256], strides = [1, 1]} : vector<8x1024xf32> to vector<8x256xf32>
    %160 = math.tanh %159 : vector<8x256xf32>
    %161 = vector.extract_strided_slice %158 {offsets = [0, 0], sizes = [8, 256], strides = [1, 1]} : vector<8x768xf32> to vector<8x256xf32>
    %162 = vector.extract_strided_slice %158 {offsets = [0, 256], sizes = [8, 256], strides = [1, 1]} : vector<8x768xf32> to vector<8x256xf32>
    %163 = vector.extract_strided_slice %158 {offsets = [0, 512], sizes = [8, 256], strides = [1, 1]} : vector<8x768xf32> to vector<8x256xf32>
    %164 = arith.mulf %162, %118 : vector<8x256xf32>
    %165 = arith.mulf %161, %160 : vector<8x256xf32>
    %166 = arith.addf %164, %165 : vector<8x256xf32>
    %167 = math.tanh %166 : vector<8x256xf32>
    %168 = arith.mulf %163, %167 : vector<8x256xf32>
    %169 = arith.truncf %168 : vector<8x256xf32> to vector<8x256xbf16>
    %cst_58 = arith.constant dense<0.000000e+00> : vector<8x1024xf32>
    %170 = tpu.matmul %169, %41, %cst_58 {dimension_numbers = #tpu.dot_dimension_numbers<[1], [0], [0], [1], [0, 0, 1, 1], [], []>} : vector<8x256xbf16>, vector<256x1024xbf16>, vector<8x1024xf32> -> vector<8x1024xf32>
    %171 = arith.addf %144, %170 : vector<8x1024xf32>
    %172 = arith.addf %171, %45 : vector<8x1024xf32>
    %173 = vector.extract_strided_slice %172 {offsets = [0, 0], sizes = [8, 768], strides = [1, 1]} : vector<8x1024xf32> to vector<8x768xf32>
    %cst_59 = arith.constant 5.000000e-01 : f32
    %174 = vector.broadcast %cst_59 : f32 to vector<8x768xf32>
    %175 = arith.mulf %174, %173 : vector<8x768xf32>
    %176 = math.tanh %175 : vector<8x768xf32>
    %cst_60 = arith.constant 1.000000e+00 : f32
    %177 = vector.broadcast %cst_60 : f32 to vector<8x768xf32>
    %178 = arith.addf %176, %177 : vector<8x768xf32>
    %cst_61 = arith.constant 5.000000e-01 : f32
    %179 = vector.broadcast %cst_61 : f32 to vector<8x768xf32>
    %180 = arith.mulf %179, %178 : vector<8x768xf32>
    %181 = vector.extract_strided_slice %172 {offsets = [0, 768], sizes = [8, 256], strides = [1, 1]} : vector<8x1024xf32> to vector<8x256xf32>
    %182 = math.tanh %181 : vector<8x256xf32>
    %183 = vector.extract_strided_slice %180 {offsets = [0, 0], sizes = [8, 256], strides = [1, 1]} : vector<8x768xf32> to vector<8x256xf32>
    %184 = vector.extract_strided_slice %180 {offsets = [0, 256], sizes = [8, 256], strides = [1, 1]} : vector<8x768xf32> to vector<8x256xf32>
    %185 = vector.extract_strided_slice %180 {offsets = [0, 512], sizes = [8, 256], strides = [1, 1]} : vector<8x768xf32> to vector<8x256xf32>
    %186 = arith.mulf %184, %140 : vector<8x256xf32>
    %187 = arith.mulf %183, %182 : vector<8x256xf32>
    %188 = arith.addf %186, %187 : vector<8x256xf32>
    %189 = math.tanh %188 : vector<8x256xf32>
    %190 = arith.mulf %185, %189 : vector<8x256xf32>
    %c3_i32 = arith.constant 3 : i32
    %191 = arith.truncf %190 : vector<8x256xf32> to vector<8x256xbf16>
    %cst_62 = arith.constant dense<0.000000e+00> : vector<8x1024xf32>
    %192 = tpu.matmul %191, %42, %cst_62 {dimension_numbers = #tpu.dot_dimension_numbers<[1], [0], [0], [1], [0, 0, 1, 1], [], []>} : vector<8x256xbf16>, vector<256x1024xbf16>, vector<8x1024xf32> -> vector<8x1024xf32>
    %193 = arith.index_cast %c3_i32 : i32 to index
    %c0_63 = arith.constant 0 : index
    %c0_64 = arith.constant 0 : index
    %194 = vector.load %arg9[%193, %c0_63, %c0_64] : memref<8x8x1024xf32, #tpu.memory_space<vmem>>, vector<1x8x1024xf32>
    %195 = vector.shape_cast %194 : vector<1x8x1024xf32> to vector<8x1024xf32>
    %196 = arith.truncf %168 : vector<8x256xf32> to vector<8x256xbf16>
    %cst_65 = arith.constant dense<0.000000e+00> : vector<8x1024xf32>
    %197 = tpu.matmul %196, %40, %cst_65 {dimension_numbers = #tpu.dot_dimension_numbers<[1], [0], [0], [1], [0, 0, 1, 1], [], []>} : vector<8x256xbf16>, vector<256x1024xbf16>, vector<8x1024xf32> -> vector<8x1024xf32>
    %198 = arith.addf %195, %197 : vector<8x1024xf32>
    %199 = vector.extract_strided_slice %198 {offsets = [0, 0], sizes = [8, 768], strides = [1, 1]} : vector<8x1024xf32> to vector<8x768xf32>
    %cst_66 = arith.constant 5.000000e-01 : f32
    %200 = vector.broadcast %cst_66 : f32 to vector<8x768xf32>
    %201 = arith.mulf %200, %199 : vector<8x768xf32>
    %202 = math.tanh %201 : vector<8x768xf32>
    %cst_67 = arith.constant 1.000000e+00 : f32
    %203 = vector.broadcast %cst_67 : f32 to vector<8x768xf32>
    %204 = arith.addf %202, %203 : vector<8x768xf32>
    %cst_68 = arith.constant 5.000000e-01 : f32
    %205 = vector.broadcast %cst_68 : f32 to vector<8x768xf32>
    %206 = arith.mulf %205, %204 : vector<8x768xf32>
    %207 = vector.extract_strided_slice %198 {offsets = [0, 768], sizes = [8, 256], strides = [1, 1]} : vector<8x1024xf32> to vector<8x256xf32>
    %208 = math.tanh %207 : vector<8x256xf32>
    %209 = vector.extract_strided_slice %206 {offsets = [0, 0], sizes = [8, 256], strides = [1, 1]} : vector<8x768xf32> to vector<8x256xf32>
    %210 = vector.extract_strided_slice %206 {offsets = [0, 256], sizes = [8, 256], strides = [1, 1]} : vector<8x768xf32> to vector<8x256xf32>
    %211 = vector.extract_strided_slice %206 {offsets = [0, 512], sizes = [8, 256], strides = [1, 1]} : vector<8x768xf32> to vector<8x256xf32>
    %212 = arith.mulf %210, %166 : vector<8x256xf32>
    %213 = arith.mulf %209, %208 : vector<8x256xf32>
    %214 = arith.addf %212, %213 : vector<8x256xf32>
    %215 = math.tanh %214 : vector<8x256xf32>
    %216 = arith.mulf %211, %215 : vector<8x256xf32>
    %217 = arith.truncf %216 : vector<8x256xf32> to vector<8x256xbf16>
    %cst_69 = arith.constant dense<0.000000e+00> : vector<8x1024xf32>
    %218 = tpu.matmul %217, %41, %cst_69 {dimension_numbers = #tpu.dot_dimension_numbers<[1], [0], [0], [1], [0, 0, 1, 1], [], []>} : vector<8x256xbf16>, vector<256x1024xbf16>, vector<8x1024xf32> -> vector<8x1024xf32>
    %219 = arith.addf %192, %218 : vector<8x1024xf32>
    %220 = arith.addf %219, %45 : vector<8x1024xf32>
    %221 = vector.extract_strided_slice %220 {offsets = [0, 0], sizes = [8, 768], strides = [1, 1]} : vector<8x1024xf32> to vector<8x768xf32>
    %cst_70 = arith.constant 5.000000e-01 : f32
    %222 = vector.broadcast %cst_70 : f32 to vector<8x768xf32>
    %223 = arith.mulf %222, %221 : vector<8x768xf32>
    %224 = math.tanh %223 : vector<8x768xf32>
    %cst_71 = arith.constant 1.000000e+00 : f32
    %225 = vector.broadcast %cst_71 : f32 to vector<8x768xf32>
    %226 = arith.addf %224, %225 : vector<8x768xf32>
    %cst_72 = arith.constant 5.000000e-01 : f32
    %227 = vector.broadcast %cst_72 : f32 to vector<8x768xf32>
    %228 = arith.mulf %227, %226 : vector<8x768xf32>
    %229 = vector.extract_strided_slice %220 {offsets = [0, 768], sizes = [8, 256], strides = [1, 1]} : vector<8x1024xf32> to vector<8x256xf32>
    %230 = math.tanh %229 : vector<8x256xf32>
    %231 = vector.extract_strided_slice %228 {offsets = [0, 0], sizes = [8, 256], strides = [1, 1]} : vector<8x768xf32> to vector<8x256xf32>
    %232 = vector.extract_strided_slice %228 {offsets = [0, 256], sizes = [8, 256], strides = [1, 1]} : vector<8x768xf32> to vector<8x256xf32>
    %233 = vector.extract_strided_slice %228 {offsets = [0, 512], sizes = [8, 256], strides = [1, 1]} : vector<8x768xf32> to vector<8x256xf32>
    %234 = arith.mulf %232, %188 : vector<8x256xf32>
    %235 = arith.mulf %231, %230 : vector<8x256xf32>
    %236 = arith.addf %234, %235 : vector<8x256xf32>
    %237 = math.tanh %236 : vector<8x256xf32>
    %238 = arith.mulf %233, %237 : vector<8x256xf32>
    %c4_i32 = arith.constant 4 : i32
    %239 = arith.truncf %238 : vector<8x256xf32> to vector<8x256xbf16>
    %cst_73 = arith.constant dense<0.000000e+00> : vector<8x1024xf32>
    %240 = tpu.matmul %239, %42, %cst_73 {dimension_numbers = #tpu.dot_dimension_numbers<[1], [0], [0], [1], [0, 0, 1, 1], [], []>} : vector<8x256xbf16>, vector<256x1024xbf16>, vector<8x1024xf32> -> vector<8x1024xf32>
    %241 = arith.index_cast %c4_i32 : i32 to index
    %c0_74 = arith.constant 0 : index
    %c0_75 = arith.constant 0 : index
    %242 = vector.load %arg9[%241, %c0_74, %c0_75] : memref<8x8x1024xf32, #tpu.memory_space<vmem>>, vector<1x8x1024xf32>
    %243 = vector.shape_cast %242 : vector<1x8x1024xf32> to vector<8x1024xf32>
    %244 = arith.truncf %216 : vector<8x256xf32> to vector<8x256xbf16>
    %cst_76 = arith.constant dense<0.000000e+00> : vector<8x1024xf32>
    %245 = tpu.matmul %244, %40, %cst_76 {dimension_numbers = #tpu.dot_dimension_numbers<[1], [0], [0], [1], [0, 0, 1, 1], [], []>} : vector<8x256xbf16>, vector<256x1024xbf16>, vector<8x1024xf32> -> vector<8x1024xf32>
    %246 = arith.addf %243, %245 : vector<8x1024xf32>
    %247 = vector.extract_strided_slice %246 {offsets = [0, 0], sizes = [8, 768], strides = [1, 1]} : vector<8x1024xf32> to vector<8x768xf32>
    %cst_77 = arith.constant 5.000000e-01 : f32
    %248 = vector.broadcast %cst_77 : f32 to vector<8x768xf32>
    %249 = arith.mulf %248, %247 : vector<8x768xf32>
    %250 = math.tanh %249 : vector<8x768xf32>
    %cst_78 = arith.constant 1.000000e+00 : f32
    %251 = vector.broadcast %cst_78 : f32 to vector<8x768xf32>
    %252 = arith.addf %250, %251 : vector<8x768xf32>
    %cst_79 = arith.constant 5.000000e-01 : f32
    %253 = vector.broadcast %cst_79 : f32 to vector<8x768xf32>
    %254 = arith.mulf %253, %252 : vector<8x768xf32>
    %255 = vector.extract_strided_slice %246 {offsets = [0, 768], sizes = [8, 256], strides = [1, 1]} : vector<8x1024xf32> to vector<8x256xf32>
    %256 = math.tanh %255 : vector<8x256xf32>
    %257 = vector.extract_strided_slice %254 {offsets = [0, 0], sizes = [8, 256], strides = [1, 1]} : vector<8x768xf32> to vector<8x256xf32>
    %258 = vector.extract_strided_slice %254 {offsets = [0, 256], sizes = [8, 256], strides = [1, 1]} : vector<8x768xf32> to vector<8x256xf32>
    %259 = vector.extract_strided_slice %254 {offsets = [0, 512], sizes = [8, 256], strides = [1, 1]} : vector<8x768xf32> to vector<8x256xf32>
    %260 = arith.mulf %258, %214 : vector<8x256xf32>
    %261 = arith.mulf %257, %256 : vector<8x256xf32>
    %262 = arith.addf %260, %261 : vector<8x256xf32>
    %263 = math.tanh %262 : vector<8x256xf32>
    %264 = arith.mulf %259, %263 : vector<8x256xf32>
    %265 = arith.truncf %264 : vector<8x256xf32> to vector<8x256xbf16>
    %cst_80 = arith.constant dense<0.000000e+00> : vector<8x1024xf32>
    %266 = tpu.matmul %265, %41, %cst_80 {dimension_numbers = #tpu.dot_dimension_numbers<[1], [0], [0], [1], [0, 0, 1, 1], [], []>} : vector<8x256xbf16>, vector<256x1024xbf16>, vector<8x1024xf32> -> vector<8x1024xf32>
    %267 = arith.addf %240, %266 : vector<8x1024xf32>
    %268 = arith.addf %267, %45 : vector<8x1024xf32>
    %269 = vector.extract_strided_slice %268 {offsets = [0, 0], sizes = [8, 768], strides = [1, 1]} : vector<8x1024xf32> to vector<8x768xf32>
    %cst_81 = arith.constant 5.000000e-01 : f32
    %270 = vector.broadcast %cst_81 : f32 to vector<8x768xf32>
    %271 = arith.mulf %270, %269 : vector<8x768xf32>
    %272 = math.tanh %271 : vector<8x768xf32>
    %cst_82 = arith.constant 1.000000e+00 : f32
    %273 = vector.broadcast %cst_82 : f32 to vector<8x768xf32>
    %274 = arith.addf %272, %273 : vector<8x768xf32>
    %cst_83 = arith.constant 5.000000e-01 : f32
    %275 = vector.broadcast %cst_83 : f32 to vector<8x768xf32>
    %276 = arith.mulf %275, %274 : vector<8x768xf32>
    %277 = vector.extract_strided_slice %268 {offsets = [0, 768], sizes = [8, 256], strides = [1, 1]} : vector<8x1024xf32> to vector<8x256xf32>
    %278 = math.tanh %277 : vector<8x256xf32>
    %279 = vector.extract_strided_slice %276 {offsets = [0, 0], sizes = [8, 256], strides = [1, 1]} : vector<8x768xf32> to vector<8x256xf32>
    %280 = vector.extract_strided_slice %276 {offsets = [0, 256], sizes = [8, 256], strides = [1, 1]} : vector<8x768xf32> to vector<8x256xf32>
    %281 = vector.extract_strided_slice %276 {offsets = [0, 512], sizes = [8, 256], strides = [1, 1]} : vector<8x768xf32> to vector<8x256xf32>
    %282 = arith.mulf %280, %236 : vector<8x256xf32>
    %283 = arith.mulf %279, %278 : vector<8x256xf32>
    %284 = arith.addf %282, %283 : vector<8x256xf32>
    %285 = math.tanh %284 : vector<8x256xf32>
    %286 = arith.mulf %281, %285 : vector<8x256xf32>
    %c5_i32 = arith.constant 5 : i32
    %287 = arith.truncf %286 : vector<8x256xf32> to vector<8x256xbf16>
    %cst_84 = arith.constant dense<0.000000e+00> : vector<8x1024xf32>
    %288 = tpu.matmul %287, %42, %cst_84 {dimension_numbers = #tpu.dot_dimension_numbers<[1], [0], [0], [1], [0, 0, 1, 1], [], []>} : vector<8x256xbf16>, vector<256x1024xbf16>, vector<8x1024xf32> -> vector<8x1024xf32>
    %289 = arith.index_cast %c5_i32 : i32 to index
    %c0_85 = arith.constant 0 : index
    %c0_86 = arith.constant 0 : index
    %290 = vector.load %arg9[%289, %c0_85, %c0_86] : memref<8x8x1024xf32, #tpu.memory_space<vmem>>, vector<1x8x1024xf32>
    %291 = vector.shape_cast %290 : vector<1x8x1024xf32> to vector<8x1024xf32>
    %292 = arith.truncf %264 : vector<8x256xf32> to vector<8x256xbf16>
    %cst_87 = arith.constant dense<0.000000e+00> : vector<8x1024xf32>
    %293 = tpu.matmul %292, %40, %cst_87 {dimension_numbers = #tpu.dot_dimension_numbers<[1], [0], [0], [1], [0, 0, 1, 1], [], []>} : vector<8x256xbf16>, vector<256x1024xbf16>, vector<8x1024xf32> -> vector<8x1024xf32>
    %294 = arith.addf %291, %293 : vector<8x1024xf32>
    %295 = vector.extract_strided_slice %294 {offsets = [0, 0], sizes = [8, 768], strides = [1, 1]} : vector<8x1024xf32> to vector<8x768xf32>
    %cst_88 = arith.constant 5.000000e-01 : f32
    %296 = vector.broadcast %cst_88 : f32 to vector<8x768xf32>
    %297 = arith.mulf %296, %295 : vector<8x768xf32>
    %298 = math.tanh %297 : vector<8x768xf32>
    %cst_89 = arith.constant 1.000000e+00 : f32
    %299 = vector.broadcast %cst_89 : f32 to vector<8x768xf32>
    %300 = arith.addf %298, %299 : vector<8x768xf32>
    %cst_90 = arith.constant 5.000000e-01 : f32
    %301 = vector.broadcast %cst_90 : f32 to vector<8x768xf32>
    %302 = arith.mulf %301, %300 : vector<8x768xf32>
    %303 = vector.extract_strided_slice %294 {offsets = [0, 768], sizes = [8, 256], strides = [1, 1]} : vector<8x1024xf32> to vector<8x256xf32>
    %304 = math.tanh %303 : vector<8x256xf32>
    %305 = vector.extract_strided_slice %302 {offsets = [0, 0], sizes = [8, 256], strides = [1, 1]} : vector<8x768xf32> to vector<8x256xf32>
    %306 = vector.extract_strided_slice %302 {offsets = [0, 256], sizes = [8, 256], strides = [1, 1]} : vector<8x768xf32> to vector<8x256xf32>
    %307 = vector.extract_strided_slice %302 {offsets = [0, 512], sizes = [8, 256], strides = [1, 1]} : vector<8x768xf32> to vector<8x256xf32>
    %308 = arith.mulf %306, %262 : vector<8x256xf32>
    %309 = arith.mulf %305, %304 : vector<8x256xf32>
    %310 = arith.addf %308, %309 : vector<8x256xf32>
    %311 = math.tanh %310 : vector<8x256xf32>
    %312 = arith.mulf %307, %311 : vector<8x256xf32>
    %313 = arith.truncf %312 : vector<8x256xf32> to vector<8x256xbf16>
    %cst_91 = arith.constant dense<0.000000e+00> : vector<8x1024xf32>
    %314 = tpu.matmul %313, %41, %cst_91 {dimension_numbers = #tpu.dot_dimension_numbers<[1], [0], [0], [1], [0, 0, 1, 1], [], []>} : vector<8x256xbf16>, vector<256x1024xbf16>, vector<8x1024xf32> -> vector<8x1024xf32>
    %315 = arith.addf %288, %314 : vector<8x1024xf32>
    %316 = arith.addf %315, %45 : vector<8x1024xf32>
    %317 = vector.extract_strided_slice %316 {offsets = [0, 0], sizes = [8, 768], strides = [1, 1]} : vector<8x1024xf32> to vector<8x768xf32>
    %cst_92 = arith.constant 5.000000e-01 : f32
    %318 = vector.broadcast %cst_92 : f32 to vector<8x768xf32>
    %319 = arith.mulf %318, %317 : vector<8x768xf32>
    %320 = math.tanh %319 : vector<8x768xf32>
    %cst_93 = arith.constant 1.000000e+00 : f32
    %321 = vector.broadcast %cst_93 : f32 to vector<8x768xf32>
    %322 = arith.addf %320, %321 : vector<8x768xf32>
    %cst_94 = arith.constant 5.000000e-01 : f32
    %323 = vector.broadcast %cst_94 : f32 to vector<8x768xf32>
    %324 = arith.mulf %323, %322 : vector<8x768xf32>
    %325 = vector.extract_strided_slice %316 {offsets = [0, 768], sizes = [8, 256], strides = [1, 1]} : vector<8x1024xf32> to vector<8x256xf32>
    %326 = math.tanh %325 : vector<8x256xf32>
    %327 = vector.extract_strided_slice %324 {offsets = [0, 0], sizes = [8, 256], strides = [1, 1]} : vector<8x768xf32> to vector<8x256xf32>
    %328 = vector.extract_strided_slice %324 {offsets = [0, 256], sizes = [8, 256], strides = [1, 1]} : vector<8x768xf32> to vector<8x256xf32>
    %329 = vector.extract_strided_slice %324 {offsets = [0, 512], sizes = [8, 256], strides = [1, 1]} : vector<8x768xf32> to vector<8x256xf32>
    %330 = arith.mulf %328, %284 : vector<8x256xf32>
    %331 = arith.mulf %327, %326 : vector<8x256xf32>
    %332 = arith.addf %330, %331 : vector<8x256xf32>
    %333 = math.tanh %332 : vector<8x256xf32>
    %334 = arith.mulf %329, %333 : vector<8x256xf32>
    %c6_i32 = arith.constant 6 : i32
    %335 = arith.truncf %334 : vector<8x256xf32> to vector<8x256xbf16>
    %cst_95 = arith.constant dense<0.000000e+00> : vector<8x1024xf32>
    %336 = tpu.matmul %335, %42, %cst_95 {dimension_numbers = #tpu.dot_dimension_numbers<[1], [0], [0], [1], [0, 0, 1, 1], [], []>} : vector<8x256xbf16>, vector<256x1024xbf16>, vector<8x1024xf32> -> vector<8x1024xf32>
    %337 = arith.index_cast %c6_i32 : i32 to index
    %c0_96 = arith.constant 0 : index
    %c0_97 = arith.constant 0 : index
    %338 = vector.load %arg9[%337, %c0_96, %c0_97] : memref<8x8x1024xf32, #tpu.memory_space<vmem>>, vector<1x8x1024xf32>
    %339 = vector.shape_cast %338 : vector<1x8x1024xf32> to vector<8x1024xf32>
    %340 = arith.truncf %312 : vector<8x256xf32> to vector<8x256xbf16>
    %cst_98 = arith.constant dense<0.000000e+00> : vector<8x1024xf32>
    %341 = tpu.matmul %340, %40, %cst_98 {dimension_numbers = #tpu.dot_dimension_numbers<[1], [0], [0], [1], [0, 0, 1, 1], [], []>} : vector<8x256xbf16>, vector<256x1024xbf16>, vector<8x1024xf32> -> vector<8x1024xf32>
    %342 = arith.addf %339, %341 : vector<8x1024xf32>
    %343 = vector.extract_strided_slice %342 {offsets = [0, 0], sizes = [8, 768], strides = [1, 1]} : vector<8x1024xf32> to vector<8x768xf32>
    %cst_99 = arith.constant 5.000000e-01 : f32
    %344 = vector.broadcast %cst_99 : f32 to vector<8x768xf32>
    %345 = arith.mulf %344, %343 : vector<8x768xf32>
    %346 = math.tanh %345 : vector<8x768xf32>
    %cst_100 = arith.constant 1.000000e+00 : f32
    %347 = vector.broadcast %cst_100 : f32 to vector<8x768xf32>
    %348 = arith.addf %346, %347 : vector<8x768xf32>
    %cst_101 = arith.constant 5.000000e-01 : f32
    %349 = vector.broadcast %cst_101 : f32 to vector<8x768xf32>
    %350 = arith.mulf %349, %348 : vector<8x768xf32>
    %351 = vector.extract_strided_slice %342 {offsets = [0, 768], sizes = [8, 256], strides = [1, 1]} : vector<8x1024xf32> to vector<8x256xf32>
    %352 = math.tanh %351 : vector<8x256xf32>
    %353 = vector.extract_strided_slice %350 {offsets = [0, 0], sizes = [8, 256], strides = [1, 1]} : vector<8x768xf32> to vector<8x256xf32>
    %354 = vector.extract_strided_slice %350 {offsets = [0, 256], sizes = [8, 256], strides = [1, 1]} : vector<8x768xf32> to vector<8x256xf32>
    %355 = vector.extract_strided_slice %350 {offsets = [0, 512], sizes = [8, 256], strides = [1, 1]} : vector<8x768xf32> to vector<8x256xf32>
    %356 = arith.mulf %354, %310 : vector<8x256xf32>
    %357 = arith.mulf %353, %352 : vector<8x256xf32>
    %358 = arith.addf %356, %357 : vector<8x256xf32>
    %359 = math.tanh %358 : vector<8x256xf32>
    %360 = arith.mulf %355, %359 : vector<8x256xf32>
    %361 = arith.truncf %360 : vector<8x256xf32> to vector<8x256xbf16>
    %cst_102 = arith.constant dense<0.000000e+00> : vector<8x1024xf32>
    %362 = tpu.matmul %361, %41, %cst_102 {dimension_numbers = #tpu.dot_dimension_numbers<[1], [0], [0], [1], [0, 0, 1, 1], [], []>} : vector<8x256xbf16>, vector<256x1024xbf16>, vector<8x1024xf32> -> vector<8x1024xf32>
    %363 = arith.addf %336, %362 : vector<8x1024xf32>
    %364 = arith.addf %363, %45 : vector<8x1024xf32>
    %365 = vector.extract_strided_slice %364 {offsets = [0, 0], sizes = [8, 768], strides = [1, 1]} : vector<8x1024xf32> to vector<8x768xf32>
    %cst_103 = arith.constant 5.000000e-01 : f32
    %366 = vector.broadcast %cst_103 : f32 to vector<8x768xf32>
    %367 = arith.mulf %366, %365 : vector<8x768xf32>
    %368 = math.tanh %367 : vector<8x768xf32>
    %cst_104 = arith.constant 1.000000e+00 : f32
    %369 = vector.broadcast %cst_104 : f32 to vector<8x768xf32>
    %370 = arith.addf %368, %369 : vector<8x768xf32>
    %cst_105 = arith.constant 5.000000e-01 : f32
    %371 = vector.broadcast %cst_105 : f32 to vector<8x768xf32>
    %372 = arith.mulf %371, %370 : vector<8x768xf32>
    %373 = vector.extract_strided_slice %364 {offsets = [0, 768], sizes = [8, 256], strides = [1, 1]} : vector<8x1024xf32> to vector<8x256xf32>
    %374 = math.tanh %373 : vector<8x256xf32>
    %375 = vector.extract_strided_slice %372 {offsets = [0, 0], sizes = [8, 256], strides = [1, 1]} : vector<8x768xf32> to vector<8x256xf32>
    %376 = vector.extract_strided_slice %372 {offsets = [0, 256], sizes = [8, 256], strides = [1, 1]} : vector<8x768xf32> to vector<8x256xf32>
    %377 = vector.extract_strided_slice %372 {offsets = [0, 512], sizes = [8, 256], strides = [1, 1]} : vector<8x768xf32> to vector<8x256xf32>
    %378 = arith.mulf %376, %332 : vector<8x256xf32>
    %379 = arith.mulf %375, %374 : vector<8x256xf32>
    %380 = arith.addf %378, %379 : vector<8x256xf32>
    %381 = math.tanh %380 : vector<8x256xf32>
    %382 = arith.mulf %377, %381 : vector<8x256xf32>
    %c7_i32 = arith.constant 7 : i32
    %383 = arith.truncf %382 : vector<8x256xf32> to vector<8x256xbf16>
    %cst_106 = arith.constant dense<0.000000e+00> : vector<8x1024xf32>
    %384 = tpu.matmul %383, %42, %cst_106 {dimension_numbers = #tpu.dot_dimension_numbers<[1], [0], [0], [1], [0, 0, 1, 1], [], []>} : vector<8x256xbf16>, vector<256x1024xbf16>, vector<8x1024xf32> -> vector<8x1024xf32>
    %385 = arith.index_cast %c7_i32 : i32 to index
    %c0_107 = arith.constant 0 : index
    %c0_108 = arith.constant 0 : index
    %386 = vector.load %arg9[%385, %c0_107, %c0_108] : memref<8x8x1024xf32, #tpu.memory_space<vmem>>, vector<1x8x1024xf32>
    %387 = vector.shape_cast %386 : vector<1x8x1024xf32> to vector<8x1024xf32>
    %388 = arith.truncf %360 : vector<8x256xf32> to vector<8x256xbf16>
    %cst_109 = arith.constant dense<0.000000e+00> : vector<8x1024xf32>
    %389 = tpu.matmul %388, %40, %cst_109 {dimension_numbers = #tpu.dot_dimension_numbers<[1], [0], [0], [1], [0, 0, 1, 1], [], []>} : vector<8x256xbf16>, vector<256x1024xbf16>, vector<8x1024xf32> -> vector<8x1024xf32>
    %390 = arith.addf %387, %389 : vector<8x1024xf32>
    %391 = vector.extract_strided_slice %390 {offsets = [0, 0], sizes = [8, 768], strides = [1, 1]} : vector<8x1024xf32> to vector<8x768xf32>
    %cst_110 = arith.constant 5.000000e-01 : f32
    %392 = vector.broadcast %cst_110 : f32 to vector<8x768xf32>
    %393 = arith.mulf %392, %391 : vector<8x768xf32>
    %394 = math.tanh %393 : vector<8x768xf32>
    %cst_111 = arith.constant 1.000000e+00 : f32
    %395 = vector.broadcast %cst_111 : f32 to vector<8x768xf32>
    %396 = arith.addf %394, %395 : vector<8x768xf32>
    %cst_112 = arith.constant 5.000000e-01 : f32
    %397 = vector.broadcast %cst_112 : f32 to vector<8x768xf32>
    %398 = arith.mulf %397, %396 : vector<8x768xf32>
    %399 = vector.extract_strided_slice %390 {offsets = [0, 768], sizes = [8, 256], strides = [1, 1]} : vector<8x1024xf32> to vector<8x256xf32>
    %400 = math.tanh %399 : vector<8x256xf32>
    %401 = vector.extract_strided_slice %398 {offsets = [0, 0], sizes = [8, 256], strides = [1, 1]} : vector<8x768xf32> to vector<8x256xf32>
    %402 = vector.extract_strided_slice %398 {offsets = [0, 256], sizes = [8, 256], strides = [1, 1]} : vector<8x768xf32> to vector<8x256xf32>
    %403 = vector.extract_strided_slice %398 {offsets = [0, 512], sizes = [8, 256], strides = [1, 1]} : vector<8x768xf32> to vector<8x256xf32>
    %404 = arith.mulf %402, %358 : vector<8x256xf32>
    %405 = arith.mulf %401, %400 : vector<8x256xf32>
    %406 = arith.addf %404, %405 : vector<8x256xf32>
    %407 = math.tanh %406 : vector<8x256xf32>
    %408 = arith.mulf %403, %407 : vector<8x256xf32>
    %409 = arith.truncf %408 : vector<8x256xf32> to vector<8x256xbf16>
    %cst_113 = arith.constant dense<0.000000e+00> : vector<8x1024xf32>
    %410 = tpu.matmul %409, %41, %cst_113 {dimension_numbers = #tpu.dot_dimension_numbers<[1], [0], [0], [1], [0, 0, 1, 1], [], []>} : vector<8x256xbf16>, vector<256x1024xbf16>, vector<8x1024xf32> -> vector<8x1024xf32>
    %411 = arith.addf %384, %410 : vector<8x1024xf32>
    %412 = arith.addf %411, %45 : vector<8x1024xf32>
    %413 = vector.extract_strided_slice %412 {offsets = [0, 0], sizes = [8, 768], strides = [1, 1]} : vector<8x1024xf32> to vector<8x768xf32>
    %cst_114 = arith.constant 5.000000e-01 : f32
    %414 = vector.broadcast %cst_114 : f32 to vector<8x768xf32>
    %415 = arith.mulf %414, %413 : vector<8x768xf32>
    %416 = math.tanh %415 : vector<8x768xf32>
    %cst_115 = arith.constant 1.000000e+00 : f32
    %417 = vector.broadcast %cst_115 : f32 to vector<8x768xf32>
    %418 = arith.addf %416, %417 : vector<8x768xf32>
    %cst_116 = arith.constant 5.000000e-01 : f32
    %419 = vector.broadcast %cst_116 : f32 to vector<8x768xf32>
    %420 = arith.mulf %419, %418 : vector<8x768xf32>
    %421 = vector.extract_strided_slice %412 {offsets = [0, 768], sizes = [8, 256], strides = [1, 1]} : vector<8x1024xf32> to vector<8x256xf32>
    %422 = math.tanh %421 : vector<8x256xf32>
    %423 = vector.extract_strided_slice %420 {offsets = [0, 0], sizes = [8, 256], strides = [1, 1]} : vector<8x768xf32> to vector<8x256xf32>
    %424 = vector.extract_strided_slice %420 {offsets = [0, 256], sizes = [8, 256], strides = [1, 1]} : vector<8x768xf32> to vector<8x256xf32>
    %425 = vector.extract_strided_slice %420 {offsets = [0, 512], sizes = [8, 256], strides = [1, 1]} : vector<8x768xf32> to vector<8x256xf32>
    %426 = arith.mulf %424, %380 : vector<8x256xf32>
    %427 = arith.mulf %423, %422 : vector<8x256xf32>
    %428 = arith.addf %426, %427 : vector<8x256xf32>
    %429 = math.tanh %428 : vector<8x256xf32>
    %430 = arith.mulf %425, %429 : vector<8x256xf32>
    %c8_i32 = arith.constant 8 : i32
    %431 = arith.truncf %430 : vector<8x256xf32> to vector<8x256xbf16>
    %c0_117 = arith.constant 0 : index
    %c0_118 = arith.constant 0 : index
    %432 = vector.load %arg6[%c0_117, %c0_118] : memref<256x128xbf16, #tpu.memory_space<vmem>>, vector<256x128xbf16>
    %cst_119 = arith.constant dense<0.000000e+00> : vector<8x128xf32>
    %433 = tpu.matmul %431, %432, %cst_119 {dimension_numbers = #tpu.dot_dimension_numbers<[1], [0], [0], [1], [0, 0, 1, 1], [], []>} : vector<8x256xbf16>, vector<256x128xbf16>, vector<8x128xf32> -> vector<8x128xf32>
    %c0_120 = arith.constant 0 : index
    %c0_121 = arith.constant 0 : index
    %434 = vector.load %arg7[%c0_120, %c0_121] : memref<1x128xf32, #tpu.memory_space<vmem>>, vector<1x128xf32>
    %435 = vector.broadcast %434 : vector<1x128xf32> to vector<8x128xf32>
    %436 = arith.addf %433, %435 : vector<8x128xf32>
    %c0_122 = arith.constant 0 : index
    %c0_123 = arith.constant 0 : index
    %437 = vector.load %arg8[%c0_122, %c0_123] : memref<8x128xf32, #tpu.memory_space<vmem>>, vector<8x128xf32>
    tpu.vector_store %arg8[%c0_122, %c0_123], %436 {strides = array<i32>} : memref<8x128xf32, #tpu.memory_space<vmem>>, vector<8x128xf32>,
    return
  }
}

</mosaic_0001>

<llo_original>
// kernel: tpu_custom_call.1
$region0: #{tpu_custom_call.1}
  #allocation0 [shape = 'u32[]', space=smem, size = 0x4, offset = 0x4, fixed_abs, tag = 'smem constant byte address 0x4 - core index']
  #allocation1 [shape = 'u32[144,128]{1,0:T(1,128)}', space=vmem, size = 0x12000, scoped, tag = 'internal scratch']
  #allocation2 [shape = 'f32[8,8,1024]{2,1,0:T(8,128)}', space=vmem, size = 0x40000, scoped, tag = 'scratch operand']
  %s0 = inlined_call_operand.vmem [shape: s32[64,1], index: 0, kind: input, shape index: {}]
  %s1 = inlined_call_operand.hbm [shape: f32[128,1024], index: 1, kind: input, shape index: {}]
  %s2 = inlined_call_operand.hbm [shape: bf16[256,1024], index: 2, kind: input, shape index: {}]
  %s3 = inlined_call_operand.hbm [shape: bf16[256,1024], index: 3, kind: input, shape index: {}]
  %s4 = inlined_call_operand.hbm [shape: bf16[256,1024], index: 4, kind: input, shape index: {}]
  %s5 = inlined_call_operand.vmem [shape: f32[1,1024], index: 5, kind: input, shape index: {}]
  %s6 = inlined_call_operand.hbm [shape: bf16[256,128], index: 6, kind: input, shape index: {}]
  %s7 = inlined_call_operand.vmem [shape: f32[1,128], index: 7, kind: input, shape index: {}]
  %s8 = inlined_call_operand.hbm [shape: f32[8,128], index: 8, kind: output, shape index: {}]
  %s9 = sld [smem:[#allocation0]]
  $region62: #{tpu_custom_call.1} parent=0
    _
  %s11 = ssub.s32 1, %s9
  %s12 = scalar_select 0, %s11, %s9
  $region1: #{tpu_custom_call.1} parent=0
    #allocation3 [shape = 'u8[524288]{0}', space=vmem, size = 0x80000, scoped, tag = 'input window, operand 1, single buffered']
    #allocation4 [shape = 's32[1]{0}', space=sflag, size = 0x4, scoped, tag = 'scoped memory for tpu_custom_call.1']
    #allocation5 [shape = 's32[1]{0}', space=sflag, size = 0x4, scoped, tag = 'scoped memory for tpu_custom_call.1']
    #allocation6 [shape = 'u8[524288]{0}', space=vmem, size = 0x80000, scoped, tag = 'input window, operand 2, single buffered']
    #allocation7 [shape = 's32[1]{0}', space=sflag, size = 0x4, scoped, tag = 'scoped memory for tpu_custom_call.1']
    #allocation8 [shape = 'u8[524288]{0}', space=vmem, size = 0x80000, scoped, tag = 'input window, operand 3, single buffered']
    #allocation9 [shape = 'u8[524288]{0}', space=vmem, size = 0x80000, scoped, tag = 'input window, operand 4, single buffered']
    #allocation10 [shape = 's32[1]{0}', space=sflag, size = 0x4, scoped, tag = 'scoped memory for tpu_custom_call.1']
    #allocation11 [shape = 'u8[65536]{0}', space=vmem, size = 0x10000, scoped, tag = 'input window, operand 6, single buffered']
    #allocation12 [shape = 'u8[4096]{0}', space=vmem, size = 0x1000, scoped, tag = 'output window, operand 0, single buffered']
    %13 = vsyncpa [#allocation4], 0
    %14 = vsyncpa [#allocation7], 0
    %15 = vsyncpa [#allocation10], 0
    %16 = vsyncpa [#allocation5], 0
    // Predicated region
    $region2: #{tpu_custom_call.1} parent=1 // pred_check
      _
    $region3: #{tpu_custom_call.1} parent=1 // pred_check_branch
      %18 = sbr.rel (0) target = $region5
    $region4: #{tpu_custom_call.1} parent=1 // pred_region
      _
    $region5: #{tpu_custom_call.1} parent=1 // pred_fallthru
      _
    // Predicated region
    $region6: #{tpu_custom_call.1} parent=1 // pred_check
      _
    $region7: #{tpu_custom_call.1} parent=1 // pred_check_branch
      %20 = sbr.rel (0) target = $region9
    $region8: #{tpu_custom_call.1} parent=1 // pred_region
      %s22 = ssub.s32 16384, 16384
      %23 = vsyncadd [#allocation4], %s22
      %s24 = sshll.u32 [#allocation3], 4
      %s25 = int_to_ptr.vmem [resolvable:$true] %s24
      %30 = dma.hbm_to_vmem [thread:$0]  %s1, 16384, %s25, [#allocation4], 1024, 1024, 64
    $region9: #{tpu_custom_call.1} parent=1 // pred_fallthru
      _
    // Predicated region
    $region10: #{tpu_custom_call.1} parent=1 // pred_check
      _
    $region11: #{tpu_custom_call.1} parent=1 // pred_check_branch
      %32 = sbr.rel (0) target = $region13
    $region12: #{tpu_custom_call.1} parent=1 // pred_region
      %s34 = ssub.s32 16384, 16384
      %35 = vsyncadd [#allocation7], %s34
      %s36 = sshll.u32 [#allocation6], 4
      %s37 = int_to_ptr.vmem [resolvable:$true] %s36
      %42 = dma.hbm_to_vmem [thread:$0]  %s2, 16384, %s37, [#allocation7], 512, 512, 32
    $region13: #{tpu_custom_call.1} parent=1 // pred_fallthru
      _
    // Predicated region
    $region14: #{tpu_custom_call.1} parent=1 // pred_check
      _
    $region15: #{tpu_custom_call.1} parent=1 // pred_check_branch
      %44 = sbr.rel (0) target = $region17
    $region16: #{tpu_custom_call.1} parent=1 // pred_region
      %s46 = ssub.s32 16384, 16384
      %47 = vsyncadd [#allocation7], %s46
      %s48 = sshll.u32 [#allocation8], 4
      %s49 = int_to_ptr.vmem [resolvable:$true] %s48
      %54 = dma.hbm_to_vmem [thread:$0]  %s3, 16384, %s49, [#allocation7], 512, 512, 32
    $region17: #{tpu_custom_call.1} parent=1 // pred_fallthru
      _
    // Predicated region
    $region18: #{tpu_custom_call.1} parent=1 // pred_check
      _
    $region19: #{tpu_custom_call.1} parent=1 // pred_check_branch
      %56 = sbr.rel (0) target = $region21
    $region20: #{tpu_custom_call.1} parent=1 // pred_region
      %s58 = ssub.s32 16384, 16384
      %59 = vsyncadd [#allocation10], %s58
      %s60 = sshll.u32 [#allocation9], 4
      %s61 = int_to_ptr.vmem [resolvable:$true] %s60
      %66 = dma.hbm_to_vmem [thread:$0]  %s4, 16384, %s61, [#allocation10], 512, 512, 32
    $region21: #{tpu_custom_call.1} parent=1 // pred_fallthru
      _
    // Predicated region
    $region22: #{tpu_custom_call.1} parent=1 // pred_check
      _
    $region23: #{tpu_custom_call.1} parent=1 // pred_check_branch
      %68 = sbr.rel (0) target = $region25
    $region24: #{tpu_custom_call.1} parent=1 // pred_region
      _
    $region25: #{tpu_custom_call.1} parent=1 // pred_fallthru
      _
    // Predicated region
    $region26: #{tpu_custom_call.1} parent=1 // pred_check
      _
    $region27: #{tpu_custom_call.1} parent=1 // pred_check_branch
      %70 = sbr.rel (0) target = $region29
    $region28: #{tpu_custom_call.1} parent=1 // pred_region
      %s72 = ssub.s32 2048, 2048
      %73 = vsyncadd [#allocation10], %s72
      %s74 = sshll.u32 [#allocation11], 4
      %s75 = int_to_ptr.vmem [resolvable:$true] %s74
      %80 = dma.hbm_to_vmem [thread:$0]  %s6, 2048, %s75, [#allocation10], 64, 64, 4
    $region29: #{tpu_custom_call.1} parent=1 // pred_fallthru
      _
    // Predicated region
    $region30: #{tpu_custom_call.1} parent=1 // pred_check
      _
    $region31: #{tpu_custom_call.1} parent=1 // pred_check_branch
      %82 = sbr.rel (0) target = $region33
    $region32: #{tpu_custom_call.1} parent=1 // pred_region
      _
    $region33: #{tpu_custom_call.1} parent=1 // pred_fallthru
      _
    // Predicated region
    $region34: #{tpu_custom_call.1} parent=1 // pred_check
      _
    $region35: #{tpu_custom_call.1} parent=1 // pred_check_branch
      %84 = sbr.rel (0) target = $region37
    $region36: #{tpu_custom_call.1} parent=1 // pred_region
      %85 = dma.done [#allocation4], 16384
    $region37: #{tpu_custom_call.1} parent=1 // pred_fallthru
      _
    // Predicated region
    $region38: #{tpu_custom_call.1} parent=1 // pred_check
      _
    $region39: #{tpu_custom_call.1} parent=1 // pred_check_branch
      %87 = sbr.rel (0) target = $region41
    $region40: #{tpu_custom_call.1} parent=1 // pred_region
      %88 = dma.done [#allocation7], 16384
    $region41: #{tpu_custom_call.1} parent=1 // pred_fallthru
      _
    // Predicated region
    $region42: #{tpu_custom_call.1} parent=1 // pred_check
      _
    $region43: #{tpu_custom_call.1} parent=1 // pred_check_branch
      %90 = sbr.rel (0) target = $region45
    $region44: #{tpu_custom_call.1} parent=1 // pred_region
      %91 = dma.done [#allocation7], 16384
    $region45: #{tpu_custom_call.1} parent=1 // pred_fallthru
      _
    // Predicated region
    $region46: #{tpu_custom_call.1} parent=1 // pred_check
      _
    $region47: #{tpu_custom_call.1} parent=1 // pred_check_branch
      %93 = sbr.rel (0) target = $region49
    $region48: #{tpu_custom_call.1} parent=1 // pred_region
      %94 = dma.done [#allocation10], 16384
    $region49: #{tpu_custom_call.1} parent=1 // pred_fallthru
      _
    // Predicated region
    $region50: #{tpu_custom_call.1} parent=1 // pred_check
      _
    $region51: #{tpu_custom_call.1} parent=1 // pred_check_branch
      %96 = sbr.rel (0) target = $region53
    $region52: #{tpu_custom_call.1} parent=1 // pred_region
      %97 = dma.done [#allocation10], 2048
    $region53: #{tpu_custom_call.1} parent=1 // pred_fallthru
      _
    %v99 = vld [vmem:[%s0] sm:$0xff]
    %v100 = vld [vmem:[%s0 + $0x8] sm:$0xff]
    %v101 = vld [vmem:[%s0 + $0x10] sm:$0xff]
    %v102 = vld [vmem:[%s0 + $0x18] sm:$0xff]
    %v103 = vld [vmem:[%s0 + $0x20] sm:$0xff]
    %v104 = vld [vmem:[%s0 + $0x28] sm:$0xff]
    %v105 = vld [vmem:[%s0 + $0x30] sm:$0xff]
    %v106 = vld [vmem:[%s0 + $0x38] sm:$0xff]
    %v107 = vlaneseq
    %v108 = vand.u32 %v107, 127
    %109 = vset.pattern.permute.xlu0 0
    %110 = vperm.xlu0 %109, %v99
    %v111 = vpop.permute.xlu0 %110
    %112 = vset.pattern.permute.xlu0 0
    %113 = vperm.xlu0 %112, %v100
    %v114 = vpop.permute.xlu0 %113
    %115 = vset.pattern.permute.xlu0 0
    %116 = vperm.xlu0 %115, %v101
    %v117 = vpop.permute.xlu0 %116
    %118 = vset.pattern.permute.xlu0 0
    %119 = vperm.xlu0 %118, %v102
    %v120 = vpop.permute.xlu0 %119
    %121 = vset.pattern.permute.xlu0 0
    %122 = vperm.xlu0 %121, %v103
    %v123 = vpop.permute.xlu0 %122
    %124 = vset.pattern.permute.xlu0 0
    %125 = vperm.xlu0 %124, %v104
    %v126 = vpop.permute.xlu0 %125
    %127 = vset.pattern.permute.xlu0 0
    %128 = vperm.xlu0 %127, %v105
    %v129 = vpop.permute.xlu0 %128
    %130 = vset.pattern.permute.xlu0 0
    %131 = vperm.xlu0 %130, %v106
    %v132 = vpop.permute.xlu0 %131
    %vm133 = vcmp.eq.s32.totalorder %v111, %v108
    %vm134 = vcmp.eq.s32.totalorder %v114, %v108
    %vm135 = vcmp.eq.s32.totalorder %v117, %v108
    %vm136 = vcmp.eq.s32.totalorder %v120, %v108
    %vm137 = vcmp.eq.s32.totalorder %v123, %v108
    %vm138 = vcmp.eq.s32.totalorder %v126, %v108
    %vm139 = vcmp.eq.s32.totalorder %v129, %v108
    %vm140 = vcmp.eq.s32.totalorder %v132, %v108
    %v141 = vsel %vm133, 1, 0
    %v142 = vsel %vm134, 1, 0
    %v143 = vsel %vm135, 1, 0
    %v144 = vsel %vm136, 1, 0
    %v145 = vsel %vm137, 1, 0
    %v146 = vsel %vm138, 1, 0
    %v147 = vsel %vm139, 1, 0
    %v148 = vsel %vm140, 1, 0
    %v149 = vcvt.s32.f32 %v141
    %v150 = vcvt.s32.f32 %v142
    %v151 = vcvt.s32.f32 %v143
    %v152 = vcvt.s32.f32 %v144
    %v153 = vcvt.s32.f32 %v145
    %v154 = vcvt.s32.f32 %v146
    %v155 = vcvt.s32.f32 %v147
    %v156 = vcvt.s32.f32 %v148
    %v157 = vld [vmem:[#allocation3] sm:$0xff]
    %v158 = vld [vmem:[#allocation3 + $0x8] sm:$0xff]
    %v159 = vld [vmem:[#allocation3 + $0x10] sm:$0xff]
    %v160 = vld [vmem:[#allocation3 + $0x18] sm:$0xff]
    %v161 = vld [vmem:[#allocation3 + $0x20] sm:$0xff]
    %v162 = vld [vmem:[#allocation3 + $0x28] sm:$0xff]
    %v163 = vld [vmem:[#allocation3 + $0x30] sm:$0xff]
    %v164 = vld [vmem:[#allocation3 + $0x38] sm:$0xff]
    %v165 = vld [vmem:[#allocation3 + $0x40] sm:$0xff]
    %v166 = vld [vmem:[#allocation3 + $0x48] sm:$0xff]
    %v167 = vld [vmem:[#allocation3 + $0x50] sm:$0xff]
    %v168 = vld [vmem:[#allocation3 + $0x58] sm:$0xff]
    %v169 = vld [vmem:[#allocation3 + $0x60] sm:$0xff]
    %v170 = vld [vmem:[#allocation3 + $0x68] sm:$0xff]
    %v171 = vld [vmem:[#allocation3 + $0x70] sm:$0xff]
    %v172 = vld [vmem:[#allocation3 + $0x78] sm:$0xff]
    %v173 = vld [vmem:[#allocation3 + $0x80] sm:$0xff]
    %v174 = vld [vmem:[#allocation3 + $0x88] sm:$0xff]
    %v175 = vld [vmem:[#allocation3 + $0x90] sm:$0xff]
    %v176 = vld [vmem:[#allocation3 + $0x98] sm:$0xff]
    %v177 = vld [vmem:[#allocation3 + $0xa0] sm:$0xff]
    %v178 = vld [vmem:[#allocation3 + $0xa8] sm:$0xff]
    %v179 = vld [vmem:[#allocation3 + $0xb0] sm:$0xff]
    %v180 = vld [vmem:[#allocation3 + $0xb8] sm:$0xff]
    %v181 = vld [vmem:[#allocation3 + $0xc0] sm:$0xff]
    %v182 = vld [vmem:[#allocation3 + $0xc8] sm:$0xff]
    %v183 = vld [vmem:[#allocation3 + $0xd0] sm:$0xff]
    %v184 = vld [vmem:[#allocation3 + $0xd8] sm:$0xff]
    %v185 = vld [vmem:[#allocation3 + $0xe0] sm:$0xff]
    %v186 = vld [vmem:[#allocation3 + $0xe8] sm:$0xff]
    %v187 = vld [vmem:[#allocation3 + $0xf0] sm:$0xff]
    %v188 = vld [vmem:[#allocation3 + $0xf8] sm:$0xff]
    %v189 = vld [vmem:[#allocation3 + $0x100] sm:$0xff]
    %v190 = vld [vmem:[#allocation3 + $0x108] sm:$0xff]
    %v191 = vld [vmem:[#allocation3 + $0x110] sm:$0xff]
    %v192 = vld [vmem:[#allocation3 + $0x118] sm:$0xff]
    %v193 = vld [vmem:[#allocation3 + $0x120] sm:$0xff]
    %v194 = vld [vmem:[#allocation3 + $0x128] sm:$0xff]
    %v195 = vld [vmem:[#allocation3 + $0x130] sm:$0xff]
    %v196 = vld [vmem:[#allocation3 + $0x138] sm:$0xff]
    %v197 = vld [vmem:[#allocation3 + $0x140] sm:$0xff]
    %v198 = vld [vmem:[#allocation3 + $0x148] sm:$0xff]
    %v199 = vld [vmem:[#allocation3 + $0x150] sm:$0xff]
    %v200 = vld [vmem:[#allocation3 + $0x158] sm:$0xff]
    %v201 = vld [vmem:[#allocation3 + $0x160] sm:$0xff]
    %v202 = vld [vmem:[#allocation3 + $0x168] sm:$0xff]
    %v203 = vld [vmem:[#allocation3 + $0x170] sm:$0xff]
    %v204 = vld [vmem:[#allocation3 + $0x178] sm:$0xff]
    %v205 = vld [vmem:[#allocation3 + $0x180] sm:$0xff]
    %v206 = vld [vmem:[#allocation3 + $0x188] sm:$0xff]
    %v207 = vld [vmem:[#allocation3 + $0x190] sm:$0xff]
    %v208 = vld [vmem:[#allocation3 + $0x198] sm:$0xff]
    %v209 = vld [vmem:[#allocation3 + $0x1a0] sm:$0xff]
    %v210 = vld [vmem:[#allocation3 + $0x1a8] sm:$0xff]
    %v211 = vld [vmem:[#allocation3 + $0x1b0] sm:$0xff]
    %v212 = vld [vmem:[#allocation3 + $0x1b8] sm:$0xff]
    %v213 = vld [vmem:[#allocation3 + $0x1c0] sm:$0xff]
    %v214 = vld [vmem:[#allocation3 + $0x1c8] sm:$0xff]
    %v215 = vld [vmem:[#allocation3 + $0x1d0] sm:$0xff]
    %v216 = vld [vmem:[#allocation3 + $0x1d8] sm:$0xff]
    %v217 = vld [vmem:[#allocation3 + $0x1e0] sm:$0xff]
    %v218 = vld [vmem:[#allocation3 + $0x1e8] sm:$0xff]
    %v219 = vld [vmem:[#allocation3 + $0x1f0] sm:$0xff]
    %v220 = vld [vmem:[#allocation3 + $0x1f8] sm:$0xff]
    %v221 = vld [vmem:[#allocation3 + $0x200] sm:$0xff]
    %v222 = vld [vmem:[#allocation3 + $0x208] sm:$0xff]
    %v223 = vld [vmem:[#allocation3 + $0x210] sm:$0xff]
    %v224 = vld [vmem:[#allocation3 + $0x218] sm:$0xff]
    %v225 = vld [vmem:[#allocation3 + $0x220] sm:$0xff]
    %v226 = vld [vmem:[#allocation3 + $0x228] sm:$0xff]
    %v227 = vld [vmem:[#allocation3 + $0x230] sm:$0xff]
    %v228 = vld [vmem:[#allocation3 + $0x238] sm:$0xff]
    %v229 = vld [vmem:[#allocation3 + $0x240] sm:$0xff]
    %v230 = vld [vmem:[#allocation3 + $0x248] sm:$0xff]
    %v231 = vld [vmem:[#allocation3 + $0x250] sm:$0xff]
    %v232 = vld [vmem:[#allocation3 + $0x258] sm:$0xff]
    %v233 = vld [vmem:[#allocation3 + $0x260] sm:$0xff]
    %v234 = vld [vmem:[#allocation3 + $0x268] sm:$0xff]
    %v235 = vld [vmem:[#allocation3 + $0x270] sm:$0xff]
    %v236 = vld [vmem:[#allocation3 + $0x278] sm:$0xff]
    %v237 = vld [vmem:[#allocation3 + $0x280] sm:$0xff]
    %v238 = vld [vmem:[#allocation3 + $0x288] sm:$0xff]
    %v239 = vld [vmem:[#allocation3 + $0x290] sm:$0xff]
    %v240 = vld [vmem:[#allocation3 + $0x298] sm:$0xff]
    %v241 = vld [vmem:[#allocation3 + $0x2a0] sm:$0xff]
    %v242 = vld [vmem:[#allocation3 + $0x2a8] sm:$0xff]
    %v243 = vld [vmem:[#allocation3 + $0x2b0] sm:$0xff]
    %v244 = vld [vmem:[#allocation3 + $0x2b8] sm:$0xff]
    %v245 = vld [vmem:[#allocation3 + $0x2c0] sm:$0xff]
    %v246 = vld [vmem:[#allocation3 + $0x2c8] sm:$0xff]
    %v247 = vld [vmem:[#allocation3 + $0x2d0] sm:$0xff]
    %v248 = vld [vmem:[#allocation3 + $0x2d8] sm:$0xff]
    %v249 = vld [vmem:[#allocation3 + $0x2e0] sm:$0xff]
    %v250 = vld [vmem:[#allocation3 + $0x2e8] sm:$0xff]
    %v251 = vld [vmem:[#allocation3 + $0x2f0] sm:$0xff]
    %v252 = vld [vmem:[#allocation3 + $0x2f8] sm:$0xff]
    %v253 = vld [vmem:[#allocation3 + $0x300] sm:$0xff]
    %v254 = vld [vmem:[#allocation3 + $0x308] sm:$0xff]
    %v255 = vld [vmem:[#allocation3 + $0x310] sm:$0xff]
    %v256 = vld [vmem:[#allocation3 + $0x318] sm:$0xff]
    %v257 = vld [vmem:[#allocation3 + $0x320] sm:$0xff]
    %v258 = vld [vmem:[#allocation3 + $0x328] sm:$0xff]
    %v259 = vld [vmem:[#allocation3 + $0x330] sm:$0xff]
    %v260 = vld [vmem:[#allocation3 + $0x338] sm:$0xff]
    %v261 = vld [vmem:[#allocation3 + $0x340] sm:$0xff]
    %v262 = vld [vmem:[#allocation3 + $0x348] sm:$0xff]
    %v263 = vld [vmem:[#allocation3 + $0x350] sm:$0xff]
    %v264 = vld [vmem:[#allocation3 + $0x358] sm:$0xff]
    %v265 = vld [vmem:[#allocation3 + $0x360] sm:$0xff]
    %v266 = vld [vmem:[#allocation3 + $0x368] sm:$0xff]
    %v267 = vld [vmem:[#allocation3 + $0x370] sm:$0xff]
    %v268 = vld [vmem:[#allocation3 + $0x378] sm:$0xff]
    %v269 = vld [vmem:[#allocation3 + $0x380] sm:$0xff]
    %v270 = vld [vmem:[#allocation3 + $0x388] sm:$0xff]
    %v271 = vld [vmem:[#allocation3 + $0x390] sm:$0xff]
    %v272 = vld [vmem:[#allocation3 + $0x398] sm:$0xff]
    %v273 = vld [vmem:[#allocation3 + $0x3a0] sm:$0xff]
    %v274 = vld [vmem:[#allocation3 + $0x3a8] sm:$0xff]
    %v275 = vld [vmem:[#allocation3 + $0x3b0] sm:$0xff]
    %v276 = vld [vmem:[#allocation3 + $0x3b8] sm:$0xff]
    %v277 = vld [vmem:[#allocation3 + $0x3c0] sm:$0xff]
    %v278 = vld [vmem:[#allocation3 + $0x3c8] sm:$0xff]
    %v279 = vld [vmem:[#allocation3 + $0x3d0] sm:$0xff]
    %v280 = vld [vmem:[#allocation3 + $0x3d8] sm:$0xff]
    %v281 = vld [vmem:[#allocation3 + $0x3e0] sm:$0xff]
    %v282 = vld [vmem:[#allocation3 + $0x3e8] sm:$0xff]
    %v283 = vld [vmem:[#allocation3 + $0x3f0] sm:$0xff]
    %v284 = vld [vmem:[#allocation3 + $0x3f8] sm:$0xff]
    %285 = vmatprep.subr.mxu0 %v158
    %286 = vmatpush1.msra.mxu0 %v157
    %287 = vmatprep.subr.mxu0 %v166
    %288 = vmatpush1.msra.mxu0 %v165
    %289 = vmatprep.subr.mxu0 %v174
    %290 = vmatpush1.msra.mxu0 %v173
    %291 = vmatprep.subr.mxu0 %v182
    %292 = vmatpush1.msra.mxu0 %v181
    %293 = vmatprep.subr.mxu0 %v190
    %294 = vmatpush1.msra.mxu0 %v189
    %295 = vmatprep.subr.mxu0 %v198
    %296 = vmatpush1.msra.mxu0 %v197
    %297 = vmatprep.subr.mxu0 %v206
    %298 = vmatpush1.msra.mxu0 %v205
    %299 = vmatprep.subr.mxu0 %v214
    %300 = vmatpush1.msra.mxu0 %v213
    %301 = vmatprep.subr.mxu0 %v222
    %302 = vmatpush1.msra.mxu0 %v221
    %303 = vmatprep.subr.mxu0 %v230
    %304 = vmatpush1.msra.mxu0 %v229
    %305 = vmatprep.subr.mxu0 %v238
    %306 = vmatpush1.msra.mxu0 %v237
    %307 = vmatprep.subr.mxu0 %v246
    %308 = vmatpush1.msra.mxu0 %v245
    %309 = vmatprep.subr.mxu0 %v254
    %310 = vmatpush1.msra.mxu0 %v253
    %311 = vmatprep.subr.mxu0 %v262
    %312 = vmatpush1.msra.mxu0 %v261
    %313 = vmatprep.subr.mxu0 %v270
    %314 = vmatpush1.msra.mxu0 %v269
    %315 = vmatprep.subr.mxu0 %v278
    %316 = vmatpush1.msra.mxu0 %v277
    %317 = vmatprep.subr.mxu0 0.0
    %318 = vmatpush1.msra.mxu0 0.0
    %319 = vmatprep.subr.mxu0 0.0
    %320 = vmatpush1.msra.mxu0 0.0
    %321 = vmatprep.subr.mxu0 0.0
    %322 = vmatpush1.msra.mxu0 0.0
    %323 = vmatprep.subr.mxu0 0.0
    %324 = vmatpush1.msra.mxu0 0.0
    %325 = vmatprep.subr.mxu0 0.0
    %326 = vmatpush1.msra.mxu0 0.0
    %327 = vmatprep.subr.mxu0 0.0
    %328 = vmatpush1.msra.mxu0 0.0
    %329 = vmatprep.subr.mxu0 0.0
    %330 = vmatpush1.msra.mxu0 0.0
    %331 = vmatprep.subr.mxu0 0.0
    %332 = vmatpush1.msra.mxu0 0.0
    %333 = vmatprep.subr.mxu0 0.0
    %334 = vmatpush1.msra.mxu0 0.0
    %335 = vmatprep.subr.mxu0 0.0
    %336 = vmatpush1.msra.mxu0 0.0
    %337 = vmatprep.subr.mxu0 0.0
    %338 = vmatpush1.msra.mxu0 0.0
    %339 = vmatprep.subr.mxu0 0.0
    %340 = vmatpush1.msra.mxu0 0.0
    %341 = vmatprep.subr.mxu0 0.0
    %342 = vmatpush1.msra.mxu0 0.0
    %343 = vmatprep.subr.mxu0 0.0
    %344 = vmatpush1.msra.mxu0 0.0
    %345 = vmatprep.subr.mxu0 0.0
    %346 = vmatpush1.msra.mxu0 0.0
    %347 = vmatprep.subr.mxu0 0.0
    %348 = vmatpush1.msra.mxu0 0.0
    %349 = vmatprep.mubr.f32.mxu0 0.0
    %350 = vmatmul.mubr.f32.gmra.mrb[0].mxu0 %v149
    %v351 = vpop.f32.mrb[0].mxu0
    %v352 = vadd.f32 0.0, %v351
    %v353 = vpop.f32.mrb[0].mxu0
    %v354 = vadd.f32 0.0, %v353
    %355 = vmatprep.mubr.f32.mxu0 0.0
    %356 = vmatmul.mubr.f32.gmra.mrb[0].mxu0 %v150
    %v357 = vpop.f32.mrb[0].mxu0
    %v358 = vadd.f32 0.0, %v357
    %v359 = vpop.f32.mrb[0].mxu0
    %v360 = vadd.f32 0.0, %v359
    %361 = vmatprep.mubr.f32.mxu0 0.0
    %362 = vmatmul.mubr.f32.gmra.mrb[0].mxu0 %v151
    %v363 = vpop.f32.mrb[0].mxu0
    %v364 = vadd.f32 0.0, %v363
    %v365 = vpop.f32.mrb[0].mxu0
    %v366 = vadd.f32 0.0, %v365
    %367 = vmatprep.mubr.f32.mxu0 0.0
    %368 = vmatmul.mubr.f32.gmra.mrb[0].mxu0 %v152
    %v369 = vpop.f32.mrb[0].mxu0
    %v370 = vadd.f32 0.0, %v369
    %v371 = vpop.f32.mrb[0].mxu0
    %v372 = vadd.f32 0.0, %v371
    %373 = vmatprep.mubr.f32.mxu0 0.0
    %374 = vmatmul.mubr.f32.gmra.mrb[0].mxu0 %v153
    %v375 = vpop.f32.mrb[0].mxu0
    %v376 = vadd.f32 0.0, %v375
    %v377 = vpop.f32.mrb[0].mxu0
    %v378 = vadd.f32 0.0, %v377
    %379 = vmatprep.mubr.f32.mxu0 0.0
    %380 = vmatmul.mubr.f32.gmra.mrb[0].mxu0 %v154
    %v381 = vpop.f32.mrb[0].mxu0
    %v382 = vadd.f32 0.0, %v381
    %v383 = vpop.f32.mrb[0].mxu0
    %v384 = vadd.f32 0.0, %v383
    %385 = vmatprep.mubr.f32.mxu0 0.0
    %386 = vmatmul.mubr.f32.gmra.mrb[0].mxu0 %v155
    %v387 = vpop.f32.mrb[0].mxu0
    %v388 = vadd.f32 0.0, %v387
    %v389 = vpop.f32.mrb[0].mxu0
    %v390 = vadd.f32 0.0, %v389
    %391 = vmatprep.mubr.f32.mxu0 0.0
    %392 = vmatmul.mubr.f32.gmra.mrb[0].mxu0 %v156
    %v393 = vpop.f32.mrb[0].mxu0
    %v394 = vadd.f32 0.0, %v393
    %v395 = vpop.f32.mrb[0].mxu0
    %v396 = vadd.f32 0.0, %v395
    %397 = vdwg.mxu0
    %398 = vmatprep.subr.mxu0 %v160
    %399 = vmatpush1.msra.mxu0 %v159
    %400 = vmatprep.subr.mxu0 %v168
    %401 = vmatpush1.msra.mxu0 %v167
    %402 = vmatprep.subr.mxu0 %v176
    %403 = vmatpush1.msra.mxu0 %v175
    %404 = vmatprep.subr.mxu0 %v184
    %405 = vmatpush1.msra.mxu0 %v183
    %406 = vmatprep.subr.mxu0 %v192
    %407 = vmatpush1.msra.mxu0 %v191
    %408 = vmatprep.subr.mxu0 %v200
    %409 = vmatpush1.msra.mxu0 %v199
    %410 = vmatprep.subr.mxu0 %v208
    %411 = vmatpush1.msra.mxu0 %v207
    %412 = vmatprep.subr.mxu0 %v216
    %413 = vmatpush1.msra.mxu0 %v215
    %414 = vmatprep.subr.mxu0 %v224
    %415 = vmatpush1.msra.mxu0 %v223
    %416 = vmatprep.subr.mxu0 %v232
    %417 = vmatpush1.msra.mxu0 %v231
    %418 = vmatprep.subr.mxu0 %v240
    %419 = vmatpush1.msra.mxu0 %v239
    %420 = vmatprep.subr.mxu0 %v248
    %421 = vmatpush1.msra.mxu0 %v247
    %422 = vmatprep.subr.mxu0 %v256
    %423 = vmatpush1.msra.mxu0 %v255
    %424 = vmatprep.subr.mxu0 %v264
    %425 = vmatpush1.msra.mxu0 %v263
    %426 = vmatprep.subr.mxu0 %v272
    %427 = vmatpush1.msra.mxu0 %v271
    %428 = vmatprep.subr.mxu0 %v280
    %429 = vmatpush1.msra.mxu0 %v279
    %430 = vmatprep.subr.mxu0 0.0
    %431 = vmatpush1.msra.mxu0 0.0
    %432 = vmatprep.subr.mxu0 0.0
    %433 = vmatpush1.msra.mxu0 0.0
    %434 = vmatprep.subr.mxu0 0.0
    %435 = vmatpush1.msra.mxu0 0.0
    %436 = vmatprep.subr.mxu0 0.0
    %437 = vmatpush1.msra.mxu0 0.0
    %438 = vmatprep.subr.mxu0 0.0
    %439 = vmatpush1.msra.mxu0 0.0
    %440 = vmatprep.subr.mxu0 0.0
    %441 = vmatpush1.msra.mxu0 0.0
    %442 = vmatprep.subr.mxu0 0.0
    %443 = vmatpush1.msra.mxu0 0.0
    %444 = vmatprep.subr.mxu0 0.0
    %445 = vmatpush1.msra.mxu0 0.0
    %446 = vmatprep.subr.mxu0 0.0
    %447 = vmatpush1.msra.mxu0 0.0
    %448 = vmatprep.subr.mxu0 0.0
    %449 = vmatpush1.msra.mxu0 0.0
    %450 = vmatprep.subr.mxu0 0.0
    %451 = vmatpush1.msra.mxu0 0.0
    %452 = vmatprep.subr.mxu0 0.0
    %453 = vmatpush1.msra.mxu0 0.0
    %454 = vmatprep.subr.mxu0 0.0
    %455 = vmatpush1.msra.mxu0 0.0
    %456 = vmatprep.subr.mxu0 0.0
    %457 = vmatpush1.msra.mxu0 0.0
    %458 = vmatprep.subr.mxu0 0.0
    %459 = vmatpush1.msra.mxu0 0.0
    %460 = vmatprep.subr.mxu0 0.0
    %461 = vmatpush1.msra.mxu0 0.0
    %462 = vmatprep.mubr.f32.mxu0 0.0
    %463 = vmatmul.mubr.f32.gmra.mrb[0].mxu0 %v149
    %v464 = vpop.f32.mrb[0].mxu0
    %v465 = vadd.f32 0.0, %v464
    %v466 = vpop.f32.mrb[0].mxu0
    %v467 = vadd.f32 0.0, %v466
    %468 = vmatprep.mubr.f32.mxu0 0.0
    %469 = vmatmul.mubr.f32.gmra.mrb[0].mxu0 %v150
    %v470 = vpop.f32.mrb[0].mxu0
    %v471 = vadd.f32 0.0, %v470
    %v472 = vpop.f32.mrb[0].mxu0
    %v473 = vadd.f32 0.0, %v472
    %474 = vmatprep.mubr.f32.mxu0 0.0
    %475 = vmatmul.mubr.f32.gmra.mrb[0].mxu0 %v151
    %v476 = vpop.f32.mrb[0].mxu0
    %v477 = vadd.f32 0.0, %v476
    %v478 = vpop.f32.mrb[0].mxu0
    %v479 = vadd.f32 0.0, %v478
    %480 = vmatprep.mubr.f32.mxu0 0.0
    %481 = vmatmul.mubr.f32.gmra.mrb[0].mxu0 %v152
    %v482 = vpop.f32.mrb[0].mxu0
    %v483 = vadd.f32 0.0, %v482
    %v484 = vpop.f32.mrb[0].mxu0
    %v485 = vadd.f32 0.0, %v484
    %486 = vmatprep.mubr.f32.mxu0 0.0
    %487 = vmatmul.mubr.f32.gmra.mrb[0].mxu0 %v153
    %v488 = vpop.f32.mrb[0].mxu0
    %v489 = vadd.f32 0.0, %v488
    %v490 = vpop.f32.mrb[0].mxu0
    %v491 = vadd.f32 0.0, %v490
    %492 = vmatprep.mubr.f32.mxu0 0.0
    %493 = vmatmul.mubr.f32.gmra.mrb[0].mxu0 %v154
    %v494 = vpop.f32.mrb[0].mxu0
    %v495 = vadd.f32 0.0, %v494
    %v496 = vpop.f32.mrb[0].mxu0
    %v497 = vadd.f32 0.0, %v496
    %498 = vmatprep.mubr.f32.mxu0 0.0
    %499 = vmatmul.mubr.f32.gmra.mrb[0].mxu0 %v155
    %v500 = vpop.f32.mrb[0].mxu0
    %v501 = vadd.f32 0.0, %v500
    %v502 = vpop.f32.mrb[0].mxu0
    %v503 = vadd.f32 0.0, %v502
    %504 = vmatprep.mubr.f32.mxu0 0.0
    %505 = vmatmul.mubr.f32.gmra.mrb[0].mxu0 %v156
    %v506 = vpop.f32.mrb[0].mxu0
    %v507 = vadd.f32 0.0, %v506
    %v508 = vpop.f32.mrb[0].mxu0
    %v509 = vadd.f32 0.0, %v508
    %510 = vdwg.mxu0
    %511 = vmatprep.subr.mxu0 %v162
    %512 = vmatpush1.msra.mxu0 %v161
    %513 = vmatprep.subr.mxu0 %v170
    %514 = vmatpush1.msra.mxu0 %v169
    %515 = vmatprep.subr.mxu0 %v178
    %516 = vmatpush1.msra.mxu0 %v177
    %517 = vmatprep.subr.mxu0 %v186
    %518 = vmatpush1.msra.mxu0 %v185
    %519 = vmatprep.subr.mxu0 %v194
    %520 = vmatpush1.msra.mxu0 %v193
    %521 = vmatprep.subr.mxu0 %v202
    %522 = vmatpush1.msra.mxu0 %v201
    %523 = vmatprep.subr.mxu0 %v210
    %524 = vmatpush1.msra.mxu0 %v209
    %525 = vmatprep.subr.mxu0 %v218
    %526 = vmatpush1.msra.mxu0 %v217
    %527 = vmatprep.subr.mxu0 %v226
    %528 = vmatpush1.msra.mxu0 %v225
    %529 = vmatprep.subr.mxu0 %v234
    %530 = vmatpush1.msra.mxu0 %v233
    %531 = vmatprep.subr.mxu0 %v242
    %532 = vmatpush1.msra.mxu0 %v241
    %533 = vmatprep.subr.mxu0 %v250
    %534 = vmatpush1.msra.mxu0 %v249
    %535 = vmatprep.subr.mxu0 %v258
    %536 = vmatpush1.msra.mxu0 %v257
    %537 = vmatprep.subr.mxu0 %v266
    %538 = vmatpush1.msra.mxu0 %v265
    %539 = vmatprep.subr.mxu0 %v274
    %540 = vmatpush1.msra.mxu0 %v273
    %541 = vmatprep.subr.mxu0 %v282
    %542 = vmatpush1.msra.mxu0 %v281
    %543 = vmatprep.subr.mxu0 0.0
    %544 = vmatpush1.msra.mxu0 0.0
    %545 = vmatprep.subr.mxu0 0.0
    %546 = vmatpush1.msra.mxu0 0.0
    %547 = vmatprep.subr.mxu0 0.0
    %548 = vmatpush1.msra.mxu0 0.0
    %549 = vmatprep.subr.mxu0 0.0
    %550 = vmatpush1.msra.mxu0 0.0
    %551 = vmatprep.subr.mxu0 0.0
    %552 = vmatpush1.msra.mxu0 0.0
    %553 = vmatprep.subr.mxu0 0.0
    %554 = vmatpush1.msra.mxu0 0.0
    %555 = vmatprep.subr.mxu0 0.0
    %556 = vmatpush1.msra.mxu0 0.0
    %557 = vmatprep.subr.mxu0 0.0
    %558 = vmatpush1.msra.mxu0 0.0
    %559 = vmatprep.subr.mxu0 0.0
    %560 = vmatpush1.msra.mxu0 0.0
    %561 = vmatprep.subr.mxu0 0.0
    %562 = vmatpush1.msra.mxu0 0.0
    %563 = vmatprep.subr.mxu0 0.0
    %564 = vmatpush1.msra.mxu0 0.0
    %565 = vmatprep.subr.mxu0 0.0
    %566 = vmatpush1.msra.mxu0 0.0
    %567 = vmatprep.subr.mxu0 0.0
    %568 = vmatpush1.msra.mxu0 0.0
    %569 = vmatprep.subr.mxu0 0.0
    %570 = vmatpush1.msra.mxu0 0.0
    %571 = vmatprep.subr.mxu0 0.0
    %572 = vmatpush1.msra.mxu0 0.0
    %573 = vmatprep.subr.mxu0 0.0
    %574 = vmatpush1.msra.mxu0 0.0
    %575 = vmatprep.mubr.f32.mxu0 0.0
    %576 = vmatmul.mubr.f32.gmra.mrb[0].mxu0 %v149
    %v577 = vpop.f32.mrb[0].mxu0
    %v578 = vadd.f32 0.0, %v577
    %v579 = vpop.f32.mrb[0].mxu0
    %v580 = vadd.f32 0.0, %v579
    %581 = vmatprep.mubr.f32.mxu0 0.0
    %582 = vmatmul.mubr.f32.gmra.mrb[0].mxu0 %v150
    %v583 = vpop.f32.mrb[0].mxu0
    %v584 = vadd.f32 0.0, %v583
    %v585 = vpop.f32.mrb[0].mxu0
    %v586 = vadd.f32 0.0, %v585
    %587 = vmatprep.mubr.f32.mxu0 0.0
    %588 = vmatmul.mubr.f32.gmra.mrb[0].mxu0 %v151
    %v589 = vpop.f32.mrb[0].mxu0
    %v590 = vadd.f32 0.0, %v589
    %v591 = vpop.f32.mrb[0].mxu0
    %v592 = vadd.f32 0.0, %v591
    %593 = vmatprep.mubr.f32.mxu0 0.0
    %594 = vmatmul.mubr.f32.gmra.mrb[0].mxu0 %v152
    %v595 = vpop.f32.mrb[0].mxu0
    %v596 = vadd.f32 0.0, %v595
    %v597 = vpop.f32.mrb[0].mxu0
    %v598 = vadd.f32 0.0, %v597
    %599 = vmatprep.mubr.f32.mxu0 0.0
    %600 = vmatmul.mubr.f32.gmra.mrb[0].mxu0 %v153
    %v601 = vpop.f32.mrb[0].mxu0
    %v602 = vadd.f32 0.0, %v601
    %v603 = vpop.f32.mrb[0].mxu0
    %v604 = vadd.f32 0.0, %v603
    %605 = vmatprep.mubr.f32.mxu0 0.0
    %606 = vmatmul.mubr.f32.gmra.mrb[0].mxu0 %v154
    %v607 = vpop.f32.mrb[0].mxu0
    %v608 = vadd.f32 0.0, %v607
    %v609 = vpop.f32.mrb[0].mxu0
    %v610 = vadd.f32 0.0, %v609
    %611 = vmatprep.mubr.f32.mxu0 0.0
    %612 = vmatmul.mubr.f32.gmra.mrb[0].mxu0 %v155
    %v613 = vpop.f32.mrb[0].mxu0
    %v614 = vadd.f32 0.0, %v613
    %v615 = vpop.f32.mrb[0].mxu0
    %v616 = vadd.f32 0.0, %v615
    %617 = vmatprep.mubr.f32.mxu0 0.0
    %618 = vmatmul.mubr.f32.gmra.mrb[0].mxu0 %v156
    %v619 = vpop.f32.mrb[0].mxu0
    %v620 = vadd.f32 0.0, %v619
    %v621 = vpop.f32.mrb[0].mxu0
    %v622 = vadd.f32 0.0, %v621
    %623 = vdwg.mxu0
    %624 = vmatprep.subr.mxu0 %v164
    %625 = vmatpush1.msra.mxu0 %v163
    %626 = vmatprep.subr.mxu0 %v172
    %627 = vmatpush1.msra.mxu0 %v171
    %628 = vmatprep.subr.mxu0 %v180
    %629 = vmatpush1.msra.mxu0 %v179
    %630 = vmatprep.subr.mxu0 %v188
    %631 = vmatpush1.msra.mxu0 %v187
    %632 = vmatprep.subr.mxu0 %v196
    %633 = vmatpush1.msra.mxu0 %v195
    %634 = vmatprep.subr.mxu0 %v204
    %635 = vmatpush1.msra.mxu0 %v203
    %636 = vmatprep.subr.mxu0 %v212
    %637 = vmatpush1.msra.mxu0 %v211
    %638 = vmatprep.subr.mxu0 %v220
    %639 = vmatpush1.msra.mxu0 %v219
    %640 = vmatprep.subr.mxu0 %v228
    %641 = vmatpush1.msra.mxu0 %v227
    %642 = vmatprep.subr.mxu0 %v236
    %643 = vmatpush1.msra.mxu0 %v235
    %644 = vmatprep.subr.mxu0 %v244
    %645 = vmatpush1.msra.mxu0 %v243
    %646 = vmatprep.subr.mxu0 %v252
    %647 = vmatpush1.msra.mxu0 %v251
    %648 = vmatprep.subr.mxu0 %v260
    %649 = vmatpush1.msra.mxu0 %v259
    %650 = vmatprep.subr.mxu0 %v268
    %651 = vmatpush1.msra.mxu0 %v267
    %652 = vmatprep.subr.mxu0 %v276
    %653 = vmatpush1.msra.mxu0 %v275
    %654 = vmatprep.subr.mxu0 %v284
    %655 = vmatpush1.msra.mxu0 %v283
    %656 = vmatprep.subr.mxu0 0.0
    %657 = vmatpush1.msra.mxu0 0.0
    %658 = vmatprep.subr.mxu0 0.0
    %659 = vmatpush1.msra.mxu0 0.0
    %660 = vmatprep.subr.mxu0 0.0
    %661 = vmatpush1.msra.mxu0 0.0
    %662 = vmatprep.subr.mxu0 0.0
    %663 = vmatpush1.msra.mxu0 0.0
    %664 = vmatprep.subr.mxu0 0.0
    %665 = vmatpush1.msra.mxu0 0.0
    %666 = vmatprep.subr.mxu0 0.0
    %667 = vmatpush1.msra.mxu0 0.0
    %668 = vmatprep.subr.mxu0 0.0
    %669 = vmatpush1.msra.mxu0 0.0
    %670 = vmatprep.subr.mxu0 0.0
    %671 = vmatpush1.msra.mxu0 0.0
    %672 = vmatprep.subr.mxu0 0.0
    %673 = vmatpush1.msra.mxu0 0.0
    %674 = vmatprep.subr.mxu0 0.0
    %675 = vmatpush1.msra.mxu0 0.0
    %676 = vmatprep.subr.mxu0 0.0
    %677 = vmatpush1.msra.mxu0 0.0
    %678 = vmatprep.subr.mxu0 0.0
    %679 = vmatpush1.msra.mxu0 0.0
    %680 = vmatprep.subr.mxu0 0.0
    %681 = vmatpush1.msra.mxu0 0.0
    %682 = vmatprep.subr.mxu0 0.0
    %683 = vmatpush1.msra.mxu0 0.0
    %684 = vmatprep.subr.mxu0 0.0
    %685 = vmatpush1.msra.mxu0 0.0
    %686 = vmatprep.subr.mxu0 0.0
    %687 = vmatpush1.msra.mxu0 0.0
    %688 = vmatprep.mubr.f32.mxu0 0.0
    %689 = vmatmul.mubr.f32.gmra.mrb[0].mxu0 %v149
    %v690 = vpop.f32.mrb[0].mxu0
    %v691 = vadd.f32 0.0, %v690
    %v692 = vpop.f32.mrb[0].mxu0
    %v693 = vadd.f32 0.0, %v692
    %694 = vmatprep.mubr.f32.mxu0 0.0
    %695 = vmatmul.mubr.f32.gmra.mrb[0].mxu0 %v150
    %v696 = vpop.f32.mrb[0].mxu0
    %v697 = vadd.f32 0.0, %v696
    %v698 = vpop.f32.mrb[0].mxu0
    %v699 = vadd.f32 0.0, %v698
    %700 = vmatprep.mubr.f32.mxu0 0.0
    %701 = vmatmul.mubr.f32.gmra.mrb[0].mxu0 %v151
    %v702 = vpop.f32.mrb[0].mxu0
    %v703 = vadd.f32 0.0, %v702
    %v704 = vpop.f32.mrb[0].mxu0
    %v705 = vadd.f32 0.0, %v704
    %706 = vmatprep.mubr.f32.mxu0 0.0
    %707 = vmatmul.mubr.f32.gmra.mrb[0].mxu0 %v152
    %v708 = vpop.f32.mrb[0].mxu0
    %v709 = vadd.f32 0.0, %v708
    %v710 = vpop.f32.mrb[0].mxu0
    %v711 = vadd.f32 0.0, %v710
    %712 = vmatprep.mubr.f32.mxu0 0.0
    %713 = vmatmul.mubr.f32.gmra.mrb[0].mxu0 %v153
    %v714 = vpop.f32.mrb[0].mxu0
    %v715 = vadd.f32 0.0, %v714
    %v716 = vpop.f32.mrb[0].mxu0
    %v717 = vadd.f32 0.0, %v716
    %718 = vmatprep.mubr.f32.mxu0 0.0
    %719 = vmatmul.mubr.f32.gmra.mrb[0].mxu0 %v154
    %v720 = vpop.f32.mrb[0].mxu0
    %v721 = vadd.f32 0.0, %v720
    %v722 = vpop.f32.mrb[0].mxu0
    %v723 = vadd.f32 0.0, %v722
    %724 = vmatprep.mubr.f32.mxu0 0.0
    %725 = vmatmul.mubr.f32.gmra.mrb[0].mxu0 %v155
    %v726 = vpop.f32.mrb[0].mxu0
    %v727 = vadd.f32 0.0, %v726
    %v728 = vpop.f32.mrb[0].mxu0
    %v729 = vadd.f32 0.0, %v728
    %730 = vmatprep.mubr.f32.mxu0 0.0
    %731 = vmatmul.mubr.f32.gmra.mrb[0].mxu0 %v156
    %v732 = vpop.f32.mrb[0].mxu0
    %v733 = vadd.f32 0.0, %v732
    %v734 = vpop.f32.mrb[0].mxu0
    %v735 = vadd.f32 0.0, %v734
    %736 = vdwg.mxu0
    %737 = vst [vmem:[#allocation2] sm:$0xff] %v352
    %738 = vst [vmem:[#allocation2 + $0x8] sm:$0xff] %v354
    %739 = vst [vmem:[#allocation2 + $0x10] sm:$0xff] %v465
    %740 = vst [vmem:[#allocation2 + $0x18] sm:$0xff] %v467
    %741 = vst [vmem:[#allocation2 + $0x20] sm:$0xff] %v578
    %742 = vst [vmem:[#allocation2 + $0x28] sm:$0xff] %v580
    %743 = vst [vmem:[#allocation2 + $0x30] sm:$0xff] %v691
    %744 = vst [vmem:[#allocation2 + $0x38] sm:$0xff] %v693
    %s745 = scalar_lea.vmem [#allocation2], 64
    %746 = vst [vmem:[%s745] sm:$0xff] %v358
    %747 = vst [vmem:[%s745 + $0x8] sm:$0xff] %v360
    %748 = vst [vmem:[%s745 + $0x10] sm:$0xff] %v471
    %749 = vst [vmem:[%s745 + $0x18] sm:$0xff] %v473
    %750 = vst [vmem:[%s745 + $0x20] sm:$0xff] %v584
    %751 = vst [vmem:[%s745 + $0x28] sm:$0xff] %v586
    %752 = vst [vmem:[%s745 + $0x30] sm:$0xff] %v697
    %753 = vst [vmem:[%s745 + $0x38] sm:$0xff] %v699
    %s754 = scalar_lea.vmem [#allocation2], 128
    %755 = vst [vmem:[%s754] sm:$0xff] %v364
    %756 = vst [vmem:[%s754 + $0x8] sm:$0xff] %v366
    %757 = vst [vmem:[%s754 + $0x10] sm:$0xff] %v477
    %758 = vst [vmem:[%s754 + $0x18] sm:$0xff] %v479
    %759 = vst [vmem:[%s754 + $0x20] sm:$0xff] %v590
    %760 = vst [vmem:[%s754 + $0x28] sm:$0xff] %v592
    %761 = vst [vmem:[%s754 + $0x30] sm:$0xff] %v703
    %762 = vst [vmem:[%s754 + $0x38] sm:$0xff] %v705
    %s763 = scalar_lea.vmem [#allocation2], 192
    %764 = vst [vmem:[%s763] sm:$0xff] %v370
    %765 = vst [vmem:[%s763 + $0x8] sm:$0xff] %v372
    %766 = vst [vmem:[%s763 + $0x10] sm:$0xff] %v483
    %767 = vst [vmem:[%s763 + $0x18] sm:$0xff] %v485
    %768 = vst [vmem:[%s763 + $0x20] sm:$0xff] %v596
    %769 = vst [vmem:[%s763 + $0x28] sm:$0xff] %v598
    %770 = vst [vmem:[%s763 + $0x30] sm:$0xff] %v709
    %771 = vst [vmem:[%s763 + $0x38] sm:$0xff] %v711
    %s772 = scalar_lea.vmem [#allocation2], 256
    %773 = vst [vmem:[%s772] sm:$0xff] %v376
    %774 = vst [vmem:[%s772 + $0x8] sm:$0xff] %v378
    %775 = vst [vmem:[%s772 + $0x10] sm:$0xff] %v489
    %776 = vst [vmem:[%s772 + $0x18] sm:$0xff] %v491
    %777 = vst [vmem:[%s772 + $0x20] sm:$0xff] %v602
    %778 = vst [vmem:[%s772 + $0x28] sm:$0xff] %v604
    %779 = vst [vmem:[%s772 + $0x30] sm:$0xff] %v715
    %780 = vst [vmem:[%s772 + $0x38] sm:$0xff] %v717
    %s781 = scalar_lea.vmem [#allocation2], 320
    %782 = vst [vmem:[%s781] sm:$0xff] %v382
    %783 = vst [vmem:[%s781 + $0x8] sm:$0xff] %v384
    %784 = vst [vmem:[%s781 + $0x10] sm:$0xff] %v495
    %785 = vst [vmem:[%s781 + $0x18] sm:$0xff] %v497
    %786 = vst [vmem:[%s781 + $0x20] sm:$0xff] %v608
    %787 = vst [vmem:[%s781 + $0x28] sm:$0xff] %v610
    %788 = vst [vmem:[%s781 + $0x30] sm:$0xff] %v721
    %789 = vst [vmem:[%s781 + $0x38] sm:$0xff] %v723
    %s790 = scalar_lea.vmem [#allocation2], 384
    %791 = vst [vmem:[%s790] sm:$0xff] %v388
    %792 = vst [vmem:[%s790 + $0x8] sm:$0xff] %v390
    %793 = vst [vmem:[%s790 + $0x10] sm:$0xff] %v501
    %794 = vst [vmem:[%s790 + $0x18] sm:$0xff] %v503
    %795 = vst [vmem:[%s790 + $0x20] sm:$0xff] %v614
    %796 = vst [vmem:[%s790 + $0x28] sm:$0xff] %v616
    %797 = vst [vmem:[%s790 + $0x30] sm:$0xff] %v727
    %798 = vst [vmem:[%s790 + $0x38] sm:$0xff] %v729
    %s799 = scalar_lea.vmem [#allocation2], 448
    %800 = vst [vmem:[%s799] sm:$0xff] %v394
    %801 = vst [vmem:[%s799 + $0x8] sm:$0xff] %v396
    %802 = vst [vmem:[%s799 + $0x10] sm:$0xff] %v507
    %803 = vst [vmem:[%s799 + $0x18] sm:$0xff] %v509
    %804 = vst [vmem:[%s799 + $0x20] sm:$0xff] %v620
    %805 = vst [vmem:[%s799 + $0x28] sm:$0xff] %v622
    %806 = vst [vmem:[%s799 + $0x30] sm:$0xff] %v733
    %807 = vst [vmem:[%s799 + $0x38] sm:$0xff] %v735
    %v808 = vld [vmem:[#allocation6] sm:$0xff]
    %v809 = vld [vmem:[#allocation6 + $0x8] sm:$0xff]
    %v810 = vld [vmem:[#allocation6 + $0x10] sm:$0xff]
    %v811 = vld [vmem:[#allocation6 + $0x18] sm:$0xff]
    %v812 = vld [vmem:[#allocation6 + $0x20] sm:$0xff]
    %v813 = vld [vmem:[#allocation6 + $0x28] sm:$0xff]
    %v814 = vld [vmem:[#allocation6 + $0x30] sm:$0xff]
    %v815 = vld [vmem:[#allocation6 + $0x38] sm:$0xff]
    %v816 = vld [vmem:[#allocation6 + $0x40] sm:$0xff]
    %v817 = vld [vmem:[#allocation6 + $0x48] sm:$0xff]
    %v818 = vld [vmem:[#allocation6 + $0x50] sm:$0xff]
    %v819 = vld [vmem:[#allocation6 + $0x58] sm:$0xff]
    %v820 = vld [vmem:[#allocation6 + $0x60] sm:$0xff]
    %v821 = vld [vmem:[#allocation6 + $0x68] sm:$0xff]
    %v822 = vld [vmem:[#allocation6 + $0x70] sm:$0xff]
    %v823 = vld [vmem:[#allocation6 + $0x78] sm:$0xff]
    %v824 = vld [vmem:[#allocation6 + $0x80] sm:$0xff]
    %v825 = vld [vmem:[#allocation6 + $0x88] sm:$0xff]
    %v826 = vld [vmem:[#allocation6 + $0x90] sm:$0xff]
    %v827 = vld [vmem:[#allocation6 + $0x98] sm:$0xff]
    %v828 = vld [vmem:[#allocation6 + $0xa0] sm:$0xff]
    %v829 = vld [vmem:[#allocation6 + $0xa8] sm:$0xff]
    %v830 = vld [vmem:[#allocation6 + $0xb0] sm:$0xff]
    %v831 = vld [vmem:[#allocation6 + $0xb8] sm:$0xff]
    %v832 = vld [vmem:[#allocation6 + $0xc0] sm:$0xff]
    %v833 = vld [vmem:[#allocation6 + $0xc8] sm:$0xff]
    %v834 = vld [vmem:[#allocation6 + $0xd0] sm:$0xff]
    %v835 = vld [vmem:[#allocation6 + $0xd8] sm:$0xff]
    %v836 = vld [vmem:[#allocation6 + $0xe0] sm:$0xff]
    %v837 = vld [vmem:[#allocation6 + $0xe8] sm:$0xff]
    %v838 = vld [vmem:[#allocation6 + $0xf0] sm:$0xff]
    %v839 = vld [vmem:[#allocation6 + $0xf8] sm:$0xff]
    %v840 = vld [vmem:[#allocation6 + $0x100] sm:$0xff]
    %v841 = vld [vmem:[#allocation6 + $0x108] sm:$0xff]
    %v842 = vld [vmem:[#allocation6 + $0x110] sm:$0xff]
    %v843 = vld [vmem:[#allocation6 + $0x118] sm:$0xff]
    %v844 = vld [vmem:[#allocation6 + $0x120] sm:$0xff]
    %v845 = vld [vmem:[#allocation6 + $0x128] sm:$0xff]
    %v846 = vld [vmem:[#allocation6 + $0x130] sm:$0xff]
    %v847 = vld [vmem:[#allocation6 + $0x138] sm:$0xff]
    %v848 = vld [vmem:[#allocation6 + $0x140] sm:$0xff]
    %v849 = vld [vmem:[#allocation6 + $0x148] sm:$0xff]
    %v850 = vld [vmem:[#allocation6 + $0x150] sm:$0xff]
    %v851 = vld [vmem:[#allocation6 + $0x158] sm:$0xff]
    %v852 = vld [vmem:[#allocation6 + $0x160] sm:$0xff]
    %v853 = vld [vmem:[#allocation6 + $0x168] sm:$0xff]
    %v854 = vld [vmem:[#allocation6 + $0x170] sm:$0xff]
    %v855 = vld [vmem:[#allocation6 + $0x178] sm:$0xff]
    %v856 = vld [vmem:[#allocation6 + $0x180] sm:$0xff]
    %v857 = vld [vmem:[#allocation6 + $0x188] sm:$0xff]
    %v858 = vld [vmem:[#allocation6 + $0x190] sm:$0xff]
    %v859 = vld [vmem:[#allocation6 + $0x198] sm:$0xff]
    %v860 = vld [vmem:[#allocation6 + $0x1a0] sm:$0xff]
    %v861 = vld [vmem:[#allocation6 + $0x1a8] sm:$0xff]
    %v862 = vld [vmem:[#allocation6 + $0x1b0] sm:$0xff]
    %v863 = vld [vmem:[#allocation6 + $0x1b8] sm:$0xff]
    %v864 = vld [vmem:[#allocation6 + $0x1c0] sm:$0xff]
    %v865 = vld [vmem:[#allocation6 + $0x1c8] sm:$0xff]
    %v866 = vld [vmem:[#allocation6 + $0x1d0] sm:$0xff]
    %v867 = vld [vmem:[#allocation6 + $0x1d8] sm:$0xff]
    %v868 = vld [vmem:[#allocation6 + $0x1e0] sm:$0xff]
    %v869 = vld [vmem:[#allocation6 + $0x1e8] sm:$0xff]
    %v870 = vld [vmem:[#allocation6 + $0x1f0] sm:$0xff]
    %v871 = vld [vmem:[#allocation6 + $0x1f8] sm:$0xff]
    %v872 = vld [vmem:[#allocation6 + $0x200] sm:$0xff]
    %v873 = vld [vmem:[#allocation6 + $0x208] sm:$0xff]
    %v874 = vld [vmem:[#allocation6 + $0x210] sm:$0xff]
    %v875 = vld [vmem:[#allocation6 + $0x218] sm:$0xff]
    %v876 = vld [vmem:[#allocation6 + $0x220] sm:$0xff]
    %v877 = vld [vmem:[#allocation6 + $0x228] sm:$0xff]
    %v878 = vld [vmem:[#allocation6 + $0x230] sm:$0xff]
    %v879 = vld [vmem:[#allocation6 + $0x238] sm:$0xff]
    %v880 = vld [vmem:[#allocation6 + $0x240] sm:$0xff]
    %v881 = vld [vmem:[#allocation6 + $0x248] sm:$0xff]
    %v882 = vld [vmem:[#allocation6 + $0x250] sm:$0xff]
    %v883 = vld [vmem:[#allocation6 + $0x258] sm:$0xff]
    %v884 = vld [vmem:[#allocation6 + $0x260] sm:$0xff]
    %v885 = vld [vmem:[#allocation6 + $0x268] sm:$0xff]
    %v886 = vld [vmem:[#allocation6 + $0x270] sm:$0xff]
    %v887 = vld [vmem:[#allocation6 + $0x278] sm:$0xff]
    %v888 = vld [vmem:[#allocation6 + $0x280] sm:$0xff]
    %v889 = vld [vmem:[#allocation6 + $0x288] sm:$0xff]
    %v890 = vld [vmem:[#allocation6 + $0x290] sm:$0xff]
    %v891 = vld [vmem:[#allocation6 + $0x298] sm:$0xff]
    %v892 = vld [vmem:[#allocation6 + $0x2a0] sm:$0xff]
    %v893 = vld [vmem:[#allocation6 + $0x2a8] sm:$0xff]
    %v894 = vld [vmem:[#allocation6 + $0x2b0] sm:$0xff]
    %v895 = vld [vmem:[#allocation6 + $0x2b8] sm:$0xff]
    %v896 = vld [vmem:[#allocation6 + $0x2c0] sm:$0xff]
    %v897 = vld [vmem:[#allocation6 + $0x2c8] sm:$0xff]
    %v898 = vld [vmem:[#allocation6 + $0x2d0] sm:$0xff]
    %v899 = vld [vmem:[#allocation6 + $0x2d8] sm:$0xff]
    %v900 = vld [vmem:[#allocation6 + $0x2e0] sm:$0xff]
    %v901 = vld [vmem:[#allocation6 + $0x2e8] sm:$0xff]
    %v902 = vld [vmem:[#allocation6 + $0x2f0] sm:$0xff]
    %v903 = vld [vmem:[#allocation6 + $0x2f8] sm:$0xff]
    %v904 = vld [vmem:[#allocation6 + $0x300] sm:$0xff]
    %v905 = vld [vmem:[#allocation6 + $0x308] sm:$0xff]
    %v906 = vld [vmem:[#allocation6 + $0x310] sm:$0xff]
    %v907 = vld [vmem:[#allocation6 + $0x318] sm:$0xff]
    %v908 = vld [vmem:[#allocation6 + $0x320] sm:$0xff]
    %v909 = vld [vmem:[#allocation6 + $0x328] sm:$0xff]
    %v910 = vld [vmem:[#allocation6 + $0x330] sm:$0xff]
    %v911 = vld [vmem:[#allocation6 + $0x338] sm:$0xff]
    %v912 = vld [vmem:[#allocation6 + $0x340] sm:$0xff]
    %v913 = vld [vmem:[#allocation6 + $0x348] sm:$0xff]
    %v914 = vld [vmem:[#allocation6 + $0x350] sm:$0xff]
    %v915 = vld [vmem:[#allocation6 + $0x358] sm:$0xff]
    %v916 = vld [vmem:[#allocation6 + $0x360] sm:$0xff]
    %v917 = vld [vmem:[#allocation6 + $0x368] sm:$0xff]
    %v918 = vld [vmem:[#allocation6 + $0x370] sm:$0xff]
    %v919 = vld [vmem:[#allocation6 + $0x378] sm:$0xff]
    %v920 = vld [vmem:[#allocation6 + $0x380] sm:$0xff]
    %v921 = vld [vmem:[#allocation6 + $0x388] sm:$0xff]
    %v922 = vld [vmem:[#allocation6 + $0x390] sm:$0xff]
    %v923 = vld [vmem:[#allocation6 + $0x398] sm:$0xff]
    %v924 = vld [vmem:[#allocation6 + $0x3a0] sm:$0xff]
    %v925 = vld [vmem:[#allocation6 + $0x3a8] sm:$0xff]
    %v926 = vld [vmem:[#allocation6 + $0x3b0] sm:$0xff]
    %v927 = vld [vmem:[#allocation6 + $0x3b8] sm:$0xff]
    %v928 = vld [vmem:[#allocation6 + $0x3c0] sm:$0xff]
    %v929 = vld [vmem:[#allocation6 + $0x3c8] sm:$0xff]
    %v930 = vld [vmem:[#allocation6 + $0x3d0] sm:$0xff]
    %v931 = vld [vmem:[#allocation6 + $0x3d8] sm:$0xff]
    %v932 = vld [vmem:[#allocation6 + $0x3e0] sm:$0xff]
    %v933 = vld [vmem:[#allocation6 + $0x3e8] sm:$0xff]
    %v934 = vld [vmem:[#allocation6 + $0x3f0] sm:$0xff]
    %v935 = vld [vmem:[#allocation6 + $0x3f8] sm:$0xff]
    %v936 = vld [vmem:[#allocation8] sm:$0xff]
    %v937 = vld [vmem:[#allocation8 + $0x8] sm:$0xff]
    %v938 = vld [vmem:[#allocation8 + $0x10] sm:$0xff]
    %v939 = vld [vmem:[#allocation8 + $0x18] sm:$0xff]
    %v940 = vld [vmem:[#allocation8 + $0x20] sm:$0xff]
    %v941 = vld [vmem:[#allocation8 + $0x28] sm:$0xff]
    %v942 = vld [vmem:[#allocation8 + $0x30] sm:$0xff]
    %v943 = vld [vmem:[#allocation8 + $0x38] sm:$0xff]
    %v944 = vld [vmem:[#allocation8 + $0x40] sm:$0xff]
    %v945 = vld [vmem:[#allocation8 + $0x48] sm:$0xff]
    %v946 = vld [vmem:[#allocation8 + $0x50] sm:$0xff]
    %v947 = vld [vmem:[#allocation8 + $0x58] sm:$0xff]
    %v948 = vld [vmem:[#allocation8 + $0x60] sm:$0xff]
    %v949 = vld [vmem:[#allocation8 + $0x68] sm:$0xff]
    %v950 = vld [vmem:[#allocation8 + $0x70] sm:$0xff]
    %v951 = vld [vmem:[#allocation8 + $0x78] sm:$0xff]
    %v952 = vld [vmem:[#allocation8 + $0x80] sm:$0xff]
    %v953 = vld [vmem:[#allocation8 + $0x88] sm:$0xff]
    %v954 = vld [vmem:[#allocation8 + $0x90] sm:$0xff]
    %v955 = vld [vmem:[#allocation8 + $0x98] sm:$0xff]
    %v956 = vld [vmem:[#allocation8 + $0xa0] sm:$0xff]
    %v957 = vld [vmem:[#allocation8 + $0xa8] sm:$0xff]
    %v958 = vld [vmem:[#allocation8 + $0xb0] sm:$0xff]
    %v959 = vld [vmem:[#allocation8 + $0xb8] sm:$0xff]
    %v960 = vld [vmem:[#allocation8 + $0xc0] sm:$0xff]
    %v961 = vld [vmem:[#allocation8 + $0xc8] sm:$0xff]
    %v962 = vld [vmem:[#allocation8 + $0xd0] sm:$0xff]
    %v963 = vld [vmem:[#allocation8 + $0xd8] sm:$0xff]
    %v964 = vld [vmem:[#allocation8 + $0xe0] sm:$0xff]
    %v965 = vld [vmem:[#allocation8 + $0xe8] sm:$0xff]
    %v966 = vld [vmem:[#allocation8 + $0xf0] sm:$0xff]
    %v967 = vld [vmem:[#allocation8 + $0xf8] sm:$0xff]
    %v968 = vld [vmem:[#allocation8 + $0x100] sm:$0xff]
    %v969 = vld [vmem:[#allocation8 + $0x108] sm:$0xff]
    %v970 = vld [vmem:[#allocation8 + $0x110] sm:$0xff]
    %v971 = vld [vmem:[#allocation8 + $0x118] sm:$0xff]
    %v972 = vld [vmem:[#allocation8 + $0x120] sm:$0xff]
    %v973 = vld [vmem:[#allocation8 + $0x128] sm:$0xff]
    %v974 = vld [vmem:[#allocation8 + $0x130] sm:$0xff]
    %v975 = vld [vmem:[#allocation8 + $0x138] sm:$0xff]
    %v976 = vld [vmem:[#allocation8 + $0x140] sm:$0xff]
    %v977 = vld [vmem:[#allocation8 + $0x148] sm:$0xff]
    %v978 = vld [vmem:[#allocation8 + $0x150] sm:$0xff]
    %v979 = vld [vmem:[#allocation8 + $0x158] sm:$0xff]
    %v980 = vld [vmem:[#allocation8 + $0x160] sm:$0xff]
    %v981 = vld [vmem:[#allocation8 + $0x168] sm:$0xff]
    %v982 = vld [vmem:[#allocation8 + $0x170] sm:$0xff]
    %v983 = vld [vmem:[#allocation8 + $0x178] sm:$0xff]
    %v984 = vld [vmem:[#allocation8 + $0x180] sm:$0xff]
    %v985 = vld [vmem:[#allocation8 + $0x188] sm:$0xff]
    %v986 = vld [vmem:[#allocation8 + $0x190] sm:$0xff]
    %v987 = vld [vmem:[#allocation8 + $0x198] sm:$0xff]
    %v988 = vld [vmem:[#allocation8 + $0x1a0] sm:$0xff]
    %v989 = vld [vmem:[#allocation8 + $0x1a8] sm:$0xff]
    %v990 = vld [vmem:[#allocation8 + $0x1b0] sm:$0xff]
    %v991 = vld [vmem:[#allocation8 + $0x1b8] sm:$0xff]
    %v992 = vld [vmem:[#allocation8 + $0x1c0] sm:$0xff]
    %v993 = vld [vmem:[#allocation8 + $0x1c8] sm:$0xff]
    %v994 = vld [vmem:[#allocation8 + $0x1d0] sm:$0xff]
    %v995 = vld [vmem:[#allocation8 + $0x1d8] sm:$0xff]
    %v996 = vld [vmem:[#allocation8 + $0x1e0] sm:$0xff]
    %v997 = vld [vmem:[#allocation8 + $0x1e8] sm:$0xff]
    %v998 = vld [vmem:[#allocation8 + $0x1f0] sm:$0xff]
    %v999 = vld [vmem:[#allocation8 + $0x1f8] sm:$0xff]
    %v1000 = vld [vmem:[#allocation8 + $0x200] sm:$0xff]
    %v1001 = vld [vmem:[#allocation8 + $0x208] sm:$0xff]
    %v1002 = vld [vmem:[#allocation8 + $0x210] sm:$0xff]
    %v1003 = vld [vmem:[#allocation8 + $0x218] sm:$0xff]
    %v1004 = vld [vmem:[#allocation8 + $0x220] sm:$0xff]
    %v1005 = vld [vmem:[#allocation8 + $0x228] sm:$0xff]
    %v1006 = vld [vmem:[#allocation8 + $0x230] sm:$0xff]
    %v1007 = vld [vmem:[#allocation8 + $0x238] sm:$0xff]
    %v1008 = vld [vmem:[#allocation8 + $0x240] sm:$0xff]
    %v1009 = vld [vmem:[#allocation8 + $0x248] sm:$0xff]
    %v1010 = vld [vmem:[#allocation8 + $0x250] sm:$0xff]
    %v1011 = vld [vmem:[#allocation8 + $0x258] sm:$0xff]
    %v1012 = vld [vmem:[#allocation8 + $0x260] sm:$0xff]
    %v1013 = vld [vmem:[#allocation8 + $0x268] sm:$0xff]
    %v1014 = vld [vmem:[#allocation8 + $0x270] sm:$0xff]
    %v1015 = vld [vmem:[#allocation8 + $0x278] sm:$0xff]
    %v1016 = vld [vmem:[#allocation8 + $0x280] sm:$0xff]
    %v1017 = vld [vmem:[#allocation8 + $0x288] sm:$0xff]
    %v1018 = vld [vmem:[#allocation8 + $0x290] sm:$0xff]
    %v1019 = vld [vmem:[#allocation8 + $0x298] sm:$0xff]
    %v1020 = vld [vmem:[#allocation8 + $0x2a0] sm:$0xff]
    %v1021 = vld [vmem:[#allocation8 + $0x2a8] sm:$0xff]
    %v1022 = vld [vmem:[#allocation8 + $0x2b0] sm:$0xff]
    %v1023 = vld [vmem:[#allocation8 + $0x2b8] sm:$0xff]
    %v1024 = vld [vmem:[#allocation8 + $0x2c0] sm:$0xff]
    %v1025 = vld [vmem:[#allocation8 + $0x2c8] sm:$0xff]
    %v1026 = vld [vmem:[#allocation8 + $0x2d0] sm:$0xff]
    %v1027 = vld [vmem:[#allocation8 + $0x2d8] sm:$0xff]
    %v1028 = vld [vmem:[#allocation8 + $0x2e0] sm:$0xff]
    %v1029 = vld [vmem:[#allocation8 + $0x2e8] sm:$0xff]
    %v1030 = vld [vmem:[#allocation8 + $0x2f0] sm:$0xff]
    %v1031 = vld [vmem:[#allocation8 + $0x2f8] sm:$0xff]
    %v1032 = vld [vmem:[#allocation8 + $0x300] sm:$0xff]
    %v1033 = vld [vmem:[#allocation8 + $0x308] sm:$0xff]
    %v1034 = vld [vmem:[#allocation8 + $0x310] sm:$0xff]
    %v1035 = vld [vmem:[#allocation8 + $0x318] sm:$0xff]
    %v1036 = vld [vmem:[#allocation8 + $0x320] sm:$0xff]
    %v1037 = vld [vmem:[#allocation8 + $0x328] sm:$0xff]
    %v1038 = vld [vmem:[#allocation8 + $0x330] sm:$0xff]
    %v1039 = vld [vmem:[#allocation8 + $0x338] sm:$0xff]
    %v1040 = vld [vmem:[#allocation8 + $0x340] sm:$0xff]
    %v1041 = vld [vmem:[#allocation8 + $0x348] sm:$0xff]
    %v1042 = vld [vmem:[#allocation8 + $0x350] sm:$0xff]
    %v1043 = vld [vmem:[#allocation8 + $0x358] sm:$0xff]
    %v1044 = vld [vmem:[#allocation8 + $0x360] sm:$0xff]
    %v1045 = vld [vmem:[#allocation8 + $0x368] sm:$0xff]
    %v1046 = vld [vmem:[#allocation8 + $0x370] sm:$0xff]
    %v1047 = vld [vmem:[#allocation8 + $0x378] sm:$0xff]
    %v1048 = vld [vmem:[#allocation8 + $0x380] sm:$0xff]
    %v1049 = vld [vmem:[#allocation8 + $0x388] sm:$0xff]
    %v1050 = vld [vmem:[#allocation8 + $0x390] sm:$0xff]
    %v1051 = vld [vmem:[#allocation8 + $0x398] sm:$0xff]
    %v1052 = vld [vmem:[#allocation8 + $0x3a0] sm:$0xff]
    %v1053 = vld [vmem:[#allocation8 + $0x3a8] sm:$0xff]
    %v1054 = vld [vmem:[#allocation8 + $0x3b0] sm:$0xff]
    %v1055 = vld [vmem:[#allocation8 + $0x3b8] sm:$0xff]
    %v1056 = vld [vmem:[#allocation8 + $0x3c0] sm:$0xff]
    %v1057 = vld [vmem:[#allocation8 + $0x3c8] sm:$0xff]
    %v1058 = vld [vmem:[#allocation8 + $0x3d0] sm:$0xff]
    %v1059 = vld [vmem:[#allocation8 + $0x3d8] sm:$0xff]
    %v1060 = vld [vmem:[#allocation8 + $0x3e0] sm:$0xff]
    %v1061 = vld [vmem:[#allocation8 + $0x3e8] sm:$0xff]
    %v1062 = vld [vmem:[#allocation8 + $0x3f0] sm:$0xff]
    %v1063 = vld [vmem:[#allocation8 + $0x3f8] sm:$0xff]
    %v1064 = vld [vmem:[#allocation9] sm:$0xff]
    %v1065 = vld [vmem:[#allocation9 + $0x8] sm:$0xff]
    %v1066 = vld [vmem:[#allocation9 + $0x10] sm:$0xff]
    %v1067 = vld [vmem:[#allocation9 + $0x18] sm:$0xff]
    %v1068 = vld [vmem:[#allocation9 + $0x20] sm:$0xff]
    %v1069 = vld [vmem:[#allocation9 + $0x28] sm:$0xff]
    %v1070 = vld [vmem:[#allocation9 + $0x30] sm:$0xff]
    %v1071 = vld [vmem:[#allocation9 + $0x38] sm:$0xff]
    %v1072 = vld [vmem:[#allocation9 + $0x40] sm:$0xff]
    %v1073 = vld [vmem:[#allocation9 + $0x48] sm:$0xff]
    %v1074 = vld [vmem:[#allocation9 + $0x50] sm:$0xff]
    %v1075 = vld [vmem:[#allocation9 + $0x58] sm:$0xff]
    %v1076 = vld [vmem:[#allocation9 + $0x60] sm:$0xff]
    %v1077 = vld [vmem:[#allocation9 + $0x68] sm:$0xff]
    %v1078 = vld [vmem:[#allocation9 + $0x70] sm:$0xff]
    %v1079 = vld [vmem:[#allocation9 + $0x78] sm:$0xff]
    %v1080 = vld [vmem:[#allocation9 + $0x80] sm:$0xff]
    %v1081 = vld [vmem:[#allocation9 + $0x88] sm:$0xff]
    %v1082 = vld [vmem:[#allocation9 + $0x90] sm:$0xff]
    %v1083 = vld [vmem:[#allocation9 + $0x98] sm:$0xff]
    %v1084 = vld [vmem:[#allocation9 + $0xa0] sm:$0xff]
    %v1085 = vld [vmem:[#allocation9 + $0xa8] sm:$0xff]
    %v1086 = vld [vmem:[#allocation9 + $0xb0] sm:$0xff]
    %v1087 = vld [vmem:[#allocation9 + $0xb8] sm:$0xff]
    %v1088 = vld [vmem:[#allocation9 + $0xc0] sm:$0xff]
    %v1089 = vld [vmem:[#allocation9 + $0xc8] sm:$0xff]
    %v1090 = vld [vmem:[#allocation9 + $0xd0] sm:$0xff]
    %v1091 = vld [vmem:[#allocation9 + $0xd8] sm:$0xff]
    %v1092 = vld [vmem:[#allocation9 + $0xe0] sm:$0xff]
    %v1093 = vld [vmem:[#allocation9 + $0xe8] sm:$0xff]
    %v1094 = vld [vmem:[#allocation9 + $0xf0] sm:$0xff]
    %v1095 = vld [vmem:[#allocation9 + $0xf8] sm:$0xff]
    %v1096 = vld [vmem:[#allocation9 + $0x100] sm:$0xff]
    %v1097 = vld [vmem:[#allocation9 + $0x108] sm:$0xff]
    %v1098 = vld [vmem:[#allocation9 + $0x110] sm:$0xff]
    %v1099 = vld [vmem:[#allocation9 + $0x118] sm:$0xff]
    %v1100 = vld [vmem:[#allocation9 + $0x120] sm:$0xff]
    %v1101 = vld [vmem:[#allocation9 + $0x128] sm:$0xff]
    %v1102 = vld [vmem:[#allocation9 + $0x130] sm:$0xff]
    %v1103 = vld [vmem:[#allocation9 + $0x138] sm:$0xff]
    %v1104 = vld [vmem:[#allocation9 + $0x140] sm:$0xff]
    %v1105 = vld [vmem:[#allocation9 + $0x148] sm:$0xff]
    %v1106 = vld [vmem:[#allocation9 + $0x150] sm:$0xff]
    %v1107 = vld [vmem:[#allocation9 + $0x158] sm:$0xff]
    %v1108 = vld [vmem:[#allocation9 + $0x160] sm:$0xff]
    %v1109 = vld [vmem:[#allocation9 + $0x168] sm:$0xff]
    %v1110 = vld [vmem:[#allocation9 + $0x170] sm:$0xff]
    %v1111 = vld [vmem:[#allocation9 + $0x178] sm:$0xff]
    %v1112 = vld [vmem:[#allocation9 + $0x180] sm:$0xff]
    %v1113 = vld [vmem:[#allocation9 + $0x188] sm:$0xff]
    %v1114 = vld [vmem:[#allocation9 + $0x190] sm:$0xff]
    %v1115 = vld [vmem:[#allocation9 + $0x198] sm:$0xff]
    %v1116 = vld [vmem:[#allocation9 + $0x1a0] sm:$0xff]
    %v1117 = vld [vmem:[#allocation9 + $0x1a8] sm:$0xff]
    %v1118 = vld [vmem:[#allocation9 + $0x1b0] sm:$0xff]
    %v1119 = vld [vmem:[#allocation9 + $0x1b8] sm:$0xff]
    %v1120 = vld [vmem:[#allocation9 + $0x1c0] sm:$0xff]
    %v1121 = vld [vmem:[#allocation9 + $0x1c8] sm:$0xff]
    %v1122 = vld [vmem:[#allocation9 + $0x1d0] sm:$0xff]
    %v1123 = vld [vmem:[#allocation9 + $0x1d8] sm:$0xff]
    %v1124 = vld [vmem:[#allocation9 + $0x1e0] sm:$0xff]
    %v1125 = vld [vmem:[#allocation9 + $0x1e8] sm:$0xff]
    %v1126 = vld [vmem:[#allocation9 + $0x1f0] sm:$0xff]
    %v1127 = vld [vmem:[#allocation9 + $0x1f8] sm:$0xff]
    %v1128 = vld [vmem:[#allocation9 + $0x200] sm:$0xff]
    %v1129 = vld [vmem:[#allocation9 + $0x208] sm:$0xff]
    %v1130 = vld [vmem:[#allocation9 + $0x210] sm:$0xff]
    %v1131 = vld [vmem:[#allocation9 + $0x218] sm:$0xff]
    %v1132 = vld [vmem:[#allocation9 + $0x220] sm:$0xff]
    %v1133 = vld [vmem:[#allocation9 + $0x228] sm:$0xff]
    %v1134 = vld [vmem:[#allocation9 + $0x230] sm:$0xff]
    %v1135 = vld [vmem:[#allocation9 + $0x238] sm:$0xff]
    %v1136 = vld [vmem:[#allocation9 + $0x240] sm:$0xff]
    %v1137 = vld [vmem:[#allocation9 + $0x248] sm:$0xff]
    %v1138 = vld [vmem:[#allocation9 + $0x250] sm:$0xff]
    %v1139 = vld [vmem:[#allocation9 + $0x258] sm:$0xff]
    %v1140 = vld [vmem:[#allocation9 + $0x260] sm:$0xff]
    %v1141 = vld [vmem:[#allocation9 + $0x268] sm:$0xff]
    %v1142 = vld [vmem:[#allocation9 + $0x270] sm:$0xff]
    %v1143 = vld [vmem:[#allocation9 + $0x278] sm:$0xff]
    %v1144 = vld [vmem:[#allocation9 + $0x280] sm:$0xff]
    %v1145 = vld [vmem:[#allocation9 + $0x288] sm:$0xff]
    %v1146 = vld [vmem:[#allocation9 + $0x290] sm:$0xff]
    %v1147 = vld [vmem:[#allocation9 + $0x298] sm:$0xff]
    %v1148 = vld [vmem:[#allocation9 + $0x2a0] sm:$0xff]
    %v1149 = vld [vmem:[#allocation9 + $0x2a8] sm:$0xff]
    %v1150 = vld [vmem:[#allocation9 + $0x2b0] sm:$0xff]
    %v1151 = vld [vmem:[#allocation9 + $0x2b8] sm:$0xff]
    %v1152 = vld [vmem:[#allocation9 + $0x2c0] sm:$0xff]
    %v1153 = vld [vmem:[#allocation9 + $0x2c8] sm:$0xff]
    %v1154 = vld [vmem:[#allocation9 + $0x2d0] sm:$0xff]
    %v1155 = vld [vmem:[#allocation9 + $0x2d8] sm:$0xff]
    %v1156 = vld [vmem:[#allocation9 + $0x2e0] sm:$0xff]
    %v1157 = vld [vmem:[#allocation9 + $0x2e8] sm:$0xff]
    %v1158 = vld [vmem:[#allocation9 + $0x2f0] sm:$0xff]
    %v1159 = vld [vmem:[#allocation9 + $0x2f8] sm:$0xff]
    %v1160 = vld [vmem:[#allocation9 + $0x300] sm:$0xff]
    %v1161 = vld [vmem:[#allocation9 + $0x308] sm:$0xff]
    %v1162 = vld [vmem:[#allocation9 + $0x310] sm:$0xff]
    %v1163 = vld [vmem:[#allocation9 + $0x318] sm:$0xff]
    %v1164 = vld [vmem:[#allocation9 + $0x320] sm:$0xff]
    %v1165 = vld [vmem:[#allocation9 + $0x328] sm:$0xff]
    %v1166 = vld [vmem:[#allocation9 + $0x330] sm:$0xff]
    %v1167 = vld [vmem:[#allocation9 + $0x338] sm:$0xff]
    %v1168 = vld [vmem:[#allocation9 + $0x340] sm:$0xff]
    %v1169 = vld [vmem:[#allocation9 + $0x348] sm:$0xff]
    %v1170 = vld [vmem:[#allocation9 + $0x350] sm:$0xff]
    %v1171 = vld [vmem:[#allocation9 + $0x358] sm:$0xff]
    %v1172 = vld [vmem:[#allocation9 + $0x360] sm:$0xff]
    %v1173 = vld [vmem:[#allocation9 + $0x368] sm:$0xff]
    %v1174 = vld [vmem:[#allocation9 + $0x370] sm:$0xff]
    %v1175 = vld [vmem:[#allocation9 + $0x378] sm:$0xff]
    %v1176 = vld [vmem:[#allocation9 + $0x380] sm:$0xff]
    %v1177 = vld [vmem:[#allocation9 + $0x388] sm:$0xff]
    %v1178 = vld [vmem:[#allocation9 + $0x390] sm:$0xff]
    %v1179 = vld [vmem:[#allocation9 + $0x398] sm:$0xff]
    %v1180 = vld [vmem:[#allocation9 + $0x3a0] sm:$0xff]
    %v1181 = vld [vmem:[#allocation9 + $0x3a8] sm:$0xff]
    %v1182 = vld [vmem:[#allocation9 + $0x3b0] sm:$0xff]
    %v1183 = vld [vmem:[#allocation9 + $0x3b8] sm:$0xff]
    %v1184 = vld [vmem:[#allocation9 + $0x3c0] sm:$0xff]
    %v1185 = vld [vmem:[#allocation9 + $0x3c8] sm:$0xff]
    %v1186 = vld [vmem:[#allocation9 + $0x3d0] sm:$0xff]
    %v1187 = vld [vmem:[#allocation9 + $0x3d8] sm:$0xff]
    %v1188 = vld [vmem:[#allocation9 + $0x3e0] sm:$0xff]
    %v1189 = vld [vmem:[#allocation9 + $0x3e8] sm:$0xff]
    %v1190 = vld [vmem:[#allocation9 + $0x3f0] sm:$0xff]
    %v1191 = vld [vmem:[#allocation9 + $0x3f8] sm:$0xff]
    %v1192 = vld [vmem:[%s5] sm:$0xff]
    %v1194 = vlaneseq
    %v1195 = vshrl.u32 %v1194, 7
    %v1196 = vsub.s32 0, %v1195
    %v1197 = vrot.slane %v1192, %v1196
    %v1198 = vlaneseq
    %v1199 = vshrl.u32 %v1198, 7
    %v1200 = vsub.s32 1, %v1199
    %v1201 = vrot.slane %v1192, %v1200
    %v1202 = vlaneseq
    %v1203 = vshrl.u32 %v1202, 7
    %v1204 = vsub.s32 2, %v1203
    %v1205 = vrot.slane %v1192, %v1204
    %v1206 = vlaneseq
    %v1207 = vshrl.u32 %v1206, 7
    %v1208 = vsub.s32 3, %v1207
    %v1209 = vrot.slane %v1192, %v1208
    %v1210 = vlaneseq
    %v1211 = vshrl.u32 %v1210, 7
    %v1212 = vsub.s32 4, %v1211
    %v1213 = vrot.slane %v1192, %v1212
    %v1214 = vlaneseq
    %v1215 = vshrl.u32 %v1214, 7
    %v1216 = vsub.s32 5, %v1215
    %v1217 = vrot.slane %v1192, %v1216
    %v1218 = vlaneseq
    %v1219 = vshrl.u32 %v1218, 7
    %v1220 = vsub.s32 6, %v1219
    %v1221 = vrot.slane %v1192, %v1220
    %v1222 = vlaneseq
    %v1223 = vshrl.u32 %v1222, 7
    %v1224 = vsub.s32 7, %v1223
    %v1225 = vrot.slane %v1192, %v1224
    %v1234 = vld [vmem:[#allocation2] sm:$0xff]
    %v1235 = vld [vmem:[#allocation2 + $0x8] sm:$0xff]
    %v1236 = vld [vmem:[#allocation2 + $0x10] sm:$0xff]
    %v1237 = vld [vmem:[#allocation2 + $0x18] sm:$0xff]
    %v1238 = vld [vmem:[#allocation2 + $0x20] sm:$0xff]
    %v1239 = vld [vmem:[#allocation2 + $0x28] sm:$0xff]
    %v1240 = vld [vmem:[#allocation2 + $0x30] sm:$0xff]
    %v1241 = vld [vmem:[#allocation2 + $0x38] sm:$0xff]
    %v1370 = vunpack.c.l.b16 %v808
    %v1371 = vunpack.c.h.b16 %v808
    %v1372 = vunpack.c.l.b16 %v809
    %v1373 = vunpack.c.h.b16 %v809
    %v1374 = vunpack.c.l.b16 %v810
    %v1375 = vunpack.c.h.b16 %v810
    %v1376 = vunpack.c.l.b16 %v811
    %v1377 = vunpack.c.h.b16 %v811
    %v1378 = vunpack.c.l.b16 %v812
    %v1379 = vunpack.c.h.b16 %v812
    %v1380 = vunpack.c.l.b16 %v813
    %v1381 = vunpack.c.h.b16 %v813
    %v1382 = vunpack.c.l.b16 %v814
    %v1383 = vunpack.c.h.b16 %v814
    %v1384 = vunpack.c.l.b16 %v815
    %v1385 = vunpack.c.h.b16 %v815
    %v1386 = vunpack.c.l.b16 %v816
    %v1387 = vunpack.c.h.b16 %v816
    %v1388 = vunpack.c.l.b16 %v817
    %v1389 = vunpack.c.h.b16 %v817
    %v1390 = vunpack.c.l.b16 %v818
    %v1391 = vunpack.c.h.b16 %v818
    %v1392 = vunpack.c.l.b16 %v819
    %v1393 = vunpack.c.h.b16 %v819
    %v1394 = vunpack.c.l.b16 %v820
    %v1395 = vunpack.c.h.b16 %v820
    %v1396 = vunpack.c.l.b16 %v821
    %v1397 = vunpack.c.h.b16 %v821
    %v1398 = vunpack.c.l.b16 %v822
    %v1399 = vunpack.c.h.b16 %v822
    %v1400 = vunpack.c.l.b16 %v823
    %v1401 = vunpack.c.h.b16 %v823
    %v1402 = vunpack.c.l.b16 %v824
    %v1403 = vunpack.c.h.b16 %v824
    %v1404 = vunpack.c.l.b16 %v825
    %v1405 = vunpack.c.h.b16 %v825
    %v1406 = vunpack.c.l.b16 %v826
    %v1407 = vunpack.c.h.b16 %v826
    %v1408 = vunpack.c.l.b16 %v827
    %v1409 = vunpack.c.h.b16 %v827
    %v1410 = vunpack.c.l.b16 %v828
    %v1411 = vunpack.c.h.b16 %v828
    %v1412 = vunpack.c.l.b16 %v829
    %v1413 = vunpack.c.h.b16 %v829
    %v1414 = vunpack.c.l.b16 %v830
    %v1415 = vunpack.c.h.b16 %v830
    %v1416 = vunpack.c.l.b16 %v831
    %v1417 = vunpack.c.h.b16 %v831
    %v1418 = vunpack.c.l.b16 %v832
    %v1419 = vunpack.c.h.b16 %v832
    %v1420 = vunpack.c.l.b16 %v833
    %v1421 = vunpack.c.h.b16 %v833
    %v1422 = vunpack.c.l.b16 %v834
    %v1423 = vunpack.c.h.b16 %v834
    %v1424 = vunpack.c.l.b16 %v835
    %v1425 = vunpack.c.h.b16 %v835
    %v1426 = vunpack.c.l.b16 %v836
    %v1427 = vunpack.c.h.b16 %v836
    %v1428 = vunpack.c.l.b16 %v837
    %v1429 = vunpack.c.h.b16 %v837
    %v1430 = vunpack.c.l.b16 %v838
    %v1431 = vunpack.c.h.b16 %v838
    %v1432 = vunpack.c.l.b16 %v839
    %v1433 = vunpack.c.h.b16 %v839
    %v1434 = vunpack.c.l.b16 %v840
    %v1435 = vunpack.c.h.b16 %v840
    %v1436 = vunpack.c.l.b16 %v841
    %v1437 = vunpack.c.h.b16 %v841
    %v1438 = vunpack.c.l.b16 %v842
    %v1439 = vunpack.c.h.b16 %v842
    %v1440 = vunpack.c.l.b16 %v843
    %v1441 = vunpack.c.h.b16 %v843
    %v1442 = vunpack.c.l.b16 %v844
    %v1443 = vunpack.c.h.b16 %v844
    %v1444 = vunpack.c.l.b16 %v845
    %v1445 = vunpack.c.h.b16 %v845
    %v1446 = vunpack.c.l.b16 %v846
    %v1447 = vunpack.c.h.b16 %v846
    %v1448 = vunpack.c.l.b16 %v847
    %v1449 = vunpack.c.h.b16 %v847
    %v1450 = vunpack.c.l.b16 %v848
    %v1451 = vunpack.c.h.b16 %v848
    %v1452 = vunpack.c.l.b16 %v849
    %v1453 = vunpack.c.h.b16 %v849
    %v1454 = vunpack.c.l.b16 %v850
    %v1455 = vunpack.c.h.b16 %v850
    %v1456 = vunpack.c.l.b16 %v851
    %v1457 = vunpack.c.h.b16 %v851
    %v1458 = vunpack.c.l.b16 %v852
    %v1459 = vunpack.c.h.b16 %v852
    %v1460 = vunpack.c.l.b16 %v853
    %v1461 = vunpack.c.h.b16 %v853
    %v1462 = vunpack.c.l.b16 %v854
    %v1463 = vunpack.c.h.b16 %v854
    %v1464 = vunpack.c.l.b16 %v855
    %v1465 = vunpack.c.h.b16 %v855
    %v1466 = vunpack.c.l.b16 %v856
    %v1467 = vunpack.c.h.b16 %v856
    %v1468 = vunpack.c.l.b16 %v857
    %v1469 = vunpack.c.h.b16 %v857
    %v1470 = vunpack.c.l.b16 %v858
    %v1471 = vunpack.c.h.b16 %v858
    %v1472 = vunpack.c.l.b16 %v859
    %v1473 = vunpack.c.h.b16 %v859
    %v1474 = vunpack.c.l.b16 %v860
    %v1475 = vunpack.c.h.b16 %v860
    %v1476 = vunpack.c.l.b16 %v861
    %v1477 = vunpack.c.h.b16 %v861
    %v1478 = vunpack.c.l.b16 %v862
    %v1479 = vunpack.c.h.b16 %v862
    %v1480 = vunpack.c.l.b16 %v863
    %v1481 = vunpack.c.h.b16 %v863
    %v1482 = vunpack.c.l.b16 %v864
    %v1483 = vunpack.c.h.b16 %v864
    %v1484 = vunpack.c.l.b16 %v865
    %v1485 = vunpack.c.h.b16 %v865
    %v1486 = vunpack.c.l.b16 %v866
    %v1487 = vunpack.c.h.b16 %v866
    %v1488 = vunpack.c.l.b16 %v867
    %v1489 = vunpack.c.h.b16 %v867
    %v1490 = vunpack.c.l.b16 %v868
    %v1491 = vunpack.c.h.b16 %v868
    %v1492 = vunpack.c.l.b16 %v869
    %v1493 = vunpack.c.h.b16 %v869
    %v1494 = vunpack.c.l.b16 %v870
    %v1495 = vunpack.c.h.b16 %v870
    %v1496 = vunpack.c.l.b16 %v871
    %v1497 = vunpack.c.h.b16 %v871
    %v1498 = vunpack.c.l.b16 %v872
    %v1499 = vunpack.c.h.b16 %v872
    %v1500 = vunpack.c.l.b16 %v873
    %v1501 = vunpack.c.h.b16 %v873
    %v1502 = vunpack.c.l.b16 %v874
    %v1503 = vunpack.c.h.b16 %v874
    %v1504 = vunpack.c.l.b16 %v875
    %v1505 = vunpack.c.h.b16 %v875
    %v1506 = vunpack.c.l.b16 %v876
    %v1507 = vunpack.c.h.b16 %v876
    %v1508 = vunpack.c.l.b16 %v877
    %v1509 = vunpack.c.h.b16 %v877
    %v1510 = vunpack.c.l.b16 %v878
    %v1511 = vunpack.c.h.b16 %v878
    %v1512 = vunpack.c.l.b16 %v879
    %v1513 = vunpack.c.h.b16 %v879
    %v1514 = vunpack.c.l.b16 %v880
    %v1515 = vunpack.c.h.b16 %v880
    %v1516 = vunpack.c.l.b16 %v881
    %v1517 = vunpack.c.h.b16 %v881
    %v1518 = vunpack.c.l.b16 %v882
    %v1519 = vunpack.c.h.b16 %v882
    %v1520 = vunpack.c.l.b16 %v883
    %v1521 = vunpack.c.h.b16 %v883
    %v1522 = vunpack.c.l.b16 %v884
    %v1523 = vunpack.c.h.b16 %v884
    %v1524 = vunpack.c.l.b16 %v885
    %v1525 = vunpack.c.h.b16 %v885
    %v1526 = vunpack.c.l.b16 %v886
    %v1527 = vunpack.c.h.b16 %v886
    %v1528 = vunpack.c.l.b16 %v887
    %v1529 = vunpack.c.h.b16 %v887
    %v1530 = vunpack.c.l.b16 %v888
    %v1531 = vunpack.c.h.b16 %v888
    %v1532 = vunpack.c.l.b16 %v889
    %v1533 = vunpack.c.h.b16 %v889
    %v1534 = vunpack.c.l.b16 %v890
    %v1535 = vunpack.c.h.b16 %v890
    %v1536 = vunpack.c.l.b16 %v891
    %v1537 = vunpack.c.h.b16 %v891
    %v1538 = vunpack.c.l.b16 %v892
    %v1539 = vunpack.c.h.b16 %v892
    %v1540 = vunpack.c.l.b16 %v893
    %v1541 = vunpack.c.h.b16 %v893
    %v1542 = vunpack.c.l.b16 %v894
    %v1543 = vunpack.c.h.b16 %v894
    %v1544 = vunpack.c.l.b16 %v895
    %v1545 = vunpack.c.h.b16 %v895
    %v1546 = vunpack.c.l.b16 %v896
    %v1547 = vunpack.c.h.b16 %v896
    %v1548 = vunpack.c.l.b16 %v897
    %v1549 = vunpack.c.h.b16 %v897
    %v1550 = vunpack.c.l.b16 %v898
    %v1551 = vunpack.c.h.b16 %v898
    %v1552 = vunpack.c.l.b16 %v899
    %v1553 = vunpack.c.h.b16 %v899
    %v1554 = vunpack.c.l.b16 %v900
    %v1555 = vunpack.c.h.b16 %v900
    %v1556 = vunpack.c.l.b16 %v901
    %v1557 = vunpack.c.h.b16 %v901
    %v1558 = vunpack.c.l.b16 %v902
    %v1559 = vunpack.c.h.b16 %v902
    %v1560 = vunpack.c.l.b16 %v903
    %v1561 = vunpack.c.h.b16 %v903
    %v1562 = vunpack.c.l.b16 %v904
    %v1563 = vunpack.c.h.b16 %v904
    %v1564 = vunpack.c.l.b16 %v905
    %v1565 = vunpack.c.h.b16 %v905
    %v1566 = vunpack.c.l.b16 %v906
    %v1567 = vunpack.c.h.b16 %v906
    %v1568 = vunpack.c.l.b16 %v907
    %v1569 = vunpack.c.h.b16 %v907
    %v1570 = vunpack.c.l.b16 %v908
    %v1571 = vunpack.c.h.b16 %v908
    %v1572 = vunpack.c.l.b16 %v909
    %v1573 = vunpack.c.h.b16 %v909
    %v1574 = vunpack.c.l.b16 %v910
    %v1575 = vunpack.c.h.b16 %v910
    %v1576 = vunpack.c.l.b16 %v911
    %v1577 = vunpack.c.h.b16 %v911
    %v1578 = vunpack.c.l.b16 %v912
    %v1579 = vunpack.c.h.b16 %v912
    %v1580 = vunpack.c.l.b16 %v913
    %v1581 = vunpack.c.h.b16 %v913
    %v1582 = vunpack.c.l.b16 %v914
    %v1583 = vunpack.c.h.b16 %v914
    %v1584 = vunpack.c.l.b16 %v915
    %v1585 = vunpack.c.h.b16 %v915
    %v1586 = vunpack.c.l.b16 %v916
    %v1587 = vunpack.c.h.b16 %v916
    %v1588 = vunpack.c.l.b16 %v917
    %v1589 = vunpack.c.h.b16 %v917
    %v1590 = vunpack.c.l.b16 %v918
    %v1591 = vunpack.c.h.b16 %v918
    %v1592 = vunpack.c.l.b16 %v919
    %v1593 = vunpack.c.h.b16 %v919
    %v1594 = vunpack.c.l.b16 %v920
    %v1595 = vunpack.c.h.b16 %v920
    %v1596 = vunpack.c.l.b16 %v921
    %v1597 = vunpack.c.h.b16 %v921
    %v1598 = vunpack.c.l.b16 %v922
    %v1599 = vunpack.c.h.b16 %v922
    %v1600 = vunpack.c.l.b16 %v923
    %v1601 = vunpack.c.h.b16 %v923
    %v1602 = vunpack.c.l.b16 %v924
    %v1603 = vunpack.c.h.b16 %v924
    %v1604 = vunpack.c.l.b16 %v925
    %v1605 = vunpack.c.h.b16 %v925
    %v1606 = vunpack.c.l.b16 %v926
    %v1607 = vunpack.c.h.b16 %v926
    %v1608 = vunpack.c.l.b16 %v927
    %v1609 = vunpack.c.h.b16 %v927
    %v1610 = vunpack.c.l.b16 %v928
    %v1611 = vunpack.c.h.b16 %v928
    %v1612 = vunpack.c.l.b16 %v929
    %v1613 = vunpack.c.h.b16 %v929
    %v1614 = vunpack.c.l.b16 %v930
    %v1615 = vunpack.c.h.b16 %v930
    %v1616 = vunpack.c.l.b16 %v931
    %v1617 = vunpack.c.h.b16 %v931
    %v1618 = vunpack.c.l.b16 %v932
    %v1619 = vunpack.c.h.b16 %v932
    %v1620 = vunpack.c.l.b16 %v933
    %v1621 = vunpack.c.h.b16 %v933
    %v1622 = vunpack.c.l.b16 %v934
    %v1623 = vunpack.c.h.b16 %v934
    %v1624 = vunpack.c.l.b16 %v935
    %v1625 = vunpack.c.h.b16 %v935
    %v1626 = vpack.c.b16 %v1378, %v1370
    %v1627 = vpack.c.b16 %v1379, %v1371
    %v1628 = vpack.c.b16 %v1380, %v1372
    %v1629 = vpack.c.b16 %v1381, %v1373
    %v1630 = vpack.c.b16 %v1382, %v1374
    %v1631 = vpack.c.b16 %v1383, %v1375
    %v1632 = vpack.c.b16 %v1384, %v1376
    %v1633 = vpack.c.b16 %v1385, %v1377
    %v1634 = vpack.c.b16 %v1394, %v1386
    %v1635 = vpack.c.b16 %v1395, %v1387
    %v1636 = vpack.c.b16 %v1396, %v1388
    %v1637 = vpack.c.b16 %v1397, %v1389
    %v1638 = vpack.c.b16 %v1398, %v1390
    %v1639 = vpack.c.b16 %v1399, %v1391
    %v1640 = vpack.c.b16 %v1400, %v1392
    %v1641 = vpack.c.b16 %v1401, %v1393
    %v1642 = vpack.c.b16 %v1410, %v1402
    %v1643 = vpack.c.b16 %v1411, %v1403
    %v1644 = vpack.c.b16 %v1412, %v1404
    %v1645 = vpack.c.b16 %v1413, %v1405
    %v1646 = vpack.c.b16 %v1414, %v1406
    %v1647 = vpack.c.b16 %v1415, %v1407
    %v1648 = vpack.c.b16 %v1416, %v1408
    %v1649 = vpack.c.b16 %v1417, %v1409
    %v1650 = vpack.c.b16 %v1426, %v1418
    %v1651 = vpack.c.b16 %v1427, %v1419
    %v1652 = vpack.c.b16 %v1428, %v1420
    %v1653 = vpack.c.b16 %v1429, %v1421
    %v1654 = vpack.c.b16 %v1430, %v1422
    %v1655 = vpack.c.b16 %v1431, %v1423
    %v1656 = vpack.c.b16 %v1432, %v1424
    %v1657 = vpack.c.b16 %v1433, %v1425
    %v1658 = vpack.c.b16 %v1442, %v1434
    %v1659 = vpack.c.b16 %v1443, %v1435
    %v1660 = vpack.c.b16 %v1444, %v1436
    %v1661 = vpack.c.b16 %v1445, %v1437
    %v1662 = vpack.c.b16 %v1446, %v1438
    %v1663 = vpack.c.b16 %v1447, %v1439
    %v1664 = vpack.c.b16 %v1448, %v1440
    %v1665 = vpack.c.b16 %v1449, %v1441
    %v1666 = vpack.c.b16 %v1458, %v1450
    %v1667 = vpack.c.b16 %v1459, %v1451
    %v1668 = vpack.c.b16 %v1460, %v1452
    %v1669 = vpack.c.b16 %v1461, %v1453
    %v1670 = vpack.c.b16 %v1462, %v1454
    %v1671 = vpack.c.b16 %v1463, %v1455
    %v1672 = vpack.c.b16 %v1464, %v1456
    %v1673 = vpack.c.b16 %v1465, %v1457
    %v1674 = vpack.c.b16 %v1474, %v1466
    %v1675 = vpack.c.b16 %v1475, %v1467
    %v1676 = vpack.c.b16 %v1476, %v1468
    %v1677 = vpack.c.b16 %v1477, %v1469
    %v1678 = vpack.c.b16 %v1478, %v1470
    %v1679 = vpack.c.b16 %v1479, %v1471
    %v1680 = vpack.c.b16 %v1480, %v1472
    %v1681 = vpack.c.b16 %v1481, %v1473
    %v1682 = vpack.c.b16 %v1490, %v1482
    %v1683 = vpack.c.b16 %v1491, %v1483
    %v1684 = vpack.c.b16 %v1492, %v1484
    %v1685 = vpack.c.b16 %v1493, %v1485
    %v1686 = vpack.c.b16 %v1494, %v1486
    %v1687 = vpack.c.b16 %v1495, %v1487
    %v1688 = vpack.c.b16 %v1496, %v1488
    %v1689 = vpack.c.b16 %v1497, %v1489
    %v1690 = vpack.c.b16 %v1506, %v1498
    %v1691 = vpack.c.b16 %v1507, %v1499
    %v1692 = vpack.c.b16 %v1508, %v1500
    %v1693 = vpack.c.b16 %v1509, %v1501
    %v1694 = vpack.c.b16 %v1510, %v1502
    %v1695 = vpack.c.b16 %v1511, %v1503
    %v1696 = vpack.c.b16 %v1512, %v1504
    %v1697 = vpack.c.b16 %v1513, %v1505
    %v1698 = vpack.c.b16 %v1522, %v1514
    %v1699 = vpack.c.b16 %v1523, %v1515
    %v1700 = vpack.c.b16 %v1524, %v1516
    %v1701 = vpack.c.b16 %v1525, %v1517
    %v1702 = vpack.c.b16 %v1526, %v1518
    %v1703 = vpack.c.b16 %v1527, %v1519
    %v1704 = vpack.c.b16 %v1528, %v1520
    %v1705 = vpack.c.b16 %v1529, %v1521
    %v1706 = vpack.c.b16 %v1538, %v1530
    %v1707 = vpack.c.b16 %v1539, %v1531
    %v1708 = vpack.c.b16 %v1540, %v1532
    %v1709 = vpack.c.b16 %v1541, %v1533
    %v1710 = vpack.c.b16 %v1542, %v1534
    %v1711 = vpack.c.b16 %v1543, %v1535
    %v1712 = vpack.c.b16 %v1544, %v1536
    %v1713 = vpack.c.b16 %v1545, %v1537
    %v1714 = vpack.c.b16 %v1554, %v1546
    %v1715 = vpack.c.b16 %v1555, %v1547
    %v1716 = vpack.c.b16 %v1556, %v1548
    %v1717 = vpack.c.b16 %v1557, %v1549
    %v1718 = vpack.c.b16 %v1558, %v1550
    %v1719 = vpack.c.b16 %v1559, %v1551
    %v1720 = vpack.c.b16 %v1560, %v1552
    %v1721 = vpack.c.b16 %v1561, %v1553
    %v1722 = vpack.c.b16 %v1570, %v1562
    %v1723 = vpack.c.b16 %v1571, %v1563
    %v1724 = vpack.c.b16 %v1572, %v1564
    %v1725 = vpack.c.b16 %v1573, %v1565
    %v1726 = vpack.c.b16 %v1574, %v1566
    %v1727 = vpack.c.b16 %v1575, %v1567
    %v1728 = vpack.c.b16 %v1576, %v1568
    %v1729 = vpack.c.b16 %v1577, %v1569
    %v1730 = vpack.c.b16 %v1586, %v1578
    %v1731 = vpack.c.b16 %v1587, %v1579
    %v1732 = vpack.c.b16 %v1588, %v1580
    %v1733 = vpack.c.b16 %v1589, %v1581
    %v1734 = vpack.c.b16 %v1590, %v1582
    %v1735 = vpack.c.b16 %v1591, %v1583
    %v1736 = vpack.c.b16 %v1592, %v1584
    %v1737 = vpack.c.b16 %v1593, %v1585
    %v1738 = vpack.c.b16 %v1602, %v1594
    %v1739 = vpack.c.b16 %v1603, %v1595
    %v1740 = vpack.c.b16 %v1604, %v1596
    %v1741 = vpack.c.b16 %v1605, %v1597
    %v1742 = vpack.c.b16 %v1606, %v1598
    %v1743 = vpack.c.b16 %v1607, %v1599
    %v1744 = vpack.c.b16 %v1608, %v1600
    %v1745 = vpack.c.b16 %v1609, %v1601
    %v1746 = vpack.c.b16 %v1618, %v1610
    %v1747 = vpack.c.b16 %v1619, %v1611
    %v1748 = vpack.c.b16 %v1620, %v1612
    %v1749 = vpack.c.b16 %v1621, %v1613
    %v1750 = vpack.c.b16 %v1622, %v1614
    %v1751 = vpack.c.b16 %v1623, %v1615
    %v1752 = vpack.c.b16 %v1624, %v1616
    %v1753 = vpack.c.b16 %v1625, %v1617
    %1882 = vmatprep.subr.bf16.mxu0 %v1627
    %1883 = vmatpush1.bf16.msra.mxu0 %v1626
    %1884 = vmatprep.subr.bf16.mxu0 %v1635
    %1885 = vmatpush1.bf16.msra.mxu0 %v1634
    %1886 = vmatprep.subr.bf16.mxu0 %v1643
    %1887 = vmatpush1.bf16.msra.mxu0 %v1642
    %1888 = vmatprep.subr.bf16.mxu0 %v1651
    %1889 = vmatpush1.bf16.msra.mxu0 %v1650
    %1890 = vmatprep.subr.bf16.mxu0 %v1659
    %1891 = vmatpush1.bf16.msra.mxu0 %v1658
    %1892 = vmatprep.subr.bf16.mxu0 %v1667
    %1893 = vmatpush1.bf16.msra.mxu0 %v1666
    %1894 = vmatprep.subr.bf16.mxu0 %v1675
    %1895 = vmatpush1.bf16.msra.mxu0 %v1674
    %1896 = vmatprep.subr.bf16.mxu0 %v1683
    %1897 = vmatpush1.bf16.msra.mxu0 %v1682
    %1898 = vmatprep.subr.bf16.mxu0 %v1691
    %1899 = vmatpush1.bf16.msra.mxu0 %v1690
    %1900 = vmatprep.subr.bf16.mxu0 %v1699
    %1901 = vmatpush1.bf16.msra.mxu0 %v1698
    %1902 = vmatprep.subr.bf16.mxu0 %v1707
    %1903 = vmatpush1.bf16.msra.mxu0 %v1706
    %1904 = vmatprep.subr.bf16.mxu0 %v1715
    %1905 = vmatpush1.bf16.msra.mxu0 %v1714
    %1906 = vmatprep.subr.bf16.mxu0 %v1723
    %1907 = vmatpush1.bf16.msra.mxu0 %v1722
    %1908 = vmatprep.subr.bf16.mxu0 %v1731
    %1909 = vmatpush1.bf16.msra.mxu0 %v1730
    %1910 = vmatprep.subr.bf16.mxu0 %v1739
    %1911 = vmatpush1.bf16.msra.mxu0 %v1738
    %1912 = vmatprep.subr.bf16.mxu0 %v1747
    %1913 = vmatpush1.bf16.msra.mxu0 %v1746
    %1914 = vmatprep.mubr.bf16.mxu0 0
    %1915 = vmatmul.mubr.bf16.gmra.mrb[0].mxu0 0
    %v1916 = vpop.f32.mrb[0].mxu0
    %v1917 = vadd.f32 0.0, %v1916
    %v1918 = vpop.f32.mrb[0].mxu0
    %v1919 = vadd.f32 0.0, %v1918
    %v1920 = vpop.f32.mrb[0].mxu0
    %v1921 = vpop.f32.mrb[0].mxu0
    %1922 = vdwg.mxu0
    %1923 = vmatprep.subr.bf16.mxu0 %v1629
    %1924 = vmatpush1.bf16.msra.mxu0 %v1628
    %1925 = vmatprep.subr.bf16.mxu0 %v1637
    %1926 = vmatpush1.bf16.msra.mxu0 %v1636
    %1927 = vmatprep.subr.bf16.mxu0 %v1645
    %1928 = vmatpush1.bf16.msra.mxu0 %v1644
    %1929 = vmatprep.subr.bf16.mxu0 %v1653
    %1930 = vmatpush1.bf16.msra.mxu0 %v1652
    %1931 = vmatprep.subr.bf16.mxu0 %v1661
    %1932 = vmatpush1.bf16.msra.mxu0 %v1660
    %1933 = vmatprep.subr.bf16.mxu0 %v1669
    %1934 = vmatpush1.bf16.msra.mxu0 %v1668
    %1935 = vmatprep.subr.bf16.mxu0 %v1677
    %1936 = vmatpush1.bf16.msra.mxu0 %v1676
    %1937 = vmatprep.subr.bf16.mxu0 %v1685
    %1938 = vmatpush1.bf16.msra.mxu0 %v1684
    %1939 = vmatprep.subr.bf16.mxu0 %v1693
    %1940 = vmatpush1.bf16.msra.mxu0 %v1692
    %1941 = vmatprep.subr.bf16.mxu0 %v1701
    %1942 = vmatpush1.bf16.msra.mxu0 %v1700
    %1943 = vmatprep.subr.bf16.mxu0 %v1709
    %1944 = vmatpush1.bf16.msra.mxu0 %v1708
    %1945 = vmatprep.subr.bf16.mxu0 %v1717
    %1946 = vmatpush1.bf16.msra.mxu0 %v1716
    %1947 = vmatprep.subr.bf16.mxu0 %v1725
    %1948 = vmatpush1.bf16.msra.mxu0 %v1724
    %1949 = vmatprep.subr.bf16.mxu0 %v1733
    %1950 = vmatpush1.bf16.msra.mxu0 %v1732
    %1951 = vmatprep.subr.bf16.mxu0 %v1741
    %1952 = vmatpush1.bf16.msra.mxu0 %v1740
    %1953 = vmatprep.subr.bf16.mxu0 %v1749
    %1954 = vmatpush1.bf16.msra.mxu0 %v1748
    %1955 = vmatprep.mubr.bf16.mxu0 0
    %1956 = vmatmul.mubr.bf16.gmra.mrb[0].mxu0 0
    %v1957 = vpop.f32.mrb[0].mxu0
    %v1958 = vadd.f32 0.0, %v1957
    %v1959 = vpop.f32.mrb[0].mxu0
    %v1960 = vadd.f32 0.0, %v1959
    %v1961 = vpop.f32.mrb[0].mxu0
    %v1962 = vpop.f32.mrb[0].mxu0
    %1963 = vdwg.mxu0
    %1964 = vmatprep.subr.bf16.mxu0 %v1631
    %1965 = vmatpush1.bf16.msra.mxu0 %v1630
    %1966 = vmatprep.subr.bf16.mxu0 %v1639
    %1967 = vmatpush1.bf16.msra.mxu0 %v1638
    %1968 = vmatprep.subr.bf16.mxu0 %v1647
    %1969 = vmatpush1.bf16.msra.mxu0 %v1646
    %1970 = vmatprep.subr.bf16.mxu0 %v1655
    %1971 = vmatpush1.bf16.msra.mxu0 %v1654
    %1972 = vmatprep.subr.bf16.mxu0 %v1663
    %1973 = vmatpush1.bf16.msra.mxu0 %v1662
    %1974 = vmatprep.subr.bf16.mxu0 %v1671
    %1975 = vmatpush1.bf16.msra.mxu0 %v1670
    %1976 = vmatprep.subr.bf16.mxu0 %v1679
    %1977 = vmatpush1.bf16.msra.mxu0 %v1678
    %1978 = vmatprep.subr.bf16.mxu0 %v1687
    %1979 = vmatpush1.bf16.msra.mxu0 %v1686
    %1980 = vmatprep.subr.bf16.mxu0 %v1695
    %1981 = vmatpush1.bf16.msra.mxu0 %v1694
    %1982 = vmatprep.subr.bf16.mxu0 %v1703
    %1983 = vmatpush1.bf16.msra.mxu0 %v1702
    %1984 = vmatprep.subr.bf16.mxu0 %v1711
    %1985 = vmatpush1.bf16.msra.mxu0 %v1710
    %1986 = vmatprep.subr.bf16.mxu0 %v1719
    %1987 = vmatpush1.bf16.msra.mxu0 %v1718
    %1988 = vmatprep.subr.bf16.mxu0 %v1727
    %1989 = vmatpush1.bf16.msra.mxu0 %v1726
    %1990 = vmatprep.subr.bf16.mxu0 %v1735
    %1991 = vmatpush1.bf16.msra.mxu0 %v1734
    %1992 = vmatprep.subr.bf16.mxu0 %v1743
    %1993 = vmatpush1.bf16.msra.mxu0 %v1742
    %1994 = vmatprep.subr.bf16.mxu0 %v1751
    %1995 = vmatpush1.bf16.msra.mxu0 %v1750
    %1996 = vmatprep.mubr.bf16.mxu0 0
    %1997 = vmatmul.mubr.bf16.gmra.mrb[0].mxu0 0
    %v1998 = vpop.f32.mrb[0].mxu0
    %v1999 = vadd.f32 0.0, %v1998
    %v2000 = vpop.f32.mrb[0].mxu0
    %v2001 = vadd.f32 0.0, %v2000
    %v2002 = vpop.f32.mrb[0].mxu0
    %v2003 = vpop.f32.mrb[0].mxu0
    %2004 = vdwg.mxu0
    %2005 = vmatprep.subr.bf16.mxu0 %v1633
    %2006 = vmatpush1.bf16.msra.mxu0 %v1632
    %2007 = vmatprep.subr.bf16.mxu0 %v1641
    %2008 = vmatpush1.bf16.msra.mxu0 %v1640
    %2009 = vmatprep.subr.bf16.mxu0 %v1649
    %2010 = vmatpush1.bf16.msra.mxu0 %v1648
    %2011 = vmatprep.subr.bf16.mxu0 %v1657
    %2012 = vmatpush1.bf16.msra.mxu0 %v1656
    %2013 = vmatprep.subr.bf16.mxu0 %v1665
    %2014 = vmatpush1.bf16.msra.mxu0 %v1664
    %2015 = vmatprep.subr.bf16.mxu0 %v1673
    %2016 = vmatpush1.bf16.msra.mxu0 %v1672
    %2017 = vmatprep.subr.bf16.mxu0 %v1681
    %2018 = vmatpush1.bf16.msra.mxu0 %v1680
    %2019 = vmatprep.subr.bf16.mxu0 %v1689
    %2020 = vmatpush1.bf16.msra.mxu0 %v1688
    %2021 = vmatprep.subr.bf16.mxu0 %v1697
    %2022 = vmatpush1.bf16.msra.mxu0 %v1696
    %2023 = vmatprep.subr.bf16.mxu0 %v1705
    %2024 = vmatpush1.bf16.msra.mxu0 %v1704
    %2025 = vmatprep.subr.bf16.mxu0 %v1713
    %2026 = vmatpush1.bf16.msra.mxu0 %v1712
    %2027 = vmatprep.subr.bf16.mxu0 %v1721
    %2028 = vmatpush1.bf16.msra.mxu0 %v1720
    %2029 = vmatprep.subr.bf16.mxu0 %v1729
    %2030 = vmatpush1.bf16.msra.mxu0 %v1728
    %2031 = vmatprep.subr.bf16.mxu0 %v1737
    %2032 = vmatpush1.bf16.msra.mxu0 %v1736
    %2033 = vmatprep.subr.bf16.mxu0 %v1745
    %2034 = vmatpush1.bf16.msra.mxu0 %v1744
    %2035 = vmatprep.subr.bf16.mxu0 %v1753
    %2036 = vmatpush1.bf16.msra.mxu0 %v1752
    %2037 = vmatprep.mubr.bf16.mxu0 0
    %2038 = vmatmul.mubr.bf16.gmra.mrb[0].mxu0 0
    %v2039 = vpop.f32.mrb[0].mxu0
    %v2040 = vadd.f32 0.0, %v2039
    %v2041 = vpop.f32.mrb[0].mxu0
    %v2042 = vadd.f32 0.0, %v2041
    %v2043 = vpop.f32.mrb[0].mxu0
    %v2044 = vpop.f32.mrb[0].mxu0
    %2045 = vdwg.mxu0
    %v2046 = vadd.f32 %v1234, %v1917
    %v2047 = vadd.f32 %v1235, %v1919
    %v2048 = vadd.f32 %v1236, %v1958
    %v2049 = vadd.f32 %v1237, %v1960
    %v2050 = vadd.f32 %v1238, %v1999
    %v2051 = vadd.f32 %v1239, %v2001
    %v2052 = vadd.f32 %v1240, %v2040
    %v2053 = vadd.f32 %v1241, %v2042
    %v2054 = vmul.f32 %v2046, 0.5
    %v2055 = vmul.f32 %v2047, 0.5
    %v2056 = vmul.f32 %v2048, 0.5
    %v2057 = vmul.f32 %v2049, 0.5
    %v2058 = vmul.f32 %v2050, 0.5
    %v2059 = vmul.f32 %v2051, 0.5
    %v2060 = vtanh.pop %v2054
    %v2061 = vtanh.pop %v2055
    %v2062 = vtanh.pop %v2056
    %v2063 = vtanh.pop %v2057
    %v2064 = vtanh.pop %v2058
    %v2065 = vtanh.pop %v2059
    %v2066 = vadd.f32 %v2060, 1.0
    %v2067 = vadd.f32 %v2061, 1.0
    %v2068 = vadd.f32 %v2062, 1.0
    %v2069 = vadd.f32 %v2063, 1.0
    %v2070 = vadd.f32 %v2064, 1.0
    %v2071 = vadd.f32 %v2065, 1.0
    %v2072 = vmul.f32 %v2066, 0.5
    %v2073 = vmul.f32 %v2067, 0.5
    %v2074 = vmul.f32 %v2068, 0.5
    %v2075 = vmul.f32 %v2069, 0.5
    %v2076 = vmul.f32 %v2070, 0.5
    %v2077 = vmul.f32 %v2071, 0.5
    %v2078 = vtanh.pop %v2052
    %v2079 = vtanh.pop %v2053
    %v2080 = vmul.f32 %v2074, 0.0
    %v2081 = vmul.f32 %v2075, 0.0
    %v2082 = vmul.f32 %v2072, %v2078
    %v2083 = vmul.f32 %v2073, %v2079
    %v2084 = vadd.f32 %v2080, %v2082
    %v2085 = vadd.f32 %v2081, %v2083
    %v2086 = vtanh.pop %v2084
    %v2087 = vtanh.pop %v2085
    %v2088 = vmul.f32 %v2076, %v2086
    %v2089 = vmul.f32 %v2077, %v2087
    %v2090 = vpack.c.bf16 %v2088, %v2088
    %v2091 = vpack.c.bf16 %v2089, %v2089
    %v2220 = vunpack.c.l.b16 %v936
    %v2221 = vunpack.c.h.b16 %v936
    %v2222 = vunpack.c.l.b16 %v937
    %v2223 = vunpack.c.h.b16 %v937
    %v2224 = vunpack.c.l.b16 %v938
    %v2225 = vunpack.c.h.b16 %v938
    %v2226 = vunpack.c.l.b16 %v939
    %v2227 = vunpack.c.h.b16 %v939
    %v2228 = vunpack.c.l.b16 %v940
    %v2229 = vunpack.c.h.b16 %v940
    %v2230 = vunpack.c.l.b16 %v941
    %v2231 = vunpack.c.h.b16 %v941
    %v2232 = vunpack.c.l.b16 %v942
    %v2233 = vunpack.c.h.b16 %v942
    %v2234 = vunpack.c.l.b16 %v943
    %v2235 = vunpack.c.h.b16 %v943
    %v2236 = vunpack.c.l.b16 %v944
    %v2237 = vunpack.c.h.b16 %v944
    %v2238 = vunpack.c.l.b16 %v945
    %v2239 = vunpack.c.h.b16 %v945
    %v2240 = vunpack.c.l.b16 %v946
    %v2241 = vunpack.c.h.b16 %v946
    %v2242 = vunpack.c.l.b16 %v947
    %v2243 = vunpack.c.h.b16 %v947
    %v2244 = vunpack.c.l.b16 %v948
    %v2245 = vunpack.c.h.b16 %v948
    %v2246 = vunpack.c.l.b16 %v949
    %v2247 = vunpack.c.h.b16 %v949
    %v2248 = vunpack.c.l.b16 %v950
    %v2249 = vunpack.c.h.b16 %v950
    %v2250 = vunpack.c.l.b16 %v951
    %v2251 = vunpack.c.h.b16 %v951
    %v2252 = vunpack.c.l.b16 %v952
    %v2253 = vunpack.c.h.b16 %v952
    %v2254 = vunpack.c.l.b16 %v953
    %v2255 = vunpack.c.h.b16 %v953
    %v2256 = vunpack.c.l.b16 %v954
    %v2257 = vunpack.c.h.b16 %v954
    %v2258 = vunpack.c.l.b16 %v955
    %v2259 = vunpack.c.h.b16 %v955
    %v2260 = vunpack.c.l.b16 %v956
    %v2261 = vunpack.c.h.b16 %v956
    %v2262 = vunpack.c.l.b16 %v957
    %v2263 = vunpack.c.h.b16 %v957
    %v2264 = vunpack.c.l.b16 %v958
    %v2265 = vunpack.c.h.b16 %v958
    %v2266 = vunpack.c.l.b16 %v959
    %v2267 = vunpack.c.h.b16 %v959
    %v2268 = vunpack.c.l.b16 %v960
    %v2269 = vunpack.c.h.b16 %v960
    %v2270 = vunpack.c.l.b16 %v961
    %v2271 = vunpack.c.h.b16 %v961
    %v2272 = vunpack.c.l.b16 %v962
    %v2273 = vunpack.c.h.b16 %v962
    %v2274 = vunpack.c.l.b16 %v963
    %v2275 = vunpack.c.h.b16 %v963
    %v2276 = vunpack.c.l.b16 %v964
    %v2277 = vunpack.c.h.b16 %v964
    %v2278 = vunpack.c.l.b16 %v965
    %v2279 = vunpack.c.h.b16 %v965
    %v2280 = vunpack.c.l.b16 %v966
    %v2281 = vunpack.c.h.b16 %v966
    %v2282 = vunpack.c.l.b16 %v967
    %v2283 = vunpack.c.h.b16 %v967
    %v2284 = vunpack.c.l.b16 %v968
    %v2285 = vunpack.c.h.b16 %v968
    %v2286 = vunpack.c.l.b16 %v969
    %v2287 = vunpack.c.h.b16 %v969
    %v2288 = vunpack.c.l.b16 %v970
    %v2289 = vunpack.c.h.b16 %v970
    %v2290 = vunpack.c.l.b16 %v971
    %v2291 = vunpack.c.h.b16 %v971
    %v2292 = vunpack.c.l.b16 %v972
    %v2293 = vunpack.c.h.b16 %v972
    %v2294 = vunpack.c.l.b16 %v973
    %v2295 = vunpack.c.h.b16 %v973
    %v2296 = vunpack.c.l.b16 %v974
    %v2297 = vunpack.c.h.b16 %v974
    %v2298 = vunpack.c.l.b16 %v975
    %v2299 = vunpack.c.h.b16 %v975
    %v2300 = vunpack.c.l.b16 %v976
    %v2301 = vunpack.c.h.b16 %v976
    %v2302 = vunpack.c.l.b16 %v977
    %v2303 = vunpack.c.h.b16 %v977
    %v2304 = vunpack.c.l.b16 %v978
    %v2305 = vunpack.c.h.b16 %v978
    %v2306 = vunpack.c.l.b16 %v979
    %v2307 = vunpack.c.h.b16 %v979
    %v2308 = vunpack.c.l.b16 %v980
    %v2309 = vunpack.c.h.b16 %v980
    %v2310 = vunpack.c.l.b16 %v981
    %v2311 = vunpack.c.h.b16 %v981
    %v2312 = vunpack.c.l.b16 %v982
    %v2313 = vunpack.c.h.b16 %v982
    %v2314 = vunpack.c.l.b16 %v983
    %v2315 = vunpack.c.h.b16 %v983
    %v2316 = vunpack.c.l.b16 %v984
    %v2317 = vunpack.c.h.b16 %v984
    %v2318 = vunpack.c.l.b16 %v985
    %v2319 = vunpack.c.h.b16 %v985
    %v2320 = vunpack.c.l.b16 %v986
    %v2321 = vunpack.c.h.b16 %v986
    %v2322 = vunpack.c.l.b16 %v987
    %v2323 = vunpack.c.h.b16 %v987
    %v2324 = vunpack.c.l.b16 %v988
    %v2325 = vunpack.c.h.b16 %v988
    %v2326 = vunpack.c.l.b16 %v989
    %v2327 = vunpack.c.h.b16 %v989
    %v2328 = vunpack.c.l.b16 %v990
    %v2329 = vunpack.c.h.b16 %v990
    %v2330 = vunpack.c.l.b16 %v991
    %v2331 = vunpack.c.h.b16 %v991
    %v2332 = vunpack.c.l.b16 %v992
    %v2333 = vunpack.c.h.b16 %v992
    %v2334 = vunpack.c.l.b16 %v993
    %v2335 = vunpack.c.h.b16 %v993
    %v2336 = vunpack.c.l.b16 %v994
    %v2337 = vunpack.c.h.b16 %v994
    %v2338 = vunpack.c.l.b16 %v995
    %v2339 = vunpack.c.h.b16 %v995
    %v2340 = vunpack.c.l.b16 %v996
    %v2341 = vunpack.c.h.b16 %v996
    %v2342 = vunpack.c.l.b16 %v997
    %v2343 = vunpack.c.h.b16 %v997
    %v2344 = vunpack.c.l.b16 %v998
    %v2345 = vunpack.c.h.b16 %v998
    %v2346 = vunpack.c.l.b16 %v999
    %v2347 = vunpack.c.h.b16 %v999
    %v2348 = vunpack.c.l.b16 %v1000
    %v2349 = vunpack.c.h.b16 %v1000
    %v2350 = vunpack.c.l.b16 %v1001
    %v2351 = vunpack.c.h.b16 %v1001
    %v2352 = vunpack.c.l.b16 %v1002
    %v2353 = vunpack.c.h.b16 %v1002
    %v2354 = vunpack.c.l.b16 %v1003
    %v2355 = vunpack.c.h.b16 %v1003
    %v2356 = vunpack.c.l.b16 %v1004
    %v2357 = vunpack.c.h.b16 %v1004
    %v2358 = vunpack.c.l.b16 %v1005
    %v2359 = vunpack.c.h.b16 %v1005
    %v2360 = vunpack.c.l.b16 %v1006
    %v2361 = vunpack.c.h.b16 %v1006
    %v2362 = vunpack.c.l.b16 %v1007
    %v2363 = vunpack.c.h.b16 %v1007
    %v2364 = vunpack.c.l.b16 %v1008
    %v2365 = vunpack.c.h.b16 %v1008
    %v2366 = vunpack.c.l.b16 %v1009
    %v2367 = vunpack.c.h.b16 %v1009
    %v2368 = vunpack.c.l.b16 %v1010
    %v2369 = vunpack.c.h.b16 %v1010
    %v2370 = vunpack.c.l.b16 %v1011
    %v2371 = vunpack.c.h.b16 %v1011
    %v2372 = vunpack.c.l.b16 %v1012
    %v2373 = vunpack.c.h.b16 %v1012
    %v2374 = vunpack.c.l.b16 %v1013
    %v2375 = vunpack.c.h.b16 %v1013
    %v2376 = vunpack.c.l.b16 %v1014
    %v2377 = vunpack.c.h.b16 %v1014
    %v2378 = vunpack.c.l.b16 %v1015
    %v2379 = vunpack.c.h.b16 %v1015
    %v2380 = vunpack.c.l.b16 %v1016
    %v2381 = vunpack.c.h.b16 %v1016
    %v2382 = vunpack.c.l.b16 %v1017
    %v2383 = vunpack.c.h.b16 %v1017
    %v2384 = vunpack.c.l.b16 %v1018
    %v2385 = vunpack.c.h.b16 %v1018
    %v2386 = vunpack.c.l.b16 %v1019
    %v2387 = vunpack.c.h.b16 %v1019
    %v2388 = vunpack.c.l.b16 %v1020
    %v2389 = vunpack.c.h.b16 %v1020
    %v2390 = vunpack.c.l.b16 %v1021
    %v2391 = vunpack.c.h.b16 %v1021
    %v2392 = vunpack.c.l.b16 %v1022
    %v2393 = vunpack.c.h.b16 %v1022
    %v2394 = vunpack.c.l.b16 %v1023
    %v2395 = vunpack.c.h.b16 %v1023
    %v2396 = vunpack.c.l.b16 %v1024
    %v2397 = vunpack.c.h.b16 %v1024
    %v2398 = vunpack.c.l.b16 %v1025
    %v2399 = vunpack.c.h.b16 %v1025
    %v2400 = vunpack.c.l.b16 %v1026
    %v2401 = vunpack.c.h.b16 %v1026
    %v2402 = vunpack.c.l.b16 %v1027
    %v2403 = vunpack.c.h.b16 %v1027
    %v2404 = vunpack.c.l.b16 %v1028
    %v2405 = vunpack.c.h.b16 %v1028
    %v2406 = vunpack.c.l.b16 %v1029
    %v2407 = vunpack.c.h.b16 %v1029
    %v2408 = vunpack.c.l.b16 %v1030
    %v2409 = vunpack.c.h.b16 %v1030
    %v2410 = vunpack.c.l.b16 %v1031
    %v2411 = vunpack.c.h.b16 %v1031
    %v2412 = vunpack.c.l.b16 %v1032
    %v2413 = vunpack.c.h.b16 %v1032
    %v2414 = vunpack.c.l.b16 %v1033
    %v2415 = vunpack.c.h.b16 %v1033
    %v2416 = vunpack.c.l.b16 %v1034
    %v2417 = vunpack.c.h.b16 %v1034
    %v2418 = vunpack.c.l.b16 %v1035
    %v2419 = vunpack.c.h.b16 %v1035
    %v2420 = vunpack.c.l.b16 %v1036
    %v2421 = vunpack.c.h.b16 %v1036
    %v2422 = vunpack.c.l.b16 %v1037
    %v2423 = vunpack.c.h.b16 %v1037
    %v2424 = vunpack.c.l.b16 %v1038
    %v2425 = vunpack.c.h.b16 %v1038
    %v2426 = vunpack.c.l.b16 %v1039
    %v2427 = vunpack.c.h.b16 %v1039
    %v2428 = vunpack.c.l.b16 %v1040
    %v2429 = vunpack.c.h.b16 %v1040
    %v2430 = vunpack.c.l.b16 %v1041
    %v2431 = vunpack.c.h.b16 %v1041
    %v2432 = vunpack.c.l.b16 %v1042
    %v2433 = vunpack.c.h.b16 %v1042
    %v2434 = vunpack.c.l.b16 %v1043
    %v2435 = vunpack.c.h.b16 %v1043
    %v2436 = vunpack.c.l.b16 %v1044
    %v2437 = vunpack.c.h.b16 %v1044
    %v2438 = vunpack.c.l.b16 %v1045
    %v2439 = vunpack.c.h.b16 %v1045
    %v2440 = vunpack.c.l.b16 %v1046
    %v2441 = vunpack.c.h.b16 %v1046
    %v2442 = vunpack.c.l.b16 %v1047
    %v2443 = vunpack.c.h.b16 %v1047
    %v2444 = vunpack.c.l.b16 %v1048
    %v2445 = vunpack.c.h.b16 %v1048
    %v2446 = vunpack.c.l.b16 %v1049
    %v2447 = vunpack.c.h.b16 %v1049
    %v2448 = vunpack.c.l.b16 %v1050
    %v2449 = vunpack.c.h.b16 %v1050
    %v2450 = vunpack.c.l.b16 %v1051
    %v2451 = vunpack.c.h.b16 %v1051
    %v2452 = vunpack.c.l.b16 %v1052
    %v2453 = vunpack.c.h.b16 %v1052
    %v2454 = vunpack.c.l.b16 %v1053
    %v2455 = vunpack.c.h.b16 %v1053
    %v2456 = vunpack.c.l.b16 %v1054
    %v2457 = vunpack.c.h.b16 %v1054
    %v2458 = vunpack.c.l.b16 %v1055
    %v2459 = vunpack.c.h.b16 %v1055
    %v2460 = vunpack.c.l.b16 %v1056
    %v2461 = vunpack.c.h.b16 %v1056
    %v2462 = vunpack.c.l.b16 %v1057
    %v2463 = vunpack.c.h.b16 %v1057
    %v2464 = vunpack.c.l.b16 %v1058
    %v2465 = vunpack.c.h.b16 %v1058
    %v2466 = vunpack.c.l.b16 %v1059
    %v2467 = vunpack.c.h.b16 %v1059
    %v2468 = vunpack.c.l.b16 %v1060
    %v2469 = vunpack.c.h.b16 %v1060
    %v2470 = vunpack.c.l.b16 %v1061
    %v2471 = vunpack.c.h.b16 %v1061
    %v2472 = vunpack.c.l.b16 %v1062
    %v2473 = vunpack.c.h.b16 %v1062
    %v2474 = vunpack.c.l.b16 %v1063
    %v2475 = vunpack.c.h.b16 %v1063
    %v2476 = vpack.c.b16 %v2228, %v2220
    %v2477 = vpack.c.b16 %v2229, %v2221
    %v2478 = vpack.c.b16 %v2230, %v2222
    %v2479 = vpack.c.b16 %v2231, %v2223
    %v2480 = vpack.c.b16 %v2232, %v2224
    %v2481 = vpack.c.b16 %v2233, %v2225
    %v2482 = vpack.c.b16 %v2234, %v2226
    %v2483 = vpack.c.b16 %v2235, %v2227
    %v2484 = vpack.c.b16 %v2244, %v2236
    %v2485 = vpack.c.b16 %v2245, %v2237
    %v2486 = vpack.c.b16 %v2246, %v2238
    %v2487 = vpack.c.b16 %v2247, %v2239
    %v2488 = vpack.c.b16 %v2248, %v2240
    %v2489 = vpack.c.b16 %v2249, %v2241
    %v2490 = vpack.c.b16 %v2250, %v2242
    %v2491 = vpack.c.b16 %v2251, %v2243
    %v2492 = vpack.c.b16 %v2260, %v2252
    %v2493 = vpack.c.b16 %v2261, %v2253
    %v2494 = vpack.c.b16 %v2262, %v2254
    %v2495 = vpack.c.b16 %v2263, %v2255
    %v2496 = vpack.c.b16 %v2264, %v2256
    %v2497 = vpack.c.b16 %v2265, %v2257
    %v2498 = vpack.c.b16 %v2266, %v2258
    %v2499 = vpack.c.b16 %v2267, %v2259
    %v2500 = vpack.c.b16 %v2276, %v2268
    %v2501 = vpack.c.b16 %v2277, %v2269
    %v2502 = vpack.c.b16 %v2278, %v2270
    %v2503 = vpack.c.b16 %v2279, %v2271
    %v2504 = vpack.c.b16 %v2280, %v2272
    %v2505 = vpack.c.b16 %v2281, %v2273
    %v2506 = vpack.c.b16 %v2282, %v2274
    %v2507 = vpack.c.b16 %v2283, %v2275
    %v2508 = vpack.c.b16 %v2292, %v2284
    %v2509 = vpack.c.b16 %v2293, %v2285
    %v2510 = vpack.c.b16 %v2294, %v2286
    %v2511 = vpack.c.b16 %v2295, %v2287
    %v2512 = vpack.c.b16 %v2296, %v2288
    %v2513 = vpack.c.b16 %v2297, %v2289
    %v2514 = vpack.c.b16 %v2298, %v2290
    %v2515 = vpack.c.b16 %v2299, %v2291
    %v2516 = vpack.c.b16 %v2308, %v2300
    %v2517 = vpack.c.b16 %v2309, %v2301
    %v2518 = vpack.c.b16 %v2310, %v2302
    %v2519 = vpack.c.b16 %v2311, %v2303
    %v2520 = vpack.c.b16 %v2312, %v2304
    %v2521 = vpack.c.b16 %v2313, %v2305
    %v2522 = vpack.c.b16 %v2314, %v2306
    %v2523 = vpack.c.b16 %v2315, %v2307
    %v2524 = vpack.c.b16 %v2324, %v2316
    %v2525 = vpack.c.b16 %v2325, %v2317
    %v2526 = vpack.c.b16 %v2326, %v2318
    %v2527 = vpack.c.b16 %v2327, %v2319
    %v2528 = vpack.c.b16 %v2328, %v2320
    %v2529 = vpack.c.b16 %v2329, %v2321
    %v2530 = vpack.c.b16 %v2330, %v2322
    %v2531 = vpack.c.b16 %v2331, %v2323
    %v2532 = vpack.c.b16 %v2340, %v2332
    %v2533 = vpack.c.b16 %v2341, %v2333
    %v2534 = vpack.c.b16 %v2342, %v2334
    %v2535 = vpack.c.b16 %v2343, %v2335
    %v2536 = vpack.c.b16 %v2344, %v2336
    %v2537 = vpack.c.b16 %v2345, %v2337
    %v2538 = vpack.c.b16 %v2346, %v2338
    %v2539 = vpack.c.b16 %v2347, %v2339
    %v2540 = vpack.c.b16 %v2356, %v2348
    %v2541 = vpack.c.b16 %v2357, %v2349
    %v2542 = vpack.c.b16 %v2358, %v2350
    %v2543 = vpack.c.b16 %v2359, %v2351
    %v2544 = vpack.c.b16 %v2360, %v2352
    %v2545 = vpack.c.b16 %v2361, %v2353
    %v2546 = vpack.c.b16 %v2362, %v2354
    %v2547 = vpack.c.b16 %v2363, %v2355
    %v2548 = vpack.c.b16 %v2372, %v2364
    %v2549 = vpack.c.b16 %v2373, %v2365
    %v2550 = vpack.c.b16 %v2374, %v2366
    %v2551 = vpack.c.b16 %v2375, %v2367
    %v2552 = vpack.c.b16 %v2376, %v2368
    %v2553 = vpack.c.b16 %v2377, %v2369
    %v2554 = vpack.c.b16 %v2378, %v2370
    %v2555 = vpack.c.b16 %v2379, %v2371
    %v2556 = vpack.c.b16 %v2388, %v2380
    %v2557 = vpack.c.b16 %v2389, %v2381
    %v2558 = vpack.c.b16 %v2390, %v2382
    %v2559 = vpack.c.b16 %v2391, %v2383
    %v2560 = vpack.c.b16 %v2392, %v2384
    %v2561 = vpack.c.b16 %v2393, %v2385
    %v2562 = vpack.c.b16 %v2394, %v2386
    %v2563 = vpack.c.b16 %v2395, %v2387
    %v2564 = vpack.c.b16 %v2404, %v2396
    %v2565 = vpack.c.b16 %v2405, %v2397
    %v2566 = vpack.c.b16 %v2406, %v2398
    %v2567 = vpack.c.b16 %v2407, %v2399
    %v2568 = vpack.c.b16 %v2408, %v2400
    %v2569 = vpack.c.b16 %v2409, %v2401
    %v2570 = vpack.c.b16 %v2410, %v2402
    %v2571 = vpack.c.b16 %v2411, %v2403
    %v2572 = vpack.c.b16 %v2420, %v2412
    %v2573 = vpack.c.b16 %v2421, %v2413
    %v2574 = vpack.c.b16 %v2422, %v2414
    %v2575 = vpack.c.b16 %v2423, %v2415
    %v2576 = vpack.c.b16 %v2424, %v2416
    %v2577 = vpack.c.b16 %v2425, %v2417
    %v2578 = vpack.c.b16 %v2426, %v2418
    %v2579 = vpack.c.b16 %v2427, %v2419
    %v2580 = vpack.c.b16 %v2436, %v2428
    %v2581 = vpack.c.b16 %v2437, %v2429
    %v2582 = vpack.c.b16 %v2438, %v2430
    %v2583 = vpack.c.b16 %v2439, %v2431
    %v2584 = vpack.c.b16 %v2440, %v2432
    %v2585 = vpack.c.b16 %v2441, %v2433
    %v2586 = vpack.c.b16 %v2442, %v2434
    %v2587 = vpack.c.b16 %v2443, %v2435
    %v2588 = vpack.c.b16 %v2452, %v2444
    %v2589 = vpack.c.b16 %v2453, %v2445
    %v2590 = vpack.c.b16 %v2454, %v2446
    %v2591 = vpack.c.b16 %v2455, %v2447
    %v2592 = vpack.c.b16 %v2456, %v2448
    %v2593 = vpack.c.b16 %v2457, %v2449
    %v2594 = vpack.c.b16 %v2458, %v2450
    %v2595 = vpack.c.b16 %v2459, %v2451
    %v2596 = vpack.c.b16 %v2468, %v2460
    %v2597 = vpack.c.b16 %v2469, %v2461
    %v2598 = vpack.c.b16 %v2470, %v2462
    %v2599 = vpack.c.b16 %v2471, %v2463
    %v2600 = vpack.c.b16 %v2472, %v2464
    %v2601 = vpack.c.b16 %v2473, %v2465
    %v2602 = vpack.c.b16 %v2474, %v2466
    %v2603 = vpack.c.b16 %v2475, %v2467
    %2732 = vmatprep.subr.bf16.mxu0 %v2477
    %2733 = vmatpush1.bf16.msra.mxu0 %v2476
    %2734 = vmatprep.subr.bf16.mxu0 %v2485
    %2735 = vmatpush1.bf16.msra.mxu0 %v2484
    %2736 = vmatprep.subr.bf16.mxu0 %v2493
    %2737 = vmatpush1.bf16.msra.mxu0 %v2492
    %2738 = vmatprep.subr.bf16.mxu0 %v2501
    %2739 = vmatpush1.bf16.msra.mxu0 %v2500
    %2740 = vmatprep.subr.bf16.mxu0 %v2509
    %2741 = vmatpush1.bf16.msra.mxu0 %v2508
    %2742 = vmatprep.subr.bf16.mxu0 %v2517
    %2743 = vmatpush1.bf16.msra.mxu0 %v2516
    %2744 = vmatprep.subr.bf16.mxu0 %v2525
    %2745 = vmatpush1.bf16.msra.mxu0 %v2524
    %2746 = vmatprep.subr.bf16.mxu0 %v2533
    %2747 = vmatpush1.bf16.msra.mxu0 %v2532
    %2748 = vmatprep.subr.bf16.mxu0 %v2541
    %2749 = vmatpush1.bf16.msra.mxu0 %v2540
    %2750 = vmatprep.subr.bf16.mxu0 %v2549
    %2751 = vmatpush1.bf16.msra.mxu0 %v2548
    %2752 = vmatprep.subr.bf16.mxu0 %v2557
    %2753 = vmatpush1.bf16.msra.mxu0 %v2556
    %2754 = vmatprep.subr.bf16.mxu0 %v2565
    %2755 = vmatpush1.bf16.msra.mxu0 %v2564
    %2756 = vmatprep.subr.bf16.mxu0 %v2573
    %2757 = vmatpush1.bf16.msra.mxu0 %v2572
    %2758 = vmatprep.subr.bf16.mxu0 %v2581
    %2759 = vmatpush1.bf16.msra.mxu0 %v2580
    %2760 = vmatprep.subr.bf16.mxu0 %v2589
    %2761 = vmatpush1.bf16.msra.mxu0 %v2588
    %2762 = vmatprep.subr.bf16.mxu0 %v2597
    %2763 = vmatpush1.bf16.msra.mxu0 %v2596
    %2764 = vmatprep.mubr.bf16.mxu0 %v2091
    %2765 = vmatmul.mubr.bf16.gmra.mrb[0].mxu0 %v2090
    %v2766 = vpop.f32.mrb[0].mxu0
    %v2767 = vadd.f32 0.0, %v2766
    %v2768 = vpop.f32.mrb[0].mxu0
    %v2769 = vadd.f32 0.0, %v2768
    %v2770 = vpop.f32.mrb[0].mxu0
    %v2771 = vpop.f32.mrb[0].mxu0
    %2772 = vdwg.mxu0
    %2773 = vmatprep.subr.bf16.mxu0 %v2479
    %2774 = vmatpush1.bf16.msra.mxu0 %v2478
    %2775 = vmatprep.subr.bf16.mxu0 %v2487
    %2776 = vmatpush1.bf16.msra.mxu0 %v2486
    %2777 = vmatprep.subr.bf16.mxu0 %v2495
    %2778 = vmatpush1.bf16.msra.mxu0 %v2494
    %2779 = vmatprep.subr.bf16.mxu0 %v2503
    %2780 = vmatpush1.bf16.msra.mxu0 %v2502
    %2781 = vmatprep.subr.bf16.mxu0 %v2511
    %2782 = vmatpush1.bf16.msra.mxu0 %v2510
    %2783 = vmatprep.subr.bf16.mxu0 %v2519
    %2784 = vmatpush1.bf16.msra.mxu0 %v2518
    %2785 = vmatprep.subr.bf16.mxu0 %v2527
    %2786 = vmatpush1.bf16.msra.mxu0 %v2526
    %2787 = vmatprep.subr.bf16.mxu0 %v2535
    %2788 = vmatpush1.bf16.msra.mxu0 %v2534
    %2789 = vmatprep.subr.bf16.mxu0 %v2543
    %2790 = vmatpush1.bf16.msra.mxu0 %v2542
    %2791 = vmatprep.subr.bf16.mxu0 %v2551
    %2792 = vmatpush1.bf16.msra.mxu0 %v2550
    %2793 = vmatprep.subr.bf16.mxu0 %v2559
    %2794 = vmatpush1.bf16.msra.mxu0 %v2558
    %2795 = vmatprep.subr.bf16.mxu0 %v2567
    %2796 = vmatpush1.bf16.msra.mxu0 %v2566
    %2797 = vmatprep.subr.bf16.mxu0 %v2575
    %2798 = vmatpush1.bf16.msra.mxu0 %v2574
    %2799 = vmatprep.subr.bf16.mxu0 %v2583
    %2800 = vmatpush1.bf16.msra.mxu0 %v2582
    %2801 = vmatprep.subr.bf16.mxu0 %v2591
    %2802 = vmatpush1.bf16.msra.mxu0 %v2590
    %2803 = vmatprep.subr.bf16.mxu0 %v2599
    %2804 = vmatpush1.bf16.msra.mxu0 %v2598
    %2805 = vmatprep.mubr.bf16.mxu0 %v2091
    %2806 = vmatmul.mubr.bf16.gmra.mrb[0].mxu0 %v2090
    %v2807 = vpop.f32.mrb[0].mxu0
    %v2808 = vadd.f32 0.0, %v2807
    %v2809 = vpop.f32.mrb[0].mxu0
    %v2810 = vadd.f32 0.0, %v2809
    %v2811 = vpop.f32.mrb[0].mxu0
    %v2812 = vpop.f32.mrb[0].mxu0
    %2813 = vdwg.mxu0
    %2814 = vmatprep.subr.bf16.mxu0 %v2481
    %2815 = vmatpush1.bf16.msra.mxu0 %v2480
    %2816 = vmatprep.subr.bf16.mxu0 %v2489
    %2817 = vmatpush1.bf16.msra.mxu0 %v2488
    %2818 = vmatprep.subr.bf16.mxu0 %v2497
    %2819 = vmatpush1.bf16.msra.mxu0 %v2496
    %2820 = vmatprep.subr.bf16.mxu0 %v2505
    %2821 = vmatpush1.bf16.msra.mxu0 %v2504
    %2822 = vmatprep.subr.bf16.mxu0 %v2513
    %2823 = vmatpush1.bf16.msra.mxu0 %v2512
    %2824 = vmatprep.subr.bf16.mxu0 %v2521
    %2825 = vmatpush1.bf16.msra.mxu0 %v2520
    %2826 = vmatprep.subr.bf16.mxu0 %v2529
    %2827 = vmatpush1.bf16.msra.mxu0 %v2528
    %2828 = vmatprep.subr.bf16.mxu0 %v2537
    %2829 = vmatpush1.bf16.msra.mxu0 %v2536
    %2830 = vmatprep.subr.bf16.mxu0 %v2545
    %2831 = vmatpush1.bf16.msra.mxu0 %v2544
    %2832 = vmatprep.subr.bf16.mxu0 %v2553
    %2833 = vmatpush1.bf16.msra.mxu0 %v2552
    %2834 = vmatprep.subr.bf16.mxu0 %v2561
    %2835 = vmatpush1.bf16.msra.mxu0 %v2560
    %2836 = vmatprep.subr.bf16.mxu0 %v2569
    %2837 = vmatpush1.bf16.msra.mxu0 %v2568
    %2838 = vmatprep.subr.bf16.mxu0 %v2577
    %2839 = vmatpush1.bf16.msra.mxu0 %v2576
    %2840 = vmatprep.subr.bf16.mxu0 %v2585
    %2841 = vmatpush1.bf16.msra.mxu0 %v2584
    %2842 = vmatprep.subr.bf16.mxu0 %v2593
    %2843 = vmatpush1.bf16.msra.mxu0 %v2592
    %2844 = vmatprep.subr.bf16.mxu0 %v2601
    %2845 = vmatpush1.bf16.msra.mxu0 %v2600
    %2846 = vmatprep.mubr.bf16.mxu0 %v2091
    %2847 = vmatmul.mubr.bf16.gmra.mrb[0].mxu0 %v2090
    %v2848 = vpop.f32.mrb[0].mxu0
    %v2849 = vadd.f32 0.0, %v2848
    %v2850 = vpop.f32.mrb[0].mxu0
    %v2851 = vadd.f32 0.0, %v2850
    %v2852 = vpop.f32.mrb[0].mxu0
    %v2853 = vpop.f32.mrb[0].mxu0
    %2854 = vdwg.mxu0
    %2855 = vmatprep.subr.bf16.mxu0 %v2483
    %2856 = vmatpush1.bf16.msra.mxu0 %v2482
    %2857 = vmatprep.subr.bf16.mxu0 %v2491
    %2858 = vmatpush1.bf16.msra.mxu0 %v2490
    %2859 = vmatprep.subr.bf16.mxu0 %v2499
    %2860 = vmatpush1.bf16.msra.mxu0 %v2498
    %2861 = vmatprep.subr.bf16.mxu0 %v2507
    %2862 = vmatpush1.bf16.msra.mxu0 %v2506
    %2863 = vmatprep.subr.bf16.mxu0 %v2515
    %2864 = vmatpush1.bf16.msra.mxu0 %v2514
    %2865 = vmatprep.subr.bf16.mxu0 %v2523
    %2866 = vmatpush1.bf16.msra.mxu0 %v2522
    %2867 = vmatprep.subr.bf16.mxu0 %v2531
    %2868 = vmatpush1.bf16.msra.mxu0 %v2530
    %2869 = vmatprep.subr.bf16.mxu0 %v2539
    %2870 = vmatpush1.bf16.msra.mxu0 %v2538
    %2871 = vmatprep.subr.bf16.mxu0 %v2547
    %2872 = vmatpush1.bf16.msra.mxu0 %v2546
    %2873 = vmatprep.subr.bf16.mxu0 %v2555
    %2874 = vmatpush1.bf16.msra.mxu0 %v2554
    %2875 = vmatprep.subr.bf16.mxu0 %v2563
    %2876 = vmatpush1.bf16.msra.mxu0 %v2562
    %2877 = vmatprep.subr.bf16.mxu0 %v2571
    %2878 = vmatpush1.bf16.msra.mxu0 %v2570
    %2879 = vmatprep.subr.bf16.mxu0 %v2579
    %2880 = vmatpush1.bf16.msra.mxu0 %v2578
    %2881 = vmatprep.subr.bf16.mxu0 %v2587
    %2882 = vmatpush1.bf16.msra.mxu0 %v2586
    %2883 = vmatprep.subr.bf16.mxu0 %v2595
    %2884 = vmatpush1.bf16.msra.mxu0 %v2594
    %2885 = vmatprep.subr.bf16.mxu0 %v2603
    %2886 = vmatpush1.bf16.msra.mxu0 %v2602
    %2887 = vmatprep.mubr.bf16.mxu0 %v2091
    %2888 = vmatmul.mubr.bf16.gmra.mrb[0].mxu0 %v2090
    %v2889 = vpop.f32.mrb[0].mxu0
    %v2890 = vadd.f32 0.0, %v2889
    %v2891 = vpop.f32.mrb[0].mxu0
    %v2892 = vadd.f32 0.0, %v2891
    %v2893 = vpop.f32.mrb[0].mxu0
    %v2894 = vpop.f32.mrb[0].mxu0
    %2895 = vdwg.mxu0
    %v3024 = vunpack.c.l.b16 %v1064
    %v3025 = vunpack.c.h.b16 %v1064
    %v3026 = vunpack.c.l.b16 %v1065
    %v3027 = vunpack.c.h.b16 %v1065
    %v3028 = vunpack.c.l.b16 %v1066
    %v3029 = vunpack.c.h.b16 %v1066
    %v3030 = vunpack.c.l.b16 %v1067
    %v3031 = vunpack.c.h.b16 %v1067
    %v3032 = vunpack.c.l.b16 %v1068
    %v3033 = vunpack.c.h.b16 %v1068
    %v3034 = vunpack.c.l.b16 %v1069
    %v3035 = vunpack.c.h.b16 %v1069
    %v3036 = vunpack.c.l.b16 %v1070
    %v3037 = vunpack.c.h.b16 %v1070
    %v3038 = vunpack.c.l.b16 %v1071
    %v3039 = vunpack.c.h.b16 %v1071
    %v3040 = vunpack.c.l.b16 %v1072
    %v3041 = vunpack.c.h.b16 %v1072
    %v3042 = vunpack.c.l.b16 %v1073
    %v3043 = vunpack.c.h.b16 %v1073
    %v3044 = vunpack.c.l.b16 %v1074
    %v3045 = vunpack.c.h.b16 %v1074
    %v3046 = vunpack.c.l.b16 %v1075
    %v3047 = vunpack.c.h.b16 %v1075
    %v3048 = vunpack.c.l.b16 %v1076
    %v3049 = vunpack.c.h.b16 %v1076
    %v3050 = vunpack.c.l.b16 %v1077
    %v3051 = vunpack.c.h.b16 %v1077
    %v3052 = vunpack.c.l.b16 %v1078
    %v3053 = vunpack.c.h.b16 %v1078
    %v3054 = vunpack.c.l.b16 %v1079
    %v3055 = vunpack.c.h.b16 %v1079
    %v3056 = vunpack.c.l.b16 %v1080
    %v3057 = vunpack.c.h.b16 %v1080
    %v3058 = vunpack.c.l.b16 %v1081
    %v3059 = vunpack.c.h.b16 %v1081
    %v3060 = vunpack.c.l.b16 %v1082
    %v3061 = vunpack.c.h.b16 %v1082
    %v3062 = vunpack.c.l.b16 %v1083
    %v3063 = vunpack.c.h.b16 %v1083
    %v3064 = vunpack.c.l.b16 %v1084
    %v3065 = vunpack.c.h.b16 %v1084
    %v3066 = vunpack.c.l.b16 %v1085
    %v3067 = vunpack.c.h.b16 %v1085
    %v3068 = vunpack.c.l.b16 %v1086
    %v3069 = vunpack.c.h.b16 %v1086
    %v3070 = vunpack.c.l.b16 %v1087
    %v3071 = vunpack.c.h.b16 %v1087
    %v3072 = vunpack.c.l.b16 %v1088
    %v3073 = vunpack.c.h.b16 %v1088
    %v3074 = vunpack.c.l.b16 %v1089
    %v3075 = vunpack.c.h.b16 %v1089
    %v3076 = vunpack.c.l.b16 %v1090
    %v3077 = vunpack.c.h.b16 %v1090
    %v3078 = vunpack.c.l.b16 %v1091
    %v3079 = vunpack.c.h.b16 %v1091
    %v3080 = vunpack.c.l.b16 %v1092
    %v3081 = vunpack.c.h.b16 %v1092
    %v3082 = vunpack.c.l.b16 %v1093
    %v3083 = vunpack.c.h.b16 %v1093
    %v3084 = vunpack.c.l.b16 %v1094
    %v3085 = vunpack.c.h.b16 %v1094
    %v3086 = vunpack.c.l.b16 %v1095
    %v3087 = vunpack.c.h.b16 %v1095
    %v3088 = vunpack.c.l.b16 %v1096
    %v3089 = vunpack.c.h.b16 %v1096
    %v3090 = vunpack.c.l.b16 %v1097
    %v3091 = vunpack.c.h.b16 %v1097
    %v3092 = vunpack.c.l.b16 %v1098
    %v3093 = vunpack.c.h.b16 %v1098
    %v3094 = vunpack.c.l.b16 %v1099
    %v3095 = vunpack.c.h.b16 %v1099
    %v3096 = vunpack.c.l.b16 %v1100
    %v3097 = vunpack.c.h.b16 %v1100
    %v3098 = vunpack.c.l.b16 %v1101
    %v3099 = vunpack.c.h.b16 %v1101
    %v3100 = vunpack.c.l.b16 %v1102
    %v3101 = vunpack.c.h.b16 %v1102
    %v3102 = vunpack.c.l.b16 %v1103
    %v3103 = vunpack.c.h.b16 %v1103
    %v3104 = vunpack.c.l.b16 %v1104
    %v3105 = vunpack.c.h.b16 %v1104
    %v3106 = vunpack.c.l.b16 %v1105
    %v3107 = vunpack.c.h.b16 %v1105
    %v3108 = vunpack.c.l.b16 %v1106
    %v3109 = vunpack.c.h.b16 %v1106
    %v3110 = vunpack.c.l.b16 %v1107
    %v3111 = vunpack.c.h.b16 %v1107
    %v3112 = vunpack.c.l.b16 %v1108
    %v3113 = vunpack.c.h.b16 %v1108
    %v3114 = vunpack.c.l.b16 %v1109
    %v3115 = vunpack.c.h.b16 %v1109
    %v3116 = vunpack.c.l.b16 %v1110
    %v3117 = vunpack.c.h.b16 %v1110
    %v3118 = vunpack.c.l.b16 %v1111
    %v3119 = vunpack.c.h.b16 %v1111
    %v3120 = vunpack.c.l.b16 %v1112
    %v3121 = vunpack.c.h.b16 %v1112
    %v3122 = vunpack.c.l.b16 %v1113
    %v3123 = vunpack.c.h.b16 %v1113
    %v3124 = vunpack.c.l.b16 %v1114
    %v3125 = vunpack.c.h.b16 %v1114
    %v3126 = vunpack.c.l.b16 %v1115
    %v3127 = vunpack.c.h.b16 %v1115
    %v3128 = vunpack.c.l.b16 %v1116
    %v3129 = vunpack.c.h.b16 %v1116
    %v3130 = vunpack.c.l.b16 %v1117
    %v3131 = vunpack.c.h.b16 %v1117
    %v3132 = vunpack.c.l.b16 %v1118
    %v3133 = vunpack.c.h.b16 %v1118
    %v3134 = vunpack.c.l.b16 %v1119
    %v3135 = vunpack.c.h.b16 %v1119
    %v3136 = vunpack.c.l.b16 %v1120
    %v3137 = vunpack.c.h.b16 %v1120
    %v3138 = vunpack.c.l.b16 %v1121
    %v3139 = vunpack.c.h.b16 %v1121
    %v3140 = vunpack.c.l.b16 %v1122
    %v3141 = vunpack.c.h.b16 %v1122
    %v3142 = vunpack.c.l.b16 %v1123
    %v3143 = vunpack.c.h.b16 %v1123
    %v3144 = vunpack.c.l.b16 %v1124
    %v3145 = vunpack.c.h.b16 %v1124
    %v3146 = vunpack.c.l.b16 %v1125
    %v3147 = vunpack.c.h.b16 %v1125
    %v3148 = vunpack.c.l.b16 %v1126
    %v3149 = vunpack.c.h.b16 %v1126
    %v3150 = vunpack.c.l.b16 %v1127
    %v3151 = vunpack.c.h.b16 %v1127
    %v3152 = vunpack.c.l.b16 %v1128
    %v3153 = vunpack.c.h.b16 %v1128
    %v3154 = vunpack.c.l.b16 %v1129
    %v3155 = vunpack.c.h.b16 %v1129
    %v3156 = vunpack.c.l.b16 %v1130
    %v3157 = vunpack.c.h.b16 %v1130
    %v3158 = vunpack.c.l.b16 %v1131
    %v3159 = vunpack.c.h.b16 %v1131
    %v3160 = vunpack.c.l.b16 %v1132
    %v3161 = vunpack.c.h.b16 %v1132
    %v3162 = vunpack.c.l.b16 %v1133
    %v3163 = vunpack.c.h.b16 %v1133
    %v3164 = vunpack.c.l.b16 %v1134
    %v3165 = vunpack.c.h.b16 %v1134
    %v3166 = vunpack.c.l.b16 %v1135
    %v3167 = vunpack.c.h.b16 %v1135
    %v3168 = vunpack.c.l.b16 %v1136
    %v3169 = vunpack.c.h.b16 %v1136
    %v3170 = vunpack.c.l.b16 %v1137
    %v3171 = vunpack.c.h.b16 %v1137
    %v3172 = vunpack.c.l.b16 %v1138
    %v3173 = vunpack.c.h.b16 %v1138
    %v3174 = vunpack.c.l.b16 %v1139
    %v3175 = vunpack.c.h.b16 %v1139
    %v3176 = vunpack.c.l.b16 %v1140
    %v3177 = vunpack.c.h.b16 %v1140
    %v3178 = vunpack.c.l.b16 %v1141
    %v3179 = vunpack.c.h.b16 %v1141
    %v3180 = vunpack.c.l.b16 %v1142
    %v3181 = vunpack.c.h.b16 %v1142
    %v3182 = vunpack.c.l.b16 %v1143
    %v3183 = vunpack.c.h.b16 %v1143
    %v3184 = vunpack.c.l.b16 %v1144
    %v3185 = vunpack.c.h.b16 %v1144
    %v3186 = vunpack.c.l.b16 %v1145
    %v3187 = vunpack.c.h.b16 %v1145
    %v3188 = vunpack.c.l.b16 %v1146
    %v3189 = vunpack.c.h.b16 %v1146
    %v3190 = vunpack.c.l.b16 %v1147
    %v3191 = vunpack.c.h.b16 %v1147
    %v3192 = vunpack.c.l.b16 %v1148
    %v3193 = vunpack.c.h.b16 %v1148
    %v3194 = vunpack.c.l.b16 %v1149
    %v3195 = vunpack.c.h.b16 %v1149
    %v3196 = vunpack.c.l.b16 %v1150
    %v3197 = vunpack.c.h.b16 %v1150
    %v3198 = vunpack.c.l.b16 %v1151
    %v3199 = vunpack.c.h.b16 %v1151
    %v3200 = vunpack.c.l.b16 %v1152
    %v3201 = vunpack.c.h.b16 %v1152
    %v3202 = vunpack.c.l.b16 %v1153
    %v3203 = vunpack.c.h.b16 %v1153
    %v3204 = vunpack.c.l.b16 %v1154
    %v3205 = vunpack.c.h.b16 %v1154
    %v3206 = vunpack.c.l.b16 %v1155
    %v3207 = vunpack.c.h.b16 %v1155
    %v3208 = vunpack.c.l.b16 %v1156
    %v3209 = vunpack.c.h.b16 %v1156
    %v3210 = vunpack.c.l.b16 %v1157
    %v3211 = vunpack.c.h.b16 %v1157
    %v3212 = vunpack.c.l.b16 %v1158
    %v3213 = vunpack.c.h.b16 %v1158
    %v3214 = vunpack.c.l.b16 %v1159
    %v3215 = vunpack.c.h.b16 %v1159
    %v3216 = vunpack.c.l.b16 %v1160
    %v3217 = vunpack.c.h.b16 %v1160
    %v3218 = vunpack.c.l.b16 %v1161
    %v3219 = vunpack.c.h.b16 %v1161
    %v3220 = vunpack.c.l.b16 %v1162
    %v3221 = vunpack.c.h.b16 %v1162
    %v3222 = vunpack.c.l.b16 %v1163
    %v3223 = vunpack.c.h.b16 %v1163
    %v3224 = vunpack.c.l.b16 %v1164
    %v3225 = vunpack.c.h.b16 %v1164
    %v3226 = vunpack.c.l.b16 %v1165
    %v3227 = vunpack.c.h.b16 %v1165
    %v3228 = vunpack.c.l.b16 %v1166
    %v3229 = vunpack.c.h.b16 %v1166
    %v3230 = vunpack.c.l.b16 %v1167
    %v3231 = vunpack.c.h.b16 %v1167
    %v3232 = vunpack.c.l.b16 %v1168
    %v3233 = vunpack.c.h.b16 %v1168
    %v3234 = vunpack.c.l.b16 %v1169
    %v3235 = vunpack.c.h.b16 %v1169
    %v3236 = vunpack.c.l.b16 %v1170
    %v3237 = vunpack.c.h.b16 %v1170
    %v3238 = vunpack.c.l.b16 %v1171
    %v3239 = vunpack.c.h.b16 %v1171
    %v3240 = vunpack.c.l.b16 %v1172
    %v3241 = vunpack.c.h.b16 %v1172
    %v3242 = vunpack.c.l.b16 %v1173
    %v3243 = vunpack.c.h.b16 %v1173
    %v3244 = vunpack.c.l.b16 %v1174
    %v3245 = vunpack.c.h.b16 %v1174
    %v3246 = vunpack.c.l.b16 %v1175
    %v3247 = vunpack.c.h.b16 %v1175
    %v3248 = vunpack.c.l.b16 %v1176
    %v3249 = vunpack.c.h.b16 %v1176
    %v3250 = vunpack.c.l.b16 %v1177
    %v3251 = vunpack.c.h.b16 %v1177
    %v3252 = vunpack.c.l.b16 %v1178
    %v3253 = vunpack.c.h.b16 %v1178
    %v3254 = vunpack.c.l.b16 %v1179
    %v3255 = vunpack.c.h.b16 %v1179
    %v3256 = vunpack.c.l.b16 %v1180
    %v3257 = vunpack.c.h.b16 %v1180
    %v3258 = vunpack.c.l.b16 %v1181
    %v3259 = vunpack.c.h.b16 %v1181
    %v3260 = vunpack.c.l.b16 %v1182
    %v3261 = vunpack.c.h.b16 %v1182
    %v3262 = vunpack.c.l.b16 %v1183
    %v3263 = vunpack.c.h.b16 %v1183
    %v3264 = vunpack.c.l.b16 %v1184
    %v3265 = vunpack.c.h.b16 %v1184
    %v3266 = vunpack.c.l.b16 %v1185
    %v3267 = vunpack.c.h.b16 %v1185
    %v3268 = vunpack.c.l.b16 %v1186
    %v3269 = vunpack.c.h.b16 %v1186
    %v3270 = vunpack.c.l.b16 %v1187
    %v3271 = vunpack.c.h.b16 %v1187
    %v3272 = vunpack.c.l.b16 %v1188
    %v3273 = vunpack.c.h.b16 %v1188
    %v3274 = vunpack.c.l.b16 %v1189
    %v3275 = vunpack.c.h.b16 %v1189
    %v3276 = vunpack.c.l.b16 %v1190
    %v3277 = vunpack.c.h.b16 %v1190
    %v3278 = vunpack.c.l.b16 %v1191
    %v3279 = vunpack.c.h.b16 %v1191
    %v3280 = vpack.c.b16 %v3032, %v3024
    %v3281 = vpack.c.b16 %v3033, %v3025
    %v3282 = vpack.c.b16 %v3034, %v3026
    %v3283 = vpack.c.b16 %v3035, %v3027
    %v3284 = vpack.c.b16 %v3036, %v3028
    %v3285 = vpack.c.b16 %v3037, %v3029
    %v3286 = vpack.c.b16 %v3038, %v3030
    %v3287 = vpack.c.b16 %v3039, %v3031
    %v3288 = vpack.c.b16 %v3048, %v3040
    %v3289 = vpack.c.b16 %v3049, %v3041
    %v3290 = vpack.c.b16 %v3050, %v3042
    %v3291 = vpack.c.b16 %v3051, %v3043
    %v3292 = vpack.c.b16 %v3052, %v3044
    %v3293 = vpack.c.b16 %v3053, %v3045
    %v3294 = vpack.c.b16 %v3054, %v3046
    %v3295 = vpack.c.b16 %v3055, %v3047
    %v3296 = vpack.c.b16 %v3064, %v3056
    %v3297 = vpack.c.b16 %v3065, %v3057
    %v3298 = vpack.c.b16 %v3066, %v3058
    %v3299 = vpack.c.b16 %v3067, %v3059
    %v3300 = vpack.c.b16 %v3068, %v3060
    %v3301 = vpack.c.b16 %v3069, %v3061
    %v3302 = vpack.c.b16 %v3070, %v3062
    %v3303 = vpack.c.b16 %v3071, %v3063
    %v3304 = vpack.c.b16 %v3080, %v3072
    %v3305 = vpack.c.b16 %v3081, %v3073
    %v3306 = vpack.c.b16 %v3082, %v3074
    %v3307 = vpack.c.b16 %v3083, %v3075
    %v3308 = vpack.c.b16 %v3084, %v3076
    %v3309 = vpack.c.b16 %v3085, %v3077
    %v3310 = vpack.c.b16 %v3086, %v3078
    %v3311 = vpack.c.b16 %v3087, %v3079
    %v3312 = vpack.c.b16 %v3096, %v3088
    %v3313 = vpack.c.b16 %v3097, %v3089
    %v3314 = vpack.c.b16 %v3098, %v3090
    %v3315 = vpack.c.b16 %v3099, %v3091
    %v3316 = vpack.c.b16 %v3100, %v3092
    %v3317 = vpack.c.b16 %v3101, %v3093
    %v3318 = vpack.c.b16 %v3102, %v3094
    %v3319 = vpack.c.b16 %v3103, %v3095
    %v3320 = vpack.c.b16 %v3112, %v3104
    %v3321 = vpack.c.b16 %v3113, %v3105
    %v3322 = vpack.c.b16 %v3114, %v3106
    %v3323 = vpack.c.b16 %v3115, %v3107
    %v3324 = vpack.c.b16 %v3116, %v3108
    %v3325 = vpack.c.b16 %v3117, %v3109
    %v3326 = vpack.c.b16 %v3118, %v3110
    %v3327 = vpack.c.b16 %v3119, %v3111
    %v3328 = vpack.c.b16 %v3128, %v3120
    %v3329 = vpack.c.b16 %v3129, %v3121
    %v3330 = vpack.c.b16 %v3130, %v3122
    %v3331 = vpack.c.b16 %v3131, %v3123
    %v3332 = vpack.c.b16 %v3132, %v3124
    %v3333 = vpack.c.b16 %v3133, %v3125
    %v3334 = vpack.c.b16 %v3134, %v3126
    %v3335 = vpack.c.b16 %v3135, %v3127
    %v3336 = vpack.c.b16 %v3144, %v3136
    %v3337 = vpack.c.b16 %v3145, %v3137
    %v3338 = vpack.c.b16 %v3146, %v3138
    %v3339 = vpack.c.b16 %v3147, %v3139
    %v3340 = vpack.c.b16 %v3148, %v3140
    %v3341 = vpack.c.b16 %v3149, %v3141
    %v3342 = vpack.c.b16 %v3150, %v3142
    %v3343 = vpack.c.b16 %v3151, %v3143
    %v3344 = vpack.c.b16 %v3160, %v3152
    %v3345 = vpack.c.b16 %v3161, %v3153
    %v3346 = vpack.c.b16 %v3162, %v3154
    %v3347 = vpack.c.b16 %v3163, %v3155
    %v3348 = vpack.c.b16 %v3164, %v3156
    %v3349 = vpack.c.b16 %v3165, %v3157
    %v3350 = vpack.c.b16 %v3166, %v3158
    %v3351 = vpack.c.b16 %v3167, %v3159
    %v3352 = vpack.c.b16 %v3176, %v3168
    %v3353 = vpack.c.b16 %v3177, %v3169
    %v3354 = vpack.c.b16 %v3178, %v3170
    %v3355 = vpack.c.b16 %v3179, %v3171
    %v3356 = vpack.c.b16 %v3180, %v3172
    %v3357 = vpack.c.b16 %v3181, %v3173
    %v3358 = vpack.c.b16 %v3182, %v3174
    %v3359 = vpack.c.b16 %v3183, %v3175
    %v3360 = vpack.c.b16 %v3192, %v3184
    %v3361 = vpack.c.b16 %v3193, %v3185
    %v3362 = vpack.c.b16 %v3194, %v3186
    %v3363 = vpack.c.b16 %v3195, %v3187
    %v3364 = vpack.c.b16 %v3196, %v3188
    %v3365 = vpack.c.b16 %v3197, %v3189
    %v3366 = vpack.c.b16 %v3198, %v3190
    %v3367 = vpack.c.b16 %v3199, %v3191
    %v3368 = vpack.c.b16 %v3208, %v3200
    %v3369 = vpack.c.b16 %v3209, %v3201
    %v3370 = vpack.c.b16 %v3210, %v3202
    %v3371 = vpack.c.b16 %v3211, %v3203
    %v3372 = vpack.c.b16 %v3212, %v3204
    %v3373 = vpack.c.b16 %v3213, %v3205
    %v3374 = vpack.c.b16 %v3214, %v3206
    %v3375 = vpack.c.b16 %v3215, %v3207
    %v3376 = vpack.c.b16 %v3224, %v3216
    %v3377 = vpack.c.b16 %v3225, %v3217
    %v3378 = vpack.c.b16 %v3226, %v3218
    %v3379 = vpack.c.b16 %v3227, %v3219
    %v3380 = vpack.c.b16 %v3228, %v3220
    %v3381 = vpack.c.b16 %v3229, %v3221
    %v3382 = vpack.c.b16 %v3230, %v3222
    %v3383 = vpack.c.b16 %v3231, %v3223
    %v3384 = vpack.c.b16 %v3240, %v3232
    %v3385 = vpack.c.b16 %v3241, %v3233
    %v3386 = vpack.c.b16 %v3242, %v3234
    %v3387 = vpack.c.b16 %v3243, %v3235
    %v3388 = vpack.c.b16 %v3244, %v3236
    %v3389 = vpack.c.b16 %v3245, %v3237
    %v3390 = vpack.c.b16 %v3246, %v3238
    %v3391 = vpack.c.b16 %v3247, %v3239
    %v3392 = vpack.c.b16 %v3256, %v3248
    %v3393 = vpack.c.b16 %v3257, %v3249
    %v3394 = vpack.c.b16 %v3258, %v3250
    %v3395 = vpack.c.b16 %v3259, %v3251
    %v3396 = vpack.c.b16 %v3260, %v3252
    %v3397 = vpack.c.b16 %v3261, %v3253
    %v3398 = vpack.c.b16 %v3262, %v3254
    %v3399 = vpack.c.b16 %v3263, %v3255
    %v3400 = vpack.c.b16 %v3272, %v3264
    %v3401 = vpack.c.b16 %v3273, %v3265
    %v3402 = vpack.c.b16 %v3274, %v3266
    %v3403 = vpack.c.b16 %v3275, %v3267
    %v3404 = vpack.c.b16 %v3276, %v3268
    %v3405 = vpack.c.b16 %v3277, %v3269
    %v3406 = vpack.c.b16 %v3278, %v3270
    %v3407 = vpack.c.b16 %v3279, %v3271
    %3536 = vmatprep.subr.bf16.mxu0 %v3281
    %3537 = vmatpush1.bf16.msra.mxu0 %v3280
    %3538 = vmatprep.subr.bf16.mxu0 %v3289
    %3539 = vmatpush1.bf16.msra.mxu0 %v3288
    %3540 = vmatprep.subr.bf16.mxu0 %v3297
    %3541 = vmatpush1.bf16.msra.mxu0 %v3296
    %3542 = vmatprep.subr.bf16.mxu0 %v3305
    %3543 = vmatpush1.bf16.msra.mxu0 %v3304
    %3544 = vmatprep.subr.bf16.mxu0 %v3313
    %3545 = vmatpush1.bf16.msra.mxu0 %v3312
    %3546 = vmatprep.subr.bf16.mxu0 %v3321
    %3547 = vmatpush1.bf16.msra.mxu0 %v3320
    %3548 = vmatprep.subr.bf16.mxu0 %v3329
    %3549 = vmatpush1.bf16.msra.mxu0 %v3328
    %3550 = vmatprep.subr.bf16.mxu0 %v3337
    %3551 = vmatpush1.bf16.msra.mxu0 %v3336
    %3552 = vmatprep.subr.bf16.mxu0 %v3345
    %3553 = vmatpush1.bf16.msra.mxu0 %v3344
    %3554 = vmatprep.subr.bf16.mxu0 %v3353
    %3555 = vmatpush1.bf16.msra.mxu0 %v3352
    %3556 = vmatprep.subr.bf16.mxu0 %v3361
    %3557 = vmatpush1.bf16.msra.mxu0 %v3360
    %3558 = vmatprep.subr.bf16.mxu0 %v3369
    %3559 = vmatpush1.bf16.msra.mxu0 %v3368
    %3560 = vmatprep.subr.bf16.mxu0 %v3377
    %3561 = vmatpush1.bf16.msra.mxu0 %v3376
    %3562 = vmatprep.subr.bf16.mxu0 %v3385
    %3563 = vmatpush1.bf16.msra.mxu0 %v3384
    %3564 = vmatprep.subr.bf16.mxu0 %v3393
    %3565 = vmatpush1.bf16.msra.mxu0 %v3392
    %3566 = vmatprep.subr.bf16.mxu0 %v3401
    %3567 = vmatpush1.bf16.msra.mxu0 %v3400
    %3568 = vmatprep.mubr.bf16.mxu0 0
    %3569 = vmatmul.mubr.bf16.gmra.mrb[0].mxu0 0
    %v3570 = vpop.f32.mrb[0].mxu0
    %v3571 = vadd.f32 %v2767, %v3570
    %v3572 = vpop.f32.mrb[0].mxu0
    %v3573 = vadd.f32 %v2769, %v3572
    %v3574 = vpop.f32.mrb[0].mxu0
    %v3575 = vpop.f32.mrb[0].mxu0
    %3576 = vdwg.mxu0
    %3577 = vmatprep.subr.bf16.mxu0 %v3283
    %3578 = vmatpush1.bf16.msra.mxu0 %v3282
    %3579 = vmatprep.subr.bf16.mxu0 %v3291
    %3580 = vmatpush1.bf16.msra.mxu0 %v3290
    %3581 = vmatprep.subr.bf16.mxu0 %v3299
    %3582 = vmatpush1.bf16.msra.mxu0 %v3298
    %3583 = vmatprep.subr.bf16.mxu0 %v3307
    %3584 = vmatpush1.bf16.msra.mxu0 %v3306
    %3585 = vmatprep.subr.bf16.mxu0 %v3315
    %3586 = vmatpush1.bf16.msra.mxu0 %v3314
    %3587 = vmatprep.subr.bf16.mxu0 %v3323
    %3588 = vmatpush1.bf16.msra.mxu0 %v3322
    %3589 = vmatprep.subr.bf16.mxu0 %v3331
    %3590 = vmatpush1.bf16.msra.mxu0 %v3330
    %3591 = vmatprep.subr.bf16.mxu0 %v3339
    %3592 = vmatpush1.bf16.msra.mxu0 %v3338
    %3593 = vmatprep.subr.bf16.mxu0 %v3347
    %3594 = vmatpush1.bf16.msra.mxu0 %v3346
    %3595 = vmatprep.subr.bf16.mxu0 %v3355
    %3596 = vmatpush1.bf16.msra.mxu0 %v3354
    %3597 = vmatprep.subr.bf16.mxu0 %v3363
    %3598 = vmatpush1.bf16.msra.mxu0 %v3362
    %3599 = vmatprep.subr.bf16.mxu0 %v3371
    %3600 = vmatpush1.bf16.msra.mxu0 %v3370
    %3601 = vmatprep.subr.bf16.mxu0 %v3379
    %3602 = vmatpush1.bf16.msra.mxu0 %v3378
    %3603 = vmatprep.subr.bf16.mxu0 %v3387
    %3604 = vmatpush1.bf16.msra.mxu0 %v3386
    %3605 = vmatprep.subr.bf16.mxu0 %v3395
    %3606 = vmatpush1.bf16.msra.mxu0 %v3394
    %3607 = vmatprep.subr.bf16.mxu0 %v3403
    %3608 = vmatpush1.bf16.msra.mxu0 %v3402
    %3609 = vmatprep.mubr.bf16.mxu0 0
    %3610 = vmatmul.mubr.bf16.gmra.mrb[0].mxu0 0
    %v3611 = vpop.f32.mrb[0].mxu0
    %v3612 = vadd.f32 %v2808, %v3611
    %v3613 = vpop.f32.mrb[0].mxu0
    %v3614 = vadd.f32 %v2810, %v3613
    %v3615 = vpop.f32.mrb[0].mxu0
    %v3616 = vpop.f32.mrb[0].mxu0
    %3617 = vdwg.mxu0
    %3618 = vmatprep.subr.bf16.mxu0 %v3285
    %3619 = vmatpush1.bf16.msra.mxu0 %v3284
    %3620 = vmatprep.subr.bf16.mxu0 %v3293
    %3621 = vmatpush1.bf16.msra.mxu0 %v3292
    %3622 = vmatprep.subr.bf16.mxu0 %v3301
    %3623 = vmatpush1.bf16.msra.mxu0 %v3300
    %3624 = vmatprep.subr.bf16.mxu0 %v3309
    %3625 = vmatpush1.bf16.msra.mxu0 %v3308
    %3626 = vmatprep.subr.bf16.mxu0 %v3317
    %3627 = vmatpush1.bf16.msra.mxu0 %v3316
    %3628 = vmatprep.subr.bf16.mxu0 %v3325
    %3629 = vmatpush1.bf16.msra.mxu0 %v3324
    %3630 = vmatprep.subr.bf16.mxu0 %v3333
    %3631 = vmatpush1.bf16.msra.mxu0 %v3332
    %3632 = vmatprep.subr.bf16.mxu0 %v3341
    %3633 = vmatpush1.bf16.msra.mxu0 %v3340
    %3634 = vmatprep.subr.bf16.mxu0 %v3349
    %3635 = vmatpush1.bf16.msra.mxu0 %v3348
    %3636 = vmatprep.subr.bf16.mxu0 %v3357
    %3637 = vmatpush1.bf16.msra.mxu0 %v3356
    %3638 = vmatprep.subr.bf16.mxu0 %v3365
    %3639 = vmatpush1.bf16.msra.mxu0 %v3364
    %3640 = vmatprep.subr.bf16.mxu0 %v3373
    %3641 = vmatpush1.bf16.msra.mxu0 %v3372
    %3642 = vmatprep.subr.bf16.mxu0 %v3381
    %3643 = vmatpush1.bf16.msra.mxu0 %v3380
    %3644 = vmatprep.subr.bf16.mxu0 %v3389
    %3645 = vmatpush1.bf16.msra.mxu0 %v3388
    %3646 = vmatprep.subr.bf16.mxu0 %v3397
    %3647 = vmatpush1.bf16.msra.mxu0 %v3396
    %3648 = vmatprep.subr.bf16.mxu0 %v3405
    %3649 = vmatpush1.bf16.msra.mxu0 %v3404
    %3650 = vmatprep.mubr.bf16.mxu0 0
    %3651 = vmatmul.mubr.bf16.gmra.mrb[0].mxu0 0
    %v3652 = vpop.f32.mrb[0].mxu0
    %v3653 = vadd.f32 %v2849, %v3652
    %v3654 = vpop.f32.mrb[0].mxu0
    %v3655 = vadd.f32 %v2851, %v3654
    %v3656 = vpop.f32.mrb[0].mxu0
    %v3657 = vpop.f32.mrb[0].mxu0
    %3658 = vdwg.mxu0
    %3659 = vmatprep.subr.bf16.mxu0 %v3287
    %3660 = vmatpush1.bf16.msra.mxu0 %v3286
    %3661 = vmatprep.subr.bf16.mxu0 %v3295
    %3662 = vmatpush1.bf16.msra.mxu0 %v3294
    %3663 = vmatprep.subr.bf16.mxu0 %v3303
    %3664 = vmatpush1.bf16.msra.mxu0 %v3302
    %3665 = vmatprep.subr.bf16.mxu0 %v3311
    %3666 = vmatpush1.bf16.msra.mxu0 %v3310
    %3667 = vmatprep.subr.bf16.mxu0 %v3319
    %3668 = vmatpush1.bf16.msra.mxu0 %v3318
    %3669 = vmatprep.subr.bf16.mxu0 %v3327
    %3670 = vmatpush1.bf16.msra.mxu0 %v3326
    %3671 = vmatprep.subr.bf16.mxu0 %v3335
    %3672 = vmatpush1.bf16.msra.mxu0 %v3334
    %3673 = vmatprep.subr.bf16.mxu0 %v3343
    %3674 = vmatpush1.bf16.msra.mxu0 %v3342
    %3675 = vmatprep.subr.bf16.mxu0 %v3351
    %3676 = vmatpush1.bf16.msra.mxu0 %v3350
    %3677 = vmatprep.subr.bf16.mxu0 %v3359
    %3678 = vmatpush1.bf16.msra.mxu0 %v3358
    %3679 = vmatprep.subr.bf16.mxu0 %v3367
    %3680 = vmatpush1.bf16.msra.mxu0 %v3366
    %3681 = vmatprep.subr.bf16.mxu0 %v3375
    %3682 = vmatpush1.bf16.msra.mxu0 %v3374
    %3683 = vmatprep.subr.bf16.mxu0 %v3383
    %3684 = vmatpush1.bf16.msra.mxu0 %v3382
    %3685 = vmatprep.subr.bf16.mxu0 %v3391
    %3686 = vmatpush1.bf16.msra.mxu0 %v3390
    %3687 = vmatprep.subr.bf16.mxu0 %v3399
    %3688 = vmatpush1.bf16.msra.mxu0 %v3398
    %3689 = vmatprep.subr.bf16.mxu0 %v3407
    %3690 = vmatpush1.bf16.msra.mxu0 %v3406
    %3691 = vmatprep.mubr.bf16.mxu0 0
    %3692 = vmatmul.mubr.bf16.gmra.mrb[0].mxu0 0
    %v3693 = vpop.f32.mrb[0].mxu0
    %v3694 = vadd.f32 %v2890, %v3693
    %v3695 = vpop.f32.mrb[0].mxu0
    %v3696 = vadd.f32 %v2892, %v3695
    %v3697 = vpop.f32.mrb[0].mxu0
    %v3698 = vpop.f32.mrb[0].mxu0
    %3699 = vdwg.mxu0
    %v3700 = vadd.f32 %v3571, %v1197
    %v3701 = vadd.f32 %v3573, %v1201
    %v3702 = vadd.f32 %v3612, %v1205
    %v3703 = vadd.f32 %v3614, %v1209
    %v3704 = vadd.f32 %v3653, %v1213
    %v3705 = vadd.f32 %v3655, %v1217
    %v3706 = vadd.f32 %v3694, %v1221
    %v3707 = vadd.f32 %v3696, %v1225
    %v3708 = vmul.f32 %v3700, 0.5
    %v3709 = vmul.f32 %v3701, 0.5
    %v3710 = vmul.f32 %v3702, 0.5
    %v3711 = vmul.f32 %v3703, 0.5
    %v3712 = vmul.f32 %v3704, 0.5
    %v3713 = vmul.f32 %v3705, 0.5
    %v3714 = vtanh.pop %v3708
    %v3715 = vtanh.pop %v3709
    %v3716 = vtanh.pop %v3710
    %v3717 = vtanh.pop %v3711
    %v3718 = vtanh.pop %v3712
    %v3719 = vtanh.pop %v3713
    %v3720 = vadd.f32 %v3714, 1.0
    %v3721 = vadd.f32 %v3715, 1.0
    %v3722 = vadd.f32 %v3716, 1.0
    %v3723 = vadd.f32 %v3717, 1.0
    %v3724 = vadd.f32 %v3718, 1.0
    %v3725 = vadd.f32 %v3719, 1.0
    %v3726 = vmul.f32 %v3720, 0.5
    %v3727 = vmul.f32 %v3721, 0.5
    %v3728 = vmul.f32 %v3722, 0.5
    %v3729 = vmul.f32 %v3723, 0.5
    %v3730 = vmul.f32 %v3724, 0.5
    %v3731 = vmul.f32 %v3725, 0.5
    %v3732 = vtanh.pop %v3706
    %v3733 = vtanh.pop %v3707
    %v3734 = vmul.f32 %v3728, 0.0
    %v3735 = vmul.f32 %v3729, 0.0
    %v3736 = vmul.f32 %v3726, %v3732
    %v3737 = vmul.f32 %v3727, %v3733
    %v3738 = vadd.f32 %v3734, %v3736
    %v3739 = vadd.f32 %v3735, %v3737
    %v3740 = vtanh.pop %v3738
    %v3741 = vtanh.pop %v3739
    %v3742 = vmul.f32 %v3730, %v3740
    %v3743 = vmul.f32 %v3731, %v3741
    %v3744 = vpack.c.bf16 %v3742, %v3742
    %v3745 = vpack.c.bf16 %v3743, %v3743
    %v3746 = vld [vmem:[%s745] sm:$0xff]
    %v3747 = vld [vmem:[%s745 + $0x8] sm:$0xff]
    %v3748 = vld [vmem:[%s745 + $0x10] sm:$0xff]
    %v3749 = vld [vmem:[%s745 + $0x18] sm:$0xff]
    %v3750 = vld [vmem:[%s745 + $0x20] sm:$0xff]
    %v3751 = vld [vmem:[%s745 + $0x28] sm:$0xff]
    %v3752 = vld [vmem:[%s745 + $0x30] sm:$0xff]
    %v3753 = vld [vmem:[%s745 + $0x38] sm:$0xff]
    %3754 = vmatprep.subr.bf16.mxu0 %v1627
    %3755 = vmatpush1.bf16.msra.mxu0 %v1626
    %3756 = vmatprep.subr.bf16.mxu0 %v1635
    %3757 = vmatpush1.bf16.msra.mxu0 %v1634
    %3758 = vmatprep.subr.bf16.mxu0 %v1643
    %3759 = vmatpush1.bf16.msra.mxu0 %v1642
    %3760 = vmatprep.subr.bf16.mxu0 %v1651
    %3761 = vmatpush1.bf16.msra.mxu0 %v1650
    %3762 = vmatprep.subr.bf16.mxu0 %v1659
    %3763 = vmatpush1.bf16.msra.mxu0 %v1658
    %3764 = vmatprep.subr.bf16.mxu0 %v1667
    %3765 = vmatpush1.bf16.msra.mxu0 %v1666
    %3766 = vmatprep.subr.bf16.mxu0 %v1675
    %3767 = vmatpush1.bf16.msra.mxu0 %v1674
    %3768 = vmatprep.subr.bf16.mxu0 %v1683
    %3769 = vmatpush1.bf16.msra.mxu0 %v1682
    %3770 = vmatprep.subr.bf16.mxu0 %v1691
    %3771 = vmatpush1.bf16.msra.mxu0 %v1690
    %3772 = vmatprep.subr.bf16.mxu0 %v1699
    %3773 = vmatpush1.bf16.msra.mxu0 %v1698
    %3774 = vmatprep.subr.bf16.mxu0 %v1707
    %3775 = vmatpush1.bf16.msra.mxu0 %v1706
    %3776 = vmatprep.subr.bf16.mxu0 %v1715
    %3777 = vmatpush1.bf16.msra.mxu0 %v1714
    %3778 = vmatprep.subr.bf16.mxu0 %v1723
    %3779 = vmatpush1.bf16.msra.mxu0 %v1722
    %3780 = vmatprep.subr.bf16.mxu0 %v1731
    %3781 = vmatpush1.bf16.msra.mxu0 %v1730
    %3782 = vmatprep.subr.bf16.mxu0 %v1739
    %3783 = vmatpush1.bf16.msra.mxu0 %v1738
    %3784 = vmatprep.subr.bf16.mxu0 %v1747
    %3785 = vmatpush1.bf16.msra.mxu0 %v1746
    %3786 = vmatprep.mubr.bf16.mxu0 %v2091
    %3787 = vmatmul.mubr.bf16.gmra.mrb[0].mxu0 %v2090
    %v3788 = vpop.f32.mrb[0].mxu0
    %v3789 = vadd.f32 0.0, %v3788
    %v3790 = vpop.f32.mrb[0].mxu0
    %v3791 = vadd.f32 0.0, %v3790
    %v3792 = vpop.f32.mrb[0].mxu0
    %v3793 = vpop.f32.mrb[0].mxu0
    %3794 = vdwg.mxu0
    %3795 = vmatprep.subr.bf16.mxu0 %v1629
    %3796 = vmatpush1.bf16.msra.mxu0 %v1628
    %3797 = vmatprep.subr.bf16.mxu0 %v1637
    %3798 = vmatpush1.bf16.msra.mxu0 %v1636
    %3799 = vmatprep.subr.bf16.mxu0 %v1645
    %3800 = vmatpush1.bf16.msra.mxu0 %v1644
    %3801 = vmatprep.subr.bf16.mxu0 %v1653
    %3802 = vmatpush1.bf16.msra.mxu0 %v1652
    %3803 = vmatprep.subr.bf16.mxu0 %v1661
    %3804 = vmatpush1.bf16.msra.mxu0 %v1660
    %3805 = vmatprep.subr.bf16.mxu0 %v1669
    %3806 = vmatpush1.bf16.msra.mxu0 %v1668
    %3807 = vmatprep.subr.bf16.mxu0 %v1677
    %3808 = vmatpush1.bf16.msra.mxu0 %v1676
    %3809 = vmatprep.subr.bf16.mxu0 %v1685
    %3810 = vmatpush1.bf16.msra.mxu0 %v1684
    %3811 = vmatprep.subr.bf16.mxu0 %v1693
    %3812 = vmatpush1.bf16.msra.mxu0 %v1692
    %3813 = vmatprep.subr.bf16.mxu0 %v1701
    %3814 = vmatpush1.bf16.msra.mxu0 %v1700
    %3815 = vmatprep.subr.bf16.mxu0 %v1709
    %3816 = vmatpush1.bf16.msra.mxu0 %v1708
    %3817 = vmatprep.subr.bf16.mxu0 %v1717
    %3818 = vmatpush1.bf16.msra.mxu0 %v1716
    %3819 = vmatprep.subr.bf16.mxu0 %v1725
    %3820 = vmatpush1.bf16.msra.mxu0 %v1724
    %3821 = vmatprep.subr.bf16.mxu0 %v1733
    %3822 = vmatpush1.bf16.msra.mxu0 %v1732
    %3823 = vmatprep.subr.bf16.mxu0 %v1741
    %3824 = vmatpush1.bf16.msra.mxu0 %v1740
    %3825 = vmatprep.subr.bf16.mxu0 %v1749
    %3826 = vmatpush1.bf16.msra.mxu0 %v1748
    %3827 = vmatprep.mubr.bf16.mxu0 %v2091
    %3828 = vmatmul.mubr.bf16.gmra.mrb[0].mxu0 %v2090
    %v3829 = vpop.f32.mrb[0].mxu0
    %v3830 = vadd.f32 0.0, %v3829
    %v3831 = vpop.f32.mrb[0].mxu0
    %v3832 = vadd.f32 0.0, %v3831
    %v3833 = vpop.f32.mrb[0].mxu0
    %v3834 = vpop.f32.mrb[0].mxu0
    %3835 = vdwg.mxu0
    %3836 = vmatprep.subr.bf16.mxu0 %v1631
    %3837 = vmatpush1.bf16.msra.mxu0 %v1630
    %3838 = vmatprep.subr.bf16.mxu0 %v1639
    %3839 = vmatpush1.bf16.msra.mxu0 %v1638
    %3840 = vmatprep.subr.bf16.mxu0 %v1647
    %3841 = vmatpush1.bf16.msra.mxu0 %v1646
    %3842 = vmatprep.subr.bf16.mxu0 %v1655
    %3843 = vmatpush1.bf16.msra.mxu0 %v1654
    %3844 = vmatprep.subr.bf16.mxu0 %v1663
    %3845 = vmatpush1.bf16.msra.mxu0 %v1662
    %3846 = vmatprep.subr.bf16.mxu0 %v1671
    %3847 = vmatpush1.bf16.msra.mxu0 %v1670
    %3848 = vmatprep.subr.bf16.mxu0 %v1679
    %3849 = vmatpush1.bf16.msra.mxu0 %v1678
    %3850 = vmatprep.subr.bf16.mxu0 %v1687
    %3851 = vmatpush1.bf16.msra.mxu0 %v1686
    %3852 = vmatprep.subr.bf16.mxu0 %v1695
    %3853 = vmatpush1.bf16.msra.mxu0 %v1694
    %3854 = vmatprep.subr.bf16.mxu0 %v1703
    %3855 = vmatpush1.bf16.msra.mxu0 %v1702
    %3856 = vmatprep.subr.bf16.mxu0 %v1711
    %3857 = vmatpush1.bf16.msra.mxu0 %v1710
    %3858 = vmatprep.subr.bf16.mxu0 %v1719
    %3859 = vmatpush1.bf16.msra.mxu0 %v1718
    %3860 = vmatprep.subr.bf16.mxu0 %v1727
    %3861 = vmatpush1.bf16.msra.mxu0 %v1726
    %3862 = vmatprep.subr.bf16.mxu0 %v1735
    %3863 = vmatpush1.bf16.msra.mxu0 %v1734
    %3864 = vmatprep.subr.bf16.mxu0 %v1743
    %3865 = vmatpush1.bf16.msra.mxu0 %v1742
    %3866 = vmatprep.subr.bf16.mxu0 %v1751
    %3867 = vmatpush1.bf16.msra.mxu0 %v1750
    %3868 = vmatprep.mubr.bf16.mxu0 %v2091
    %3869 = vmatmul.mubr.bf16.gmra.mrb[0].mxu0 %v2090
    %v3870 = vpop.f32.mrb[0].mxu0
    %v3871 = vadd.f32 0.0, %v3870
    %v3872 = vpop.f32.mrb[0].mxu0
    %v3873 = vadd.f32 0.0, %v3872
    %v3874 = vpop.f32.mrb[0].mxu0
    %v3875 = vpop.f32.mrb[0].mxu0
    %3876 = vdwg.mxu0
    %3877 = vmatprep.subr.bf16.mxu0 %v1633
    %3878 = vmatpush1.bf16.msra.mxu0 %v1632
    %3879 = vmatprep.subr.bf16.mxu0 %v1641
    %3880 = vmatpush1.bf16.msra.mxu0 %v1640
    %3881 = vmatprep.subr.bf16.mxu0 %v1649
    %3882 = vmatpush1.bf16.msra.mxu0 %v1648
    %3883 = vmatprep.subr.bf16.mxu0 %v1657
    %3884 = vmatpush1.bf16.msra.mxu0 %v1656
    %3885 = vmatprep.subr.bf16.mxu0 %v1665
    %3886 = vmatpush1.bf16.msra.mxu0 %v1664
    %3887 = vmatprep.subr.bf16.mxu0 %v1673
    %3888 = vmatpush1.bf16.msra.mxu0 %v1672
    %3889 = vmatprep.subr.bf16.mxu0 %v1681
    %3890 = vmatpush1.bf16.msra.mxu0 %v1680
    %3891 = vmatprep.subr.bf16.mxu0 %v1689
    %3892 = vmatpush1.bf16.msra.mxu0 %v1688
    %3893 = vmatprep.subr.bf16.mxu0 %v1697
    %3894 = vmatpush1.bf16.msra.mxu0 %v1696
    %3895 = vmatprep.subr.bf16.mxu0 %v1705
    %3896 = vmatpush1.bf16.msra.mxu0 %v1704
    %3897 = vmatprep.subr.bf16.mxu0 %v1713
    %3898 = vmatpush1.bf16.msra.mxu0 %v1712
    %3899 = vmatprep.subr.bf16.mxu0 %v1721
    %3900 = vmatpush1.bf16.msra.mxu0 %v1720
    %3901 = vmatprep.subr.bf16.mxu0 %v1729
    %3902 = vmatpush1.bf16.msra.mxu0 %v1728
    %3903 = vmatprep.subr.bf16.mxu0 %v1737
    %3904 = vmatpush1.bf16.msra.mxu0 %v1736
    %3905 = vmatprep.subr.bf16.mxu0 %v1745
    %3906 = vmatpush1.bf16.msra.mxu0 %v1744
    %3907 = vmatprep.subr.bf16.mxu0 %v1753
    %3908 = vmatpush1.bf16.msra.mxu0 %v1752
    %3909 = vmatprep.mubr.bf16.mxu0 %v2091
    %3910 = vmatmul.mubr.bf16.gmra.mrb[0].mxu0 %v2090
    %v3911 = vpop.f32.mrb[0].mxu0
    %v3912 = vadd.f32 0.0, %v3911
    %v3913 = vpop.f32.mrb[0].mxu0
    %v3914 = vadd.f32 0.0, %v3913
    %v3915 = vpop.f32.mrb[0].mxu0
    %v3916 = vpop.f32.mrb[0].mxu0
    %3917 = vdwg.mxu0
    %v3918 = vadd.f32 %v3746, %v3789
    %v3919 = vadd.f32 %v3747, %v3791
    %v3920 = vadd.f32 %v3748, %v3830
    %v3921 = vadd.f32 %v3749, %v3832
    %v3922 = vadd.f32 %v3750, %v3871
    %v3923 = vadd.f32 %v3751, %v3873
    %v3924 = vadd.f32 %v3752, %v3912
    %v3925 = vadd.f32 %v3753, %v3914
    %v3926 = vmul.f32 %v3918, 0.5
    %v3927 = vmul.f32 %v3919, 0.5
    %v3928 = vmul.f32 %v3920, 0.5
    %v3929 = vmul.f32 %v3921, 0.5
    %v3930 = vmul.f32 %v3922, 0.5
    %v3931 = vmul.f32 %v3923, 0.5
    %v3932 = vtanh.pop %v3926
    %v3933 = vtanh.pop %v3927
    %v3934 = vtanh.pop %v3928
    %v3935 = vtanh.pop %v3929
    %v3936 = vtanh.pop %v3930
    %v3937 = vtanh.pop %v3931
    %v3938 = vadd.f32 %v3932, 1.0
    %v3939 = vadd.f32 %v3933, 1.0
    %v3940 = vadd.f32 %v3934, 1.0
    %v3941 = vadd.f32 %v3935, 1.0
    %v3942 = vadd.f32 %v3936, 1.0
    %v3943 = vadd.f32 %v3937, 1.0
    %v3944 = vmul.f32 %v3938, 0.5
    %v3945 = vmul.f32 %v3939, 0.5
    %v3946 = vmul.f32 %v3940, 0.5
    %v3947 = vmul.f32 %v3941, 0.5
    %v3948 = vmul.f32 %v3942, 0.5
    %v3949 = vmul.f32 %v3943, 0.5
    %v3950 = vtanh.pop %v3924
    %v3951 = vtanh.pop %v3925
    %v3952 = vmul.f32 %v3946, %v2084
    %v3953 = vmul.f32 %v3947, %v2085
    %v3954 = vmul.f32 %v3944, %v3950
    %v3955 = vmul.f32 %v3945, %v3951
    %v3956 = vadd.f32 %v3952, %v3954
    %v3957 = vadd.f32 %v3953, %v3955
    %v3958 = vtanh.pop %v3956
    %v3959 = vtanh.pop %v3957
    %v3960 = vmul.f32 %v3948, %v3958
    %v3961 = vmul.f32 %v3949, %v3959
    %v3962 = vpack.c.bf16 %v3960, %v3960
    %v3963 = vpack.c.bf16 %v3961, %v3961
    %3964 = vmatprep.subr.bf16.mxu0 %v2477
    %3965 = vmatpush1.bf16.msra.mxu0 %v2476
    %3966 = vmatprep.subr.bf16.mxu0 %v2485
    %3967 = vmatpush1.bf16.msra.mxu0 %v2484
    %3968 = vmatprep.subr.bf16.mxu0 %v2493
    %3969 = vmatpush1.bf16.msra.mxu0 %v2492
    %3970 = vmatprep.subr.bf16.mxu0 %v2501
    %3971 = vmatpush1.bf16.msra.mxu0 %v2500
    %3972 = vmatprep.subr.bf16.mxu0 %v2509
    %3973 = vmatpush1.bf16.msra.mxu0 %v2508
    %3974 = vmatprep.subr.bf16.mxu0 %v2517
    %3975 = vmatpush1.bf16.msra.mxu0 %v2516
    %3976 = vmatprep.subr.bf16.mxu0 %v2525
    %3977 = vmatpush1.bf16.msra.mxu0 %v2524
    %3978 = vmatprep.subr.bf16.mxu0 %v2533
    %3979 = vmatpush1.bf16.msra.mxu0 %v2532
    %3980 = vmatprep.subr.bf16.mxu0 %v2541
    %3981 = vmatpush1.bf16.msra.mxu0 %v2540
    %3982 = vmatprep.subr.bf16.mxu0 %v2549
    %3983 = vmatpush1.bf16.msra.mxu0 %v2548
    %3984 = vmatprep.subr.bf16.mxu0 %v2557
    %3985 = vmatpush1.bf16.msra.mxu0 %v2556
    %3986 = vmatprep.subr.bf16.mxu0 %v2565
    %3987 = vmatpush1.bf16.msra.mxu0 %v2564
    %3988 = vmatprep.subr.bf16.mxu0 %v2573
    %3989 = vmatpush1.bf16.msra.mxu0 %v2572
    %3990 = vmatprep.subr.bf16.mxu0 %v2581
    %3991 = vmatpush1.bf16.msra.mxu0 %v2580
    %3992 = vmatprep.subr.bf16.mxu0 %v2589
    %3993 = vmatpush1.bf16.msra.mxu0 %v2588
    %3994 = vmatprep.subr.bf16.mxu0 %v2597
    %3995 = vmatpush1.bf16.msra.mxu0 %v2596
    %3996 = vmatprep.mubr.bf16.mxu0 %v3963
    %3997 = vmatmul.mubr.bf16.gmra.mrb[0].mxu0 %v3962
    %v3998 = vpop.f32.mrb[0].mxu0
    %v3999 = vadd.f32 0.0, %v3998
    %v4000 = vpop.f32.mrb[0].mxu0
    %v4001 = vadd.f32 0.0, %v4000
    %v4002 = vpop.f32.mrb[0].mxu0
    %v4003 = vpop.f32.mrb[0].mxu0
    %4004 = vdwg.mxu0
    %4005 = vmatprep.subr.bf16.mxu0 %v2479
    %4006 = vmatpush1.bf16.msra.mxu0 %v2478
    %4007 = vmatprep.subr.bf16.mxu0 %v2487
    %4008 = vmatpush1.bf16.msra.mxu0 %v2486
    %4009 = vmatprep.subr.bf16.mxu0 %v2495
    %4010 = vmatpush1.bf16.msra.mxu0 %v2494
    %4011 = vmatprep.subr.bf16.mxu0 %v2503
    %4012 = vmatpush1.bf16.msra.mxu0 %v2502
    %4013 = vmatprep.subr.bf16.mxu0 %v2511
    %4014 = vmatpush1.bf16.msra.mxu0 %v2510
    %4015 = vmatprep.subr.bf16.mxu0 %v2519
    %4016 = vmatpush1.bf16.msra.mxu0 %v2518
    %4017 = vmatprep.subr.bf16.mxu0 %v2527
    %4018 = vmatpush1.bf16.msra.mxu0 %v2526
    %4019 = vmatprep.subr.bf16.mxu0 %v2535
    %4020 = vmatpush1.bf16.msra.mxu0 %v2534
    %4021 = vmatprep.subr.bf16.mxu0 %v2543
    %4022 = vmatpush1.bf16.msra.mxu0 %v2542
    %4023 = vmatprep.subr.bf16.mxu0 %v2551
    %4024 = vmatpush1.bf16.msra.mxu0 %v2550
    %4025 = vmatprep.subr.bf16.mxu0 %v2559
    %4026 = vmatpush1.bf16.msra.mxu0 %v2558
    %4027 = vmatprep.subr.bf16.mxu0 %v2567
    %4028 = vmatpush1.bf16.msra.mxu0 %v2566
    %4029 = vmatprep.subr.bf16.mxu0 %v2575
    %4030 = vmatpush1.bf16.msra.mxu0 %v2574
    %4031 = vmatprep.subr.bf16.mxu0 %v2583
    %4032 = vmatpush1.bf16.msra.mxu0 %v2582
    %4033 = vmatprep.subr.bf16.mxu0 %v2591
    %4034 = vmatpush1.bf16.msra.mxu0 %v2590
    %4035 = vmatprep.subr.bf16.mxu0 %v2599
    %4036 = vmatpush1.bf16.msra.mxu0 %v2598
    %4037 = vmatprep.mubr.bf16.mxu0 %v3963
    %4038 = vmatmul.mubr.bf16.gmra.mrb[0].mxu0 %v3962
    %v4039 = vpop.f32.mrb[0].mxu0
    %v4040 = vadd.f32 0.0, %v4039
    %v4041 = vpop.f32.mrb[0].mxu0
    %v4042 = vadd.f32 0.0, %v4041
    %v4043 = vpop.f32.mrb[0].mxu0
    %v4044 = vpop.f32.mrb[0].mxu0
    %4045 = vdwg.mxu0
    %4046 = vmatprep.subr.bf16.mxu0 %v2481
    %4047 = vmatpush1.bf16.msra.mxu0 %v2480
    %4048 = vmatprep.subr.bf16.mxu0 %v2489
    %4049 = vmatpush1.bf16.msra.mxu0 %v2488
    %4050 = vmatprep.subr.bf16.mxu0 %v2497
    %4051 = vmatpush1.bf16.msra.mxu0 %v2496
    %4052 = vmatprep.subr.bf16.mxu0 %v2505
    %4053 = vmatpush1.bf16.msra.mxu0 %v2504
    %4054 = vmatprep.subr.bf16.mxu0 %v2513
    %4055 = vmatpush1.bf16.msra.mxu0 %v2512
    %4056 = vmatprep.subr.bf16.mxu0 %v2521
    %4057 = vmatpush1.bf16.msra.mxu0 %v2520
    %4058 = vmatprep.subr.bf16.mxu0 %v2529
    %4059 = vmatpush1.bf16.msra.mxu0 %v2528
    %4060 = vmatprep.subr.bf16.mxu0 %v2537
    %4061 = vmatpush1.bf16.msra.mxu0 %v2536
    %4062 = vmatprep.subr.bf16.mxu0 %v2545
    %4063 = vmatpush1.bf16.msra.mxu0 %v2544
    %4064 = vmatprep.subr.bf16.mxu0 %v2553
    %4065 = vmatpush1.bf16.msra.mxu0 %v2552
    %4066 = vmatprep.subr.bf16.mxu0 %v2561
    %4067 = vmatpush1.bf16.msra.mxu0 %v2560
    %4068 = vmatprep.subr.bf16.mxu0 %v2569
    %4069 = vmatpush1.bf16.msra.mxu0 %v2568
    %4070 = vmatprep.subr.bf16.mxu0 %v2577
    %4071 = vmatpush1.bf16.msra.mxu0 %v2576
    %4072 = vmatprep.subr.bf16.mxu0 %v2585
    %4073 = vmatpush1.bf16.msra.mxu0 %v2584
    %4074 = vmatprep.subr.bf16.mxu0 %v2593
    %4075 = vmatpush1.bf16.msra.mxu0 %v2592
    %4076 = vmatprep.subr.bf16.mxu0 %v2601
    %4077 = vmatpush1.bf16.msra.mxu0 %v2600
    %4078 = vmatprep.mubr.bf16.mxu0 %v3963
    %4079 = vmatmul.mubr.bf16.gmra.mrb[0].mxu0 %v3962
    %v4080 = vpop.f32.mrb[0].mxu0
    %v4081 = vadd.f32 0.0, %v4080
    %v4082 = vpop.f32.mrb[0].mxu0
    %v4083 = vadd.f32 0.0, %v4082
    %v4084 = vpop.f32.mrb[0].mxu0
    %v4085 = vpop.f32.mrb[0].mxu0
    %4086 = vdwg.mxu0
    %4087 = vmatprep.subr.bf16.mxu0 %v2483
    %4088 = vmatpush1.bf16.msra.mxu0 %v2482
    %4089 = vmatprep.subr.bf16.mxu0 %v2491
    %4090 = vmatpush1.bf16.msra.mxu0 %v2490
    %4091 = vmatprep.subr.bf16.mxu0 %v2499
    %4092 = vmatpush1.bf16.msra.mxu0 %v2498
    %4093 = vmatprep.subr.bf16.mxu0 %v2507
    %4094 = vmatpush1.bf16.msra.mxu0 %v2506
    %4095 = vmatprep.subr.bf16.mxu0 %v2515
    %4096 = vmatpush1.bf16.msra.mxu0 %v2514
    %4097 = vmatprep.subr.bf16.mxu0 %v2523
    %4098 = vmatpush1.bf16.msra.mxu0 %v2522
    %4099 = vmatprep.subr.bf16.mxu0 %v2531
    %4100 = vmatpush1.bf16.msra.mxu0 %v2530
    %4101 = vmatprep.subr.bf16.mxu0 %v2539
    %4102 = vmatpush1.bf16.msra.mxu0 %v2538
    %4103 = vmatprep.subr.bf16.mxu0 %v2547
    %4104 = vmatpush1.bf16.msra.mxu0 %v2546
    %4105 = vmatprep.subr.bf16.mxu0 %v2555
    %4106 = vmatpush1.bf16.msra.mxu0 %v2554
    %4107 = vmatprep.subr.bf16.mxu0 %v2563
    %4108 = vmatpush1.bf16.msra.mxu0 %v2562
    %4109 = vmatprep.subr.bf16.mxu0 %v2571
    %4110 = vmatpush1.bf16.msra.mxu0 %v2570
    %4111 = vmatprep.subr.bf16.mxu0 %v2579
    %4112 = vmatpush1.bf16.msra.mxu0 %v2578
    %4113 = vmatprep.subr.bf16.mxu0 %v2587
    %4114 = vmatpush1.bf16.msra.mxu0 %v2586
    %4115 = vmatprep.subr.bf16.mxu0 %v2595
    %4116 = vmatpush1.bf16.msra.mxu0 %v2594
    %4117 = vmatprep.subr.bf16.mxu0 %v2603
    %4118 = vmatpush1.bf16.msra.mxu0 %v2602
    %4119 = vmatprep.mubr.bf16.mxu0 %v3963
    %4120 = vmatmul.mubr.bf16.gmra.mrb[0].mxu0 %v3962
    %v4121 = vpop.f32.mrb[0].mxu0
    %v4122 = vadd.f32 0.0, %v4121
    %v4123 = vpop.f32.mrb[0].mxu0
    %v4124 = vadd.f32 0.0, %v4123
    %v4125 = vpop.f32.mrb[0].mxu0
    %v4126 = vpop.f32.mrb[0].mxu0
    %4127 = vdwg.mxu0
    %4128 = vmatprep.subr.bf16.mxu0 %v3281
    %4129 = vmatpush1.bf16.msra.mxu0 %v3280
    %4130 = vmatprep.subr.bf16.mxu0 %v3289
    %4131 = vmatpush1.bf16.msra.mxu0 %v3288
    %4132 = vmatprep.subr.bf16.mxu0 %v3297
    %4133 = vmatpush1.bf16.msra.mxu0 %v3296
    %4134 = vmatprep.subr.bf16.mxu0 %v3305
    %4135 = vmatpush1.bf16.msra.mxu0 %v3304
    %4136 = vmatprep.subr.bf16.mxu0 %v3313
    %4137 = vmatpush1.bf16.msra.mxu0 %v3312
    %4138 = vmatprep.subr.bf16.mxu0 %v3321
    %4139 = vmatpush1.bf16.msra.mxu0 %v3320
    %4140 = vmatprep.subr.bf16.mxu0 %v3329
    %4141 = vmatpush1.bf16.msra.mxu0 %v3328
    %4142 = vmatprep.subr.bf16.mxu0 %v3337
    %4143 = vmatpush1.bf16.msra.mxu0 %v3336
    %4144 = vmatprep.subr.bf16.mxu0 %v3345
    %4145 = vmatpush1.bf16.msra.mxu0 %v3344
    %4146 = vmatprep.subr.bf16.mxu0 %v3353
    %4147 = vmatpush1.bf16.msra.mxu0 %v3352
    %4148 = vmatprep.subr.bf16.mxu0 %v3361
    %4149 = vmatpush1.bf16.msra.mxu0 %v3360
    %4150 = vmatprep.subr.bf16.mxu0 %v3369
    %4151 = vmatpush1.bf16.msra.mxu0 %v3368
    %4152 = vmatprep.subr.bf16.mxu0 %v3377
    %4153 = vmatpush1.bf16.msra.mxu0 %v3376
    %4154 = vmatprep.subr.bf16.mxu0 %v3385
    %4155 = vmatpush1.bf16.msra.mxu0 %v3384
    %4156 = vmatprep.subr.bf16.mxu0 %v3393
    %4157 = vmatpush1.bf16.msra.mxu0 %v3392
    %4158 = vmatprep.subr.bf16.mxu0 %v3401
    %4159 = vmatpush1.bf16.msra.mxu0 %v3400
    %4160 = vmatprep.mubr.bf16.mxu0 %v3745
    %4161 = vmatmul.mubr.bf16.gmra.mrb[0].mxu0 %v3744
    %v4162 = vpop.f32.mrb[0].mxu0
    %v4163 = vadd.f32 %v3999, %v4162
    %v4164 = vpop.f32.mrb[0].mxu0
    %v4165 = vadd.f32 %v4001, %v4164
    %v4166 = vpop.f32.mrb[0].mxu0
    %v4167 = vpop.f32.mrb[0].mxu0
    %4168 = vdwg.mxu0
    %4169 = vmatprep.subr.bf16.mxu0 %v3283
    %4170 = vmatpush1.bf16.msra.mxu0 %v3282
    %4171 = vmatprep.subr.bf16.mxu0 %v3291
    %4172 = vmatpush1.bf16.msra.mxu0 %v3290
    %4173 = vmatprep.subr.bf16.mxu0 %v3299
    %4174 = vmatpush1.bf16.msra.mxu0 %v3298
    %4175 = vmatprep.subr.bf16.mxu0 %v3307
    %4176 = vmatpush1.bf16.msra.mxu0 %v3306
    %4177 = vmatprep.subr.bf16.mxu0 %v3315
    %4178 = vmatpush1.bf16.msra.mxu0 %v3314
    %4179 = vmatprep.subr.bf16.mxu0 %v3323
    %4180 = vmatpush1.bf16.msra.mxu0 %v3322
    %4181 = vmatprep.subr.bf16.mxu0 %v3331
    %4182 = vmatpush1.bf16.msra.mxu0 %v3330
    %4183 = vmatprep.subr.bf16.mxu0 %v3339
    %4184 = vmatpush1.bf16.msra.mxu0 %v3338
    %4185 = vmatprep.subr.bf16.mxu0 %v3347
    %4186 = vmatpush1.bf16.msra.mxu0 %v3346
    %4187 = vmatprep.subr.bf16.mxu0 %v3355
    %4188 = vmatpush1.bf16.msra.mxu0 %v3354
    %4189 = vmatprep.subr.bf16.mxu0 %v3363
    %4190 = vmatpush1.bf16.msra.mxu0 %v3362
    %4191 = vmatprep.subr.bf16.mxu0 %v3371
    %4192 = vmatpush1.bf16.msra.mxu0 %v3370
    %4193 = vmatprep.subr.bf16.mxu0 %v3379
    %4194 = vmatpush1.bf16.msra.mxu0 %v3378
    %4195 = vmatprep.subr.bf16.mxu0 %v3387
    %4196 = vmatpush1.bf16.msra.mxu0 %v3386
    %4197 = vmatprep.subr.bf16.mxu0 %v3395
    %4198 = vmatpush1.bf16.msra.mxu0 %v3394
    %4199 = vmatprep.subr.bf16.mxu0 %v3403
    %4200 = vmatpush1.bf16.msra.mxu0 %v3402
    %4201 = vmatprep.mubr.bf16.mxu0 %v3745
    %4202 = vmatmul.mubr.bf16.gmra.mrb[0].mxu0 %v3744
    %v4203 = vpop.f32.mrb[0].mxu0
    %v4204 = vadd.f32 %v4040, %v4203
    %v4205 = vpop.f32.mrb[0].mxu0
    %v4206 = vadd.f32 %v4042, %v4205
    %v4207 = vpop.f32.mrb[0].mxu0
    %v4208 = vpop.f32.mrb[0].mxu0
    %4209 = vdwg.mxu0
    %4210 = vmatprep.subr.bf16.mxu0 %v3285
    %4211 = vmatpush1.bf16.msra.mxu0 %v3284
    %4212 = vmatprep.subr.bf16.mxu0 %v3293
    %4213 = vmatpush1.bf16.msra.mxu0 %v3292
    %4214 = vmatprep.subr.bf16.mxu0 %v3301
    %4215 = vmatpush1.bf16.msra.mxu0 %v3300
    %4216 = vmatprep.subr.bf16.mxu0 %v3309
    %4217 = vmatpush1.bf16.msra.mxu0 %v3308
    %4218 = vmatprep.subr.bf16.mxu0 %v3317
    %4219 = vmatpush1.bf16.msra.mxu0 %v3316
    %4220 = vmatprep.subr.bf16.mxu0 %v3325
    %4221 = vmatpush1.bf16.msra.mxu0 %v3324
    %4222 = vmatprep.subr.bf16.mxu0 %v3333
    %4223 = vmatpush1.bf16.msra.mxu0 %v3332
    %4224 = vmatprep.subr.bf16.mxu0 %v3341
    %4225 = vmatpush1.bf16.msra.mxu0 %v3340
    %4226 = vmatprep.subr.bf16.mxu0 %v3349
    %4227 = vmatpush1.bf16.msra.mxu0 %v3348
    %4228 = vmatprep.subr.bf16.mxu0 %v3357
    %4229 = vmatpush1.bf16.msra.mxu0 %v3356
    %4230 = vmatprep.subr.bf16.mxu0 %v3365
    %4231 = vmatpush1.bf16.msra.mxu0 %v3364
    %4232 = vmatprep.subr.bf16.mxu0 %v3373
    %4233 = vmatpush1.bf16.msra.mxu0 %v3372
    %4234 = vmatprep.subr.bf16.mxu0 %v3381
    %4235 = vmatpush1.bf16.msra.mxu0 %v3380
    %4236 = vmatprep.subr.bf16.mxu0 %v3389
    %4237 = vmatpush1.bf16.msra.mxu0 %v3388
    %4238 = vmatprep.subr.bf16.mxu0 %v3397
    %4239 = vmatpush1.bf16.msra.mxu0 %v3396
    %4240 = vmatprep.subr.bf16.mxu0 %v3405
    %4241 = vmatpush1.bf16.msra.mxu0 %v3404
    %4242 = vmatprep.mubr.bf16.mxu0 %v3745
    %4243 = vmatmul.mubr.bf16.gmra.mrb[0].mxu0 %v3744
    %v4244 = vpop.f32.mrb[0].mxu0
    %v4245 = vadd.f32 %v4081, %v4244
    %v4246 = vpop.f32.mrb[0].mxu0
    %v4247 = vadd.f32 %v4083, %v4246
    %v4248 = vpop.f32.mrb[0].mxu0
    %v4249 = vpop.f32.mrb[0].mxu0
    %4250 = vdwg.mxu0
    %4251 = vmatprep.subr.bf16.mxu0 %v3287
    %4252 = vmatpush1.bf16.msra.mxu0 %v3286
    %4253 = vmatprep.subr.bf16.mxu0 %v3295
    %4254 = vmatpush1.bf16.msra.mxu0 %v3294
    %4255 = vmatprep.subr.bf16.mxu0 %v3303
    %4256 = vmatpush1.bf16.msra.mxu0 %v3302
    %4257 = vmatprep.subr.bf16.mxu0 %v3311
    %4258 = vmatpush1.bf16.msra.mxu0 %v3310
    %4259 = vmatprep.subr.bf16.mxu0 %v3319
    %4260 = vmatpush1.bf16.msra.mxu0 %v3318
    %4261 = vmatprep.subr.bf16.mxu0 %v3327
    %4262 = vmatpush1.bf16.msra.mxu0 %v3326
    %4263 = vmatprep.subr.bf16.mxu0 %v3335
    %4264 = vmatpush1.bf16.msra.mxu0 %v3334
    %4265 = vmatprep.subr.bf16.mxu0 %v3343
    %4266 = vmatpush1.bf16.msra.mxu0 %v3342
    %4267 = vmatprep.subr.bf16.mxu0 %v3351
    %4268 = vmatpush1.bf16.msra.mxu0 %v3350
    %4269 = vmatprep.subr.bf16.mxu0 %v3359
    %4270 = vmatpush1.bf16.msra.mxu0 %v3358
    %4271 = vmatprep.subr.bf16.mxu0 %v3367
    %4272 = vmatpush1.bf16.msra.mxu0 %v3366
    %4273 = vmatprep.subr.bf16.mxu0 %v3375
    %4274 = vmatpush1.bf16.msra.mxu0 %v3374
    %4275 = vmatprep.subr.bf16.mxu0 %v3383
    %4276 = vmatpush1.bf16.msra.mxu0 %v3382
    %4277 = vmatprep.subr.bf16.mxu0 %v3391
    %4278 = vmatpush1.bf16.msra.mxu0 %v3390
    %4279 = vmatprep.subr.bf16.mxu0 %v3399
    %4280 = vmatpush1.bf16.msra.mxu0 %v3398
    %4281 = vmatprep.subr.bf16.mxu0 %v3407
    %4282 = vmatpush1.bf16.msra.mxu0 %v3406
    %4283 = vmatprep.mubr.bf16.mxu0 %v3745
    %4284 = vmatmul.mubr.bf16.gmra.mrb[0].mxu0 %v3744
    %v4285 = vpop.f32.mrb[0].mxu0
    %v4286 = vadd.f32 %v4122, %v4285
    %v4287 = vpop.f32.mrb[0].mxu0
    %v4288 = vadd.f32 %v4124, %v4287
    %v4289 = vpop.f32.mrb[0].mxu0
    %v4290 = vpop.f32.mrb[0].mxu0
    %4291 = vdwg.mxu0
    %v4292 = vadd.f32 %v4163, %v1197
    %v4293 = vadd.f32 %v4165, %v1201
    %v4294 = vadd.f32 %v4204, %v1205
    %v4295 = vadd.f32 %v4206, %v1209
    %v4296 = vadd.f32 %v4245, %v1213
    %v4297 = vadd.f32 %v4247, %v1217
    %v4298 = vadd.f32 %v4286, %v1221
    %v4299 = vadd.f32 %v4288, %v1225
    %v4300 = vmul.f32 %v4292, 0.5
    %v4301 = vmul.f32 %v4293, 0.5
    %v4302 = vmul.f32 %v4294, 0.5
    %v4303 = vmul.f32 %v4295, 0.5
    %v4304 = vmul.f32 %v4296, 0.5
    %v4305 = vmul.f32 %v4297, 0.5
    %v4306 = vtanh.pop %v4300
    %v4307 = vtanh.pop %v4301
    %v4308 = vtanh.pop %v4302
    %v4309 = vtanh.pop %v4303
    %v4310 = vtanh.pop %v4304
    %v4311 = vtanh.pop %v4305
    %v4312 = vadd.f32 %v4306, 1.0
    %v4313 = vadd.f32 %v4307, 1.0
    %v4314 = vadd.f32 %v4308, 1.0
    %v4315 = vadd.f32 %v4309, 1.0
    %v4316 = vadd.f32 %v4310, 1.0
    %v4317 = vadd.f32 %v4311, 1.0
    %v4318 = vmul.f32 %v4312, 0.5
    %v4319 = vmul.f32 %v4313, 0.5
    %v4320 = vmul.f32 %v4314, 0.5
    %v4321 = vmul.f32 %v4315, 0.5
    %v4322 = vmul.f32 %v4316, 0.5
    %v4323 = vmul.f32 %v4317, 0.5
    %v4324 = vtanh.pop %v4298
    %v4325 = vtanh.pop %v4299
    %v4326 = vmul.f32 %v4320, %v3738
    %v4327 = vmul.f32 %v4321, %v3739
    %v4328 = vmul.f32 %v4318, %v4324
    %v4329 = vmul.f32 %v4319, %v4325
    %v4330 = vadd.f32 %v4326, %v4328
    %v4331 = vadd.f32 %v4327, %v4329
    %v4332 = vtanh.pop %v4330
    %v4333 = vtanh.pop %v4331
    %v4334 = vmul.f32 %v4322, %v4332
    %v4335 = vmul.f32 %v4323, %v4333
    %v4336 = vpack.c.bf16 %v4334, %v4334
    %v4337 = vpack.c.bf16 %v4335, %v4335
    %v4338 = vld [vmem:[%s754] sm:$0xff]
    %v4339 = vld [vmem:[%s754 + $0x8] sm:$0xff]
    %v4340 = vld [vmem:[%s754 + $0x10] sm:$0xff]
    %v4341 = vld [vmem:[%s754 + $0x18] sm:$0xff]
    %v4342 = vld [vmem:[%s754 + $0x20] sm:$0xff]
    %v4343 = vld [vmem:[%s754 + $0x28] sm:$0xff]
    %v4344 = vld [vmem:[%s754 + $0x30] sm:$0xff]
    %v4345 = vld [vmem:[%s754 + $0x38] sm:$0xff]
    %4346 = vmatprep.subr.bf16.mxu0 %v1627
    %4347 = vmatpush1.bf16.msra.mxu0 %v1626
    %4348 = vmatprep.subr.bf16.mxu0 %v1635
    %4349 = vmatpush1.bf16.msra.mxu0 %v1634
    %4350 = vmatprep.subr.bf16.mxu0 %v1643
    %4351 = vmatpush1.bf16.msra.mxu0 %v1642
    %4352 = vmatprep.subr.bf16.mxu0 %v1651
    %4353 = vmatpush1.bf16.msra.mxu0 %v1650
    %4354 = vmatprep.subr.bf16.mxu0 %v1659
    %4355 = vmatpush1.bf16.msra.mxu0 %v1658
    %4356 = vmatprep.subr.bf16.mxu0 %v1667
    %4357 = vmatpush1.bf16.msra.mxu0 %v1666
    %4358 = vmatprep.subr.bf16.mxu0 %v1675
    %4359 = vmatpush1.bf16.msra.mxu0 %v1674
    %4360 = vmatprep.subr.bf16.mxu0 %v1683
    %4361 = vmatpush1.bf16.msra.mxu0 %v1682
    %4362 = vmatprep.subr.bf16.mxu0 %v1691
    %4363 = vmatpush1.bf16.msra.mxu0 %v1690
    %4364 = vmatprep.subr.bf16.mxu0 %v1699
    %4365 = vmatpush1.bf16.msra.mxu0 %v1698
    %4366 = vmatprep.subr.bf16.mxu0 %v1707
    %4367 = vmatpush1.bf16.msra.mxu0 %v1706
    %4368 = vmatprep.subr.bf16.mxu0 %v1715
    %4369 = vmatpush1.bf16.msra.mxu0 %v1714
    %4370 = vmatprep.subr.bf16.mxu0 %v1723
    %4371 = vmatpush1.bf16.msra.mxu0 %v1722
    %4372 = vmatprep.subr.bf16.mxu0 %v1731
    %4373 = vmatpush1.bf16.msra.mxu0 %v1730
    %4374 = vmatprep.subr.bf16.mxu0 %v1739
    %4375 = vmatpush1.bf16.msra.mxu0 %v1738
    %4376 = vmatprep.subr.bf16.mxu0 %v1747
    %4377 = vmatpush1.bf16.msra.mxu0 %v1746
    %4378 = vmatprep.mubr.bf16.mxu0 %v3963
    %4379 = vmatmul.mubr.bf16.gmra.mrb[0].mxu0 %v3962
    %v4380 = vpop.f32.mrb[0].mxu0
    %v4381 = vadd.f32 0.0, %v4380
    %v4382 = vpop.f32.mrb[0].mxu0
    %v4383 = vadd.f32 0.0, %v4382
    %v4384 = vpop.f32.mrb[0].mxu0
    %v4385 = vpop.f32.mrb[0].mxu0
    %4386 = vdwg.mxu0
    %4387 = vmatprep.subr.bf16.mxu0 %v1629
    %4388 = vmatpush1.bf16.msra.mxu0 %v1628
    %4389 = vmatprep.subr.bf16.mxu0 %v1637
    %4390 = vmatpush1.bf16.msra.mxu0 %v1636
    %4391 = vmatprep.subr.bf16.mxu0 %v1645
    %4392 = vmatpush1.bf16.msra.mxu0 %v1644
    %4393 = vmatprep.subr.bf16.mxu0 %v1653
    %4394 = vmatpush1.bf16.msra.mxu0 %v1652
    %4395 = vmatprep.subr.bf16.mxu0 %v1661
    %4396 = vmatpush1.bf16.msra.mxu0 %v1660
    %4397 = vmatprep.subr.bf16.mxu0 %v1669
    %4398 = vmatpush1.bf16.msra.mxu0 %v1668
    %4399 = vmatprep.subr.bf16.mxu0 %v1677
    %4400 = vmatpush1.bf16.msra.mxu0 %v1676
    %4401 = vmatprep.subr.bf16.mxu0 %v1685
    %4402 = vmatpush1.bf16.msra.mxu0 %v1684
    %4403 = vmatprep.subr.bf16.mxu0 %v1693
    %4404 = vmatpush1.bf16.msra.mxu0 %v1692
    %4405 = vmatprep.subr.bf16.mxu0 %v1701
    %4406 = vmatpush1.bf16.msra.mxu0 %v1700
    %4407 = vmatprep.subr.bf16.mxu0 %v1709
    %4408 = vmatpush1.bf16.msra.mxu0 %v1708
    %4409 = vmatprep.subr.bf16.mxu0 %v1717
    %4410 = vmatpush1.bf16.msra.mxu0 %v1716
    %4411 = vmatprep.subr.bf16.mxu0 %v1725
    %4412 = vmatpush1.bf16.msra.mxu0 %v1724
    %4413 = vmatprep.subr.bf16.mxu0 %v1733
    %4414 = vmatpush1.bf16.msra.mxu0 %v1732
    %4415 = vmatprep.subr.bf16.mxu0 %v1741
    %4416 = vmatpush1.bf16.msra.mxu0 %v1740
    %4417 = vmatprep.subr.bf16.mxu0 %v1749
    %4418 = vmatpush1.bf16.msra.mxu0 %v1748
    %4419 = vmatprep.mubr.bf16.mxu0 %v3963
    %4420 = vmatmul.mubr.bf16.gmra.mrb[0].mxu0 %v3962
    %v4421 = vpop.f32.mrb[0].mxu0
    %v4422 = vadd.f32 0.0, %v4421
    %v4423 = vpop.f32.mrb[0].mxu0
    %v4424 = vadd.f32 0.0, %v4423
    %v4425 = vpop.f32.mrb[0].mxu0
    %v4426 = vpop.f32.mrb[0].mxu0
    %4427 = vdwg.mxu0
    %4428 = vmatprep.subr.bf16.mxu0 %v1631
    %4429 = vmatpush1.bf16.msra.mxu0 %v1630
    %4430 = vmatprep.subr.bf16.mxu0 %v1639
    %4431 = vmatpush1.bf16.msra.mxu0 %v1638
    %4432 = vmatprep.subr.bf16.mxu0 %v1647
    %4433 = vmatpush1.bf16.msra.mxu0 %v1646
    %4434 = vmatprep.subr.bf16.mxu0 %v1655
    %4435 = vmatpush1.bf16.msra.mxu0 %v1654
    %4436 = vmatprep.subr.bf16.mxu0 %v1663
    %4437 = vmatpush1.bf16.msra.mxu0 %v1662
    %4438 = vmatprep.subr.bf16.mxu0 %v1671
    %4439 = vmatpush1.bf16.msra.mxu0 %v1670
    %4440 = vmatprep.subr.bf16.mxu0 %v1679
    %4441 = vmatpush1.bf16.msra.mxu0 %v1678
    %4442 = vmatprep.subr.bf16.mxu0 %v1687
    %4443 = vmatpush1.bf16.msra.mxu0 %v1686
    %4444 = vmatprep.subr.bf16.mxu0 %v1695
    %4445 = vmatpush1.bf16.msra.mxu0 %v1694
    %4446 = vmatprep.subr.bf16.mxu0 %v1703
    %4447 = vmatpush1.bf16.msra.mxu0 %v1702
    %4448 = vmatprep.subr.bf16.mxu0 %v1711
    %4449 = vmatpush1.bf16.msra.mxu0 %v1710
    %4450 = vmatprep.subr.bf16.mxu0 %v1719
    %4451 = vmatpush1.bf16.msra.mxu0 %v1718
    %4452 = vmatprep.subr.bf16.mxu0 %v1727
    %4453 = vmatpush1.bf16.msra.mxu0 %v1726
    %4454 = vmatprep.subr.bf16.mxu0 %v1735
    %4455 = vmatpush1.bf16.msra.mxu0 %v1734
    %4456 = vmatprep.subr.bf16.mxu0 %v1743
    %4457 = vmatpush1.bf16.msra.mxu0 %v1742
    %4458 = vmatprep.subr.bf16.mxu0 %v1751
    %4459 = vmatpush1.bf16.msra.mxu0 %v1750
    %4460 = vmatprep.mubr.bf16.mxu0 %v3963
    %4461 = vmatmul.mubr.bf16.gmra.mrb[0].mxu0 %v3962
    %v4462 = vpop.f32.mrb[0].mxu0
    %v4463 = vadd.f32 0.0, %v4462
    %v4464 = vpop.f32.mrb[0].mxu0
    %v4465 = vadd.f32 0.0, %v4464
    %v4466 = vpop.f32.mrb[0].mxu0
    %v4467 = vpop.f32.mrb[0].mxu0
    %4468 = vdwg.mxu0
    %4469 = vmatprep.subr.bf16.mxu0 %v1633
    %4470 = vmatpush1.bf16.msra.mxu0 %v1632
    %4471 = vmatprep.subr.bf16.mxu0 %v1641
    %4472 = vmatpush1.bf16.msra.mxu0 %v1640
    %4473 = vmatprep.subr.bf16.mxu0 %v1649
    %4474 = vmatpush1.bf16.msra.mxu0 %v1648
    %4475 = vmatprep.subr.bf16.mxu0 %v1657
    %4476 = vmatpush1.bf16.msra.mxu0 %v1656
    %4477 = vmatprep.subr.bf16.mxu0 %v1665
    %4478 = vmatpush1.bf16.msra.mxu0 %v1664
    %4479 = vmatprep.subr.bf16.mxu0 %v1673
    %4480 = vmatpush1.bf16.msra.mxu0 %v1672
    %4481 = vmatprep.subr.bf16.mxu0 %v1681
    %4482 = vmatpush1.bf16.msra.mxu0 %v1680
    %4483 = vmatprep.subr.bf16.mxu0 %v1689
    %4484 = vmatpush1.bf16.msra.mxu0 %v1688
    %4485 = vmatprep.subr.bf16.mxu0 %v1697
    %4486 = vmatpush1.bf16.msra.mxu0 %v1696
    %4487 = vmatprep.subr.bf16.mxu0 %v1705
    %4488 = vmatpush1.bf16.msra.mxu0 %v1704
    %4489 = vmatprep.subr.bf16.mxu0 %v1713
    %4490 = vmatpush1.bf16.msra.mxu0 %v1712
    %4491 = vmatprep.subr.bf16.mxu0 %v1721
    %4492 = vmatpush1.bf16.msra.mxu0 %v1720
    %4493 = vmatprep.subr.bf16.mxu0 %v1729
    %4494 = vmatpush1.bf16.msra.mxu0 %v1728
    %4495 = vmatprep.subr.bf16.mxu0 %v1737
    %4496 = vmatpush1.bf16.msra.mxu0 %v1736
    %4497 = vmatprep.subr.bf16.mxu0 %v1745
    %4498 = vmatpush1.bf16.msra.mxu0 %v1744
    %4499 = vmatprep.subr.bf16.mxu0 %v1753
    %4500 = vmatpush1.bf16.msra.mxu0 %v1752
    %4501 = vmatprep.mubr.bf16.mxu0 %v3963
    %4502 = vmatmul.mubr.bf16.gmra.mrb[0].mxu0 %v3962
    %v4503 = vpop.f32.mrb[0].mxu0
    %v4504 = vadd.f32 0.0, %v4503
    %v4505 = vpop.f32.mrb[0].mxu0
    %v4506 = vadd.f32 0.0, %v4505
    %v4507 = vpop.f32.mrb[0].mxu0
    %v4508 = vpop.f32.mrb[0].mxu0
    %4509 = vdwg.mxu0
    %v4510 = vadd.f32 %v4338, %v4381
    %v4511 = vadd.f32 %v4339, %v4383
    %v4512 = vadd.f32 %v4340, %v4422
    %v4513 = vadd.f32 %v4341, %v4424
    %v4514 = vadd.f32 %v4342, %v4463
    %v4515 = vadd.f32 %v4343, %v4465
    %v4516 = vadd.f32 %v4344, %v4504
    %v4517 = vadd.f32 %v4345, %v4506
    %v4518 = vmul.f32 %v4510, 0.5
    %v4519 = vmul.f32 %v4511, 0.5
    %v4520 = vmul.f32 %v4512, 0.5
    %v4521 = vmul.f32 %v4513, 0.5
    %v4522 = vmul.f32 %v4514, 0.5
    %v4523 = vmul.f32 %v4515, 0.5
    %v4524 = vtanh.pop %v4518
    %v4525 = vtanh.pop %v4519
    %v4526 = vtanh.pop %v4520
    %v4527 = vtanh.pop %v4521
    %v4528 = vtanh.pop %v4522
    %v4529 = vtanh.pop %v4523
    %v4530 = vadd.f32 %v4524, 1.0
    %v4531 = vadd.f32 %v4525, 1.0
    %v4532 = vadd.f32 %v4526, 1.0
    %v4533 = vadd.f32 %v4527, 1.0
    %v4534 = vadd.f32 %v4528, 1.0
    %v4535 = vadd.f32 %v4529, 1.0
    %v4536 = vmul.f32 %v4530, 0.5
    %v4537 = vmul.f32 %v4531, 0.5
    %v4538 = vmul.f32 %v4532, 0.5
    %v4539 = vmul.f32 %v4533, 0.5
    %v4540 = vmul.f32 %v4534, 0.5
    %v4541 = vmul.f32 %v4535, 0.5
    %v4542 = vtanh.pop %v4516
    %v4543 = vtanh.pop %v4517
    %v4544 = vmul.f32 %v4538, %v3956
    %v4545 = vmul.f32 %v4539, %v3957
    %v4546 = vmul.f32 %v4536, %v4542
    %v4547 = vmul.f32 %v4537, %v4543
    %v4548 = vadd.f32 %v4544, %v4546
    %v4549 = vadd.f32 %v4545, %v4547
    %v4550 = vtanh.pop %v4548
    %v4551 = vtanh.pop %v4549
    %v4552 = vmul.f32 %v4540, %v4550
    %v4553 = vmul.f32 %v4541, %v4551
    %v4554 = vpack.c.bf16 %v4552, %v4552
    %v4555 = vpack.c.bf16 %v4553, %v4553
    %4556 = vmatprep.subr.bf16.mxu0 %v2477
    %4557 = vmatpush1.bf16.msra.mxu0 %v2476
    %4558 = vmatprep.subr.bf16.mxu0 %v2485
    %4559 = vmatpush1.bf16.msra.mxu0 %v2484
    %4560 = vmatprep.subr.bf16.mxu0 %v2493
    %4561 = vmatpush1.bf16.msra.mxu0 %v2492
    %4562 = vmatprep.subr.bf16.mxu0 %v2501
    %4563 = vmatpush1.bf16.msra.mxu0 %v2500
    %4564 = vmatprep.subr.bf16.mxu0 %v2509
    %4565 = vmatpush1.bf16.msra.mxu0 %v2508
    %4566 = vmatprep.subr.bf16.mxu0 %v2517
    %4567 = vmatpush1.bf16.msra.mxu0 %v2516
    %4568 = vmatprep.subr.bf16.mxu0 %v2525
    %4569 = vmatpush1.bf16.msra.mxu0 %v2524
    %4570 = vmatprep.subr.bf16.mxu0 %v2533
    %4571 = vmatpush1.bf16.msra.mxu0 %v2532
    %4572 = vmatprep.subr.bf16.mxu0 %v2541
    %4573 = vmatpush1.bf16.msra.mxu0 %v2540
    %4574 = vmatprep.subr.bf16.mxu0 %v2549
    %4575 = vmatpush1.bf16.msra.mxu0 %v2548
    %4576 = vmatprep.subr.bf16.mxu0 %v2557
    %4577 = vmatpush1.bf16.msra.mxu0 %v2556
    %4578 = vmatprep.subr.bf16.mxu0 %v2565
    %4579 = vmatpush1.bf16.msra.mxu0 %v2564
    %4580 = vmatprep.subr.bf16.mxu0 %v2573
    %4581 = vmatpush1.bf16.msra.mxu0 %v2572
    %4582 = vmatprep.subr.bf16.mxu0 %v2581
    %4583 = vmatpush1.bf16.msra.mxu0 %v2580
    %4584 = vmatprep.subr.bf16.mxu0 %v2589
    %4585 = vmatpush1.bf16.msra.mxu0 %v2588
    %4586 = vmatprep.subr.bf16.mxu0 %v2597
    %4587 = vmatpush1.bf16.msra.mxu0 %v2596
    %4588 = vmatprep.mubr.bf16.mxu0 %v4555
    %4589 = vmatmul.mubr.bf16.gmra.mrb[0].mxu0 %v4554
    %v4590 = vpop.f32.mrb[0].mxu0
    %v4591 = vadd.f32 0.0, %v4590
    %v4592 = vpop.f32.mrb[0].mxu0
    %v4593 = vadd.f32 0.0, %v4592
    %v4594 = vpop.f32.mrb[0].mxu0
    %v4595 = vpop.f32.mrb[0].mxu0
    %4596 = vdwg.mxu0
    %4597 = vmatprep.subr.bf16.mxu0 %v2479
    %4598 = vmatpush1.bf16.msra.mxu0 %v2478
    %4599 = vmatprep.subr.bf16.mxu0 %v2487
    %4600 = vmatpush1.bf16.msra.mxu0 %v2486
    %4601 = vmatprep.subr.bf16.mxu0 %v2495
    %4602 = vmatpush1.bf16.msra.mxu0 %v2494
    %4603 = vmatprep.subr.bf16.mxu0 %v2503
    %4604 = vmatpush1.bf16.msra.mxu0 %v2502
    %4605 = vmatprep.subr.bf16.mxu0 %v2511
    %4606 = vmatpush1.bf16.msra.mxu0 %v2510
    %4607 = vmatprep.subr.bf16.mxu0 %v2519
    %4608 = vmatpush1.bf16.msra.mxu0 %v2518
    %4609 = vmatprep.subr.bf16.mxu0 %v2527
    %4610 = vmatpush1.bf16.msra.mxu0 %v2526
    %4611 = vmatprep.subr.bf16.mxu0 %v2535
    %4612 = vmatpush1.bf16.msra.mxu0 %v2534
    %4613 = vmatprep.subr.bf16.mxu0 %v2543
    %4614 = vmatpush1.bf16.msra.mxu0 %v2542
    %4615 = vmatprep.subr.bf16.mxu0 %v2551
    %4616 = vmatpush1.bf16.msra.mxu0 %v2550
    %4617 = vmatprep.subr.bf16.mxu0 %v2559
    %4618 = vmatpush1.bf16.msra.mxu0 %v2558
    %4619 = vmatprep.subr.bf16.mxu0 %v2567
    %4620 = vmatpush1.bf16.msra.mxu0 %v2566
    %4621 = vmatprep.subr.bf16.mxu0 %v2575
    %4622 = vmatpush1.bf16.msra.mxu0 %v2574
    %4623 = vmatprep.subr.bf16.mxu0 %v2583
    %4624 = vmatpush1.bf16.msra.mxu0 %v2582
    %4625 = vmatprep.subr.bf16.mxu0 %v2591
    %4626 = vmatpush1.bf16.msra.mxu0 %v2590
    %4627 = vmatprep.subr.bf16.mxu0 %v2599
    %4628 = vmatpush1.bf16.msra.mxu0 %v2598
    %4629 = vmatprep.mubr.bf16.mxu0 %v4555
    %4630 = vmatmul.mubr.bf16.gmra.mrb[0].mxu0 %v4554
    %v4631 = vpop.f32.mrb[0].mxu0
    %v4632 = vadd.f32 0.0, %v4631
    %v4633 = vpop.f32.mrb[0].mxu0
    %v4634 = vadd.f32 0.0, %v4633
    %v4635 = vpop.f32.mrb[0].mxu0
    %v4636 = vpop.f32.mrb[0].mxu0
    %4637 = vdwg.mxu0
    %4638 = vmatprep.subr.bf16.mxu0 %v2481
    %4639 = vmatpush1.bf16.msra.mxu0 %v2480
    %4640 = vmatprep.subr.bf16.mxu0 %v2489
    %4641 = vmatpush1.bf16.msra.mxu0 %v2488
    %4642 = vmatprep.subr.bf16.mxu0 %v2497
    %4643 = vmatpush1.bf16.msra.mxu0 %v2496
    %4644 = vmatprep.subr.bf16.mxu0 %v2505
    %4645 = vmatpush1.bf16.msra.mxu0 %v2504
    %4646 = vmatprep.subr.bf16.mxu0 %v2513
    %4647 = vmatpush1.bf16.msra.mxu0 %v2512
    %4648 = vmatprep.subr.bf16.mxu0 %v2521
    %4649 = vmatpush1.bf16.msra.mxu0 %v2520
    %4650 = vmatprep.subr.bf16.mxu0 %v2529
    %4651 = vmatpush1.bf16.msra.mxu0 %v2528
    %4652 = vmatprep.subr.bf16.mxu0 %v2537
    %4653 = vmatpush1.bf16.msra.mxu0 %v2536
    %4654 = vmatprep.subr.bf16.mxu0 %v2545
    %4655 = vmatpush1.bf16.msra.mxu0 %v2544
    %4656 = vmatprep.subr.bf16.mxu0 %v2553
    %4657 = vmatpush1.bf16.msra.mxu0 %v2552
    %4658 = vmatprep.subr.bf16.mxu0 %v2561
    %4659 = vmatpush1.bf16.msra.mxu0 %v2560
    %4660 = vmatprep.subr.bf16.mxu0 %v2569
    %4661 = vmatpush1.bf16.msra.mxu0 %v2568
    %4662 = vmatprep.subr.bf16.mxu0 %v2577
    %4663 = vmatpush1.bf16.msra.mxu0 %v2576
    %4664 = vmatprep.subr.bf16.mxu0 %v2585
    %4665 = vmatpush1.bf16.msra.mxu0 %v2584
    %4666 = vmatprep.subr.bf16.mxu0 %v2593
    %4667 = vmatpush1.bf16.msra.mxu0 %v2592
    %4668 = vmatprep.subr.bf16.mxu0 %v2601
    %4669 = vmatpush1.bf16.msra.mxu0 %v2600
    %4670 = vmatprep.mubr.bf16.mxu0 %v4555
    %4671 = vmatmul.mubr.bf16.gmra.mrb[0].mxu0 %v4554
    %v4672 = vpop.f32.mrb[0].mxu0
    %v4673 = vadd.f32 0.0, %v4672
    %v4674 = vpop.f32.mrb[0].mxu0
    %v4675 = vadd.f32 0.0, %v4674
    %v4676 = vpop.f32.mrb[0].mxu0
    %v4677 = vpop.f32.mrb[0].mxu0
    %4678 = vdwg.mxu0
    %4679 = vmatprep.subr.bf16.mxu0 %v2483
    %4680 = vmatpush1.bf16.msra.mxu0 %v2482
    %4681 = vmatprep.subr.bf16.mxu0 %v2491
    %4682 = vmatpush1.bf16.msra.mxu0 %v2490
    %4683 = vmatprep.subr.bf16.mxu0 %v2499
    %4684 = vmatpush1.bf16.msra.mxu0 %v2498
    %4685 = vmatprep.subr.bf16.mxu0 %v2507
    %4686 = vmatpush1.bf16.msra.mxu0 %v2506
    %4687 = vmatprep.subr.bf16.mxu0 %v2515
    %4688 = vmatpush1.bf16.msra.mxu0 %v2514
    %4689 = vmatprep.subr.bf16.mxu0 %v2523
    %4690 = vmatpush1.bf16.msra.mxu0 %v2522
    %4691 = vmatprep.subr.bf16.mxu0 %v2531
    %4692 = vmatpush1.bf16.msra.mxu0 %v2530
    %4693 = vmatprep.subr.bf16.mxu0 %v2539
    %4694 = vmatpush1.bf16.msra.mxu0 %v2538
    %4695 = vmatprep.subr.bf16.mxu0 %v2547
    %4696 = vmatpush1.bf16.msra.mxu0 %v2546
    %4697 = vmatprep.subr.bf16.mxu0 %v2555
    %4698 = vmatpush1.bf16.msra.mxu0 %v2554
    %4699 = vmatprep.subr.bf16.mxu0 %v2563
    %4700 = vmatpush1.bf16.msra.mxu0 %v2562
    %4701 = vmatprep.subr.bf16.mxu0 %v2571
    %4702 = vmatpush1.bf16.msra.mxu0 %v2570
    %4703 = vmatprep.subr.bf16.mxu0 %v2579
    %4704 = vmatpush1.bf16.msra.mxu0 %v2578
    %4705 = vmatprep.subr.bf16.mxu0 %v2587
    %4706 = vmatpush1.bf16.msra.mxu0 %v2586
    %4707 = vmatprep.subr.bf16.mxu0 %v2595
    %4708 = vmatpush1.bf16.msra.mxu0 %v2594
    %4709 = vmatprep.subr.bf16.mxu0 %v2603
    %4710 = vmatpush1.bf16.msra.mxu0 %v2602
    %4711 = vmatprep.mubr.bf16.mxu0 %v4555
    %4712 = vmatmul.mubr.bf16.gmra.mrb[0].mxu0 %v4554
    %v4713 = vpop.f32.mrb[0].mxu0
    %v4714 = vadd.f32 0.0, %v4713
    %v4715 = vpop.f32.mrb[0].mxu0
    %v4716 = vadd.f32 0.0, %v4715
    %v4717 = vpop.f32.mrb[0].mxu0
    %v4718 = vpop.f32.mrb[0].mxu0
    %4719 = vdwg.mxu0
    %4720 = vmatprep.subr.bf16.mxu0 %v3281
    %4721 = vmatpush1.bf16.msra.mxu0 %v3280
    %4722 = vmatprep.subr.bf16.mxu0 %v3289
    %4723 = vmatpush1.bf16.msra.mxu0 %v3288
    %4724 = vmatprep.subr.bf16.mxu0 %v3297
    %4725 = vmatpush1.bf16.msra.mxu0 %v3296
    %4726 = vmatprep.subr.bf16.mxu0 %v3305
    %4727 = vmatpush1.bf16.msra.mxu0 %v3304
    %4728 = vmatprep.subr.bf16.mxu0 %v3313
    %4729 = vmatpush1.bf16.msra.mxu0 %v3312
    %4730 = vmatprep.subr.bf16.mxu0 %v3321
    %4731 = vmatpush1.bf16.msra.mxu0 %v3320
    %4732 = vmatprep.subr.bf16.mxu0 %v3329
    %4733 = vmatpush1.bf16.msra.mxu0 %v3328
    %4734 = vmatprep.subr.bf16.mxu0 %v3337
    %4735 = vmatpush1.bf16.msra.mxu0 %v3336
    %4736 = vmatprep.subr.bf16.mxu0 %v3345
    %4737 = vmatpush1.bf16.msra.mxu0 %v3344
    %4738 = vmatprep.subr.bf16.mxu0 %v3353
    %4739 = vmatpush1.bf16.msra.mxu0 %v3352
    %4740 = vmatprep.subr.bf16.mxu0 %v3361
    %4741 = vmatpush1.bf16.msra.mxu0 %v3360
    %4742 = vmatprep.subr.bf16.mxu0 %v3369
    %4743 = vmatpush1.bf16.msra.mxu0 %v3368
    %4744 = vmatprep.subr.bf16.mxu0 %v3377
    %4745 = vmatpush1.bf16.msra.mxu0 %v3376
    %4746 = vmatprep.subr.bf16.mxu0 %v3385
    %4747 = vmatpush1.bf16.msra.mxu0 %v3384
    %4748 = vmatprep.subr.bf16.mxu0 %v3393
    %4749 = vmatpush1.bf16.msra.mxu0 %v3392
    %4750 = vmatprep.subr.bf16.mxu0 %v3401
    %4751 = vmatpush1.bf16.msra.mxu0 %v3400
    %4752 = vmatprep.mubr.bf16.mxu0 %v4337
    %4753 = vmatmul.mubr.bf16.gmra.mrb[0].mxu0 %v4336
    %v4754 = vpop.f32.mrb[0].mxu0
    %v4755 = vadd.f32 %v4591, %v4754
    %v4756 = vpop.f32.mrb[0].mxu0
    %v4757 = vadd.f32 %v4593, %v4756
    %v4758 = vpop.f32.mrb[0].mxu0
    %v4759 = vpop.f32.mrb[0].mxu0
    %4760 = vdwg.mxu0
    %4761 = vmatprep.subr.bf16.mxu0 %v3283
    %4762 = vmatpush1.bf16.msra.mxu0 %v3282
    %4763 = vmatprep.subr.bf16.mxu0 %v3291
    %4764 = vmatpush1.bf16.msra.mxu0 %v3290
    %4765 = vmatprep.subr.bf16.mxu0 %v3299
    %4766 = vmatpush1.bf16.msra.mxu0 %v3298
    %4767 = vmatprep.subr.bf16.mxu0 %v3307
    %4768 = vmatpush1.bf16.msra.mxu0 %v3306
    %4769 = vmatprep.subr.bf16.mxu0 %v3315
    %4770 = vmatpush1.bf16.msra.mxu0 %v3314
    %4771 = vmatprep.subr.bf16.mxu0 %v3323
    %4772 = vmatpush1.bf16.msra.mxu0 %v3322
    %4773 = vmatprep.subr.bf16.mxu0 %v3331
    %4774 = vmatpush1.bf16.msra.mxu0 %v3330
    %4775 = vmatprep.subr.bf16.mxu0 %v3339
    %4776 = vmatpush1.bf16.msra.mxu0 %v3338
    %4777 = vmatprep.subr.bf16.mxu0 %v3347
    %4778 = vmatpush1.bf16.msra.mxu0 %v3346
    %4779 = vmatprep.subr.bf16.mxu0 %v3355
    %4780 = vmatpush1.bf16.msra.mxu0 %v3354
    %4781 = vmatprep.subr.bf16.mxu0 %v3363
    %4782 = vmatpush1.bf16.msra.mxu0 %v3362
    %4783 = vmatprep.subr.bf16.mxu0 %v3371
    %4784 = vmatpush1.bf16.msra.mxu0 %v3370
    %4785 = vmatprep.subr.bf16.mxu0 %v3379
    %4786 = vmatpush1.bf16.msra.mxu0 %v3378
    %4787 = vmatprep.subr.bf16.mxu0 %v3387
    %4788 = vmatpush1.bf16.msra.mxu0 %v3386
    %4789 = vmatprep.subr.bf16.mxu0 %v3395
    %4790 = vmatpush1.bf16.msra.mxu0 %v3394
    %4791 = vmatprep.subr.bf16.mxu0 %v3403
    %4792 = vmatpush1.bf16.msra.mxu0 %v3402
    %4793 = vmatprep.mubr.bf16.mxu0 %v4337
    %4794 = vmatmul.mubr.bf16.gmra.mrb[0].mxu0 %v4336
    %v4795 = vpop.f32.mrb[0].mxu0
    %v4796 = vadd.f32 %v4632, %v4795
    %v4797 = vpop.f32.mrb[0].mxu0
    %v4798 = vadd.f32 %v4634, %v4797
    %v4799 = vpop.f32.mrb[0].mxu0
    %v4800 = vpop.f32.mrb[0].mxu0
    %4801 = vdwg.mxu0
    %4802 = vmatprep.subr.bf16.mxu0 %v3285
    %4803 = vmatpush1.bf16.msra.mxu0 %v3284
    %4804 = vmatprep.subr.bf16.mxu0 %v3293
    %4805 = vmatpush1.bf16.msra.mxu0 %v3292
    %4806 = vmatprep.subr.bf16.mxu0 %v3301
    %4807 = vmatpush1.bf16.msra.mxu0 %v3300
    %4808 = vmatprep.subr.bf16.mxu0 %v3309
    %4809 = vmatpush1.bf16.msra.mxu0 %v3308
    %4810 = vmatprep.subr.bf16.mxu0 %v3317
    %4811 = vmatpush1.bf16.msra.mxu0 %v3316
    %4812 = vmatprep.subr.bf16.mxu0 %v3325
    %4813 = vmatpush1.bf16.msra.mxu0 %v3324
    %4814 = vmatprep.subr.bf16.mxu0 %v3333
    %4815 = vmatpush1.bf16.msra.mxu0 %v3332
    %4816 = vmatprep.subr.bf16.mxu0 %v3341
    %4817 = vmatpush1.bf16.msra.mxu0 %v3340
    %4818 = vmatprep.subr.bf16.mxu0 %v3349
    %4819 = vmatpush1.bf16.msra.mxu0 %v3348
    %4820 = vmatprep.subr.bf16.mxu0 %v3357
    %4821 = vmatpush1.bf16.msra.mxu0 %v3356
    %4822 = vmatprep.subr.bf16.mxu0 %v3365
    %4823 = vmatpush1.bf16.msra.mxu0 %v3364
    %4824 = vmatprep.subr.bf16.mxu0 %v3373
    %4825 = vmatpush1.bf16.msra.mxu0 %v3372
    %4826 = vmatprep.subr.bf16.mxu0 %v3381
    %4827 = vmatpush1.bf16.msra.mxu0 %v3380
    %4828 = vmatprep.subr.bf16.mxu0 %v3389
    %4829 = vmatpush1.bf16.msra.mxu0 %v3388
    %4830 = vmatprep.subr.bf16.mxu0 %v3397
    %4831 = vmatpush1.bf16.msra.mxu0 %v3396
    %4832 = vmatprep.subr.bf16.mxu0 %v3405
    %4833 = vmatpush1.bf16.msra.mxu0 %v3404
    %4834 = vmatprep.mubr.bf16.mxu0 %v4337
    %4835 = vmatmul.mubr.bf16.gmra.mrb[0].mxu0 %v4336
    %v4836 = vpop.f32.mrb[0].mxu0
    %v4837 = vadd.f32 %v4673, %v4836
    %v4838 = vpop.f32.mrb[0].mxu0
    %v4839 = vadd.f32 %v4675, %v4838
    %v4840 = vpop.f32.mrb[0].mxu0
    %v4841 = vpop.f32.mrb[0].mxu0
    %4842 = vdwg.mxu0
    %4843 = vmatprep.subr.bf16.mxu0 %v3287
    %4844 = vmatpush1.bf16.msra.mxu0 %v3286
    %4845 = vmatprep.subr.bf16.mxu0 %v3295
    %4846 = vmatpush1.bf16.msra.mxu0 %v3294
    %4847 = vmatprep.subr.bf16.mxu0 %v3303
    %4848 = vmatpush1.bf16.msra.mxu0 %v3302
    %4849 = vmatprep.subr.bf16.mxu0 %v3311
    %4850 = vmatpush1.bf16.msra.mxu0 %v3310
    %4851 = vmatprep.subr.bf16.mxu0 %v3319
    %4852 = vmatpush1.bf16.msra.mxu0 %v3318
    %4853 = vmatprep.subr.bf16.mxu0 %v3327
    %4854 = vmatpush1.bf16.msra.mxu0 %v3326
    %4855 = vmatprep.subr.bf16.mxu0 %v3335
    %4856 = vmatpush1.bf16.msra.mxu0 %v3334
    %4857 = vmatprep.subr.bf16.mxu0 %v3343
    %4858 = vmatpush1.bf16.msra.mxu0 %v3342
    %4859 = vmatprep.subr.bf16.mxu0 %v3351
    %4860 = vmatpush1.bf16.msra.mxu0 %v3350
    %4861 = vmatprep.subr.bf16.mxu0 %v3359
    %4862 = vmatpush1.bf16.msra.mxu0 %v3358
    %4863 = vmatprep.subr.bf16.mxu0 %v3367
    %4864 = vmatpush1.bf16.msra.mxu0 %v3366
    %4865 = vmatprep.subr.bf16.mxu0 %v3375
    %4866 = vmatpush1.bf16.msra.mxu0 %v3374
    %4867 = vmatprep.subr.bf16.mxu0 %v3383
    %4868 = vmatpush1.bf16.msra.mxu0 %v3382
    %4869 = vmatprep.subr.bf16.mxu0 %v3391
    %4870 = vmatpush1.bf16.msra.mxu0 %v3390
    %4871 = vmatprep.subr.bf16.mxu0 %v3399
    %4872 = vmatpush1.bf16.msra.mxu0 %v3398
    %4873 = vmatprep.subr.bf16.mxu0 %v3407
    %4874 = vmatpush1.bf16.msra.mxu0 %v3406
    %4875 = vmatprep.mubr.bf16.mxu0 %v4337
    %4876 = vmatmul.mubr.bf16.gmra.mrb[0].mxu0 %v4336
    %v4877 = vpop.f32.mrb[0].mxu0
    %v4878 = vadd.f32 %v4714, %v4877
    %v4879 = vpop.f32.mrb[0].mxu0
    %v4880 = vadd.f32 %v4716, %v4879
    %v4881 = vpop.f32.mrb[0].mxu0
    %v4882 = vpop.f32.mrb[0].mxu0
    %4883 = vdwg.mxu0
    %v4884 = vadd.f32 %v4755, %v1197
    %v4885 = vadd.f32 %v4757, %v1201
    %v4886 = vadd.f32 %v4796, %v1205
    %v4887 = vadd.f32 %v4798, %v1209
    %v4888 = vadd.f32 %v4837, %v1213
    %v4889 = vadd.f32 %v4839, %v1217
    %v4890 = vadd.f32 %v4878, %v1221
    %v4891 = vadd.f32 %v4880, %v1225
    %v4892 = vmul.f32 %v4884, 0.5
    %v4893 = vmul.f32 %v4885, 0.5
    %v4894 = vmul.f32 %v4886, 0.5
    %v4895 = vmul.f32 %v4887, 0.5
    %v4896 = vmul.f32 %v4888, 0.5
    %v4897 = vmul.f32 %v4889, 0.5
    %v4898 = vtanh.pop %v4892
    %v4899 = vtanh.pop %v4893
    %v4900 = vtanh.pop %v4894
    %v4901 = vtanh.pop %v4895
    %v4902 = vtanh.pop %v4896
    %v4903 = vtanh.pop %v4897
    %v4904 = vadd.f32 %v4898, 1.0
    %v4905 = vadd.f32 %v4899, 1.0
    %v4906 = vadd.f32 %v4900, 1.0
    %v4907 = vadd.f32 %v4901, 1.0
    %v4908 = vadd.f32 %v4902, 1.0
    %v4909 = vadd.f32 %v4903, 1.0
    %v4910 = vmul.f32 %v4904, 0.5
    %v4911 = vmul.f32 %v4905, 0.5
    %v4912 = vmul.f32 %v4906, 0.5
    %v4913 = vmul.f32 %v4907, 0.5
    %v4914 = vmul.f32 %v4908, 0.5
    %v4915 = vmul.f32 %v4909, 0.5
    %v4916 = vtanh.pop %v4890
    %v4917 = vtanh.pop %v4891
    %v4918 = vmul.f32 %v4912, %v4330
    %v4919 = vmul.f32 %v4913, %v4331
    %v4920 = vmul.f32 %v4910, %v4916
    %v4921 = vmul.f32 %v4911, %v4917
    %v4922 = vadd.f32 %v4918, %v4920
    %v4923 = vadd.f32 %v4919, %v4921
    %v4924 = vtanh.pop %v4922
    %v4925 = vtanh.pop %v4923
    %v4926 = vmul.f32 %v4914, %v4924
    %v4927 = vmul.f32 %v4915, %v4925
    %v4928 = vpack.c.bf16 %v4926, %v4926
    %v4929 = vpack.c.bf16 %v4927, %v4927
    %v4930 = vld [vmem:[%s763] sm:$0xff]
    %v4931 = vld [vmem:[%s763 + $0x8] sm:$0xff]
    %v4932 = vld [vmem:[%s763 + $0x10] sm:$0xff]
    %v4933 = vld [vmem:[%s763 + $0x18] sm:$0xff]
    %v4934 = vld [vmem:[%s763 + $0x20] sm:$0xff]
    %v4935 = vld [vmem:[%s763 + $0x28] sm:$0xff]
    %v4936 = vld [vmem:[%s763 + $0x30] sm:$0xff]
    %v4937 = vld [vmem:[%s763 + $0x38] sm:$0xff]
    %4938 = vmatprep.subr.bf16.mxu0 %v1627
    %4939 = vmatpush1.bf16.msra.mxu0 %v1626
    %4940 = vmatprep.subr.bf16.mxu0 %v1635
    %4941 = vmatpush1.bf16.msra.mxu0 %v1634
    %4942 = vmatprep.subr.bf16.mxu0 %v1643
    %4943 = vmatpush1.bf16.msra.mxu0 %v1642
    %4944 = vmatprep.subr.bf16.mxu0 %v1651
    %4945 = vmatpush1.bf16.msra.mxu0 %v1650
    %4946 = vmatprep.subr.bf16.mxu0 %v1659
    %4947 = vmatpush1.bf16.msra.mxu0 %v1658
    %4948 = vmatprep.subr.bf16.mxu0 %v1667
    %4949 = vmatpush1.bf16.msra.mxu0 %v1666
    %4950 = vmatprep.subr.bf16.mxu0 %v1675
    %4951 = vmatpush1.bf16.msra.mxu0 %v1674
    %4952 = vmatprep.subr.bf16.mxu0 %v1683
    %4953 = vmatpush1.bf16.msra.mxu0 %v1682
    %4954 = vmatprep.subr.bf16.mxu0 %v1691
    %4955 = vmatpush1.bf16.msra.mxu0 %v1690
    %4956 = vmatprep.subr.bf16.mxu0 %v1699
    %4957 = vmatpush1.bf16.msra.mxu0 %v1698
    %4958 = vmatprep.subr.bf16.mxu0 %v1707
    %4959 = vmatpush1.bf16.msra.mxu0 %v1706
    %4960 = vmatprep.subr.bf16.mxu0 %v1715
    %4961 = vmatpush1.bf16.msra.mxu0 %v1714
    %4962 = vmatprep.subr.bf16.mxu0 %v1723
    %4963 = vmatpush1.bf16.msra.mxu0 %v1722
    %4964 = vmatprep.subr.bf16.mxu0 %v1731
    %4965 = vmatpush1.bf16.msra.mxu0 %v1730
    %4966 = vmatprep.subr.bf16.mxu0 %v1739
    %4967 = vmatpush1.bf16.msra.mxu0 %v1738
    %4968 = vmatprep.subr.bf16.mxu0 %v1747
    %4969 = vmatpush1.bf16.msra.mxu0 %v1746
    %4970 = vmatprep.mubr.bf16.mxu0 %v4555
    %4971 = vmatmul.mubr.bf16.gmra.mrb[0].mxu0 %v4554
    %v4972 = vpop.f32.mrb[0].mxu0
    %v4973 = vadd.f32 0.0, %v4972
    %v4974 = vpop.f32.mrb[0].mxu0
    %v4975 = vadd.f32 0.0, %v4974
    %v4976 = vpop.f32.mrb[0].mxu0
    %v4977 = vpop.f32.mrb[0].mxu0
    %4978 = vdwg.mxu0
    %4979 = vmatprep.subr.bf16.mxu0 %v1629
    %4980 = vmatpush1.bf16.msra.mxu0 %v1628
    %4981 = vmatprep.subr.bf16.mxu0 %v1637
    %4982 = vmatpush1.bf16.msra.mxu0 %v1636
    %4983 = vmatprep.subr.bf16.mxu0 %v1645
    %4984 = vmatpush1.bf16.msra.mxu0 %v1644
    %4985 = vmatprep.subr.bf16.mxu0 %v1653
    %4986 = vmatpush1.bf16.msra.mxu0 %v1652
    %4987 = vmatprep.subr.bf16.mxu0 %v1661
    %4988 = vmatpush1.bf16.msra.mxu0 %v1660
    %4989 = vmatprep.subr.bf16.mxu0 %v1669
    %4990 = vmatpush1.bf16.msra.mxu0 %v1668
    %4991 = vmatprep.subr.bf16.mxu0 %v1677
    %4992 = vmatpush1.bf16.msra.mxu0 %v1676
    %4993 = vmatprep.subr.bf16.mxu0 %v1685
    %4994 = vmatpush1.bf16.msra.mxu0 %v1684
    %4995 = vmatprep.subr.bf16.mxu0 %v1693
    %4996 = vmatpush1.bf16.msra.mxu0 %v1692
    %4997 = vmatprep.subr.bf16.mxu0 %v1701
    %4998 = vmatpush1.bf16.msra.mxu0 %v1700
    %4999 = vmatprep.subr.bf16.mxu0 %v1709
    %5000 = vmatpush1.bf16.msra.mxu0 %v1708
    %5001 = vmatprep.subr.bf16.mxu0 %v1717
    %5002 = vmatpush1.bf16.msra.mxu0 %v1716
    %5003 = vmatprep.subr.bf16.mxu0 %v1725
    %5004 = vmatpush1.bf16.msra.mxu0 %v1724
    %5005 = vmatprep.subr.bf16.mxu0 %v1733
    %5006 = vmatpush1.bf16.msra.mxu0 %v1732
    %5007 = vmatprep.subr.bf16.mxu0 %v1741
    %5008 = vmatpush1.bf16.msra.mxu0 %v1740
    %5009 = vmatprep.subr.bf16.mxu0 %v1749
    %5010 = vmatpush1.bf16.msra.mxu0 %v1748
    %5011 = vmatprep.mubr.bf16.mxu0 %v4555
    %5012 = vmatmul.mubr.bf16.gmra.mrb[0].mxu0 %v4554
    %v5013 = vpop.f32.mrb[0].mxu0
    %v5014 = vadd.f32 0.0, %v5013
    %v5015 = vpop.f32.mrb[0].mxu0
    %v5016 = vadd.f32 0.0, %v5015
    %v5017 = vpop.f32.mrb[0].mxu0
    %v5018 = vpop.f32.mrb[0].mxu0
    %5019 = vdwg.mxu0
    %5020 = vmatprep.subr.bf16.mxu0 %v1631
    %5021 = vmatpush1.bf16.msra.mxu0 %v1630
    %5022 = vmatprep.subr.bf16.mxu0 %v1639
    %5023 = vmatpush1.bf16.msra.mxu0 %v1638
    %5024 = vmatprep.subr.bf16.mxu0 %v1647
    %5025 = vmatpush1.bf16.msra.mxu0 %v1646
    %5026 = vmatprep.subr.bf16.mxu0 %v1655
    %5027 = vmatpush1.bf16.msra.mxu0 %v1654
    %5028 = vmatprep.subr.bf16.mxu0 %v1663
    %5029 = vmatpush1.bf16.msra.mxu0 %v1662
    %5030 = vmatprep.subr.bf16.mxu0 %v1671
    %5031 = vmatpush1.bf16.msra.mxu0 %v1670
    %5032 = vmatprep.subr.bf16.mxu0 %v1679
    %5033 = vmatpush1.bf16.msra.mxu0 %v1678
    %5034 = vmatprep.subr.bf16.mxu0 %v1687
    %5035 = vmatpush1.bf16.msra.mxu0 %v1686
    %5036 = vmatprep.subr.bf16.mxu0 %v1695
    %5037 = vmatpush1.bf16.msra.mxu0 %v1694
    %5038 = vmatprep.subr.bf16.mxu0 %v1703
    %5039 = vmatpush1.bf16.msra.mxu0 %v1702
    %5040 = vmatprep.subr.bf16.mxu0 %v1711
    %5041 = vmatpush1.bf16.msra.mxu0 %v1710
    %5042 = vmatprep.subr.bf16.mxu0 %v1719
    %5043 = vmatpush1.bf16.msra.mxu0 %v1718
    %5044 = vmatprep.subr.bf16.mxu0 %v1727
    %5045 = vmatpush1.bf16.msra.mxu0 %v1726
    %5046 = vmatprep.subr.bf16.mxu0 %v1735
    %5047 = vmatpush1.bf16.msra.mxu0 %v1734
    %5048 = vmatprep.subr.bf16.mxu0 %v1743
    %5049 = vmatpush1.bf16.msra.mxu0 %v1742
    %5050 = vmatprep.subr.bf16.mxu0 %v1751
    %5051 = vmatpush1.bf16.msra.mxu0 %v1750
    %5052 = vmatprep.mubr.bf16.mxu0 %v4555
    %5053 = vmatmul.mubr.bf16.gmra.mrb[0].mxu0 %v4554
    %v5054 = vpop.f32.mrb[0].mxu0
    %v5055 = vadd.f32 0.0, %v5054
    %v5056 = vpop.f32.mrb[0].mxu0
    %v5057 = vadd.f32 0.0, %v5056
    %v5058 = vpop.f32.mrb[0].mxu0
    %v5059 = vpop.f32.mrb[0].mxu0
    %5060 = vdwg.mxu0
    %5061 = vmatprep.subr.bf16.mxu0 %v1633
    %5062 = vmatpush1.bf16.msra.mxu0 %v1632
    %5063 = vmatprep.subr.bf16.mxu0 %v1641
    %5064 = vmatpush1.bf16.msra.mxu0 %v1640
    %5065 = vmatprep.subr.bf16.mxu0 %v1649
    %5066 = vmatpush1.bf16.msra.mxu0 %v1648
    %5067 = vmatprep.subr.bf16.mxu0 %v1657
    %5068 = vmatpush1.bf16.msra.mxu0 %v1656
    %5069 = vmatprep.subr.bf16.mxu0 %v1665
    %5070 = vmatpush1.bf16.msra.mxu0 %v1664
    %5071 = vmatprep.subr.bf16.mxu0 %v1673
    %5072 = vmatpush1.bf16.msra.mxu0 %v1672
    %5073 = vmatprep.subr.bf16.mxu0 %v1681
    %5074 = vmatpush1.bf16.msra.mxu0 %v1680
    %5075 = vmatprep.subr.bf16.mxu0 %v1689
    %5076 = vmatpush1.bf16.msra.mxu0 %v1688
    %5077 = vmatprep.subr.bf16.mxu0 %v1697
    %5078 = vmatpush1.bf16.msra.mxu0 %v1696
    %5079 = vmatprep.subr.bf16.mxu0 %v1705
    %5080 = vmatpush1.bf16.msra.mxu0 %v1704
    %5081 = vmatprep.subr.bf16.mxu0 %v1713
    %5082 = vmatpush1.bf16.msra.mxu0 %v1712
    %5083 = vmatprep.subr.bf16.mxu0 %v1721
    %5084 = vmatpush1.bf16.msra.mxu0 %v1720
    %5085 = vmatprep.subr.bf16.mxu0 %v1729
    %5086 = vmatpush1.bf16.msra.mxu0 %v1728
    %5087 = vmatprep.subr.bf16.mxu0 %v1737
    %5088 = vmatpush1.bf16.msra.mxu0 %v1736
    %5089 = vmatprep.subr.bf16.mxu0 %v1745
    %5090 = vmatpush1.bf16.msra.mxu0 %v1744
    %5091 = vmatprep.subr.bf16.mxu0 %v1753
    %5092 = vmatpush1.bf16.msra.mxu0 %v1752
    %5093 = vmatprep.mubr.bf16.mxu0 %v4555
    %5094 = vmatmul.mubr.bf16.gmra.mrb[0].mxu0 %v4554
    %v5095 = vpop.f32.mrb[0].mxu0
    %v5096 = vadd.f32 0.0, %v5095
    %v5097 = vpop.f32.mrb[0].mxu0
    %v5098 = vadd.f32 0.0, %v5097
    %v5099 = vpop.f32.mrb[0].mxu0
    %v5100 = vpop.f32.mrb[0].mxu0
    %5101 = vdwg.mxu0
    %v5102 = vadd.f32 %v4930, %v4973
    %v5103 = vadd.f32 %v4931, %v4975
    %v5104 = vadd.f32 %v4932, %v5014
    %v5105 = vadd.f32 %v4933, %v5016
    %v5106 = vadd.f32 %v4934, %v5055
    %v5107 = vadd.f32 %v4935, %v5057
    %v5108 = vadd.f32 %v4936, %v5096
    %v5109 = vadd.f32 %v4937, %v5098
    %v5110 = vmul.f32 %v5102, 0.5
    %v5111 = vmul.f32 %v5103, 0.5
    %v5112 = vmul.f32 %v5104, 0.5
    %v5113 = vmul.f32 %v5105, 0.5
    %v5114 = vmul.f32 %v5106, 0.5
    %v5115 = vmul.f32 %v5107, 0.5
    %v5116 = vtanh.pop %v5110
    %v5117 = vtanh.pop %v5111
    %v5118 = vtanh.pop %v5112
    %v5119 = vtanh.pop %v5113
    %v5120 = vtanh.pop %v5114
    %v5121 = vtanh.pop %v5115
    %v5122 = vadd.f32 %v5116, 1.0
    %v5123 = vadd.f32 %v5117, 1.0
    %v5124 = vadd.f32 %v5118, 1.0
    %v5125 = vadd.f32 %v5119, 1.0
    %v5126 = vadd.f32 %v5120, 1.0
    %v5127 = vadd.f32 %v5121, 1.0
    %v5128 = vmul.f32 %v5122, 0.5
    %v5129 = vmul.f32 %v5123, 0.5
    %v5130 = vmul.f32 %v5124, 0.5
    %v5131 = vmul.f32 %v5125, 0.5
    %v5132 = vmul.f32 %v5126, 0.5
    %v5133 = vmul.f32 %v5127, 0.5
    %v5134 = vtanh.pop %v5108
    %v5135 = vtanh.pop %v5109
    %v5136 = vmul.f32 %v5130, %v4548
    %v5137 = vmul.f32 %v5131, %v4549
    %v5138 = vmul.f32 %v5128, %v5134
    %v5139 = vmul.f32 %v5129, %v5135
    %v5140 = vadd.f32 %v5136, %v5138
    %v5141 = vadd.f32 %v5137, %v5139
    %v5142 = vtanh.pop %v5140
    %v5143 = vtanh.pop %v5141
    %v5144 = vmul.f32 %v5132, %v5142
    %v5145 = vmul.f32 %v5133, %v5143
    %v5146 = vpack.c.bf16 %v5144, %v5144
    %v5147 = vpack.c.bf16 %v5145, %v5145
    %5148 = vmatprep.subr.bf16.mxu0 %v2477
    %5149 = vmatpush1.bf16.msra.mxu0 %v2476
    %5150 = vmatprep.subr.bf16.mxu0 %v2485
    %5151 = vmatpush1.bf16.msra.mxu0 %v2484
    %5152 = vmatprep.subr.bf16.mxu0 %v2493
    %5153 = vmatpush1.bf16.msra.mxu0 %v2492
    %5154 = vmatprep.subr.bf16.mxu0 %v2501
    %5155 = vmatpush1.bf16.msra.mxu0 %v2500
    %5156 = vmatprep.subr.bf16.mxu0 %v2509
    %5157 = vmatpush1.bf16.msra.mxu0 %v2508
    %5158 = vmatprep.subr.bf16.mxu0 %v2517
    %5159 = vmatpush1.bf16.msra.mxu0 %v2516
    %5160 = vmatprep.subr.bf16.mxu0 %v2525
    %5161 = vmatpush1.bf16.msra.mxu0 %v2524
    %5162 = vmatprep.subr.bf16.mxu0 %v2533
    %5163 = vmatpush1.bf16.msra.mxu0 %v2532
    %5164 = vmatprep.subr.bf16.mxu0 %v2541
    %5165 = vmatpush1.bf16.msra.mxu0 %v2540
    %5166 = vmatprep.subr.bf16.mxu0 %v2549
    %5167 = vmatpush1.bf16.msra.mxu0 %v2548
    %5168 = vmatprep.subr.bf16.mxu0 %v2557
    %5169 = vmatpush1.bf16.msra.mxu0 %v2556
    %5170 = vmatprep.subr.bf16.mxu0 %v2565
    %5171 = vmatpush1.bf16.msra.mxu0 %v2564
    %5172 = vmatprep.subr.bf16.mxu0 %v2573
    %5173 = vmatpush1.bf16.msra.mxu0 %v2572
    %5174 = vmatprep.subr.bf16.mxu0 %v2581
    %5175 = vmatpush1.bf16.msra.mxu0 %v2580
    %5176 = vmatprep.subr.bf16.mxu0 %v2589
    %5177 = vmatpush1.bf16.msra.mxu0 %v2588
    %5178 = vmatprep.subr.bf16.mxu0 %v2597
    %5179 = vmatpush1.bf16.msra.mxu0 %v2596
    %5180 = vmatprep.mubr.bf16.mxu0 %v5147
    %5181 = vmatmul.mubr.bf16.gmra.mrb[0].mxu0 %v5146
    %v5182 = vpop.f32.mrb[0].mxu0
    %v5183 = vadd.f32 0.0, %v5182
    %v5184 = vpop.f32.mrb[0].mxu0
    %v5185 = vadd.f32 0.0, %v5184
    %v5186 = vpop.f32.mrb[0].mxu0
    %v5187 = vpop.f32.mrb[0].mxu0
    %5188 = vdwg.mxu0
    %5189 = vmatprep.subr.bf16.mxu0 %v2479
    %5190 = vmatpush1.bf16.msra.mxu0 %v2478
    %5191 = vmatprep.subr.bf16.mxu0 %v2487
    %5192 = vmatpush1.bf16.msra.mxu0 %v2486
    %5193 = vmatprep.subr.bf16.mxu0 %v2495
    %5194 = vmatpush1.bf16.msra.mxu0 %v2494
    %5195 = vmatprep.subr.bf16.mxu0 %v2503
    %5196 = vmatpush1.bf16.msra.mxu0 %v2502
    %5197 = vmatprep.subr.bf16.mxu0 %v2511
    %5198 = vmatpush1.bf16.msra.mxu0 %v2510
    %5199 = vmatprep.subr.bf16.mxu0 %v2519
    %5200 = vmatpush1.bf16.msra.mxu0 %v2518
    %5201 = vmatprep.subr.bf16.mxu0 %v2527
    %5202 = vmatpush1.bf16.msra.mxu0 %v2526
    %5203 = vmatprep.subr.bf16.mxu0 %v2535
    %5204 = vmatpush1.bf16.msra.mxu0 %v2534
    %5205 = vmatprep.subr.bf16.mxu0 %v2543
    %5206 = vmatpush1.bf16.msra.mxu0 %v2542
    %5207 = vmatprep.subr.bf16.mxu0 %v2551
    %5208 = vmatpush1.bf16.msra.mxu0 %v2550
    %5209 = vmatprep.subr.bf16.mxu0 %v2559
    %5210 = vmatpush1.bf16.msra.mxu0 %v2558
    %5211 = vmatprep.subr.bf16.mxu0 %v2567
    %5212 = vmatpush1.bf16.msra.mxu0 %v2566
    %5213 = vmatprep.subr.bf16.mxu0 %v2575
    %5214 = vmatpush1.bf16.msra.mxu0 %v2574
    %5215 = vmatprep.subr.bf16.mxu0 %v2583
    %5216 = vmatpush1.bf16.msra.mxu0 %v2582
    %5217 = vmatprep.subr.bf16.mxu0 %v2591
    %5218 = vmatpush1.bf16.msra.mxu0 %v2590
    %5219 = vmatprep.subr.bf16.mxu0 %v2599
    %5220 = vmatpush1.bf16.msra.mxu0 %v2598
    %5221 = vmatprep.mubr.bf16.mxu0 %v5147
    %5222 = vmatmul.mubr.bf16.gmra.mrb[0].mxu0 %v5146
    %v5223 = vpop.f32.mrb[0].mxu0
    %v5224 = vadd.f32 0.0, %v5223
    %v5225 = vpop.f32.mrb[0].mxu0
    %v5226 = vadd.f32 0.0, %v5225
    %v5227 = vpop.f32.mrb[0].mxu0
    %v5228 = vpop.f32.mrb[0].mxu0
    %5229 = vdwg.mxu0
    %5230 = vmatprep.subr.bf16.mxu0 %v2481
    %5231 = vmatpush1.bf16.msra.mxu0 %v2480
    %5232 = vmatprep.subr.bf16.mxu0 %v2489
    %5233 = vmatpush1.bf16.msra.mxu0 %v2488
    %5234 = vmatprep.subr.bf16.mxu0 %v2497
    %5235 = vmatpush1.bf16.msra.mxu0 %v2496
    %5236 = vmatprep.subr.bf16.mxu0 %v2505
    %5237 = vmatpush1.bf16.msra.mxu0 %v2504
    %5238 = vmatprep.subr.bf16.mxu0 %v2513
    %5239 = vmatpush1.bf16.msra.mxu0 %v2512
    %5240 = vmatprep.subr.bf16.mxu0 %v2521
    %5241 = vmatpush1.bf16.msra.mxu0 %v2520
    %5242 = vmatprep.subr.bf16.mxu0 %v2529
    %5243 = vmatpush1.bf16.msra.mxu0 %v2528
    %5244 = vmatprep.subr.bf16.mxu0 %v2537
    %5245 = vmatpush1.bf16.msra.mxu0 %v2536
    %5246 = vmatprep.subr.bf16.mxu0 %v2545
    %5247 = vmatpush1.bf16.msra.mxu0 %v2544
    %5248 = vmatprep.subr.bf16.mxu0 %v2553
    %5249 = vmatpush1.bf16.msra.mxu0 %v2552
    %5250 = vmatprep.subr.bf16.mxu0 %v2561
    %5251 = vmatpush1.bf16.msra.mxu0 %v2560
    %5252 = vmatprep.subr.bf16.mxu0 %v2569
    %5253 = vmatpush1.bf16.msra.mxu0 %v2568
    %5254 = vmatprep.subr.bf16.mxu0 %v2577
    %5255 = vmatpush1.bf16.msra.mxu0 %v2576
    %5256 = vmatprep.subr.bf16.mxu0 %v2585
    %5257 = vmatpush1.bf16.msra.mxu0 %v2584
    %5258 = vmatprep.subr.bf16.mxu0 %v2593
    %5259 = vmatpush1.bf16.msra.mxu0 %v2592
    %5260 = vmatprep.subr.bf16.mxu0 %v2601
    %5261 = vmatpush1.bf16.msra.mxu0 %v2600
    %5262 = vmatprep.mubr.bf16.mxu0 %v5147
    %5263 = vmatmul.mubr.bf16.gmra.mrb[0].mxu0 %v5146
    %v5264 = vpop.f32.mrb[0].mxu0
    %v5265 = vadd.f32 0.0, %v5264
    %v5266 = vpop.f32.mrb[0].mxu0
    %v5267 = vadd.f32 0.0, %v5266
    %v5268 = vpop.f32.mrb[0].mxu0
    %v5269 = vpop.f32.mrb[0].mxu0
    %5270 = vdwg.mxu0
    %5271 = vmatprep.subr.bf16.mxu0 %v2483
    %5272 = vmatpush1.bf16.msra.mxu0 %v2482
    %5273 = vmatprep.subr.bf16.mxu0 %v2491
    %5274 = vmatpush1.bf16.msra.mxu0 %v2490
    %5275 = vmatprep.subr.bf16.mxu0 %v2499
    %5276 = vmatpush1.bf16.msra.mxu0 %v2498
    %5277 = vmatprep.subr.bf16.mxu0 %v2507
    %5278 = vmatpush1.bf16.msra.mxu0 %v2506
    %5279 = vmatprep.subr.bf16.mxu0 %v2515
    %5280 = vmatpush1.bf16.msra.mxu0 %v2514
    %5281 = vmatprep.subr.bf16.mxu0 %v2523
    %5282 = vmatpush1.bf16.msra.mxu0 %v2522
    %5283 = vmatprep.subr.bf16.mxu0 %v2531
    %5284 = vmatpush1.bf16.msra.mxu0 %v2530
    %5285 = vmatprep.subr.bf16.mxu0 %v2539
    %5286 = vmatpush1.bf16.msra.mxu0 %v2538
    %5287 = vmatprep.subr.bf16.mxu0 %v2547
    %5288 = vmatpush1.bf16.msra.mxu0 %v2546
    %5289 = vmatprep.subr.bf16.mxu0 %v2555
    %5290 = vmatpush1.bf16.msra.mxu0 %v2554
    %5291 = vmatprep.subr.bf16.mxu0 %v2563
    %5292 = vmatpush1.bf16.msra.mxu0 %v2562
    %5293 = vmatprep.subr.bf16.mxu0 %v2571
    %5294 = vmatpush1.bf16.msra.mxu0 %v2570
    %5295 = vmatprep.subr.bf16.mxu0 %v2579
    %5296 = vmatpush1.bf16.msra.mxu0 %v2578
    %5297 = vmatprep.subr.bf16.mxu0 %v2587
    %5298 = vmatpush1.bf16.msra.mxu0 %v2586
    %5299 = vmatprep.subr.bf16.mxu0 %v2595
    %5300 = vmatpush1.bf16.msra.mxu0 %v2594
    %5301 = vmatprep.subr.bf16.mxu0 %v2603
    %5302 = vmatpush1.bf16.msra.mxu0 %v2602
    %5303 = vmatprep.mubr.bf16.mxu0 %v5147
    %5304 = vmatmul.mubr.bf16.gmra.mrb[0].mxu0 %v5146
    %v5305 = vpop.f32.mrb[0].mxu0
    %v5306 = vadd.f32 0.0, %v5305
    %v5307 = vpop.f32.mrb[0].mxu0
    %v5308 = vadd.f32 0.0, %v5307
    %v5309 = vpop.f32.mrb[0].mxu0
    %v5310 = vpop.f32.mrb[0].mxu0
    %5311 = vdwg.mxu0
    %5312 = vmatprep.subr.bf16.mxu0 %v3281
    %5313 = vmatpush1.bf16.msra.mxu0 %v3280
    %5314 = vmatprep.subr.bf16.mxu0 %v3289
    %5315 = vmatpush1.bf16.msra.mxu0 %v3288
    %5316 = vmatprep.subr.bf16.mxu0 %v3297
    %5317 = vmatpush1.bf16.msra.mxu0 %v3296
    %5318 = vmatprep.subr.bf16.mxu0 %v3305
    %5319 = vmatpush1.bf16.msra.mxu0 %v3304
    %5320 = vmatprep.subr.bf16.mxu0 %v3313
    %5321 = vmatpush1.bf16.msra.mxu0 %v3312
    %5322 = vmatprep.subr.bf16.mxu0 %v3321
    %5323 = vmatpush1.bf16.msra.mxu0 %v3320
    %5324 = vmatprep.subr.bf16.mxu0 %v3329
    %5325 = vmatpush1.bf16.msra.mxu0 %v3328
    %5326 = vmatprep.subr.bf16.mxu0 %v3337
    %5327 = vmatpush1.bf16.msra.mxu0 %v3336
    %5328 = vmatprep.subr.bf16.mxu0 %v3345
    %5329 = vmatpush1.bf16.msra.mxu0 %v3344
    %5330 = vmatprep.subr.bf16.mxu0 %v3353
    %5331 = vmatpush1.bf16.msra.mxu0 %v3352
    %5332 = vmatprep.subr.bf16.mxu0 %v3361
    %5333 = vmatpush1.bf16.msra.mxu0 %v3360
    %5334 = vmatprep.subr.bf16.mxu0 %v3369
    %5335 = vmatpush1.bf16.msra.mxu0 %v3368
    %5336 = vmatprep.subr.bf16.mxu0 %v3377
    %5337 = vmatpush1.bf16.msra.mxu0 %v3376
    %5338 = vmatprep.subr.bf16.mxu0 %v3385
    %5339 = vmatpush1.bf16.msra.mxu0 %v3384
    %5340 = vmatprep.subr.bf16.mxu0 %v3393
    %5341 = vmatpush1.bf16.msra.mxu0 %v3392
    %5342 = vmatprep.subr.bf16.mxu0 %v3401
    %5343 = vmatpush1.bf16.msra.mxu0 %v3400
    %5344 = vmatprep.mubr.bf16.mxu0 %v4929
    %5345 = vmatmul.mubr.bf16.gmra.mrb[0].mxu0 %v4928
    %v5346 = vpop.f32.mrb[0].mxu0
    %v5347 = vadd.f32 %v5183, %v5346
    %v5348 = vpop.f32.mrb[0].mxu0
    %v5349 = vadd.f32 %v5185, %v5348
    %v5350 = vpop.f32.mrb[0].mxu0
    %v5351 = vpop.f32.mrb[0].mxu0
    %5352 = vdwg.mxu0
    %5353 = vmatprep.subr.bf16.mxu0 %v3283
    %5354 = vmatpush1.bf16.msra.mxu0 %v3282
    %5355 = vmatprep.subr.bf16.mxu0 %v3291
    %5356 = vmatpush1.bf16.msra.mxu0 %v3290
    %5357 = vmatprep.subr.bf16.mxu0 %v3299
    %5358 = vmatpush1.bf16.msra.mxu0 %v3298
    %5359 = vmatprep.subr.bf16.mxu0 %v3307
    %5360 = vmatpush1.bf16.msra.mxu0 %v3306
    %5361 = vmatprep.subr.bf16.mxu0 %v3315
    %5362 = vmatpush1.bf16.msra.mxu0 %v3314
    %5363 = vmatprep.subr.bf16.mxu0 %v3323
    %5364 = vmatpush1.bf16.msra.mxu0 %v3322
    %5365 = vmatprep.subr.bf16.mxu0 %v3331
    %5366 = vmatpush1.bf16.msra.mxu0 %v3330
    %5367 = vmatprep.subr.bf16.mxu0 %v3339
    %5368 = vmatpush1.bf16.msra.mxu0 %v3338
    %5369 = vmatprep.subr.bf16.mxu0 %v3347
    %5370 = vmatpush1.bf16.msra.mxu0 %v3346
    %5371 = vmatprep.subr.bf16.mxu0 %v3355
    %5372 = vmatpush1.bf16.msra.mxu0 %v3354
    %5373 = vmatprep.subr.bf16.mxu0 %v3363
    %5374 = vmatpush1.bf16.msra.mxu0 %v3362
    %5375 = vmatprep.subr.bf16.mxu0 %v3371
    %5376 = vmatpush1.bf16.msra.mxu0 %v3370
    %5377 = vmatprep.subr.bf16.mxu0 %v3379
    %5378 = vmatpush1.bf16.msra.mxu0 %v3378
    %5379 = vmatprep.subr.bf16.mxu0 %v3387
    %5380 = vmatpush1.bf16.msra.mxu0 %v3386
    %5381 = vmatprep.subr.bf16.mxu0 %v3395
    %5382 = vmatpush1.bf16.msra.mxu0 %v3394
    %5383 = vmatprep.subr.bf16.mxu0 %v3403
    %5384 = vmatpush1.bf16.msra.mxu0 %v3402
    %5385 = vmatprep.mubr.bf16.mxu0 %v4929
    %5386 = vmatmul.mubr.bf16.gmra.mrb[0].mxu0 %v4928
    %v5387 = vpop.f32.mrb[0].mxu0
    %v5388 = vadd.f32 %v5224, %v5387
    %v5389 = vpop.f32.mrb[0].mxu0
    %v5390 = vadd.f32 %v5226, %v5389
    %v5391 = vpop.f32.mrb[0].mxu0
    %v5392 = vpop.f32.mrb[0].mxu0
    %5393 = vdwg.mxu0
    %5394 = vmatprep.subr.bf16.mxu0 %v3285
    %5395 = vmatpush1.bf16.msra.mxu0 %v3284
    %5396 = vmatprep.subr.bf16.mxu0 %v3293
    %5397 = vmatpush1.bf16.msra.mxu0 %v3292
    %5398 = vmatprep.subr.bf16.mxu0 %v3301
    %5399 = vmatpush1.bf16.msra.mxu0 %v3300
    %5400 = vmatprep.subr.bf16.mxu0 %v3309
    %5401 = vmatpush1.bf16.msra.mxu0 %v3308
    %5402 = vmatprep.subr.bf16.mxu0 %v3317
    %5403 = vmatpush1.bf16.msra.mxu0 %v3316
    %5404 = vmatprep.subr.bf16.mxu0 %v3325
    %5405 = vmatpush1.bf16.msra.mxu0 %v3324
    %5406 = vmatprep.subr.bf16.mxu0 %v3333
    %5407 = vmatpush1.bf16.msra.mxu0 %v3332
    %5408 = vmatprep.subr.bf16.mxu0 %v3341
    %5409 = vmatpush1.bf16.msra.mxu0 %v3340
    %5410 = vmatprep.subr.bf16.mxu0 %v3349
    %5411 = vmatpush1.bf16.msra.mxu0 %v3348
    %5412 = vmatprep.subr.bf16.mxu0 %v3357
    %5413 = vmatpush1.bf16.msra.mxu0 %v3356
    %5414 = vmatprep.subr.bf16.mxu0 %v3365
    %5415 = vmatpush1.bf16.msra.mxu0 %v3364
    %5416 = vmatprep.subr.bf16.mxu0 %v3373
    %5417 = vmatpush1.bf16.msra.mxu0 %v3372
    %5418 = vmatprep.subr.bf16.mxu0 %v3381
    %5419 = vmatpush1.bf16.msra.mxu0 %v3380
    %5420 = vmatprep.subr.bf16.mxu0 %v3389
    %5421 = vmatpush1.bf16.msra.mxu0 %v3388
    %5422 = vmatprep.subr.bf16.mxu0 %v3397
    %5423 = vmatpush1.bf16.msra.mxu0 %v3396
    %5424 = vmatprep.subr.bf16.mxu0 %v3405
    %5425 = vmatpush1.bf16.msra.mxu0 %v3404
    %5426 = vmatprep.mubr.bf16.mxu0 %v4929
    %5427 = vmatmul.mubr.bf16.gmra.mrb[0].mxu0 %v4928
    %v5428 = vpop.f32.mrb[0].mxu0
    %v5429 = vadd.f32 %v5265, %v5428
    %v5430 = vpop.f32.mrb[0].mxu0
    %v5431 = vadd.f32 %v5267, %v5430
    %v5432 = vpop.f32.mrb[0].mxu0
    %v5433 = vpop.f32.mrb[0].mxu0
    %5434 = vdwg.mxu0
    %5435 = vmatprep.subr.bf16.mxu0 %v3287
    %5436 = vmatpush1.bf16.msra.mxu0 %v3286
    %5437 = vmatprep.subr.bf16.mxu0 %v3295
    %5438 = vmatpush1.bf16.msra.mxu0 %v3294
    %5439 = vmatprep.subr.bf16.mxu0 %v3303
    %5440 = vmatpush1.bf16.msra.mxu0 %v3302
    %5441 = vmatprep.subr.bf16.mxu0 %v3311
    %5442 = vmatpush1.bf16.msra.mxu0 %v3310
    %5443 = vmatprep.subr.bf16.mxu0 %v3319
    %5444 = vmatpush1.bf16.msra.mxu0 %v3318
    %5445 = vmatprep.subr.bf16.mxu0 %v3327
    %5446 = vmatpush1.bf16.msra.mxu0 %v3326
    %5447 = vmatprep.subr.bf16.mxu0 %v3335
    %5448 = vmatpush1.bf16.msra.mxu0 %v3334
    %5449 = vmatprep.subr.bf16.mxu0 %v3343
    %5450 = vmatpush1.bf16.msra.mxu0 %v3342
    %5451 = vmatprep.subr.bf16.mxu0 %v3351
    %5452 = vmatpush1.bf16.msra.mxu0 %v3350
    %5453 = vmatprep.subr.bf16.mxu0 %v3359
    %5454 = vmatpush1.bf16.msra.mxu0 %v3358
    %5455 = vmatprep.subr.bf16.mxu0 %v3367
    %5456 = vmatpush1.bf16.msra.mxu0 %v3366
    %5457 = vmatprep.subr.bf16.mxu0 %v3375
    %5458 = vmatpush1.bf16.msra.mxu0 %v3374
    %5459 = vmatprep.subr.bf16.mxu0 %v3383
    %5460 = vmatpush1.bf16.msra.mxu0 %v3382
    %5461 = vmatprep.subr.bf16.mxu0 %v3391
    %5462 = vmatpush1.bf16.msra.mxu0 %v3390
    %5463 = vmatprep.subr.bf16.mxu0 %v3399
    %5464 = vmatpush1.bf16.msra.mxu0 %v3398
    %5465 = vmatprep.subr.bf16.mxu0 %v3407
    %5466 = vmatpush1.bf16.msra.mxu0 %v3406
    %5467 = vmatprep.mubr.bf16.mxu0 %v4929
    %5468 = vmatmul.mubr.bf16.gmra.mrb[0].mxu0 %v4928
    %v5469 = vpop.f32.mrb[0].mxu0
    %v5470 = vadd.f32 %v5306, %v5469
    %v5471 = vpop.f32.mrb[0].mxu0
    %v5472 = vadd.f32 %v5308, %v5471
    %v5473 = vpop.f32.mrb[0].mxu0
    %v5474 = vpop.f32.mrb[0].mxu0
    %5475 = vdwg.mxu0
    %v5476 = vadd.f32 %v5347, %v1197
    %v5477 = vadd.f32 %v5349, %v1201
    %v5478 = vadd.f32 %v5388, %v1205
    %v5479 = vadd.f32 %v5390, %v1209
    %v5480 = vadd.f32 %v5429, %v1213
    %v5481 = vadd.f32 %v5431, %v1217
    %v5482 = vadd.f32 %v5470, %v1221
    %v5483 = vadd.f32 %v5472, %v1225
    %v5484 = vmul.f32 %v5476, 0.5
    %v5485 = vmul.f32 %v5477, 0.5
    %v5486 = vmul.f32 %v5478, 0.5
    %v5487 = vmul.f32 %v5479, 0.5
    %v5488 = vmul.f32 %v5480, 0.5
    %v5489 = vmul.f32 %v5481, 0.5
    %v5490 = vtanh.pop %v5484
    %v5491 = vtanh.pop %v5485
    %v5492 = vtanh.pop %v5486
    %v5493 = vtanh.pop %v5487
    %v5494 = vtanh.pop %v5488
    %v5495 = vtanh.pop %v5489
    %v5496 = vadd.f32 %v5490, 1.0
    %v5497 = vadd.f32 %v5491, 1.0
    %v5498 = vadd.f32 %v5492, 1.0
    %v5499 = vadd.f32 %v5493, 1.0
    %v5500 = vadd.f32 %v5494, 1.0
    %v5501 = vadd.f32 %v5495, 1.0
    %v5502 = vmul.f32 %v5496, 0.5
    %v5503 = vmul.f32 %v5497, 0.5
    %v5504 = vmul.f32 %v5498, 0.5
    %v5505 = vmul.f32 %v5499, 0.5
    %v5506 = vmul.f32 %v5500, 0.5
    %v5507 = vmul.f32 %v5501, 0.5
    %v5508 = vtanh.pop %v5482
    %v5509 = vtanh.pop %v5483
    %v5510 = vmul.f32 %v5504, %v4922
    %v5511 = vmul.f32 %v5505, %v4923
    %v5512 = vmul.f32 %v5502, %v5508
    %v5513 = vmul.f32 %v5503, %v5509
    %v5514 = vadd.f32 %v5510, %v5512
    %v5515 = vadd.f32 %v5511, %v5513
    %v5516 = vtanh.pop %v5514
    %v5517 = vtanh.pop %v5515
    %v5518 = vmul.f32 %v5506, %v5516
    %v5519 = vmul.f32 %v5507, %v5517
    %v5520 = vpack.c.bf16 %v5518, %v5518
    %v5521 = vpack.c.bf16 %v5519, %v5519
    %v5522 = vld [vmem:[%s772] sm:$0xff]
    %v5523 = vld [vmem:[%s772 + $0x8] sm:$0xff]
    %v5524 = vld [vmem:[%s772 + $0x10] sm:$0xff]
    %v5525 = vld [vmem:[%s772 + $0x18] sm:$0xff]
    %v5526 = vld [vmem:[%s772 + $0x20] sm:$0xff]
    %v5527 = vld [vmem:[%s772 + $0x28] sm:$0xff]
    %v5528 = vld [vmem:[%s772 + $0x30] sm:$0xff]
    %v5529 = vld [vmem:[%s772 + $0x38] sm:$0xff]
    %5530 = vmatprep.subr.bf16.mxu0 %v1627
    %5531 = vmatpush1.bf16.msra.mxu0 %v1626
    %5532 = vmatprep.subr.bf16.mxu0 %v1635
    %5533 = vmatpush1.bf16.msra.mxu0 %v1634
    %5534 = vmatprep.subr.bf16.mxu0 %v1643
    %5535 = vmatpush1.bf16.msra.mxu0 %v1642
    %5536 = vmatprep.subr.bf16.mxu0 %v1651
    %5537 = vmatpush1.bf16.msra.mxu0 %v1650
    %5538 = vmatprep.subr.bf16.mxu0 %v1659
    %5539 = vmatpush1.bf16.msra.mxu0 %v1658
    %5540 = vmatprep.subr.bf16.mxu0 %v1667
    %5541 = vmatpush1.bf16.msra.mxu0 %v1666
    %5542 = vmatprep.subr.bf16.mxu0 %v1675
    %5543 = vmatpush1.bf16.msra.mxu0 %v1674
    %5544 = vmatprep.subr.bf16.mxu0 %v1683
    %5545 = vmatpush1.bf16.msra.mxu0 %v1682
    %5546 = vmatprep.subr.bf16.mxu0 %v1691
    %5547 = vmatpush1.bf16.msra.mxu0 %v1690
    %5548 = vmatprep.subr.bf16.mxu0 %v1699
    %5549 = vmatpush1.bf16.msra.mxu0 %v1698
    %5550 = vmatprep.subr.bf16.mxu0 %v1707
    %5551 = vmatpush1.bf16.msra.mxu0 %v1706
    %5552 = vmatprep.subr.bf16.mxu0 %v1715
    %5553 = vmatpush1.bf16.msra.mxu0 %v1714
    %5554 = vmatprep.subr.bf16.mxu0 %v1723
    %5555 = vmatpush1.bf16.msra.mxu0 %v1722
    %5556 = vmatprep.subr.bf16.mxu0 %v1731
    %5557 = vmatpush1.bf16.msra.mxu0 %v1730
    %5558 = vmatprep.subr.bf16.mxu0 %v1739
    %5559 = vmatpush1.bf16.msra.mxu0 %v1738
    %5560 = vmatprep.subr.bf16.mxu0 %v1747
    %5561 = vmatpush1.bf16.msra.mxu0 %v1746
    %5562 = vmatprep.mubr.bf16.mxu0 %v5147
    %5563 = vmatmul.mubr.bf16.gmra.mrb[0].mxu0 %v5146
    %v5564 = vpop.f32.mrb[0].mxu0
    %v5565 = vadd.f32 0.0, %v5564
    %v5566 = vpop.f32.mrb[0].mxu0
    %v5567 = vadd.f32 0.0, %v5566
    %v5568 = vpop.f32.mrb[0].mxu0
    %v5569 = vpop.f32.mrb[0].mxu0
    %5570 = vdwg.mxu0
    %5571 = vmatprep.subr.bf16.mxu0 %v1629
    %5572 = vmatpush1.bf16.msra.mxu0 %v1628
    %5573 = vmatprep.subr.bf16.mxu0 %v1637
    %5574 = vmatpush1.bf16.msra.mxu0 %v1636
    %5575 = vmatprep.subr.bf16.mxu0 %v1645
    %5576 = vmatpush1.bf16.msra.mxu0 %v1644
    %5577 = vmatprep.subr.bf16.mxu0 %v1653
    %5578 = vmatpush1.bf16.msra.mxu0 %v1652
    %5579 = vmatprep.subr.bf16.mxu0 %v1661
    %5580 = vmatpush1.bf16.msra.mxu0 %v1660
    %5581 = vmatprep.subr.bf16.mxu0 %v1669
    %5582 = vmatpush1.bf16.msra.mxu0 %v1668
    %5583 = vmatprep.subr.bf16.mxu0 %v1677
    %5584 = vmatpush1.bf16.msra.mxu0 %v1676
    %5585 = vmatprep.subr.bf16.mxu0 %v1685
    %5586 = vmatpush1.bf16.msra.mxu0 %v1684
    %5587 = vmatprep.subr.bf16.mxu0 %v1693
    %5588 = vmatpush1.bf16.msra.mxu0 %v1692
    %5589 = vmatprep.subr.bf16.mxu0 %v1701
    %5590 = vmatpush1.bf16.msra.mxu0 %v1700
    %5591 = vmatprep.subr.bf16.mxu0 %v1709
    %5592 = vmatpush1.bf16.msra.mxu0 %v1708
    %5593 = vmatprep.subr.bf16.mxu0 %v1717
    %5594 = vmatpush1.bf16.msra.mxu0 %v1716
    %5595 = vmatprep.subr.bf16.mxu0 %v1725
    %5596 = vmatpush1.bf16.msra.mxu0 %v1724
    %5597 = vmatprep.subr.bf16.mxu0 %v1733
    %5598 = vmatpush1.bf16.msra.mxu0 %v1732
    %5599 = vmatprep.subr.bf16.mxu0 %v1741
    %5600 = vmatpush1.bf16.msra.mxu0 %v1740
    %5601 = vmatprep.subr.bf16.mxu0 %v1749
    %5602 = vmatpush1.bf16.msra.mxu0 %v1748
    %5603 = vmatprep.mubr.bf16.mxu0 %v5147
    %5604 = vmatmul.mubr.bf16.gmra.mrb[0].mxu0 %v5146
    %v5605 = vpop.f32.mrb[0].mxu0
    %v5606 = vadd.f32 0.0, %v5605
    %v5607 = vpop.f32.mrb[0].mxu0
    %v5608 = vadd.f32 0.0, %v5607
    %v5609 = vpop.f32.mrb[0].mxu0
    %v5610 = vpop.f32.mrb[0].mxu0
    %5611 = vdwg.mxu0
    %5612 = vmatprep.subr.bf16.mxu0 %v1631
    %5613 = vmatpush1.bf16.msra.mxu0 %v1630
    %5614 = vmatprep.subr.bf16.mxu0 %v1639
    %5615 = vmatpush1.bf16.msra.mxu0 %v1638
    %5616 = vmatprep.subr.bf16.mxu0 %v1647
    %5617 = vmatpush1.bf16.msra.mxu0 %v1646
    %5618 = vmatprep.subr.bf16.mxu0 %v1655
    %5619 = vmatpush1.bf16.msra.mxu0 %v1654
    %5620 = vmatprep.subr.bf16.mxu0 %v1663
    %5621 = vmatpush1.bf16.msra.mxu0 %v1662
    %5622 = vmatprep.subr.bf16.mxu0 %v1671
    %5623 = vmatpush1.bf16.msra.mxu0 %v1670
    %5624 = vmatprep.subr.bf16.mxu0 %v1679
    %5625 = vmatpush1.bf16.msra.mxu0 %v1678
    %5626 = vmatprep.subr.bf16.mxu0 %v1687
    %5627 = vmatpush1.bf16.msra.mxu0 %v1686
    %5628 = vmatprep.subr.bf16.mxu0 %v1695
    %5629 = vmatpush1.bf16.msra.mxu0 %v1694
    %5630 = vmatprep.subr.bf16.mxu0 %v1703
    %5631 = vmatpush1.bf16.msra.mxu0 %v1702
    %5632 = vmatprep.subr.bf16.mxu0 %v1711
    %5633 = vmatpush1.bf16.msra.mxu0 %v1710
    %5634 = vmatprep.subr.bf16.mxu0 %v1719
    %5635 = vmatpush1.bf16.msra.mxu0 %v1718
    %5636 = vmatprep.subr.bf16.mxu0 %v1727
    %5637 = vmatpush1.bf16.msra.mxu0 %v1726
    %5638 = vmatprep.subr.bf16.mxu0 %v1735
    %5639 = vmatpush1.bf16.msra.mxu0 %v1734
    %5640 = vmatprep.subr.bf16.mxu0 %v1743
    %5641 = vmatpush1.bf16.msra.mxu0 %v1742
    %5642 = vmatprep.subr.bf16.mxu0 %v1751
    %5643 = vmatpush1.bf16.msra.mxu0 %v1750
    %5644 = vmatprep.mubr.bf16.mxu0 %v5147
    %5645 = vmatmul.mubr.bf16.gmra.mrb[0].mxu0 %v5146
    %v5646 = vpop.f32.mrb[0].mxu0
    %v5647 = vadd.f32 0.0, %v5646
    %v5648 = vpop.f32.mrb[0].mxu0
    %v5649 = vadd.f32 0.0, %v5648
    %v5650 = vpop.f32.mrb[0].mxu0
    %v5651 = vpop.f32.mrb[0].mxu0
    %5652 = vdwg.mxu0
    %5653 = vmatprep.subr.bf16.mxu0 %v1633
    %5654 = vmatpush1.bf16.msra.mxu0 %v1632
    %5655 = vmatprep.subr.bf16.mxu0 %v1641
    %5656 = vmatpush1.bf16.msra.mxu0 %v1640
    %5657 = vmatprep.subr.bf16.mxu0 %v1649
    %5658 = vmatpush1.bf16.msra.mxu0 %v1648
    %5659 = vmatprep.subr.bf16.mxu0 %v1657
    %5660 = vmatpush1.bf16.msra.mxu0 %v1656
    %5661 = vmatprep.subr.bf16.mxu0 %v1665
    %5662 = vmatpush1.bf16.msra.mxu0 %v1664
    %5663 = vmatprep.subr.bf16.mxu0 %v1673
    %5664 = vmatpush1.bf16.msra.mxu0 %v1672
    %5665 = vmatprep.subr.bf16.mxu0 %v1681
    %5666 = vmatpush1.bf16.msra.mxu0 %v1680
    %5667 = vmatprep.subr.bf16.mxu0 %v1689
    %5668 = vmatpush1.bf16.msra.mxu0 %v1688
    %5669 = vmatprep.subr.bf16.mxu0 %v1697
    %5670 = vmatpush1.bf16.msra.mxu0 %v1696
    %5671 = vmatprep.subr.bf16.mxu0 %v1705
    %5672 = vmatpush1.bf16.msra.mxu0 %v1704
    %5673 = vmatprep.subr.bf16.mxu0 %v1713
    %5674 = vmatpush1.bf16.msra.mxu0 %v1712
    %5675 = vmatprep.subr.bf16.mxu0 %v1721
    %5676 = vmatpush1.bf16.msra.mxu0 %v1720
    %5677 = vmatprep.subr.bf16.mxu0 %v1729
    %5678 = vmatpush1.bf16.msra.mxu0 %v1728
    %5679 = vmatprep.subr.bf16.mxu0 %v1737
    %5680 = vmatpush1.bf16.msra.mxu0 %v1736
    %5681 = vmatprep.subr.bf16.mxu0 %v1745
    %5682 = vmatpush1.bf16.msra.mxu0 %v1744
    %5683 = vmatprep.subr.bf16.mxu0 %v1753
    %5684 = vmatpush1.bf16.msra.mxu0 %v1752
    %5685 = vmatprep.mubr.bf16.mxu0 %v5147
    %5686 = vmatmul.mubr.bf16.gmra.mrb[0].mxu0 %v5146
    %v5687 = vpop.f32.mrb[0].mxu0
    %v5688 = vadd.f32 0.0, %v5687
    %v5689 = vpop.f32.mrb[0].mxu0
    %v5690 = vadd.f32 0.0, %v5689
    %v5691 = vpop.f32.mrb[0].mxu0
    %v5692 = vpop.f32.mrb[0].mxu0
    %5693 = vdwg.mxu0
    %v5694 = vadd.f32 %v5522, %v5565
    %v5695 = vadd.f32 %v5523, %v5567
    %v5696 = vadd.f32 %v5524, %v5606
    %v5697 = vadd.f32 %v5525, %v5608
    %v5698 = vadd.f32 %v5526, %v5647
    %v5699 = vadd.f32 %v5527, %v5649
    %v5700 = vadd.f32 %v5528, %v5688
    %v5701 = vadd.f32 %v5529, %v5690
    %v5702 = vmul.f32 %v5694, 0.5
    %v5703 = vmul.f32 %v5695, 0.5
    %v5704 = vmul.f32 %v5696, 0.5
    %v5705 = vmul.f32 %v5697, 0.5
    %v5706 = vmul.f32 %v5698, 0.5
    %v5707 = vmul.f32 %v5699, 0.5
    %v5708 = vtanh.pop %v5702
    %v5709 = vtanh.pop %v5703
    %v5710 = vtanh.pop %v5704
    %v5711 = vtanh.pop %v5705
    %v5712 = vtanh.pop %v5706
    %v5713 = vtanh.pop %v5707
    %v5714 = vadd.f32 %v5708, 1.0
    %v5715 = vadd.f32 %v5709, 1.0
    %v5716 = vadd.f32 %v5710, 1.0
    %v5717 = vadd.f32 %v5711, 1.0
    %v5718 = vadd.f32 %v5712, 1.0
    %v5719 = vadd.f32 %v5713, 1.0
    %v5720 = vmul.f32 %v5714, 0.5
    %v5721 = vmul.f32 %v5715, 0.5
    %v5722 = vmul.f32 %v5716, 0.5
    %v5723 = vmul.f32 %v5717, 0.5
    %v5724 = vmul.f32 %v5718, 0.5
    %v5725 = vmul.f32 %v5719, 0.5
    %v5726 = vtanh.pop %v5700
    %v5727 = vtanh.pop %v5701
    %v5728 = vmul.f32 %v5722, %v5140
    %v5729 = vmul.f32 %v5723, %v5141
    %v5730 = vmul.f32 %v5720, %v5726
    %v5731 = vmul.f32 %v5721, %v5727
    %v5732 = vadd.f32 %v5728, %v5730
    %v5733 = vadd.f32 %v5729, %v5731
    %v5734 = vtanh.pop %v5732
    %v5735 = vtanh.pop %v5733
    %v5736 = vmul.f32 %v5724, %v5734
    %v5737 = vmul.f32 %v5725, %v5735
    %v5738 = vpack.c.bf16 %v5736, %v5736
    %v5739 = vpack.c.bf16 %v5737, %v5737
    %5740 = vmatprep.subr.bf16.mxu0 %v2477
    %5741 = vmatpush1.bf16.msra.mxu0 %v2476
    %5742 = vmatprep.subr.bf16.mxu0 %v2485
    %5743 = vmatpush1.bf16.msra.mxu0 %v2484
    %5744 = vmatprep.subr.bf16.mxu0 %v2493
    %5745 = vmatpush1.bf16.msra.mxu0 %v2492
    %5746 = vmatprep.subr.bf16.mxu0 %v2501
    %5747 = vmatpush1.bf16.msra.mxu0 %v2500
    %5748 = vmatprep.subr.bf16.mxu0 %v2509
    %5749 = vmatpush1.bf16.msra.mxu0 %v2508
    %5750 = vmatprep.subr.bf16.mxu0 %v2517
    %5751 = vmatpush1.bf16.msra.mxu0 %v2516
    %5752 = vmatprep.subr.bf16.mxu0 %v2525
    %5753 = vmatpush1.bf16.msra.mxu0 %v2524
    %5754 = vmatprep.subr.bf16.mxu0 %v2533
    %5755 = vmatpush1.bf16.msra.mxu0 %v2532
    %5756 = vmatprep.subr.bf16.mxu0 %v2541
    %5757 = vmatpush1.bf16.msra.mxu0 %v2540
    %5758 = vmatprep.subr.bf16.mxu0 %v2549
    %5759 = vmatpush1.bf16.msra.mxu0 %v2548
    %5760 = vmatprep.subr.bf16.mxu0 %v2557
    %5761 = vmatpush1.bf16.msra.mxu0 %v2556
    %5762 = vmatprep.subr.bf16.mxu0 %v2565
    %5763 = vmatpush1.bf16.msra.mxu0 %v2564
    %5764 = vmatprep.subr.bf16.mxu0 %v2573
    %5765 = vmatpush1.bf16.msra.mxu0 %v2572
    %5766 = vmatprep.subr.bf16.mxu0 %v2581
    %5767 = vmatpush1.bf16.msra.mxu0 %v2580
    %5768 = vmatprep.subr.bf16.mxu0 %v2589
    %5769 = vmatpush1.bf16.msra.mxu0 %v2588
    %5770 = vmatprep.subr.bf16.mxu0 %v2597
    %5771 = vmatpush1.bf16.msra.mxu0 %v2596
    %5772 = vmatprep.mubr.bf16.mxu0 %v5739
    %5773 = vmatmul.mubr.bf16.gmra.mrb[0].mxu0 %v5738
    %v5774 = vpop.f32.mrb[0].mxu0
    %v5775 = vadd.f32 0.0, %v5774
    %v5776 = vpop.f32.mrb[0].mxu0
    %v5777 = vadd.f32 0.0, %v5776
    %v5778 = vpop.f32.mrb[0].mxu0
    %v5779 = vpop.f32.mrb[0].mxu0
    %5780 = vdwg.mxu0
    %5781 = vmatprep.subr.bf16.mxu0 %v2479
    %5782 = vmatpush1.bf16.msra.mxu0 %v2478
    %5783 = vmatprep.subr.bf16.mxu0 %v2487
    %5784 = vmatpush1.bf16.msra.mxu0 %v2486
    %5785 = vmatprep.subr.bf16.mxu0 %v2495
    %5786 = vmatpush1.bf16.msra.mxu0 %v2494
    %5787 = vmatprep.subr.bf16.mxu0 %v2503
    %5788 = vmatpush1.bf16.msra.mxu0 %v2502
    %5789 = vmatprep.subr.bf16.mxu0 %v2511
    %5790 = vmatpush1.bf16.msra.mxu0 %v2510
    %5791 = vmatprep.subr.bf16.mxu0 %v2519
    %5792 = vmatpush1.bf16.msra.mxu0 %v2518
    %5793 = vmatprep.subr.bf16.mxu0 %v2527
    %5794 = vmatpush1.bf16.msra.mxu0 %v2526
    %5795 = vmatprep.subr.bf16.mxu0 %v2535
    %5796 = vmatpush1.bf16.msra.mxu0 %v2534
    %5797 = vmatprep.subr.bf16.mxu0 %v2543
    %5798 = vmatpush1.bf16.msra.mxu0 %v2542
    %5799 = vmatprep.subr.bf16.mxu0 %v2551
    %5800 = vmatpush1.bf16.msra.mxu0 %v2550
    %5801 = vmatprep.subr.bf16.mxu0 %v2559
    %5802 = vmatpush1.bf16.msra.mxu0 %v2558
    %5803 = vmatprep.subr.bf16.mxu0 %v2567
    %5804 = vmatpush1.bf16.msra.mxu0 %v2566
    %5805 = vmatprep.subr.bf16.mxu0 %v2575
    %5806 = vmatpush1.bf16.msra.mxu0 %v2574
    %5807 = vmatprep.subr.bf16.mxu0 %v2583
    %5808 = vmatpush1.bf16.msra.mxu0 %v2582
    %5809 = vmatprep.subr.bf16.mxu0 %v2591
    %5810 = vmatpush1.bf16.msra.mxu0 %v2590
    %5811 = vmatprep.subr.bf16.mxu0 %v2599
    %5812 = vmatpush1.bf16.msra.mxu0 %v2598
    %5813 = vmatprep.mubr.bf16.mxu0 %v5739
    %5814 = vmatmul.mubr.bf16.gmra.mrb[0].mxu0 %v5738
    %v5815 = vpop.f32.mrb[0].mxu0
    %v5816 = vadd.f32 0.0, %v5815
    %v5817 = vpop.f32.mrb[0].mxu0
    %v5818 = vadd.f32 0.0, %v5817
    %v5819 = vpop.f32.mrb[0].mxu0
    %v5820 = vpop.f32.mrb[0].mxu0
    %5821 = vdwg.mxu0
    %5822 = vmatprep.subr.bf16.mxu0 %v2481
    %5823 = vmatpush1.bf16.msra.mxu0 %v2480
    %5824 = vmatprep.subr.bf16.mxu0 %v2489
    %5825 = vmatpush1.bf16.msra.mxu0 %v2488
    %5826 = vmatprep.subr.bf16.mxu0 %v2497
    %5827 = vmatpush1.bf16.msra.mxu0 %v2496
    %5828 = vmatprep.subr.bf16.mxu0 %v2505
    %5829 = vmatpush1.bf16.msra.mxu0 %v2504
    %5830 = vmatprep.subr.bf16.mxu0 %v2513
    %5831 = vmatpush1.bf16.msra.mxu0 %v2512
    %5832 = vmatprep.subr.bf16.mxu0 %v2521
    %5833 = vmatpush1.bf16.msra.mxu0 %v2520
    %5834 = vmatprep.subr.bf16.mxu0 %v2529
    %5835 = vmatpush1.bf16.msra.mxu0 %v2528
    %5836 = vmatprep.subr.bf16.mxu0 %v2537
    %5837 = vmatpush1.bf16.msra.mxu0 %v2536
    %5838 = vmatprep.subr.bf16.mxu0 %v2545
    %5839 = vmatpush1.bf16.msra.mxu0 %v2544
    %5840 = vmatprep.subr.bf16.mxu0 %v2553
    %5841 = vmatpush1.bf16.msra.mxu0 %v2552
    %5842 = vmatprep.subr.bf16.mxu0 %v2561
    %5843 = vmatpush1.bf16.msra.mxu0 %v2560
    %5844 = vmatprep.subr.bf16.mxu0 %v2569
    %5845 = vmatpush1.bf16.msra.mxu0 %v2568
    %5846 = vmatprep.subr.bf16.mxu0 %v2577
    %5847 = vmatpush1.bf16.msra.mxu0 %v2576
    %5848 = vmatprep.subr.bf16.mxu0 %v2585
    %5849 = vmatpush1.bf16.msra.mxu0 %v2584
    %5850 = vmatprep.subr.bf16.mxu0 %v2593
    %5851 = vmatpush1.bf16.msra.mxu0 %v2592
    %5852 = vmatprep.subr.bf16.mxu0 %v2601
    %5853 = vmatpush1.bf16.msra.mxu0 %v2600
    %5854 = vmatprep.mubr.bf16.mxu0 %v5739
    %5855 = vmatmul.mubr.bf16.gmra.mrb[0].mxu0 %v5738
    %v5856 = vpop.f32.mrb[0].mxu0
    %v5857 = vadd.f32 0.0, %v5856
    %v5858 = vpop.f32.mrb[0].mxu0
    %v5859 = vadd.f32 0.0, %v5858
    %v5860 = vpop.f32.mrb[0].mxu0
    %v5861 = vpop.f32.mrb[0].mxu0
    %5862 = vdwg.mxu0
    %5863 = vmatprep.subr.bf16.mxu0 %v2483
    %5864 = vmatpush1.bf16.msra.mxu0 %v2482
    %5865 = vmatprep.subr.bf16.mxu0 %v2491
    %5866 = vmatpush1.bf16.msra.mxu0 %v2490
    %5867 = vmatprep.subr.bf16.mxu0 %v2499
    %5868 = vmatpush1.bf16.msra.mxu0 %v2498
    %5869 = vmatprep.subr.bf16.mxu0 %v2507
    %5870 = vmatpush1.bf16.msra.mxu0 %v2506
    %5871 = vmatprep.subr.bf16.mxu0 %v2515
    %5872 = vmatpush1.bf16.msra.mxu0 %v2514
    %5873 = vmatprep.subr.bf16.mxu0 %v2523
    %5874 = vmatpush1.bf16.msra.mxu0 %v2522
    %5875 = vmatprep.subr.bf16.mxu0 %v2531
    %5876 = vmatpush1.bf16.msra.mxu0 %v2530
    %5877 = vmatprep.subr.bf16.mxu0 %v2539
    %5878 = vmatpush1.bf16.msra.mxu0 %v2538
    %5879 = vmatprep.subr.bf16.mxu0 %v2547
    %5880 = vmatpush1.bf16.msra.mxu0 %v2546
    %5881 = vmatprep.subr.bf16.mxu0 %v2555
    %5882 = vmatpush1.bf16.msra.mxu0 %v2554
    %5883 = vmatprep.subr.bf16.mxu0 %v2563
    %5884 = vmatpush1.bf16.msra.mxu0 %v2562
    %5885 = vmatprep.subr.bf16.mxu0 %v2571
    %5886 = vmatpush1.bf16.msra.mxu0 %v2570
    %5887 = vmatprep.subr.bf16.mxu0 %v2579
    %5888 = vmatpush1.bf16.msra.mxu0 %v2578
    %5889 = vmatprep.subr.bf16.mxu0 %v2587
    %5890 = vmatpush1.bf16.msra.mxu0 %v2586
    %5891 = vmatprep.subr.bf16.mxu0 %v2595
    %5892 = vmatpush1.bf16.msra.mxu0 %v2594
    %5893 = vmatprep.subr.bf16.mxu0 %v2603
    %5894 = vmatpush1.bf16.msra.mxu0 %v2602
    %5895 = vmatprep.mubr.bf16.mxu0 %v5739
    %5896 = vmatmul.mubr.bf16.gmra.mrb[0].mxu0 %v5738
    %v5897 = vpop.f32.mrb[0].mxu0
    %v5898 = vadd.f32 0.0, %v5897
    %v5899 = vpop.f32.mrb[0].mxu0
    %v5900 = vadd.f32 0.0, %v5899
    %v5901 = vpop.f32.mrb[0].mxu0
    %v5902 = vpop.f32.mrb[0].mxu0
    %5903 = vdwg.mxu0
    %5904 = vmatprep.subr.bf16.mxu0 %v3281
    %5905 = vmatpush1.bf16.msra.mxu0 %v3280
    %5906 = vmatprep.subr.bf16.mxu0 %v3289
    %5907 = vmatpush1.bf16.msra.mxu0 %v3288
    %5908 = vmatprep.subr.bf16.mxu0 %v3297
    %5909 = vmatpush1.bf16.msra.mxu0 %v3296
    %5910 = vmatprep.subr.bf16.mxu0 %v3305
    %5911 = vmatpush1.bf16.msra.mxu0 %v3304
    %5912 = vmatprep.subr.bf16.mxu0 %v3313
    %5913 = vmatpush1.bf16.msra.mxu0 %v3312
    %5914 = vmatprep.subr.bf16.mxu0 %v3321
    %5915 = vmatpush1.bf16.msra.mxu0 %v3320
    %5916 = vmatprep.subr.bf16.mxu0 %v3329
    %5917 = vmatpush1.bf16.msra.mxu0 %v3328
    %5918 = vmatprep.subr.bf16.mxu0 %v3337
    %5919 = vmatpush1.bf16.msra.mxu0 %v3336
    %5920 = vmatprep.subr.bf16.mxu0 %v3345
    %5921 = vmatpush1.bf16.msra.mxu0 %v3344
    %5922 = vmatprep.subr.bf16.mxu0 %v3353
    %5923 = vmatpush1.bf16.msra.mxu0 %v3352
    %5924 = vmatprep.subr.bf16.mxu0 %v3361
    %5925 = vmatpush1.bf16.msra.mxu0 %v3360
    %5926 = vmatprep.subr.bf16.mxu0 %v3369
    %5927 = vmatpush1.bf16.msra.mxu0 %v3368
    %5928 = vmatprep.subr.bf16.mxu0 %v3377
    %5929 = vmatpush1.bf16.msra.mxu0 %v3376
    %5930 = vmatprep.subr.bf16.mxu0 %v3385
    %5931 = vmatpush1.bf16.msra.mxu0 %v3384
    %5932 = vmatprep.subr.bf16.mxu0 %v3393
    %5933 = vmatpush1.bf16.msra.mxu0 %v3392
    %5934 = vmatprep.subr.bf16.mxu0 %v3401
    %5935 = vmatpush1.bf16.msra.mxu0 %v3400
    %5936 = vmatprep.mubr.bf16.mxu0 %v5521
    %5937 = vmatmul.mubr.bf16.gmra.mrb[0].mxu0 %v5520
    %v5938 = vpop.f32.mrb[0].mxu0
    %v5939 = vadd.f32 %v5775, %v5938
    %v5940 = vpop.f32.mrb[0].mxu0
    %v5941 = vadd.f32 %v5777, %v5940
    %v5942 = vpop.f32.mrb[0].mxu0
    %v5943 = vpop.f32.mrb[0].mxu0
    %5944 = vdwg.mxu0
    %5945 = vmatprep.subr.bf16.mxu0 %v3283
    %5946 = vmatpush1.bf16.msra.mxu0 %v3282
    %5947 = vmatprep.subr.bf16.mxu0 %v3291
    %5948 = vmatpush1.bf16.msra.mxu0 %v3290
    %5949 = vmatprep.subr.bf16.mxu0 %v3299
    %5950 = vmatpush1.bf16.msra.mxu0 %v3298
    %5951 = vmatprep.subr.bf16.mxu0 %v3307
    %5952 = vmatpush1.bf16.msra.mxu0 %v3306
    %5953 = vmatprep.subr.bf16.mxu0 %v3315
    %5954 = vmatpush1.bf16.msra.mxu0 %v3314
    %5955 = vmatprep.subr.bf16.mxu0 %v3323
    %5956 = vmatpush1.bf16.msra.mxu0 %v3322
    %5957 = vmatprep.subr.bf16.mxu0 %v3331
    %5958 = vmatpush1.bf16.msra.mxu0 %v3330
    %5959 = vmatprep.subr.bf16.mxu0 %v3339
    %5960 = vmatpush1.bf16.msra.mxu0 %v3338
    %5961 = vmatprep.subr.bf16.mxu0 %v3347
    %5962 = vmatpush1.bf16.msra.mxu0 %v3346
    %5963 = vmatprep.subr.bf16.mxu0 %v3355
    %5964 = vmatpush1.bf16.msra.mxu0 %v3354
    %5965 = vmatprep.subr.bf16.mxu0 %v3363
    %5966 = vmatpush1.bf16.msra.mxu0 %v3362
    %5967 = vmatprep.subr.bf16.mxu0 %v3371
    %5968 = vmatpush1.bf16.msra.mxu0 %v3370
    %5969 = vmatprep.subr.bf16.mxu0 %v3379
    %5970 = vmatpush1.bf16.msra.mxu0 %v3378
    %5971 = vmatprep.subr.bf16.mxu0 %v3387
    %5972 = vmatpush1.bf16.msra.mxu0 %v3386
    %5973 = vmatprep.subr.bf16.mxu0 %v3395
    %5974 = vmatpush1.bf16.msra.mxu0 %v3394
    %5975 = vmatprep.subr.bf16.mxu0 %v3403
    %5976 = vmatpush1.bf16.msra.mxu0 %v3402
    %5977 = vmatprep.mubr.bf16.mxu0 %v5521
    %5978 = vmatmul.mubr.bf16.gmra.mrb[0].mxu0 %v5520
    %v5979 = vpop.f32.mrb[0].mxu0
    %v5980 = vadd.f32 %v5816, %v5979
    %v5981 = vpop.f32.mrb[0].mxu0
    %v5982 = vadd.f32 %v5818, %v5981
    %v5983 = vpop.f32.mrb[0].mxu0
    %v5984 = vpop.f32.mrb[0].mxu0
    %5985 = vdwg.mxu0
    %5986 = vmatprep.subr.bf16.mxu0 %v3285
    %5987 = vmatpush1.bf16.msra.mxu0 %v3284
    %5988 = vmatprep.subr.bf16.mxu0 %v3293
    %5989 = vmatpush1.bf16.msra.mxu0 %v3292
    %5990 = vmatprep.subr.bf16.mxu0 %v3301
    %5991 = vmatpush1.bf16.msra.mxu0 %v3300
    %5992 = vmatprep.subr.bf16.mxu0 %v3309
    %5993 = vmatpush1.bf16.msra.mxu0 %v3308
    %5994 = vmatprep.subr.bf16.mxu0 %v3317
    %5995 = vmatpush1.bf16.msra.mxu0 %v3316
    %5996 = vmatprep.subr.bf16.mxu0 %v3325
    %5997 = vmatpush1.bf16.msra.mxu0 %v3324
    %5998 = vmatprep.subr.bf16.mxu0 %v3333
    %5999 = vmatpush1.bf16.msra.mxu0 %v3332
    %6000 = vmatprep.subr.bf16.mxu0 %v3341
    %6001 = vmatpush1.bf16.msra.mxu0 %v3340
    %6002 = vmatprep.subr.bf16.mxu0 %v3349
    %6003 = vmatpush1.bf16.msra.mxu0 %v3348
    %6004 = vmatprep.subr.bf16.mxu0 %v3357
    %6005 = vmatpush1.bf16.msra.mxu0 %v3356
    %6006 = vmatprep.subr.bf16.mxu0 %v3365
    %6007 = vmatpush1.bf16.msra.mxu0 %v3364
    %6008 = vmatprep.subr.bf16.mxu0 %v3373
    %6009 = vmatpush1.bf16.msra.mxu0 %v3372
    %6010 = vmatprep.subr.bf16.mxu0 %v3381
    %6011 = vmatpush1.bf16.msra.mxu0 %v3380
    %6012 = vmatprep.subr.bf16.mxu0 %v3389
    %6013 = vmatpush1.bf16.msra.mxu0 %v3388
    %6014 = vmatprep.subr.bf16.mxu0 %v3397
    %6015 = vmatpush1.bf16.msra.mxu0 %v3396
    %6016 = vmatprep.subr.bf16.mxu0 %v3405
    %6017 = vmatpush1.bf16.msra.mxu0 %v3404
    %6018 = vmatprep.mubr.bf16.mxu0 %v5521
    %6019 = vmatmul.mubr.bf16.gmra.mrb[0].mxu0 %v5520
    %v6020 = vpop.f32.mrb[0].mxu0
    %v6021 = vadd.f32 %v5857, %v6020
    %v6022 = vpop.f32.mrb[0].mxu0
    %v6023 = vadd.f32 %v5859, %v6022
    %v6024 = vpop.f32.mrb[0].mxu0
    %v6025 = vpop.f32.mrb[0].mxu0
    %6026 = vdwg.mxu0
    %6027 = vmatprep.subr.bf16.mxu0 %v3287
    %6028 = vmatpush1.bf16.msra.mxu0 %v3286
    %6029 = vmatprep.subr.bf16.mxu0 %v3295
    %6030 = vmatpush1.bf16.msra.mxu0 %v3294
    %6031 = vmatprep.subr.bf16.mxu0 %v3303
    %6032 = vmatpush1.bf16.msra.mxu0 %v3302
    %6033 = vmatprep.subr.bf16.mxu0 %v3311
    %6034 = vmatpush1.bf16.msra.mxu0 %v3310
    %6035 = vmatprep.subr.bf16.mxu0 %v3319
    %6036 = vmatpush1.bf16.msra.mxu0 %v3318
    %6037 = vmatprep.subr.bf16.mxu0 %v3327
    %6038 = vmatpush1.bf16.msra.mxu0 %v3326
    %6039 = vmatprep.subr.bf16.mxu0 %v3335
    %6040 = vmatpush1.bf16.msra.mxu0 %v3334
    %6041 = vmatprep.subr.bf16.mxu0 %v3343
    %6042 = vmatpush1.bf16.msra.mxu0 %v3342
    %6043 = vmatprep.subr.bf16.mxu0 %v3351
    %6044 = vmatpush1.bf16.msra.mxu0 %v3350
    %6045 = vmatprep.subr.bf16.mxu0 %v3359
    %6046 = vmatpush1.bf16.msra.mxu0 %v3358
    %6047 = vmatprep.subr.bf16.mxu0 %v3367
    %6048 = vmatpush1.bf16.msra.mxu0 %v3366
    %6049 = vmatprep.subr.bf16.mxu0 %v3375
    %6050 = vmatpush1.bf16.msra.mxu0 %v3374
    %6051 = vmatprep.subr.bf16.mxu0 %v3383
    %6052 = vmatpush1.bf16.msra.mxu0 %v3382
    %6053 = vmatprep.subr.bf16.mxu0 %v3391
    %6054 = vmatpush1.bf16.msra.mxu0 %v3390
    %6055 = vmatprep.subr.bf16.mxu0 %v3399
    %6056 = vmatpush1.bf16.msra.mxu0 %v3398
    %6057 = vmatprep.subr.bf16.mxu0 %v3407
    %6058 = vmatpush1.bf16.msra.mxu0 %v3406
    %6059 = vmatprep.mubr.bf16.mxu0 %v5521
    %6060 = vmatmul.mubr.bf16.gmra.mrb[0].mxu0 %v5520
    %v6061 = vpop.f32.mrb[0].mxu0
    %v6062 = vadd.f32 %v5898, %v6061
    %v6063 = vpop.f32.mrb[0].mxu0
    %v6064 = vadd.f32 %v5900, %v6063
    %v6065 = vpop.f32.mrb[0].mxu0
    %v6066 = vpop.f32.mrb[0].mxu0
    %6067 = vdwg.mxu0
    %v6068 = vadd.f32 %v5939, %v1197
    %v6069 = vadd.f32 %v5941, %v1201
    %v6070 = vadd.f32 %v5980, %v1205
    %v6071 = vadd.f32 %v5982, %v1209
    %v6072 = vadd.f32 %v6021, %v1213
    %v6073 = vadd.f32 %v6023, %v1217
    %v6074 = vadd.f32 %v6062, %v1221
    %v6075 = vadd.f32 %v6064, %v1225
    %v6076 = vmul.f32 %v6068, 0.5
    %v6077 = vmul.f32 %v6069, 0.5
    %v6078 = vmul.f32 %v6070, 0.5
    %v6079 = vmul.f32 %v6071, 0.5
    %v6080 = vmul.f32 %v6072, 0.5
    %v6081 = vmul.f32 %v6073, 0.5
    %v6082 = vtanh.pop %v6076
    %v6083 = vtanh.pop %v6077
    %v6084 = vtanh.pop %v6078
    %v6085 = vtanh.pop %v6079
    %v6086 = vtanh.pop %v6080
    %v6087 = vtanh.pop %v6081
    %v6088 = vadd.f32 %v6082, 1.0
    %v6089 = vadd.f32 %v6083, 1.0
    %v6090 = vadd.f32 %v6084, 1.0
    %v6091 = vadd.f32 %v6085, 1.0
    %v6092 = vadd.f32 %v6086, 1.0
    %v6093 = vadd.f32 %v6087, 1.0
    %v6094 = vmul.f32 %v6088, 0.5
    %v6095 = vmul.f32 %v6089, 0.5
    %v6096 = vmul.f32 %v6090, 0.5
    %v6097 = vmul.f32 %v6091, 0.5
    %v6098 = vmul.f32 %v6092, 0.5
    %v6099 = vmul.f32 %v6093, 0.5
    %v6100 = vtanh.pop %v6074
    %v6101 = vtanh.pop %v6075
    %v6102 = vmul.f32 %v6096, %v5514
    %v6103 = vmul.f32 %v6097, %v5515
    %v6104 = vmul.f32 %v6094, %v6100
    %v6105 = vmul.f32 %v6095, %v6101
    %v6106 = vadd.f32 %v6102, %v6104
    %v6107 = vadd.f32 %v6103, %v6105
    %v6108 = vtanh.pop %v6106
    %v6109 = vtanh.pop %v6107
    %v6110 = vmul.f32 %v6098, %v6108
    %v6111 = vmul.f32 %v6099, %v6109
    %v6112 = vpack.c.bf16 %v6110, %v6110
    %v6113 = vpack.c.bf16 %v6111, %v6111
    %v6114 = vld [vmem:[%s781] sm:$0xff]
    %v6115 = vld [vmem:[%s781 + $0x8] sm:$0xff]
    %v6116 = vld [vmem:[%s781 + $0x10] sm:$0xff]
    %v6117 = vld [vmem:[%s781 + $0x18] sm:$0xff]
    %v6118 = vld [vmem:[%s781 + $0x20] sm:$0xff]
    %v6119 = vld [vmem:[%s781 + $0x28] sm:$0xff]
    %v6120 = vld [vmem:[%s781 + $0x30] sm:$0xff]
    %v6121 = vld [vmem:[%s781 + $0x38] sm:$0xff]
    %6122 = vmatprep.subr.bf16.mxu0 %v1627
    %6123 = vmatpush1.bf16.msra.mxu0 %v1626
    %6124 = vmatprep.subr.bf16.mxu0 %v1635
    %6125 = vmatpush1.bf16.msra.mxu0 %v1634
    %6126 = vmatprep.subr.bf16.mxu0 %v1643
    %6127 = vmatpush1.bf16.msra.mxu0 %v1642
    %6128 = vmatprep.subr.bf16.mxu0 %v1651
    %6129 = vmatpush1.bf16.msra.mxu0 %v1650
    %6130 = vmatprep.subr.bf16.mxu0 %v1659
    %6131 = vmatpush1.bf16.msra.mxu0 %v1658
    %6132 = vmatprep.subr.bf16.mxu0 %v1667
    %6133 = vmatpush1.bf16.msra.mxu0 %v1666
    %6134 = vmatprep.subr.bf16.mxu0 %v1675
    %6135 = vmatpush1.bf16.msra.mxu0 %v1674
    %6136 = vmatprep.subr.bf16.mxu0 %v1683
    %6137 = vmatpush1.bf16.msra.mxu0 %v1682
    %6138 = vmatprep.subr.bf16.mxu0 %v1691
    %6139 = vmatpush1.bf16.msra.mxu0 %v1690
    %6140 = vmatprep.subr.bf16.mxu0 %v1699
    %6141 = vmatpush1.bf16.msra.mxu0 %v1698
    %6142 = vmatprep.subr.bf16.mxu0 %v1707
    %6143 = vmatpush1.bf16.msra.mxu0 %v1706
    %6144 = vmatprep.subr.bf16.mxu0 %v1715
    %6145 = vmatpush1.bf16.msra.mxu0 %v1714
    %6146 = vmatprep.subr.bf16.mxu0 %v1723
    %6147 = vmatpush1.bf16.msra.mxu0 %v1722
    %6148 = vmatprep.subr.bf16.mxu0 %v1731
    %6149 = vmatpush1.bf16.msra.mxu0 %v1730
    %6150 = vmatprep.subr.bf16.mxu0 %v1739
    %6151 = vmatpush1.bf16.msra.mxu0 %v1738
    %6152 = vmatprep.subr.bf16.mxu0 %v1747
    %6153 = vmatpush1.bf16.msra.mxu0 %v1746
    %6154 = vmatprep.mubr.bf16.mxu0 %v5739
    %6155 = vmatmul.mubr.bf16.gmra.mrb[0].mxu0 %v5738
    %v6156 = vpop.f32.mrb[0].mxu0
    %v6157 = vadd.f32 0.0, %v6156
    %v6158 = vpop.f32.mrb[0].mxu0
    %v6159 = vadd.f32 0.0, %v6158
    %v6160 = vpop.f32.mrb[0].mxu0
    %v6161 = vpop.f32.mrb[0].mxu0
    %6162 = vdwg.mxu0
    %6163 = vmatprep.subr.bf16.mxu0 %v1629
    %6164 = vmatpush1.bf16.msra.mxu0 %v1628
    %6165 = vmatprep.subr.bf16.mxu0 %v1637
    %6166 = vmatpush1.bf16.msra.mxu0 %v1636
    %6167 = vmatprep.subr.bf16.mxu0 %v1645
    %6168 = vmatpush1.bf16.msra.mxu0 %v1644
    %6169 = vmatprep.subr.bf16.mxu0 %v1653
    %6170 = vmatpush1.bf16.msra.mxu0 %v1652
    %6171 = vmatprep.subr.bf16.mxu0 %v1661
    %6172 = vmatpush1.bf16.msra.mxu0 %v1660
    %6173 = vmatprep.subr.bf16.mxu0 %v1669
    %6174 = vmatpush1.bf16.msra.mxu0 %v1668
    %6175 = vmatprep.subr.bf16.mxu0 %v1677
    %6176 = vmatpush1.bf16.msra.mxu0 %v1676
    %6177 = vmatprep.subr.bf16.mxu0 %v1685
    %6178 = vmatpush1.bf16.msra.mxu0 %v1684
    %6179 = vmatprep.subr.bf16.mxu0 %v1693
    %6180 = vmatpush1.bf16.msra.mxu0 %v1692
    %6181 = vmatprep.subr.bf16.mxu0 %v1701
    %6182 = vmatpush1.bf16.msra.mxu0 %v1700
    %6183 = vmatprep.subr.bf16.mxu0 %v1709
    %6184 = vmatpush1.bf16.msra.mxu0 %v1708
    %6185 = vmatprep.subr.bf16.mxu0 %v1717
    %6186 = vmatpush1.bf16.msra.mxu0 %v1716
    %6187 = vmatprep.subr.bf16.mxu0 %v1725
    %6188 = vmatpush1.bf16.msra.mxu0 %v1724
    %6189 = vmatprep.subr.bf16.mxu0 %v1733
    %6190 = vmatpush1.bf16.msra.mxu0 %v1732
    %6191 = vmatprep.subr.bf16.mxu0 %v1741
    %6192 = vmatpush1.bf16.msra.mxu0 %v1740
    %6193 = vmatprep.subr.bf16.mxu0 %v1749
    %6194 = vmatpush1.bf16.msra.mxu0 %v1748
    %6195 = vmatprep.mubr.bf16.mxu0 %v5739
    %6196 = vmatmul.mubr.bf16.gmra.mrb[0].mxu0 %v5738
    %v6197 = vpop.f32.mrb[0].mxu0
    %v6198 = vadd.f32 0.0, %v6197
    %v6199 = vpop.f32.mrb[0].mxu0
    %v6200 = vadd.f32 0.0, %v6199
    %v6201 = vpop.f32.mrb[0].mxu0
    %v6202 = vpop.f32.mrb[0].mxu0
    %6203 = vdwg.mxu0
    %6204 = vmatprep.subr.bf16.mxu0 %v1631
    %6205 = vmatpush1.bf16.msra.mxu0 %v1630
    %6206 = vmatprep.subr.bf16.mxu0 %v1639
    %6207 = vmatpush1.bf16.msra.mxu0 %v1638
    %6208 = vmatprep.subr.bf16.mxu0 %v1647
    %6209 = vmatpush1.bf16.msra.mxu0 %v1646
    %6210 = vmatprep.subr.bf16.mxu0 %v1655
    %6211 = vmatpush1.bf16.msra.mxu0 %v1654
    %6212 = vmatprep.subr.bf16.mxu0 %v1663
    %6213 = vmatpush1.bf16.msra.mxu0 %v1662
    %6214 = vmatprep.subr.bf16.mxu0 %v1671
    %6215 = vmatpush1.bf16.msra.mxu0 %v1670
    %6216 = vmatprep.subr.bf16.mxu0 %v1679
    %6217 = vmatpush1.bf16.msra.mxu0 %v1678
    %6218 = vmatprep.subr.bf16.mxu0 %v1687
    %6219 = vmatpush1.bf16.msra.mxu0 %v1686
    %6220 = vmatprep.subr.bf16.mxu0 %v1695
    %6221 = vmatpush1.bf16.msra.mxu0 %v1694
    %6222 = vmatprep.subr.bf16.mxu0 %v1703
    %6223 = vmatpush1.bf16.msra.mxu0 %v1702
    %6224 = vmatprep.subr.bf16.mxu0 %v1711
    %6225 = vmatpush1.bf16.msra.mxu0 %v1710
    %6226 = vmatprep.subr.bf16.mxu0 %v1719
    %6227 = vmatpush1.bf16.msra.mxu0 %v1718
    %6228 = vmatprep.subr.bf16.mxu0 %v1727
    %6229 = vmatpush1.bf16.msra.mxu0 %v1726
    %6230 = vmatprep.subr.bf16.mxu0 %v1735
    %6231 = vmatpush1.bf16.msra.mxu0 %v1734
    %6232 = vmatprep.subr.bf16.mxu0 %v1743
    %6233 = vmatpush1.bf16.msra.mxu0 %v1742
    %6234 = vmatprep.subr.bf16.mxu0 %v1751
    %6235 = vmatpush1.bf16.msra.mxu0 %v1750
    %6236 = vmatprep.mubr.bf16.mxu0 %v5739
    %6237 = vmatmul.mubr.bf16.gmra.mrb[0].mxu0 %v5738
    %v6238 = vpop.f32.mrb[0].mxu0
    %v6239 = vadd.f32 0.0, %v6238
    %v6240 = vpop.f32.mrb[0].mxu0
    %v6241 = vadd.f32 0.0, %v6240
    %v6242 = vpop.f32.mrb[0].mxu0
    %v6243 = vpop.f32.mrb[0].mxu0
    %6244 = vdwg.mxu0
    %6245 = vmatprep.subr.bf16.mxu0 %v1633
    %6246 = vmatpush1.bf16.msra.mxu0 %v1632
    %6247 = vmatprep.subr.bf16.mxu0 %v1641
    %6248 = vmatpush1.bf16.msra.mxu0 %v1640
    %6249 = vmatprep.subr.bf16.mxu0 %v1649
    %6250 = vmatpush1.bf16.msra.mxu0 %v1648
    %6251 = vmatprep.subr.bf16.mxu0 %v1657
    %6252 = vmatpush1.bf16.msra.mxu0 %v1656
    %6253 = vmatprep.subr.bf16.mxu0 %v1665
    %6254 = vmatpush1.bf16.msra.mxu0 %v1664
    %6255 = vmatprep.subr.bf16.mxu0 %v1673
    %6256 = vmatpush1.bf16.msra.mxu0 %v1672
    %6257 = vmatprep.subr.bf16.mxu0 %v1681
    %6258 = vmatpush1.bf16.msra.mxu0 %v1680
    %6259 = vmatprep.subr.bf16.mxu0 %v1689
    %6260 = vmatpush1.bf16.msra.mxu0 %v1688
    %6261 = vmatprep.subr.bf16.mxu0 %v1697
    %6262 = vmatpush1.bf16.msra.mxu0 %v1696
    %6263 = vmatprep.subr.bf16.mxu0 %v1705
    %6264 = vmatpush1.bf16.msra.mxu0 %v1704
    %6265 = vmatprep.subr.bf16.mxu0 %v1713
    %6266 = vmatpush1.bf16.msra.mxu0 %v1712
    %6267 = vmatprep.subr.bf16.mxu0 %v1721
    %6268 = vmatpush1.bf16.msra.mxu0 %v1720
    %6269 = vmatprep.subr.bf16.mxu0 %v1729
    %6270 = vmatpush1.bf16.msra.mxu0 %v1728
    %6271 = vmatprep.subr.bf16.mxu0 %v1737
    %6272 = vmatpush1.bf16.msra.mxu0 %v1736
    %6273 = vmatprep.subr.bf16.mxu0 %v1745
    %6274 = vmatpush1.bf16.msra.mxu0 %v1744
    %6275 = vmatprep.subr.bf16.mxu0 %v1753
    %6276 = vmatpush1.bf16.msra.mxu0 %v1752
    %6277 = vmatprep.mubr.bf16.mxu0 %v5739
    %6278 = vmatmul.mubr.bf16.gmra.mrb[0].mxu0 %v5738
    %v6279 = vpop.f32.mrb[0].mxu0
    %v6280 = vadd.f32 0.0, %v6279
    %v6281 = vpop.f32.mrb[0].mxu0
    %v6282 = vadd.f32 0.0, %v6281
    %v6283 = vpop.f32.mrb[0].mxu0
    %v6284 = vpop.f32.mrb[0].mxu0
    %6285 = vdwg.mxu0
    %v6286 = vadd.f32 %v6114, %v6157
    %v6287 = vadd.f32 %v6115, %v6159
    %v6288 = vadd.f32 %v6116, %v6198
    %v6289 = vadd.f32 %v6117, %v6200
    %v6290 = vadd.f32 %v6118, %v6239
    %v6291 = vadd.f32 %v6119, %v6241
    %v6292 = vadd.f32 %v6120, %v6280
    %v6293 = vadd.f32 %v6121, %v6282
    %v6294 = vmul.f32 %v6286, 0.5
    %v6295 = vmul.f32 %v6287, 0.5
    %v6296 = vmul.f32 %v6288, 0.5
    %v6297 = vmul.f32 %v6289, 0.5
    %v6298 = vmul.f32 %v6290, 0.5
    %v6299 = vmul.f32 %v6291, 0.5
    %v6300 = vtanh.pop %v6294
    %v6301 = vtanh.pop %v6295
    %v6302 = vtanh.pop %v6296
    %v6303 = vtanh.pop %v6297
    %v6304 = vtanh.pop %v6298
    %v6305 = vtanh.pop %v6299
    %v6306 = vadd.f32 %v6300, 1.0
    %v6307 = vadd.f32 %v6301, 1.0
    %v6308 = vadd.f32 %v6302, 1.0
    %v6309 = vadd.f32 %v6303, 1.0
    %v6310 = vadd.f32 %v6304, 1.0
    %v6311 = vadd.f32 %v6305, 1.0
    %v6312 = vmul.f32 %v6306, 0.5
    %v6313 = vmul.f32 %v6307, 0.5
    %v6314 = vmul.f32 %v6308, 0.5
    %v6315 = vmul.f32 %v6309, 0.5
    %v6316 = vmul.f32 %v6310, 0.5
    %v6317 = vmul.f32 %v6311, 0.5
    %v6318 = vtanh.pop %v6292
    %v6319 = vtanh.pop %v6293
    %v6320 = vmul.f32 %v6314, %v5732
    %v6321 = vmul.f32 %v6315, %v5733
    %v6322 = vmul.f32 %v6312, %v6318
    %v6323 = vmul.f32 %v6313, %v6319
    %v6324 = vadd.f32 %v6320, %v6322
    %v6325 = vadd.f32 %v6321, %v6323
    %v6326 = vtanh.pop %v6324
    %v6327 = vtanh.pop %v6325
    %v6328 = vmul.f32 %v6316, %v6326
    %v6329 = vmul.f32 %v6317, %v6327
    %v6330 = vpack.c.bf16 %v6328, %v6328
    %v6331 = vpack.c.bf16 %v6329, %v6329
    %6332 = vmatprep.subr.bf16.mxu0 %v2477
    %6333 = vmatpush1.bf16.msra.mxu0 %v2476
    %6334 = vmatprep.subr.bf16.mxu0 %v2485
    %6335 = vmatpush1.bf16.msra.mxu0 %v2484
    %6336 = vmatprep.subr.bf16.mxu0 %v2493
    %6337 = vmatpush1.bf16.msra.mxu0 %v2492
    %6338 = vmatprep.subr.bf16.mxu0 %v2501
    %6339 = vmatpush1.bf16.msra.mxu0 %v2500
    %6340 = vmatprep.subr.bf16.mxu0 %v2509
    %6341 = vmatpush1.bf16.msra.mxu0 %v2508
    %6342 = vmatprep.subr.bf16.mxu0 %v2517
    %6343 = vmatpush1.bf16.msra.mxu0 %v2516
    %6344 = vmatprep.subr.bf16.mxu0 %v2525
    %6345 = vmatpush1.bf16.msra.mxu0 %v2524
    %6346 = vmatprep.subr.bf16.mxu0 %v2533
    %6347 = vmatpush1.bf16.msra.mxu0 %v2532
    %6348 = vmatprep.subr.bf16.mxu0 %v2541
    %6349 = vmatpush1.bf16.msra.mxu0 %v2540
    %6350 = vmatprep.subr.bf16.mxu0 %v2549
    %6351 = vmatpush1.bf16.msra.mxu0 %v2548
    %6352 = vmatprep.subr.bf16.mxu0 %v2557
    %6353 = vmatpush1.bf16.msra.mxu0 %v2556
    %6354 = vmatprep.subr.bf16.mxu0 %v2565
    %6355 = vmatpush1.bf16.msra.mxu0 %v2564
    %6356 = vmatprep.subr.bf16.mxu0 %v2573
    %6357 = vmatpush1.bf16.msra.mxu0 %v2572
    %6358 = vmatprep.subr.bf16.mxu0 %v2581
    %6359 = vmatpush1.bf16.msra.mxu0 %v2580
    %6360 = vmatprep.subr.bf16.mxu0 %v2589
    %6361 = vmatpush1.bf16.msra.mxu0 %v2588
    %6362 = vmatprep.subr.bf16.mxu0 %v2597
    %6363 = vmatpush1.bf16.msra.mxu0 %v2596
    %6364 = vmatprep.mubr.bf16.mxu0 %v6331
    %6365 = vmatmul.mubr.bf16.gmra.mrb[0].mxu0 %v6330
    %v6366 = vpop.f32.mrb[0].mxu0
    %v6367 = vadd.f32 0.0, %v6366
    %v6368 = vpop.f32.mrb[0].mxu0
    %v6369 = vadd.f32 0.0, %v6368
    %v6370 = vpop.f32.mrb[0].mxu0
    %v6371 = vpop.f32.mrb[0].mxu0
    %6372 = vdwg.mxu0
    %6373 = vmatprep.subr.bf16.mxu0 %v2479
    %6374 = vmatpush1.bf16.msra.mxu0 %v2478
    %6375 = vmatprep.subr.bf16.mxu0 %v2487
    %6376 = vmatpush1.bf16.msra.mxu0 %v2486
    %6377 = vmatprep.subr.bf16.mxu0 %v2495
    %6378 = vmatpush1.bf16.msra.mxu0 %v2494
    %6379 = vmatprep.subr.bf16.mxu0 %v2503
    %6380 = vmatpush1.bf16.msra.mxu0 %v2502
    %6381 = vmatprep.subr.bf16.mxu0 %v2511
    %6382 = vmatpush1.bf16.msra.mxu0 %v2510
    %6383 = vmatprep.subr.bf16.mxu0 %v2519
    %6384 = vmatpush1.bf16.msra.mxu0 %v2518
    %6385 = vmatprep.subr.bf16.mxu0 %v2527
    %6386 = vmatpush1.bf16.msra.mxu0 %v2526
    %6387 = vmatprep.subr.bf16.mxu0 %v2535
    %6388 = vmatpush1.bf16.msra.mxu0 %v2534
    %6389 = vmatprep.subr.bf16.mxu0 %v2543
    %6390 = vmatpush1.bf16.msra.mxu0 %v2542
    %6391 = vmatprep.subr.bf16.mxu0 %v2551
    %6392 = vmatpush1.bf16.msra.mxu0 %v2550
    %6393 = vmatprep.subr.bf16.mxu0 %v2559
    %6394 = vmatpush1.bf16.msra.mxu0 %v2558
    %6395 = vmatprep.subr.bf16.mxu0 %v2567
    %6396 = vmatpush1.bf16.msra.mxu0 %v2566
    %6397 = vmatprep.subr.bf16.mxu0 %v2575
    %6398 = vmatpush1.bf16.msra.mxu0 %v2574
    %6399 = vmatprep.subr.bf16.mxu0 %v2583
    %6400 = vmatpush1.bf16.msra.mxu0 %v2582
    %6401 = vmatprep.subr.bf16.mxu0 %v2591
    %6402 = vmatpush1.bf16.msra.mxu0 %v2590
    %6403 = vmatprep.subr.bf16.mxu0 %v2599
    %6404 = vmatpush1.bf16.msra.mxu0 %v2598
    %6405 = vmatprep.mubr.bf16.mxu0 %v6331
    %6406 = vmatmul.mubr.bf16.gmra.mrb[0].mxu0 %v6330
    %v6407 = vpop.f32.mrb[0].mxu0
    %v6408 = vadd.f32 0.0, %v6407
    %v6409 = vpop.f32.mrb[0].mxu0
    %v6410 = vadd.f32 0.0, %v6409
    %v6411 = vpop.f32.mrb[0].mxu0
    %v6412 = vpop.f32.mrb[0].mxu0
    %6413 = vdwg.mxu0
    %6414 = vmatprep.subr.bf16.mxu0 %v2481
    %6415 = vmatpush1.bf16.msra.mxu0 %v2480
    %6416 = vmatprep.subr.bf16.mxu0 %v2489
    %6417 = vmatpush1.bf16.msra.mxu0 %v2488
    %6418 = vmatprep.subr.bf16.mxu0 %v2497
    %6419 = vmatpush1.bf16.msra.mxu0 %v2496
    %6420 = vmatprep.subr.bf16.mxu0 %v2505
    %6421 = vmatpush1.bf16.msra.mxu0 %v2504
    %6422 = vmatprep.subr.bf16.mxu0 %v2513
    %6423 = vmatpush1.bf16.msra.mxu0 %v2512
    %6424 = vmatprep.subr.bf16.mxu0 %v2521
    %6425 = vmatpush1.bf16.msra.mxu0 %v2520
    %6426 = vmatprep.subr.bf16.mxu0 %v2529
    %6427 = vmatpush1.bf16.msra.mxu0 %v2528
    %6428 = vmatprep.subr.bf16.mxu0 %v2537
    %6429 = vmatpush1.bf16.msra.mxu0 %v2536
    %6430 = vmatprep.subr.bf16.mxu0 %v2545
    %6431 = vmatpush1.bf16.msra.mxu0 %v2544
    %6432 = vmatprep.subr.bf16.mxu0 %v2553
    %6433 = vmatpush1.bf16.msra.mxu0 %v2552
    %6434 = vmatprep.subr.bf16.mxu0 %v2561
    %6435 = vmatpush1.bf16.msra.mxu0 %v2560
    %6436 = vmatprep.subr.bf16.mxu0 %v2569
    %6437 = vmatpush1.bf16.msra.mxu0 %v2568
    %6438 = vmatprep.subr.bf16.mxu0 %v2577
    %6439 = vmatpush1.bf16.msra.mxu0 %v2576
    %6440 = vmatprep.subr.bf16.mxu0 %v2585
    %6441 = vmatpush1.bf16.msra.mxu0 %v2584
    %6442 = vmatprep.subr.bf16.mxu0 %v2593
    %6443 = vmatpush1.bf16.msra.mxu0 %v2592
    %6444 = vmatprep.subr.bf16.mxu0 %v2601
    %6445 = vmatpush1.bf16.msra.mxu0 %v2600
    %6446 = vmatprep.mubr.bf16.mxu0 %v6331
    %6447 = vmatmul.mubr.bf16.gmra.mrb[0].mxu0 %v6330
    %v6448 = vpop.f32.mrb[0].mxu0
    %v6449 = vadd.f32 0.0, %v6448
    %v6450 = vpop.f32.mrb[0].mxu0
    %v6451 = vadd.f32 0.0, %v6450
    %v6452 = vpop.f32.mrb[0].mxu0
    %v6453 = vpop.f32.mrb[0].mxu0
    %6454 = vdwg.mxu0
    %6455 = vmatprep.subr.bf16.mxu0 %v2483
    %6456 = vmatpush1.bf16.msra.mxu0 %v2482
    %6457 = vmatprep.subr.bf16.mxu0 %v2491
    %6458 = vmatpush1.bf16.msra.mxu0 %v2490
    %6459 = vmatprep.subr.bf16.mxu0 %v2499
    %6460 = vmatpush1.bf16.msra.mxu0 %v2498
    %6461 = vmatprep.subr.bf16.mxu0 %v2507
    %6462 = vmatpush1.bf16.msra.mxu0 %v2506
    %6463 = vmatprep.subr.bf16.mxu0 %v2515
    %6464 = vmatpush1.bf16.msra.mxu0 %v2514
    %6465 = vmatprep.subr.bf16.mxu0 %v2523
    %6466 = vmatpush1.bf16.msra.mxu0 %v2522
    %6467 = vmatprep.subr.bf16.mxu0 %v2531
    %6468 = vmatpush1.bf16.msra.mxu0 %v2530
    %6469 = vmatprep.subr.bf16.mxu0 %v2539
    %6470 = vmatpush1.bf16.msra.mxu0 %v2538
    %6471 = vmatprep.subr.bf16.mxu0 %v2547
    %6472 = vmatpush1.bf16.msra.mxu0 %v2546
    %6473 = vmatprep.subr.bf16.mxu0 %v2555
    %6474 = vmatpush1.bf16.msra.mxu0 %v2554
    %6475 = vmatprep.subr.bf16.mxu0 %v2563
    %6476 = vmatpush1.bf16.msra.mxu0 %v2562
    %6477 = vmatprep.subr.bf16.mxu0 %v2571
    %6478 = vmatpush1.bf16.msra.mxu0 %v2570
    %6479 = vmatprep.subr.bf16.mxu0 %v2579
    %6480 = vmatpush1.bf16.msra.mxu0 %v2578
    %6481 = vmatprep.subr.bf16.mxu0 %v2587
    %6482 = vmatpush1.bf16.msra.mxu0 %v2586
    %6483 = vmatprep.subr.bf16.mxu0 %v2595
    %6484 = vmatpush1.bf16.msra.mxu0 %v2594
    %6485 = vmatprep.subr.bf16.mxu0 %v2603
    %6486 = vmatpush1.bf16.msra.mxu0 %v2602
    %6487 = vmatprep.mubr.bf16.mxu0 %v6331
    %6488 = vmatmul.mubr.bf16.gmra.mrb[0].mxu0 %v6330
    %v6489 = vpop.f32.mrb[0].mxu0
    %v6490 = vadd.f32 0.0, %v6489
    %v6491 = vpop.f32.mrb[0].mxu0
    %v6492 = vadd.f32 0.0, %v6491
    %v6493 = vpop.f32.mrb[0].mxu0
    %v6494 = vpop.f32.mrb[0].mxu0
    %6495 = vdwg.mxu0
    %6496 = vmatprep.subr.bf16.mxu0 %v3281
    %6497 = vmatpush1.bf16.msra.mxu0 %v3280
    %6498 = vmatprep.subr.bf16.mxu0 %v3289
    %6499 = vmatpush1.bf16.msra.mxu0 %v3288
    %6500 = vmatprep.subr.bf16.mxu0 %v3297
    %6501 = vmatpush1.bf16.msra.mxu0 %v3296
    %6502 = vmatprep.subr.bf16.mxu0 %v3305
    %6503 = vmatpush1.bf16.msra.mxu0 %v3304
    %6504 = vmatprep.subr.bf16.mxu0 %v3313
    %6505 = vmatpush1.bf16.msra.mxu0 %v3312
    %6506 = vmatprep.subr.bf16.mxu0 %v3321
    %6507 = vmatpush1.bf16.msra.mxu0 %v3320
    %6508 = vmatprep.subr.bf16.mxu0 %v3329
    %6509 = vmatpush1.bf16.msra.mxu0 %v3328
    %6510 = vmatprep.subr.bf16.mxu0 %v3337
    %6511 = vmatpush1.bf16.msra.mxu0 %v3336
    %6512 = vmatprep.subr.bf16.mxu0 %v3345
    %6513 = vmatpush1.bf16.msra.mxu0 %v3344
    %6514 = vmatprep.subr.bf16.mxu0 %v3353
    %6515 = vmatpush1.bf16.msra.mxu0 %v3352
    %6516 = vmatprep.subr.bf16.mxu0 %v3361
    %6517 = vmatpush1.bf16.msra.mxu0 %v3360
    %6518 = vmatprep.subr.bf16.mxu0 %v3369
    %6519 = vmatpush1.bf16.msra.mxu0 %v3368
    %6520 = vmatprep.subr.bf16.mxu0 %v3377
    %6521 = vmatpush1.bf16.msra.mxu0 %v3376
    %6522 = vmatprep.subr.bf16.mxu0 %v3385
    %6523 = vmatpush1.bf16.msra.mxu0 %v3384
    %6524 = vmatprep.subr.bf16.mxu0 %v3393
    %6525 = vmatpush1.bf16.msra.mxu0 %v3392
    %6526 = vmatprep.subr.bf16.mxu0 %v3401
    %6527 = vmatpush1.bf16.msra.mxu0 %v3400
    %6528 = vmatprep.mubr.bf16.mxu0 %v6113
    %6529 = vmatmul.mubr.bf16.gmra.mrb[0].mxu0 %v6112
    %v6530 = vpop.f32.mrb[0].mxu0
    %v6531 = vadd.f32 %v6367, %v6530
    %v6532 = vpop.f32.mrb[0].mxu0
    %v6533 = vadd.f32 %v6369, %v6532
    %v6534 = vpop.f32.mrb[0].mxu0
    %v6535 = vpop.f32.mrb[0].mxu0
    %6536 = vdwg.mxu0
    %6537 = vmatprep.subr.bf16.mxu0 %v3283
    %6538 = vmatpush1.bf16.msra.mxu0 %v3282
    %6539 = vmatprep.subr.bf16.mxu0 %v3291
    %6540 = vmatpush1.bf16.msra.mxu0 %v3290
    %6541 = vmatprep.subr.bf16.mxu0 %v3299
    %6542 = vmatpush1.bf16.msra.mxu0 %v3298
    %6543 = vmatprep.subr.bf16.mxu0 %v3307
    %6544 = vmatpush1.bf16.msra.mxu0 %v3306
    %6545 = vmatprep.subr.bf16.mxu0 %v3315
    %6546 = vmatpush1.bf16.msra.mxu0 %v3314
    %6547 = vmatprep.subr.bf16.mxu0 %v3323
    %6548 = vmatpush1.bf16.msra.mxu0 %v3322
    %6549 = vmatprep.subr.bf16.mxu0 %v3331
    %6550 = vmatpush1.bf16.msra.mxu0 %v3330
    %6551 = vmatprep.subr.bf16.mxu0 %v3339
    %6552 = vmatpush1.bf16.msra.mxu0 %v3338
    %6553 = vmatprep.subr.bf16.mxu0 %v3347
    %6554 = vmatpush1.bf16.msra.mxu0 %v3346
    %6555 = vmatprep.subr.bf16.mxu0 %v3355
    %6556 = vmatpush1.bf16.msra.mxu0 %v3354
    %6557 = vmatprep.subr.bf16.mxu0 %v3363
    %6558 = vmatpush1.bf16.msra.mxu0 %v3362
    %6559 = vmatprep.subr.bf16.mxu0 %v3371
    %6560 = vmatpush1.bf16.msra.mxu0 %v3370
    %6561 = vmatprep.subr.bf16.mxu0 %v3379
    %6562 = vmatpush1.bf16.msra.mxu0 %v3378
    %6563 = vmatprep.subr.bf16.mxu0 %v3387
    %6564 = vmatpush1.bf16.msra.mxu0 %v3386
    %6565 = vmatprep.subr.bf16.mxu0 %v3395
    %6566 = vmatpush1.bf16.msra.mxu0 %v3394
    %6567 = vmatprep.subr.bf16.mxu0 %v3403
    %6568 = vmatpush1.bf16.msra.mxu0 %v3402
    %6569 = vmatprep.mubr.bf16.mxu0 %v6113
    %6570 = vmatmul.mubr.bf16.gmra.mrb[0].mxu0 %v6112
    %v6571 = vpop.f32.mrb[0].mxu0
    %v6572 = vadd.f32 %v6408, %v6571
    %v6573 = vpop.f32.mrb[0].mxu0
    %v6574 = vadd.f32 %v6410, %v6573
    %v6575 = vpop.f32.mrb[0].mxu0
    %v6576 = vpop.f32.mrb[0].mxu0
    %6577 = vdwg.mxu0
    %6578 = vmatprep.subr.bf16.mxu0 %v3285
    %6579 = vmatpush1.bf16.msra.mxu0 %v3284
    %6580 = vmatprep.subr.bf16.mxu0 %v3293
    %6581 = vmatpush1.bf16.msra.mxu0 %v3292
    %6582 = vmatprep.subr.bf16.mxu0 %v3301
    %6583 = vmatpush1.bf16.msra.mxu0 %v3300
    %6584 = vmatprep.subr.bf16.mxu0 %v3309
    %6585 = vmatpush1.bf16.msra.mxu0 %v3308
    %6586 = vmatprep.subr.bf16.mxu0 %v3317
    %6587 = vmatpush1.bf16.msra.mxu0 %v3316
    %6588 = vmatprep.subr.bf16.mxu0 %v3325
    %6589 = vmatpush1.bf16.msra.mxu0 %v3324
    %6590 = vmatprep.subr.bf16.mxu0 %v3333
    %6591 = vmatpush1.bf16.msra.mxu0 %v3332
    %6592 = vmatprep.subr.bf16.mxu0 %v3341
    %6593 = vmatpush1.bf16.msra.mxu0 %v3340
    %6594 = vmatprep.subr.bf16.mxu0 %v3349
    %6595 = vmatpush1.bf16.msra.mxu0 %v3348
    %6596 = vmatprep.subr.bf16.mxu0 %v3357
    %6597 = vmatpush1.bf16.msra.mxu0 %v3356
    %6598 = vmatprep.subr.bf16.mxu0 %v3365
    %6599 = vmatpush1.bf16.msra.mxu0 %v3364
    %6600 = vmatprep.subr.bf16.mxu0 %v3373
    %6601 = vmatpush1.bf16.msra.mxu0 %v3372
    %6602 = vmatprep.subr.bf16.mxu0 %v3381
    %6603 = vmatpush1.bf16.msra.mxu0 %v3380
    %6604 = vmatprep.subr.bf16.mxu0 %v3389
    %6605 = vmatpush1.bf16.msra.mxu0 %v3388
    %6606 = vmatprep.subr.bf16.mxu0 %v3397
    %6607 = vmatpush1.bf16.msra.mxu0 %v3396
    %6608 = vmatprep.subr.bf16.mxu0 %v3405
    %6609 = vmatpush1.bf16.msra.mxu0 %v3404
    %6610 = vmatprep.mubr.bf16.mxu0 %v6113
    %6611 = vmatmul.mubr.bf16.gmra.mrb[0].mxu0 %v6112
    %v6612 = vpop.f32.mrb[0].mxu0
    %v6613 = vadd.f32 %v6449, %v6612
    %v6614 = vpop.f32.mrb[0].mxu0
    %v6615 = vadd.f32 %v6451, %v6614
    %v6616 = vpop.f32.mrb[0].mxu0
    %v6617 = vpop.f32.mrb[0].mxu0
    %6618 = vdwg.mxu0
    %6619 = vmatprep.subr.bf16.mxu0 %v3287
    %6620 = vmatpush1.bf16.msra.mxu0 %v3286
    %6621 = vmatprep.subr.bf16.mxu0 %v3295
    %6622 = vmatpush1.bf16.msra.mxu0 %v3294
    %6623 = vmatprep.subr.bf16.mxu0 %v3303
    %6624 = vmatpush1.bf16.msra.mxu0 %v3302
    %6625 = vmatprep.subr.bf16.mxu0 %v3311
    %6626 = vmatpush1.bf16.msra.mxu0 %v3310
    %6627 = vmatprep.subr.bf16.mxu0 %v3319
    %6628 = vmatpush1.bf16.msra.mxu0 %v3318
    %6629 = vmatprep.subr.bf16.mxu0 %v3327
    %6630 = vmatpush1.bf16.msra.mxu0 %v3326
    %6631 = vmatprep.subr.bf16.mxu0 %v3335
    %6632 = vmatpush1.bf16.msra.mxu0 %v3334
    %6633 = vmatprep.subr.bf16.mxu0 %v3343
    %6634 = vmatpush1.bf16.msra.mxu0 %v3342
    %6635 = vmatprep.subr.bf16.mxu0 %v3351
    %6636 = vmatpush1.bf16.msra.mxu0 %v3350
    %6637 = vmatprep.subr.bf16.mxu0 %v3359
    %6638 = vmatpush1.bf16.msra.mxu0 %v3358
    %6639 = vmatprep.subr.bf16.mxu0 %v3367
    %6640 = vmatpush1.bf16.msra.mxu0 %v3366
    %6641 = vmatprep.subr.bf16.mxu0 %v3375
    %6642 = vmatpush1.bf16.msra.mxu0 %v3374
    %6643 = vmatprep.subr.bf16.mxu0 %v3383
    %6644 = vmatpush1.bf16.msra.mxu0 %v3382
    %6645 = vmatprep.subr.bf16.mxu0 %v3391
    %6646 = vmatpush1.bf16.msra.mxu0 %v3390
    %6647 = vmatprep.subr.bf16.mxu0 %v3399
    %6648 = vmatpush1.bf16.msra.mxu0 %v3398
    %6649 = vmatprep.subr.bf16.mxu0 %v3407
    %6650 = vmatpush1.bf16.msra.mxu0 %v3406
    %6651 = vmatprep.mubr.bf16.mxu0 %v6113
    %6652 = vmatmul.mubr.bf16.gmra.mrb[0].mxu0 %v6112
    %v6653 = vpop.f32.mrb[0].mxu0
    %v6654 = vadd.f32 %v6490, %v6653
    %v6655 = vpop.f32.mrb[0].mxu0
    %v6656 = vadd.f32 %v6492, %v6655
    %v6657 = vpop.f32.mrb[0].mxu0
    %v6658 = vpop.f32.mrb[0].mxu0
    %6659 = vdwg.mxu0
    %v6660 = vadd.f32 %v6531, %v1197
    %v6661 = vadd.f32 %v6533, %v1201
    %v6662 = vadd.f32 %v6572, %v1205
    %v6663 = vadd.f32 %v6574, %v1209
    %v6664 = vadd.f32 %v6613, %v1213
    %v6665 = vadd.f32 %v6615, %v1217
    %v6666 = vadd.f32 %v6654, %v1221
    %v6667 = vadd.f32 %v6656, %v1225
    %v6668 = vmul.f32 %v6660, 0.5
    %v6669 = vmul.f32 %v6661, 0.5
    %v6670 = vmul.f32 %v6662, 0.5
    %v6671 = vmul.f32 %v6663, 0.5
    %v6672 = vmul.f32 %v6664, 0.5
    %v6673 = vmul.f32 %v6665, 0.5
    %v6674 = vtanh.pop %v6668
    %v6675 = vtanh.pop %v6669
    %v6676 = vtanh.pop %v6670
    %v6677 = vtanh.pop %v6671
    %v6678 = vtanh.pop %v6672
    %v6679 = vtanh.pop %v6673
    %v6680 = vadd.f32 %v6674, 1.0
    %v6681 = vadd.f32 %v6675, 1.0
    %v6682 = vadd.f32 %v6676, 1.0
    %v6683 = vadd.f32 %v6677, 1.0
    %v6684 = vadd.f32 %v6678, 1.0
    %v6685 = vadd.f32 %v6679, 1.0
    %v6686 = vmul.f32 %v6680, 0.5
    %v6687 = vmul.f32 %v6681, 0.5
    %v6688 = vmul.f32 %v6682, 0.5
    %v6689 = vmul.f32 %v6683, 0.5
    %v6690 = vmul.f32 %v6684, 0.5
    %v6691 = vmul.f32 %v6685, 0.5
    %v6692 = vtanh.pop %v6666
    %v6693 = vtanh.pop %v6667
    %v6694 = vmul.f32 %v6688, %v6106
    %v6695 = vmul.f32 %v6689, %v6107
    %v6696 = vmul.f32 %v6686, %v6692
    %v6697 = vmul.f32 %v6687, %v6693
    %v6698 = vadd.f32 %v6694, %v6696
    %v6699 = vadd.f32 %v6695, %v6697
    %v6700 = vtanh.pop %v6698
    %v6701 = vtanh.pop %v6699
    %v6702 = vmul.f32 %v6690, %v6700
    %v6703 = vmul.f32 %v6691, %v6701
    %v6704 = vpack.c.bf16 %v6702, %v6702
    %v6705 = vpack.c.bf16 %v6703, %v6703
    %v6706 = vld [vmem:[%s790] sm:$0xff]
    %v6707 = vld [vmem:[%s790 + $0x8] sm:$0xff]
    %v6708 = vld [vmem:[%s790 + $0x10] sm:$0xff]
    %v6709 = vld [vmem:[%s790 + $0x18] sm:$0xff]
    %v6710 = vld [vmem:[%s790 + $0x20] sm:$0xff]
    %v6711 = vld [vmem:[%s790 + $0x28] sm:$0xff]
    %v6712 = vld [vmem:[%s790 + $0x30] sm:$0xff]
    %v6713 = vld [vmem:[%s790 + $0x38] sm:$0xff]
    %6714 = vmatprep.subr.bf16.mxu0 %v1627
    %6715 = vmatpush1.bf16.msra.mxu0 %v1626
    %6716 = vmatprep.subr.bf16.mxu0 %v1635
    %6717 = vmatpush1.bf16.msra.mxu0 %v1634
    %6718 = vmatprep.subr.bf16.mxu0 %v1643
    %6719 = vmatpush1.bf16.msra.mxu0 %v1642
    %6720 = vmatprep.subr.bf16.mxu0 %v1651
    %6721 = vmatpush1.bf16.msra.mxu0 %v1650
    %6722 = vmatprep.subr.bf16.mxu0 %v1659
    %6723 = vmatpush1.bf16.msra.mxu0 %v1658
    %6724 = vmatprep.subr.bf16.mxu0 %v1667
    %6725 = vmatpush1.bf16.msra.mxu0 %v1666
    %6726 = vmatprep.subr.bf16.mxu0 %v1675
    %6727 = vmatpush1.bf16.msra.mxu0 %v1674
    %6728 = vmatprep.subr.bf16.mxu0 %v1683
    %6729 = vmatpush1.bf16.msra.mxu0 %v1682
    %6730 = vmatprep.subr.bf16.mxu0 %v1691
    %6731 = vmatpush1.bf16.msra.mxu0 %v1690
    %6732 = vmatprep.subr.bf16.mxu0 %v1699
    %6733 = vmatpush1.bf16.msra.mxu0 %v1698
    %6734 = vmatprep.subr.bf16.mxu0 %v1707
    %6735 = vmatpush1.bf16.msra.mxu0 %v1706
    %6736 = vmatprep.subr.bf16.mxu0 %v1715
    %6737 = vmatpush1.bf16.msra.mxu0 %v1714
    %6738 = vmatprep.subr.bf16.mxu0 %v1723
    %6739 = vmatpush1.bf16.msra.mxu0 %v1722
    %6740 = vmatprep.subr.bf16.mxu0 %v1731
    %6741 = vmatpush1.bf16.msra.mxu0 %v1730
    %6742 = vmatprep.subr.bf16.mxu0 %v1739
    %6743 = vmatpush1.bf16.msra.mxu0 %v1738
    %6744 = vmatprep.subr.bf16.mxu0 %v1747
    %6745 = vmatpush1.bf16.msra.mxu0 %v1746
    %6746 = vmatprep.mubr.bf16.mxu0 %v6331
    %6747 = vmatmul.mubr.bf16.gmra.mrb[0].mxu0 %v6330
    %v6748 = vpop.f32.mrb[0].mxu0
    %v6749 = vadd.f32 0.0, %v6748
    %v6750 = vpop.f32.mrb[0].mxu0
    %v6751 = vadd.f32 0.0, %v6750
    %v6752 = vpop.f32.mrb[0].mxu0
    %v6753 = vpop.f32.mrb[0].mxu0
    %6754 = vdwg.mxu0
    %6755 = vmatprep.subr.bf16.mxu0 %v1629
    %6756 = vmatpush1.bf16.msra.mxu0 %v1628
    %6757 = vmatprep.subr.bf16.mxu0 %v1637
    %6758 = vmatpush1.bf16.msra.mxu0 %v1636
    %6759 = vmatprep.subr.bf16.mxu0 %v1645
    %6760 = vmatpush1.bf16.msra.mxu0 %v1644
    %6761 = vmatprep.subr.bf16.mxu0 %v1653
    %6762 = vmatpush1.bf16.msra.mxu0 %v1652
    %6763 = vmatprep.subr.bf16.mxu0 %v1661
    %6764 = vmatpush1.bf16.msra.mxu0 %v1660
    %6765 = vmatprep.subr.bf16.mxu0 %v1669
    %6766 = vmatpush1.bf16.msra.mxu0 %v1668
    %6767 = vmatprep.subr.bf16.mxu0 %v1677
    %6768 = vmatpush1.bf16.msra.mxu0 %v1676
    %6769 = vmatprep.subr.bf16.mxu0 %v1685
    %6770 = vmatpush1.bf16.msra.mxu0 %v1684
    %6771 = vmatprep.subr.bf16.mxu0 %v1693
    %6772 = vmatpush1.bf16.msra.mxu0 %v1692
    %6773 = vmatprep.subr.bf16.mxu0 %v1701
    %6774 = vmatpush1.bf16.msra.mxu0 %v1700
    %6775 = vmatprep.subr.bf16.mxu0 %v1709
    %6776 = vmatpush1.bf16.msra.mxu0 %v1708
    %6777 = vmatprep.subr.bf16.mxu0 %v1717
    %6778 = vmatpush1.bf16.msra.mxu0 %v1716
    %6779 = vmatprep.subr.bf16.mxu0 %v1725
    %6780 = vmatpush1.bf16.msra.mxu0 %v1724
    %6781 = vmatprep.subr.bf16.mxu0 %v1733
    %6782 = vmatpush1.bf16.msra.mxu0 %v1732
    %6783 = vmatprep.subr.bf16.mxu0 %v1741
    %6784 = vmatpush1.bf16.msra.mxu0 %v1740
    %6785 = vmatprep.subr.bf16.mxu0 %v1749
    %6786 = vmatpush1.bf16.msra.mxu0 %v1748
    %6787 = vmatprep.mubr.bf16.mxu0 %v6331
    %6788 = vmatmul.mubr.bf16.gmra.mrb[0].mxu0 %v6330
    %v6789 = vpop.f32.mrb[0].mxu0
    %v6790 = vadd.f32 0.0, %v6789
    %v6791 = vpop.f32.mrb[0].mxu0
    %v6792 = vadd.f32 0.0, %v6791
    %v6793 = vpop.f32.mrb[0].mxu0
    %v6794 = vpop.f32.mrb[0].mxu0
    %6795 = vdwg.mxu0
    %6796 = vmatprep.subr.bf16.mxu0 %v1631
    %6797 = vmatpush1.bf16.msra.mxu0 %v1630
    %6798 = vmatprep.subr.bf16.mxu0 %v1639
    %6799 = vmatpush1.bf16.msra.mxu0 %v1638
    %6800 = vmatprep.subr.bf16.mxu0 %v1647
    %6801 = vmatpush1.bf16.msra.mxu0 %v1646
    %6802 = vmatprep.subr.bf16.mxu0 %v1655
    %6803 = vmatpush1.bf16.msra.mxu0 %v1654
    %6804 = vmatprep.subr.bf16.mxu0 %v1663
    %6805 = vmatpush1.bf16.msra.mxu0 %v1662
    %6806 = vmatprep.subr.bf16.mxu0 %v1671
    %6807 = vmatpush1.bf16.msra.mxu0 %v1670
    %6808 = vmatprep.subr.bf16.mxu0 %v1679
    %6809 = vmatpush1.bf16.msra.mxu0 %v1678
    %6810 = vmatprep.subr.bf16.mxu0 %v1687
    %6811 = vmatpush1.bf16.msra.mxu0 %v1686
    %6812 = vmatprep.subr.bf16.mxu0 %v1695
    %6813 = vmatpush1.bf16.msra.mxu0 %v1694
    %6814 = vmatprep.subr.bf16.mxu0 %v1703
    %6815 = vmatpush1.bf16.msra.mxu0 %v1702
    %6816 = vmatprep.subr.bf16.mxu0 %v1711
    %6817 = vmatpush1.bf16.msra.mxu0 %v1710
    %6818 = vmatprep.subr.bf16.mxu0 %v1719
    %6819 = vmatpush1.bf16.msra.mxu0 %v1718
    %6820 = vmatprep.subr.bf16.mxu0 %v1727
    %6821 = vmatpush1.bf16.msra.mxu0 %v1726
    %6822 = vmatprep.subr.bf16.mxu0 %v1735
    %6823 = vmatpush1.bf16.msra.mxu0 %v1734
    %6824 = vmatprep.subr.bf16.mxu0 %v1743
    %6825 = vmatpush1.bf16.msra.mxu0 %v1742
    %6826 = vmatprep.subr.bf16.mxu0 %v1751
    %6827 = vmatpush1.bf16.msra.mxu0 %v1750
    %6828 = vmatprep.mubr.bf16.mxu0 %v6331
    %6829 = vmatmul.mubr.bf16.gmra.mrb[0].mxu0 %v6330
    %v6830 = vpop.f32.mrb[0].mxu0
    %v6831 = vadd.f32 0.0, %v6830
    %v6832 = vpop.f32.mrb[0].mxu0
    %v6833 = vadd.f32 0.0, %v6832
    %v6834 = vpop.f32.mrb[0].mxu0
    %v6835 = vpop.f32.mrb[0].mxu0
    %6836 = vdwg.mxu0
    %6837 = vmatprep.subr.bf16.mxu0 %v1633
    %6838 = vmatpush1.bf16.msra.mxu0 %v1632
    %6839 = vmatprep.subr.bf16.mxu0 %v1641
    %6840 = vmatpush1.bf16.msra.mxu0 %v1640
    %6841 = vmatprep.subr.bf16.mxu0 %v1649
    %6842 = vmatpush1.bf16.msra.mxu0 %v1648
    %6843 = vmatprep.subr.bf16.mxu0 %v1657
    %6844 = vmatpush1.bf16.msra.mxu0 %v1656
    %6845 = vmatprep.subr.bf16.mxu0 %v1665
    %6846 = vmatpush1.bf16.msra.mxu0 %v1664
    %6847 = vmatprep.subr.bf16.mxu0 %v1673
    %6848 = vmatpush1.bf16.msra.mxu0 %v1672
    %6849 = vmatprep.subr.bf16.mxu0 %v1681
    %6850 = vmatpush1.bf16.msra.mxu0 %v1680
    %6851 = vmatprep.subr.bf16.mxu0 %v1689
    %6852 = vmatpush1.bf16.msra.mxu0 %v1688
    %6853 = vmatprep.subr.bf16.mxu0 %v1697
    %6854 = vmatpush1.bf16.msra.mxu0 %v1696
    %6855 = vmatprep.subr.bf16.mxu0 %v1705
    %6856 = vmatpush1.bf16.msra.mxu0 %v1704
    %6857 = vmatprep.subr.bf16.mxu0 %v1713
    %6858 = vmatpush1.bf16.msra.mxu0 %v1712
    %6859 = vmatprep.subr.bf16.mxu0 %v1721
    %6860 = vmatpush1.bf16.msra.mxu0 %v1720
    %6861 = vmatprep.subr.bf16.mxu0 %v1729
    %6862 = vmatpush1.bf16.msra.mxu0 %v1728
    %6863 = vmatprep.subr.bf16.mxu0 %v1737
    %6864 = vmatpush1.bf16.msra.mxu0 %v1736
    %6865 = vmatprep.subr.bf16.mxu0 %v1745
    %6866 = vmatpush1.bf16.msra.mxu0 %v1744
    %6867 = vmatprep.subr.bf16.mxu0 %v1753
    %6868 = vmatpush1.bf16.msra.mxu0 %v1752
    %6869 = vmatprep.mubr.bf16.mxu0 %v6331
    %6870 = vmatmul.mubr.bf16.gmra.mrb[0].mxu0 %v6330
    %v6871 = vpop.f32.mrb[0].mxu0
    %v6872 = vadd.f32 0.0, %v6871
    %v6873 = vpop.f32.mrb[0].mxu0
    %v6874 = vadd.f32 0.0, %v6873
    %v6875 = vpop.f32.mrb[0].mxu0
    %v6876 = vpop.f32.mrb[0].mxu0
    %6877 = vdwg.mxu0
    %v6878 = vadd.f32 %v6706, %v6749
    %v6879 = vadd.f32 %v6707, %v6751
    %v6880 = vadd.f32 %v6708, %v6790
    %v6881 = vadd.f32 %v6709, %v6792
    %v6882 = vadd.f32 %v6710, %v6831
    %v6883 = vadd.f32 %v6711, %v6833
    %v6884 = vadd.f32 %v6712, %v6872
    %v6885 = vadd.f32 %v6713, %v6874
    %v6886 = vmul.f32 %v6878, 0.5
    %v6887 = vmul.f32 %v6879, 0.5
    %v6888 = vmul.f32 %v6880, 0.5
    %v6889 = vmul.f32 %v6881, 0.5
    %v6890 = vmul.f32 %v6882, 0.5
    %v6891 = vmul.f32 %v6883, 0.5
    %v6892 = vtanh.pop %v6886
    %v6893 = vtanh.pop %v6887
    %v6894 = vtanh.pop %v6888
    %v6895 = vtanh.pop %v6889
    %v6896 = vtanh.pop %v6890
    %v6897 = vtanh.pop %v6891
    %v6898 = vadd.f32 %v6892, 1.0
    %v6899 = vadd.f32 %v6893, 1.0
    %v6900 = vadd.f32 %v6894, 1.0
    %v6901 = vadd.f32 %v6895, 1.0
    %v6902 = vadd.f32 %v6896, 1.0
    %v6903 = vadd.f32 %v6897, 1.0
    %v6904 = vmul.f32 %v6898, 0.5
    %v6905 = vmul.f32 %v6899, 0.5
    %v6906 = vmul.f32 %v6900, 0.5
    %v6907 = vmul.f32 %v6901, 0.5
    %v6908 = vmul.f32 %v6902, 0.5
    %v6909 = vmul.f32 %v6903, 0.5
    %v6910 = vtanh.pop %v6884
    %v6911 = vtanh.pop %v6885
    %v6912 = vmul.f32 %v6906, %v6324
    %v6913 = vmul.f32 %v6907, %v6325
    %v6914 = vmul.f32 %v6904, %v6910
    %v6915 = vmul.f32 %v6905, %v6911
    %v6916 = vadd.f32 %v6912, %v6914
    %v6917 = vadd.f32 %v6913, %v6915
    %v6918 = vtanh.pop %v6916
    %v6919 = vtanh.pop %v6917
    %v6920 = vmul.f32 %v6908, %v6918
    %v6921 = vmul.f32 %v6909, %v6919
    %v6922 = vpack.c.bf16 %v6920, %v6920
    %v6923 = vpack.c.bf16 %v6921, %v6921
    %6924 = vmatprep.subr.bf16.mxu0 %v2477
    %6925 = vmatpush1.bf16.msra.mxu0 %v2476
    %6926 = vmatprep.subr.bf16.mxu0 %v2485
    %6927 = vmatpush1.bf16.msra.mxu0 %v2484
    %6928 = vmatprep.subr.bf16.mxu0 %v2493
    %6929 = vmatpush1.bf16.msra.mxu0 %v2492
    %6930 = vmatprep.subr.bf16.mxu0 %v2501
    %6931 = vmatpush1.bf16.msra.mxu0 %v2500
    %6932 = vmatprep.subr.bf16.mxu0 %v2509
    %6933 = vmatpush1.bf16.msra.mxu0 %v2508
    %6934 = vmatprep.subr.bf16.mxu0 %v2517
    %6935 = vmatpush1.bf16.msra.mxu0 %v2516
    %6936 = vmatprep.subr.bf16.mxu0 %v2525
    %6937 = vmatpush1.bf16.msra.mxu0 %v2524
    %6938 = vmatprep.subr.bf16.mxu0 %v2533
    %6939 = vmatpush1.bf16.msra.mxu0 %v2532
    %6940 = vmatprep.subr.bf16.mxu0 %v2541
    %6941 = vmatpush1.bf16.msra.mxu0 %v2540
    %6942 = vmatprep.subr.bf16.mxu0 %v2549
    %6943 = vmatpush1.bf16.msra.mxu0 %v2548
    %6944 = vmatprep.subr.bf16.mxu0 %v2557
    %6945 = vmatpush1.bf16.msra.mxu0 %v2556
    %6946 = vmatprep.subr.bf16.mxu0 %v2565
    %6947 = vmatpush1.bf16.msra.mxu0 %v2564
    %6948 = vmatprep.subr.bf16.mxu0 %v2573
    %6949 = vmatpush1.bf16.msra.mxu0 %v2572
    %6950 = vmatprep.subr.bf16.mxu0 %v2581
    %6951 = vmatpush1.bf16.msra.mxu0 %v2580
    %6952 = vmatprep.subr.bf16.mxu0 %v2589
    %6953 = vmatpush1.bf16.msra.mxu0 %v2588
    %6954 = vmatprep.subr.bf16.mxu0 %v2597
    %6955 = vmatpush1.bf16.msra.mxu0 %v2596
    %6956 = vmatprep.mubr.bf16.mxu0 %v6923
    %6957 = vmatmul.mubr.bf16.gmra.mrb[0].mxu0 %v6922
    %v6958 = vpop.f32.mrb[0].mxu0
    %v6959 = vadd.f32 0.0, %v6958
    %v6960 = vpop.f32.mrb[0].mxu0
    %v6961 = vadd.f32 0.0, %v6960
    %v6962 = vpop.f32.mrb[0].mxu0
    %v6963 = vpop.f32.mrb[0].mxu0
    %6964 = vdwg.mxu0
    %6965 = vmatprep.subr.bf16.mxu0 %v2479
    %6966 = vmatpush1.bf16.msra.mxu0 %v2478
    %6967 = vmatprep.subr.bf16.mxu0 %v2487
    %6968 = vmatpush1.bf16.msra.mxu0 %v2486
    %6969 = vmatprep.subr.bf16.mxu0 %v2495
    %6970 = vmatpush1.bf16.msra.mxu0 %v2494
    %6971 = vmatprep.subr.bf16.mxu0 %v2503
    %6972 = vmatpush1.bf16.msra.mxu0 %v2502
    %6973 = vmatprep.subr.bf16.mxu0 %v2511
    %6974 = vmatpush1.bf16.msra.mxu0 %v2510
    %6975 = vmatprep.subr.bf16.mxu0 %v2519
    %6976 = vmatpush1.bf16.msra.mxu0 %v2518
    %6977 = vmatprep.subr.bf16.mxu0 %v2527
    %6978 = vmatpush1.bf16.msra.mxu0 %v2526
    %6979 = vmatprep.subr.bf16.mxu0 %v2535
    %6980 = vmatpush1.bf16.msra.mxu0 %v2534
    %6981 = vmatprep.subr.bf16.mxu0 %v2543
    %6982 = vmatpush1.bf16.msra.mxu0 %v2542
    %6983 = vmatprep.subr.bf16.mxu0 %v2551
    %6984 = vmatpush1.bf16.msra.mxu0 %v2550
    %6985 = vmatprep.subr.bf16.mxu0 %v2559
    %6986 = vmatpush1.bf16.msra.mxu0 %v2558
    %6987 = vmatprep.subr.bf16.mxu0 %v2567
    %6988 = vmatpush1.bf16.msra.mxu0 %v2566
    %6989 = vmatprep.subr.bf16.mxu0 %v2575
    %6990 = vmatpush1.bf16.msra.mxu0 %v2574
    %6991 = vmatprep.subr.bf16.mxu0 %v2583
    %6992 = vmatpush1.bf16.msra.mxu0 %v2582
    %6993 = vmatprep.subr.bf16.mxu0 %v2591
    %6994 = vmatpush1.bf16.msra.mxu0 %v2590
    %6995 = vmatprep.subr.bf16.mxu0 %v2599
    %6996 = vmatpush1.bf16.msra.mxu0 %v2598
    %6997 = vmatprep.mubr.bf16.mxu0 %v6923
    %6998 = vmatmul.mubr.bf16.gmra.mrb[0].mxu0 %v6922
    %v6999 = vpop.f32.mrb[0].mxu0
    %v7000 = vadd.f32 0.0, %v6999
    %v7001 = vpop.f32.mrb[0].mxu0
    %v7002 = vadd.f32 0.0, %v7001
    %v7003 = vpop.f32.mrb[0].mxu0
    %v7004 = vpop.f32.mrb[0].mxu0
    %7005 = vdwg.mxu0
    %7006 = vmatprep.subr.bf16.mxu0 %v2481
    %7007 = vmatpush1.bf16.msra.mxu0 %v2480
    %7008 = vmatprep.subr.bf16.mxu0 %v2489
    %7009 = vmatpush1.bf16.msra.mxu0 %v2488
    %7010 = vmatprep.subr.bf16.mxu0 %v2497
    %7011 = vmatpush1.bf16.msra.mxu0 %v2496
    %7012 = vmatprep.subr.bf16.mxu0 %v2505
    %7013 = vmatpush1.bf16.msra.mxu0 %v2504
    %7014 = vmatprep.subr.bf16.mxu0 %v2513
    %7015 = vmatpush1.bf16.msra.mxu0 %v2512
    %7016 = vmatprep.subr.bf16.mxu0 %v2521
    %7017 = vmatpush1.bf16.msra.mxu0 %v2520
    %7018 = vmatprep.subr.bf16.mxu0 %v2529
    %7019 = vmatpush1.bf16.msra.mxu0 %v2528
    %7020 = vmatprep.subr.bf16.mxu0 %v2537
    %7021 = vmatpush1.bf16.msra.mxu0 %v2536
    %7022 = vmatprep.subr.bf16.mxu0 %v2545
    %7023 = vmatpush1.bf16.msra.mxu0 %v2544
    %7024 = vmatprep.subr.bf16.mxu0 %v2553
    %7025 = vmatpush1.bf16.msra.mxu0 %v2552
    %7026 = vmatprep.subr.bf16.mxu0 %v2561
    %7027 = vmatpush1.bf16.msra.mxu0 %v2560
    %7028 = vmatprep.subr.bf16.mxu0 %v2569
    %7029 = vmatpush1.bf16.msra.mxu0 %v2568
    %7030 = vmatprep.subr.bf16.mxu0 %v2577
    %7031 = vmatpush1.bf16.msra.mxu0 %v2576
    %7032 = vmatprep.subr.bf16.mxu0 %v2585
    %7033 = vmatpush1.bf16.msra.mxu0 %v2584
    %7034 = vmatprep.subr.bf16.mxu0 %v2593
    %7035 = vmatpush1.bf16.msra.mxu0 %v2592
    %7036 = vmatprep.subr.bf16.mxu0 %v2601
    %7037 = vmatpush1.bf16.msra.mxu0 %v2600
    %7038 = vmatprep.mubr.bf16.mxu0 %v6923
    %7039 = vmatmul.mubr.bf16.gmra.mrb[0].mxu0 %v6922
    %v7040 = vpop.f32.mrb[0].mxu0
    %v7041 = vadd.f32 0.0, %v7040
    %v7042 = vpop.f32.mrb[0].mxu0
    %v7043 = vadd.f32 0.0, %v7042
    %v7044 = vpop.f32.mrb[0].mxu0
    %v7045 = vpop.f32.mrb[0].mxu0
    %7046 = vdwg.mxu0
    %7047 = vmatprep.subr.bf16.mxu0 %v2483
    %7048 = vmatpush1.bf16.msra.mxu0 %v2482
    %7049 = vmatprep.subr.bf16.mxu0 %v2491
    %7050 = vmatpush1.bf16.msra.mxu0 %v2490
    %7051 = vmatprep.subr.bf16.mxu0 %v2499
    %7052 = vmatpush1.bf16.msra.mxu0 %v2498
    %7053 = vmatprep.subr.bf16.mxu0 %v2507
    %7054 = vmatpush1.bf16.msra.mxu0 %v2506
    %7055 = vmatprep.subr.bf16.mxu0 %v2515
    %7056 = vmatpush1.bf16.msra.mxu0 %v2514
    %7057 = vmatprep.subr.bf16.mxu0 %v2523
    %7058 = vmatpush1.bf16.msra.mxu0 %v2522
    %7059 = vmatprep.subr.bf16.mxu0 %v2531
    %7060 = vmatpush1.bf16.msra.mxu0 %v2530
    %7061 = vmatprep.subr.bf16.mxu0 %v2539
    %7062 = vmatpush1.bf16.msra.mxu0 %v2538
    %7063 = vmatprep.subr.bf16.mxu0 %v2547
    %7064 = vmatpush1.bf16.msra.mxu0 %v2546
    %7065 = vmatprep.subr.bf16.mxu0 %v2555
    %7066 = vmatpush1.bf16.msra.mxu0 %v2554
    %7067 = vmatprep.subr.bf16.mxu0 %v2563
    %7068 = vmatpush1.bf16.msra.mxu0 %v2562
    %7069 = vmatprep.subr.bf16.mxu0 %v2571
    %7070 = vmatpush1.bf16.msra.mxu0 %v2570
    %7071 = vmatprep.subr.bf16.mxu0 %v2579
    %7072 = vmatpush1.bf16.msra.mxu0 %v2578
    %7073 = vmatprep.subr.bf16.mxu0 %v2587
    %7074 = vmatpush1.bf16.msra.mxu0 %v2586
    %7075 = vmatprep.subr.bf16.mxu0 %v2595
    %7076 = vmatpush1.bf16.msra.mxu0 %v2594
    %7077 = vmatprep.subr.bf16.mxu0 %v2603
    %7078 = vmatpush1.bf16.msra.mxu0 %v2602
    %7079 = vmatprep.mubr.bf16.mxu0 %v6923
    %7080 = vmatmul.mubr.bf16.gmra.mrb[0].mxu0 %v6922
    %v7081 = vpop.f32.mrb[0].mxu0
    %v7082 = vadd.f32 0.0, %v7081
    %v7083 = vpop.f32.mrb[0].mxu0
    %v7084 = vadd.f32 0.0, %v7083
    %v7085 = vpop.f32.mrb[0].mxu0
    %v7086 = vpop.f32.mrb[0].mxu0
    %7087 = vdwg.mxu0
    %7088 = vmatprep.subr.bf16.mxu0 %v3281
    %7089 = vmatpush1.bf16.msra.mxu0 %v3280
    %7090 = vmatprep.subr.bf16.mxu0 %v3289
    %7091 = vmatpush1.bf16.msra.mxu0 %v3288
    %7092 = vmatprep.subr.bf16.mxu0 %v3297
    %7093 = vmatpush1.bf16.msra.mxu0 %v3296
    %7094 = vmatprep.subr.bf16.mxu0 %v3305
    %7095 = vmatpush1.bf16.msra.mxu0 %v3304
    %7096 = vmatprep.subr.bf16.mxu0 %v3313
    %7097 = vmatpush1.bf16.msra.mxu0 %v3312
    %7098 = vmatprep.subr.bf16.mxu0 %v3321
    %7099 = vmatpush1.bf16.msra.mxu0 %v3320
    %7100 = vmatprep.subr.bf16.mxu0 %v3329
    %7101 = vmatpush1.bf16.msra.mxu0 %v3328
    %7102 = vmatprep.subr.bf16.mxu0 %v3337
    %7103 = vmatpush1.bf16.msra.mxu0 %v3336
    %7104 = vmatprep.subr.bf16.mxu0 %v3345
    %7105 = vmatpush1.bf16.msra.mxu0 %v3344
    %7106 = vmatprep.subr.bf16.mxu0 %v3353
    %7107 = vmatpush1.bf16.msra.mxu0 %v3352
    %7108 = vmatprep.subr.bf16.mxu0 %v3361
    %7109 = vmatpush1.bf16.msra.mxu0 %v3360
    %7110 = vmatprep.subr.bf16.mxu0 %v3369
    %7111 = vmatpush1.bf16.msra.mxu0 %v3368
    %7112 = vmatprep.subr.bf16.mxu0 %v3377
    %7113 = vmatpush1.bf16.msra.mxu0 %v3376
    %7114 = vmatprep.subr.bf16.mxu0 %v3385
    %7115 = vmatpush1.bf16.msra.mxu0 %v3384
    %7116 = vmatprep.subr.bf16.mxu0 %v3393
    %7117 = vmatpush1.bf16.msra.mxu0 %v3392
    %7118 = vmatprep.subr.bf16.mxu0 %v3401
    %7119 = vmatpush1.bf16.msra.mxu0 %v3400
    %7120 = vmatprep.mubr.bf16.mxu0 %v6705
    %7121 = vmatmul.mubr.bf16.gmra.mrb[0].mxu0 %v6704
    %v7122 = vpop.f32.mrb[0].mxu0
    %v7123 = vadd.f32 %v6959, %v7122
    %v7124 = vpop.f32.mrb[0].mxu0
    %v7125 = vadd.f32 %v6961, %v7124
    %v7126 = vpop.f32.mrb[0].mxu0
    %v7127 = vpop.f32.mrb[0].mxu0
    %7128 = vdwg.mxu0
    %7129 = vmatprep.subr.bf16.mxu0 %v3283
    %7130 = vmatpush1.bf16.msra.mxu0 %v3282
    %7131 = vmatprep.subr.bf16.mxu0 %v3291
    %7132 = vmatpush1.bf16.msra.mxu0 %v3290
    %7133 = vmatprep.subr.bf16.mxu0 %v3299
    %7134 = vmatpush1.bf16.msra.mxu0 %v3298
    %7135 = vmatprep.subr.bf16.mxu0 %v3307
    %7136 = vmatpush1.bf16.msra.mxu0 %v3306
    %7137 = vmatprep.subr.bf16.mxu0 %v3315
    %7138 = vmatpush1.bf16.msra.mxu0 %v3314
    %7139 = vmatprep.subr.bf16.mxu0 %v3323
    %7140 = vmatpush1.bf16.msra.mxu0 %v3322
    %7141 = vmatprep.subr.bf16.mxu0 %v3331
    %7142 = vmatpush1.bf16.msra.mxu0 %v3330
    %7143 = vmatprep.subr.bf16.mxu0 %v3339
    %7144 = vmatpush1.bf16.msra.mxu0 %v3338
    %7145 = vmatprep.subr.bf16.mxu0 %v3347
    %7146 = vmatpush1.bf16.msra.mxu0 %v3346
    %7147 = vmatprep.subr.bf16.mxu0 %v3355
    %7148 = vmatpush1.bf16.msra.mxu0 %v3354
    %7149 = vmatprep.subr.bf16.mxu0 %v3363
    %7150 = vmatpush1.bf16.msra.mxu0 %v3362
    %7151 = vmatprep.subr.bf16.mxu0 %v3371
    %7152 = vmatpush1.bf16.msra.mxu0 %v3370
    %7153 = vmatprep.subr.bf16.mxu0 %v3379
    %7154 = vmatpush1.bf16.msra.mxu0 %v3378
    %7155 = vmatprep.subr.bf16.mxu0 %v3387
    %7156 = vmatpush1.bf16.msra.mxu0 %v3386
    %7157 = vmatprep.subr.bf16.mxu0 %v3395
    %7158 = vmatpush1.bf16.msra.mxu0 %v3394
    %7159 = vmatprep.subr.bf16.mxu0 %v3403
    %7160 = vmatpush1.bf16.msra.mxu0 %v3402
    %7161 = vmatprep.mubr.bf16.mxu0 %v6705
    %7162 = vmatmul.mubr.bf16.gmra.mrb[0].mxu0 %v6704
    %v7163 = vpop.f32.mrb[0].mxu0
    %v7164 = vadd.f32 %v7000, %v7163
    %v7165 = vpop.f32.mrb[0].mxu0
    %v7166 = vadd.f32 %v7002, %v7165
    %v7167 = vpop.f32.mrb[0].mxu0
    %v7168 = vpop.f32.mrb[0].mxu0
    %7169 = vdwg.mxu0
    %7170 = vmatprep.subr.bf16.mxu0 %v3285
    %7171 = vmatpush1.bf16.msra.mxu0 %v3284
    %7172 = vmatprep.subr.bf16.mxu0 %v3293
    %7173 = vmatpush1.bf16.msra.mxu0 %v3292
    %7174 = vmatprep.subr.bf16.mxu0 %v3301
    %7175 = vmatpush1.bf16.msra.mxu0 %v3300
    %7176 = vmatprep.subr.bf16.mxu0 %v3309
    %7177 = vmatpush1.bf16.msra.mxu0 %v3308
    %7178 = vmatprep.subr.bf16.mxu0 %v3317
    %7179 = vmatpush1.bf16.msra.mxu0 %v3316
    %7180 = vmatprep.subr.bf16.mxu0 %v3325
    %7181 = vmatpush1.bf16.msra.mxu0 %v3324
    %7182 = vmatprep.subr.bf16.mxu0 %v3333
    %7183 = vmatpush1.bf16.msra.mxu0 %v3332
    %7184 = vmatprep.subr.bf16.mxu0 %v3341
    %7185 = vmatpush1.bf16.msra.mxu0 %v3340
    %7186 = vmatprep.subr.bf16.mxu0 %v3349
    %7187 = vmatpush1.bf16.msra.mxu0 %v3348
    %7188 = vmatprep.subr.bf16.mxu0 %v3357
    %7189 = vmatpush1.bf16.msra.mxu0 %v3356
    %7190 = vmatprep.subr.bf16.mxu0 %v3365
    %7191 = vmatpush1.bf16.msra.mxu0 %v3364
    %7192 = vmatprep.subr.bf16.mxu0 %v3373
    %7193 = vmatpush1.bf16.msra.mxu0 %v3372
    %7194 = vmatprep.subr.bf16.mxu0 %v3381
    %7195 = vmatpush1.bf16.msra.mxu0 %v3380
    %7196 = vmatprep.subr.bf16.mxu0 %v3389
    %7197 = vmatpush1.bf16.msra.mxu0 %v3388
    %7198 = vmatprep.subr.bf16.mxu0 %v3397
    %7199 = vmatpush1.bf16.msra.mxu0 %v3396
    %7200 = vmatprep.subr.bf16.mxu0 %v3405
    %7201 = vmatpush1.bf16.msra.mxu0 %v3404
    %7202 = vmatprep.mubr.bf16.mxu0 %v6705
    %7203 = vmatmul.mubr.bf16.gmra.mrb[0].mxu0 %v6704
    %v7204 = vpop.f32.mrb[0].mxu0
    %v7205 = vadd.f32 %v7041, %v7204
    %v7206 = vpop.f32.mrb[0].mxu0
    %v7207 = vadd.f32 %v7043, %v7206
    %v7208 = vpop.f32.mrb[0].mxu0
    %v7209 = vpop.f32.mrb[0].mxu0
    %7210 = vdwg.mxu0
    %7211 = vmatprep.subr.bf16.mxu0 %v3287
    %7212 = vmatpush1.bf16.msra.mxu0 %v3286
    %7213 = vmatprep.subr.bf16.mxu0 %v3295
    %7214 = vmatpush1.bf16.msra.mxu0 %v3294
    %7215 = vmatprep.subr.bf16.mxu0 %v3303
    %7216 = vmatpush1.bf16.msra.mxu0 %v3302
    %7217 = vmatprep.subr.bf16.mxu0 %v3311
    %7218 = vmatpush1.bf16.msra.mxu0 %v3310
    %7219 = vmatprep.subr.bf16.mxu0 %v3319
    %7220 = vmatpush1.bf16.msra.mxu0 %v3318
    %7221 = vmatprep.subr.bf16.mxu0 %v3327
    %7222 = vmatpush1.bf16.msra.mxu0 %v3326
    %7223 = vmatprep.subr.bf16.mxu0 %v3335
    %7224 = vmatpush1.bf16.msra.mxu0 %v3334
    %7225 = vmatprep.subr.bf16.mxu0 %v3343
    %7226 = vmatpush1.bf16.msra.mxu0 %v3342
    %7227 = vmatprep.subr.bf16.mxu0 %v3351
    %7228 = vmatpush1.bf16.msra.mxu0 %v3350
    %7229 = vmatprep.subr.bf16.mxu0 %v3359
    %7230 = vmatpush1.bf16.msra.mxu0 %v3358
    %7231 = vmatprep.subr.bf16.mxu0 %v3367
    %7232 = vmatpush1.bf16.msra.mxu0 %v3366
    %7233 = vmatprep.subr.bf16.mxu0 %v3375
    %7234 = vmatpush1.bf16.msra.mxu0 %v3374
    %7235 = vmatprep.subr.bf16.mxu0 %v3383
    %7236 = vmatpush1.bf16.msra.mxu0 %v3382
    %7237 = vmatprep.subr.bf16.mxu0 %v3391
    %7238 = vmatpush1.bf16.msra.mxu0 %v3390
    %7239 = vmatprep.subr.bf16.mxu0 %v3399
    %7240 = vmatpush1.bf16.msra.mxu0 %v3398
    %7241 = vmatprep.subr.bf16.mxu0 %v3407
    %7242 = vmatpush1.bf16.msra.mxu0 %v3406
    %7243 = vmatprep.mubr.bf16.mxu0 %v6705
    %7244 = vmatmul.mubr.bf16.gmra.mrb[0].mxu0 %v6704
    %v7245 = vpop.f32.mrb[0].mxu0
    %v7246 = vadd.f32 %v7082, %v7245
    %v7247 = vpop.f32.mrb[0].mxu0
    %v7248 = vadd.f32 %v7084, %v7247
    %v7249 = vpop.f32.mrb[0].mxu0
    %v7250 = vpop.f32.mrb[0].mxu0
    %7251 = vdwg.mxu0
    %v7252 = vadd.f32 %v7123, %v1197
    %v7253 = vadd.f32 %v7125, %v1201
    %v7254 = vadd.f32 %v7164, %v1205
    %v7255 = vadd.f32 %v7166, %v1209
    %v7256 = vadd.f32 %v7205, %v1213
    %v7257 = vadd.f32 %v7207, %v1217
    %v7258 = vadd.f32 %v7246, %v1221
    %v7259 = vadd.f32 %v7248, %v1225
    %v7260 = vmul.f32 %v7252, 0.5
    %v7261 = vmul.f32 %v7253, 0.5
    %v7262 = vmul.f32 %v7254, 0.5
    %v7263 = vmul.f32 %v7255, 0.5
    %v7264 = vmul.f32 %v7256, 0.5
    %v7265 = vmul.f32 %v7257, 0.5
    %v7266 = vtanh.pop %v7260
    %v7267 = vtanh.pop %v7261
    %v7268 = vtanh.pop %v7262
    %v7269 = vtanh.pop %v7263
    %v7270 = vtanh.pop %v7264
    %v7271 = vtanh.pop %v7265
    %v7272 = vadd.f32 %v7266, 1.0
    %v7273 = vadd.f32 %v7267, 1.0
    %v7274 = vadd.f32 %v7268, 1.0
    %v7275 = vadd.f32 %v7269, 1.0
    %v7276 = vadd.f32 %v7270, 1.0
    %v7277 = vadd.f32 %v7271, 1.0
    %v7278 = vmul.f32 %v7272, 0.5
    %v7279 = vmul.f32 %v7273, 0.5
    %v7280 = vmul.f32 %v7274, 0.5
    %v7281 = vmul.f32 %v7275, 0.5
    %v7282 = vmul.f32 %v7276, 0.5
    %v7283 = vmul.f32 %v7277, 0.5
    %v7284 = vtanh.pop %v7258
    %v7285 = vtanh.pop %v7259
    %v7286 = vmul.f32 %v7280, %v6698
    %v7287 = vmul.f32 %v7281, %v6699
    %v7288 = vmul.f32 %v7278, %v7284
    %v7289 = vmul.f32 %v7279, %v7285
    %v7290 = vadd.f32 %v7286, %v7288
    %v7291 = vadd.f32 %v7287, %v7289
    %v7292 = vtanh.pop %v7290
    %v7293 = vtanh.pop %v7291
    %v7294 = vmul.f32 %v7282, %v7292
    %v7295 = vmul.f32 %v7283, %v7293
    %v7296 = vpack.c.bf16 %v7294, %v7294
    %v7297 = vpack.c.bf16 %v7295, %v7295
    %v7298 = vld [vmem:[%s799] sm:$0xff]
    %v7299 = vld [vmem:[%s799 + $0x8] sm:$0xff]
    %v7300 = vld [vmem:[%s799 + $0x10] sm:$0xff]
    %v7301 = vld [vmem:[%s799 + $0x18] sm:$0xff]
    %v7302 = vld [vmem:[%s799 + $0x20] sm:$0xff]
    %v7303 = vld [vmem:[%s799 + $0x28] sm:$0xff]
    %v7304 = vld [vmem:[%s799 + $0x30] sm:$0xff]
    %v7305 = vld [vmem:[%s799 + $0x38] sm:$0xff]
    %7306 = vmatprep.subr.bf16.mxu0 %v1627
    %7307 = vmatpush1.bf16.msra.mxu0 %v1626
    %7308 = vmatprep.subr.bf16.mxu0 %v1635
    %7309 = vmatpush1.bf16.msra.mxu0 %v1634
    %7310 = vmatprep.subr.bf16.mxu0 %v1643
    %7311 = vmatpush1.bf16.msra.mxu0 %v1642
    %7312 = vmatprep.subr.bf16.mxu0 %v1651
    %7313 = vmatpush1.bf16.msra.mxu0 %v1650
    %7314 = vmatprep.subr.bf16.mxu0 %v1659
    %7315 = vmatpush1.bf16.msra.mxu0 %v1658
    %7316 = vmatprep.subr.bf16.mxu0 %v1667
    %7317 = vmatpush1.bf16.msra.mxu0 %v1666
    %7318 = vmatprep.subr.bf16.mxu0 %v1675
    %7319 = vmatpush1.bf16.msra.mxu0 %v1674
    %7320 = vmatprep.subr.bf16.mxu0 %v1683
    %7321 = vmatpush1.bf16.msra.mxu0 %v1682
    %7322 = vmatprep.subr.bf16.mxu0 %v1691
    %7323 = vmatpush1.bf16.msra.mxu0 %v1690
    %7324 = vmatprep.subr.bf16.mxu0 %v1699
    %7325 = vmatpush1.bf16.msra.mxu0 %v1698
    %7326 = vmatprep.subr.bf16.mxu0 %v1707
    %7327 = vmatpush1.bf16.msra.mxu0 %v1706
    %7328 = vmatprep.subr.bf16.mxu0 %v1715
    %7329 = vmatpush1.bf16.msra.mxu0 %v1714
    %7330 = vmatprep.subr.bf16.mxu0 %v1723
    %7331 = vmatpush1.bf16.msra.mxu0 %v1722
    %7332 = vmatprep.subr.bf16.mxu0 %v1731
    %7333 = vmatpush1.bf16.msra.mxu0 %v1730
    %7334 = vmatprep.subr.bf16.mxu0 %v1739
    %7335 = vmatpush1.bf16.msra.mxu0 %v1738
    %7336 = vmatprep.subr.bf16.mxu0 %v1747
    %7337 = vmatpush1.bf16.msra.mxu0 %v1746
    %7338 = vmatprep.mubr.bf16.mxu0 %v6923
    %7339 = vmatmul.mubr.bf16.gmra.mrb[0].mxu0 %v6922
    %v7340 = vpop.f32.mrb[0].mxu0
    %v7341 = vadd.f32 0.0, %v7340
    %v7342 = vpop.f32.mrb[0].mxu0
    %v7343 = vadd.f32 0.0, %v7342
    %v7344 = vpop.f32.mrb[0].mxu0
    %v7345 = vpop.f32.mrb[0].mxu0
    %7346 = vdwg.mxu0
    %7347 = vmatprep.subr.bf16.mxu0 %v1629
    %7348 = vmatpush1.bf16.msra.mxu0 %v1628
    %7349 = vmatprep.subr.bf16.mxu0 %v1637
    %7350 = vmatpush1.bf16.msra.mxu0 %v1636
    %7351 = vmatprep.subr.bf16.mxu0 %v1645
    %7352 = vmatpush1.bf16.msra.mxu0 %v1644
    %7353 = vmatprep.subr.bf16.mxu0 %v1653
    %7354 = vmatpush1.bf16.msra.mxu0 %v1652
    %7355 = vmatprep.subr.bf16.mxu0 %v1661
    %7356 = vmatpush1.bf16.msra.mxu0 %v1660
    %7357 = vmatprep.subr.bf16.mxu0 %v1669
    %7358 = vmatpush1.bf16.msra.mxu0 %v1668
    %7359 = vmatprep.subr.bf16.mxu0 %v1677
    %7360 = vmatpush1.bf16.msra.mxu0 %v1676
    %7361 = vmatprep.subr.bf16.mxu0 %v1685
    %7362 = vmatpush1.bf16.msra.mxu0 %v1684
    %7363 = vmatprep.subr.bf16.mxu0 %v1693
    %7364 = vmatpush1.bf16.msra.mxu0 %v1692
    %7365 = vmatprep.subr.bf16.mxu0 %v1701
    %7366 = vmatpush1.bf16.msra.mxu0 %v1700
    %7367 = vmatprep.subr.bf16.mxu0 %v1709
    %7368 = vmatpush1.bf16.msra.mxu0 %v1708
    %7369 = vmatprep.subr.bf16.mxu0 %v1717
    %7370 = vmatpush1.bf16.msra.mxu0 %v1716
    %7371 = vmatprep.subr.bf16.mxu0 %v1725
    %7372 = vmatpush1.bf16.msra.mxu0 %v1724
    %7373 = vmatprep.subr.bf16.mxu0 %v1733
    %7374 = vmatpush1.bf16.msra.mxu0 %v1732
    %7375 = vmatprep.subr.bf16.mxu0 %v1741
    %7376 = vmatpush1.bf16.msra.mxu0 %v1740
    %7377 = vmatprep.subr.bf16.mxu0 %v1749
    %7378 = vmatpush1.bf16.msra.mxu0 %v1748
    %7379 = vmatprep.mubr.bf16.mxu0 %v6923
    %7380 = vmatmul.mubr.bf16.gmra.mrb[0].mxu0 %v6922
    %v7381 = vpop.f32.mrb[0].mxu0
    %v7382 = vadd.f32 0.0, %v7381
    %v7383 = vpop.f32.mrb[0].mxu0
    %v7384 = vadd.f32 0.0, %v7383
    %v7385 = vpop.f32.mrb[0].mxu0
    %v7386 = vpop.f32.mrb[0].mxu0
    %7387 = vdwg.mxu0
    %7388 = vmatprep.subr.bf16.mxu0 %v1631
    %7389 = vmatpush1.bf16.msra.mxu0 %v1630
    %7390 = vmatprep.subr.bf16.mxu0 %v1639
    %7391 = vmatpush1.bf16.msra.mxu0 %v1638
    %7392 = vmatprep.subr.bf16.mxu0 %v1647
    %7393 = vmatpush1.bf16.msra.mxu0 %v1646
    %7394 = vmatprep.subr.bf16.mxu0 %v1655
    %7395 = vmatpush1.bf16.msra.mxu0 %v1654
    %7396 = vmatprep.subr.bf16.mxu0 %v1663
    %7397 = vmatpush1.bf16.msra.mxu0 %v1662
    %7398 = vmatprep.subr.bf16.mxu0 %v1671
    %7399 = vmatpush1.bf16.msra.mxu0 %v1670
    %7400 = vmatprep.subr.bf16.mxu0 %v1679
    %7401 = vmatpush1.bf16.msra.mxu0 %v1678
    %7402 = vmatprep.subr.bf16.mxu0 %v1687
    %7403 = vmatpush1.bf16.msra.mxu0 %v1686
    %7404 = vmatprep.subr.bf16.mxu0 %v1695
    %7405 = vmatpush1.bf16.msra.mxu0 %v1694
    %7406 = vmatprep.subr.bf16.mxu0 %v1703
    %7407 = vmatpush1.bf16.msra.mxu0 %v1702
    %7408 = vmatprep.subr.bf16.mxu0 %v1711
    %7409 = vmatpush1.bf16.msra.mxu0 %v1710
    %7410 = vmatprep.subr.bf16.mxu0 %v1719
    %7411 = vmatpush1.bf16.msra.mxu0 %v1718
    %7412 = vmatprep.subr.bf16.mxu0 %v1727
    %7413 = vmatpush1.bf16.msra.mxu0 %v1726
    %7414 = vmatprep.subr.bf16.mxu0 %v1735
    %7415 = vmatpush1.bf16.msra.mxu0 %v1734
    %7416 = vmatprep.subr.bf16.mxu0 %v1743
    %7417 = vmatpush1.bf16.msra.mxu0 %v1742
    %7418 = vmatprep.subr.bf16.mxu0 %v1751
    %7419 = vmatpush1.bf16.msra.mxu0 %v1750
    %7420 = vmatprep.mubr.bf16.mxu0 %v6923
    %7421 = vmatmul.mubr.bf16.gmra.mrb[0].mxu0 %v6922
    %v7422 = vpop.f32.mrb[0].mxu0
    %v7423 = vadd.f32 0.0, %v7422
    %v7424 = vpop.f32.mrb[0].mxu0
    %v7425 = vadd.f32 0.0, %v7424
    %v7426 = vpop.f32.mrb[0].mxu0
    %v7427 = vpop.f32.mrb[0].mxu0
    %7428 = vdwg.mxu0
    %7429 = vmatprep.subr.bf16.mxu0 %v1633
    %7430 = vmatpush1.bf16.msra.mxu0 %v1632
    %7431 = vmatprep.subr.bf16.mxu0 %v1641
    %7432 = vmatpush1.bf16.msra.mxu0 %v1640
    %7433 = vmatprep.subr.bf16.mxu0 %v1649
    %7434 = vmatpush1.bf16.msra.mxu0 %v1648
    %7435 = vmatprep.subr.bf16.mxu0 %v1657
    %7436 = vmatpush1.bf16.msra.mxu0 %v1656
    %7437 = vmatprep.subr.bf16.mxu0 %v1665
    %7438 = vmatpush1.bf16.msra.mxu0 %v1664
    %7439 = vmatprep.subr.bf16.mxu0 %v1673
    %7440 = vmatpush1.bf16.msra.mxu0 %v1672
    %7441 = vmatprep.subr.bf16.mxu0 %v1681
    %7442 = vmatpush1.bf16.msra.mxu0 %v1680
    %7443 = vmatprep.subr.bf16.mxu0 %v1689
    %7444 = vmatpush1.bf16.msra.mxu0 %v1688
    %7445 = vmatprep.subr.bf16.mxu0 %v1697
    %7446 = vmatpush1.bf16.msra.mxu0 %v1696
    %7447 = vmatprep.subr.bf16.mxu0 %v1705
    %7448 = vmatpush1.bf16.msra.mxu0 %v1704
    %7449 = vmatprep.subr.bf16.mxu0 %v1713
    %7450 = vmatpush1.bf16.msra.mxu0 %v1712
    %7451 = vmatprep.subr.bf16.mxu0 %v1721
    %7452 = vmatpush1.bf16.msra.mxu0 %v1720
    %7453 = vmatprep.subr.bf16.mxu0 %v1729
    %7454 = vmatpush1.bf16.msra.mxu0 %v1728
    %7455 = vmatprep.subr.bf16.mxu0 %v1737
    %7456 = vmatpush1.bf16.msra.mxu0 %v1736
    %7457 = vmatprep.subr.bf16.mxu0 %v1745
    %7458 = vmatpush1.bf16.msra.mxu0 %v1744
    %7459 = vmatprep.subr.bf16.mxu0 %v1753
    %7460 = vmatpush1.bf16.msra.mxu0 %v1752
    %7461 = vmatprep.mubr.bf16.mxu0 %v6923
    %7462 = vmatmul.mubr.bf16.gmra.mrb[0].mxu0 %v6922
    %v7463 = vpop.f32.mrb[0].mxu0
    %v7464 = vadd.f32 0.0, %v7463
    %v7465 = vpop.f32.mrb[0].mxu0
    %v7466 = vadd.f32 0.0, %v7465
    %v7467 = vpop.f32.mrb[0].mxu0
    %v7468 = vpop.f32.mrb[0].mxu0
    %7469 = vdwg.mxu0
    %v7470 = vadd.f32 %v7298, %v7341
    %v7471 = vadd.f32 %v7299, %v7343
    %v7472 = vadd.f32 %v7300, %v7382
    %v7473 = vadd.f32 %v7301, %v7384
    %v7474 = vadd.f32 %v7302, %v7423
    %v7475 = vadd.f32 %v7303, %v7425
    %v7476 = vadd.f32 %v7304, %v7464
    %v7477 = vadd.f32 %v7305, %v7466
    %v7478 = vmul.f32 %v7470, 0.5
    %v7479 = vmul.f32 %v7471, 0.5
    %v7480 = vmul.f32 %v7472, 0.5
    %v7481 = vmul.f32 %v7473, 0.5
    %v7482 = vmul.f32 %v7474, 0.5
    %v7483 = vmul.f32 %v7475, 0.5
    %v7484 = vtanh.pop %v7478
    %v7485 = vtanh.pop %v7479
    %v7486 = vtanh.pop %v7480
    %v7487 = vtanh.pop %v7481
    %v7488 = vtanh.pop %v7482
    %v7489 = vtanh.pop %v7483
    %v7490 = vadd.f32 %v7484, 1.0
    %v7491 = vadd.f32 %v7485, 1.0
    %v7492 = vadd.f32 %v7486, 1.0
    %v7493 = vadd.f32 %v7487, 1.0
    %v7494 = vadd.f32 %v7488, 1.0
    %v7495 = vadd.f32 %v7489, 1.0
    %v7496 = vmul.f32 %v7490, 0.5
    %v7497 = vmul.f32 %v7491, 0.5
    %v7498 = vmul.f32 %v7492, 0.5
    %v7499 = vmul.f32 %v7493, 0.5
    %v7500 = vmul.f32 %v7494, 0.5
    %v7501 = vmul.f32 %v7495, 0.5
    %v7502 = vtanh.pop %v7476
    %v7503 = vtanh.pop %v7477
    %v7504 = vmul.f32 %v7498, %v6916
    %v7505 = vmul.f32 %v7499, %v6917
    %v7506 = vmul.f32 %v7496, %v7502
    %v7507 = vmul.f32 %v7497, %v7503
    %v7508 = vadd.f32 %v7504, %v7506
    %v7509 = vadd.f32 %v7505, %v7507
    %v7510 = vtanh.pop %v7508
    %v7511 = vtanh.pop %v7509
    %v7512 = vmul.f32 %v7500, %v7510
    %v7513 = vmul.f32 %v7501, %v7511
    %v7514 = vpack.c.bf16 %v7512, %v7512
    %v7515 = vpack.c.bf16 %v7513, %v7513
    %7516 = vmatprep.subr.bf16.mxu0 %v2477
    %7517 = vmatpush1.bf16.msra.mxu0 %v2476
    %7518 = vmatprep.subr.bf16.mxu0 %v2485
    %7519 = vmatpush1.bf16.msra.mxu0 %v2484
    %7520 = vmatprep.subr.bf16.mxu0 %v2493
    %7521 = vmatpush1.bf16.msra.mxu0 %v2492
    %7522 = vmatprep.subr.bf16.mxu0 %v2501
    %7523 = vmatpush1.bf16.msra.mxu0 %v2500
    %7524 = vmatprep.subr.bf16.mxu0 %v2509
    %7525 = vmatpush1.bf16.msra.mxu0 %v2508
    %7526 = vmatprep.subr.bf16.mxu0 %v2517
    %7527 = vmatpush1.bf16.msra.mxu0 %v2516
    %7528 = vmatprep.subr.bf16.mxu0 %v2525
    %7529 = vmatpush1.bf16.msra.mxu0 %v2524
    %7530 = vmatprep.subr.bf16.mxu0 %v2533
    %7531 = vmatpush1.bf16.msra.mxu0 %v2532
    %7532 = vmatprep.subr.bf16.mxu0 %v2541
    %7533 = vmatpush1.bf16.msra.mxu0 %v2540
    %7534 = vmatprep.subr.bf16.mxu0 %v2549
    %7535 = vmatpush1.bf16.msra.mxu0 %v2548
    %7536 = vmatprep.subr.bf16.mxu0 %v2557
    %7537 = vmatpush1.bf16.msra.mxu0 %v2556
    %7538 = vmatprep.subr.bf16.mxu0 %v2565
    %7539 = vmatpush1.bf16.msra.mxu0 %v2564
    %7540 = vmatprep.subr.bf16.mxu0 %v2573
    %7541 = vmatpush1.bf16.msra.mxu0 %v2572
    %7542 = vmatprep.subr.bf16.mxu0 %v2581
    %7543 = vmatpush1.bf16.msra.mxu0 %v2580
    %7544 = vmatprep.subr.bf16.mxu0 %v2589
    %7545 = vmatpush1.bf16.msra.mxu0 %v2588
    %7546 = vmatprep.subr.bf16.mxu0 %v2597
    %7547 = vmatpush1.bf16.msra.mxu0 %v2596
    %7548 = vmatprep.mubr.bf16.mxu0 %v7515
    %7549 = vmatmul.mubr.bf16.gmra.mrb[0].mxu0 %v7514
    %v7550 = vpop.f32.mrb[0].mxu0
    %v7551 = vadd.f32 0.0, %v7550
    %v7552 = vpop.f32.mrb[0].mxu0
    %v7553 = vadd.f32 0.0, %v7552
    %v7554 = vpop.f32.mrb[0].mxu0
    %v7555 = vpop.f32.mrb[0].mxu0
    %7556 = vdwg.mxu0
    %7557 = vmatprep.subr.bf16.mxu0 %v2479
    %7558 = vmatpush1.bf16.msra.mxu0 %v2478
    %7559 = vmatprep.subr.bf16.mxu0 %v2487
    %7560 = vmatpush1.bf16.msra.mxu0 %v2486
    %7561 = vmatprep.subr.bf16.mxu0 %v2495
    %7562 = vmatpush1.bf16.msra.mxu0 %v2494
    %7563 = vmatprep.subr.bf16.mxu0 %v2503
    %7564 = vmatpush1.bf16.msra.mxu0 %v2502
    %7565 = vmatprep.subr.bf16.mxu0 %v2511
    %7566 = vmatpush1.bf16.msra.mxu0 %v2510
    %7567 = vmatprep.subr.bf16.mxu0 %v2519
    %7568 = vmatpush1.bf16.msra.mxu0 %v2518
    %7569 = vmatprep.subr.bf16.mxu0 %v2527
    %7570 = vmatpush1.bf16.msra.mxu0 %v2526
    %7571 = vmatprep.subr.bf16.mxu0 %v2535
    %7572 = vmatpush1.bf16.msra.mxu0 %v2534
    %7573 = vmatprep.subr.bf16.mxu0 %v2543
    %7574 = vmatpush1.bf16.msra.mxu0 %v2542
    %7575 = vmatprep.subr.bf16.mxu0 %v2551
    %7576 = vmatpush1.bf16.msra.mxu0 %v2550
    %7577 = vmatprep.subr.bf16.mxu0 %v2559
    %7578 = vmatpush1.bf16.msra.mxu0 %v2558
    %7579 = vmatprep.subr.bf16.mxu0 %v2567
    %7580 = vmatpush1.bf16.msra.mxu0 %v2566
    %7581 = vmatprep.subr.bf16.mxu0 %v2575
    %7582 = vmatpush1.bf16.msra.mxu0 %v2574
    %7583 = vmatprep.subr.bf16.mxu0 %v2583
    %7584 = vmatpush1.bf16.msra.mxu0 %v2582
    %7585 = vmatprep.subr.bf16.mxu0 %v2591
    %7586 = vmatpush1.bf16.msra.mxu0 %v2590
    %7587 = vmatprep.subr.bf16.mxu0 %v2599
    %7588 = vmatpush1.bf16.msra.mxu0 %v2598
    %7589 = vmatprep.mubr.bf16.mxu0 %v7515
    %7590 = vmatmul.mubr.bf16.gmra.mrb[0].mxu0 %v7514
    %v7591 = vpop.f32.mrb[0].mxu0
    %v7592 = vadd.f32 0.0, %v7591
    %v7593 = vpop.f32.mrb[0].mxu0
    %v7594 = vadd.f32 0.0, %v7593
    %v7595 = vpop.f32.mrb[0].mxu0
    %v7596 = vpop.f32.mrb[0].mxu0
    %7597 = vdwg.mxu0
    %7598 = vmatprep.subr.bf16.mxu0 %v2481
    %7599 = vmatpush1.bf16.msra.mxu0 %v2480
    %7600 = vmatprep.subr.bf16.mxu0 %v2489
    %7601 = vmatpush1.bf16.msra.mxu0 %v2488
    %7602 = vmatprep.subr.bf16.mxu0 %v2497
    %7603 = vmatpush1.bf16.msra.mxu0 %v2496
    %7604 = vmatprep.subr.bf16.mxu0 %v2505
    %7605 = vmatpush1.bf16.msra.mxu0 %v2504
    %7606 = vmatprep.subr.bf16.mxu0 %v2513
    %7607 = vmatpush1.bf16.msra.mxu0 %v2512
    %7608 = vmatprep.subr.bf16.mxu0 %v2521
    %7609 = vmatpush1.bf16.msra.mxu0 %v2520
    %7610 = vmatprep.subr.bf16.mxu0 %v2529
    %7611 = vmatpush1.bf16.msra.mxu0 %v2528
    %7612 = vmatprep.subr.bf16.mxu0 %v2537
    %7613 = vmatpush1.bf16.msra.mxu0 %v2536
    %7614 = vmatprep.subr.bf16.mxu0 %v2545
    %7615 = vmatpush1.bf16.msra.mxu0 %v2544
    %7616 = vmatprep.subr.bf16.mxu0 %v2553
    %7617 = vmatpush1.bf16.msra.mxu0 %v2552
    %7618 = vmatprep.subr.bf16.mxu0 %v2561
    %7619 = vmatpush1.bf16.msra.mxu0 %v2560
    %7620 = vmatprep.subr.bf16.mxu0 %v2569
    %7621 = vmatpush1.bf16.msra.mxu0 %v2568
    %7622 = vmatprep.subr.bf16.mxu0 %v2577
    %7623 = vmatpush1.bf16.msra.mxu0 %v2576
    %7624 = vmatprep.subr.bf16.mxu0 %v2585
    %7625 = vmatpush1.bf16.msra.mxu0 %v2584
    %7626 = vmatprep.subr.bf16.mxu0 %v2593
    %7627 = vmatpush1.bf16.msra.mxu0 %v2592
    %7628 = vmatprep.subr.bf16.mxu0 %v2601
    %7629 = vmatpush1.bf16.msra.mxu0 %v2600
    %7630 = vmatprep.mubr.bf16.mxu0 %v7515
    %7631 = vmatmul.mubr.bf16.gmra.mrb[0].mxu0 %v7514
    %v7632 = vpop.f32.mrb[0].mxu0
    %v7633 = vadd.f32 0.0, %v7632
    %v7634 = vpop.f32.mrb[0].mxu0
    %v7635 = vadd.f32 0.0, %v7634
    %v7636 = vpop.f32.mrb[0].mxu0
    %v7637 = vpop.f32.mrb[0].mxu0
    %7638 = vdwg.mxu0
    %7639 = vmatprep.subr.bf16.mxu0 %v2483
    %7640 = vmatpush1.bf16.msra.mxu0 %v2482
    %7641 = vmatprep.subr.bf16.mxu0 %v2491
    %7642 = vmatpush1.bf16.msra.mxu0 %v2490
    %7643 = vmatprep.subr.bf16.mxu0 %v2499
    %7644 = vmatpush1.bf16.msra.mxu0 %v2498
    %7645 = vmatprep.subr.bf16.mxu0 %v2507
    %7646 = vmatpush1.bf16.msra.mxu0 %v2506
    %7647 = vmatprep.subr.bf16.mxu0 %v2515
    %7648 = vmatpush1.bf16.msra.mxu0 %v2514
    %7649 = vmatprep.subr.bf16.mxu0 %v2523
    %7650 = vmatpush1.bf16.msra.mxu0 %v2522
    %7651 = vmatprep.subr.bf16.mxu0 %v2531
    %7652 = vmatpush1.bf16.msra.mxu0 %v2530
    %7653 = vmatprep.subr.bf16.mxu0 %v2539
    %7654 = vmatpush1.bf16.msra.mxu0 %v2538
    %7655 = vmatprep.subr.bf16.mxu0 %v2547
    %7656 = vmatpush1.bf16.msra.mxu0 %v2546
    %7657 = vmatprep.subr.bf16.mxu0 %v2555
    %7658 = vmatpush1.bf16.msra.mxu0 %v2554
    %7659 = vmatprep.subr.bf16.mxu0 %v2563
    %7660 = vmatpush1.bf16.msra.mxu0 %v2562
    %7661 = vmatprep.subr.bf16.mxu0 %v2571
    %7662 = vmatpush1.bf16.msra.mxu0 %v2570
    %7663 = vmatprep.subr.bf16.mxu0 %v2579
    %7664 = vmatpush1.bf16.msra.mxu0 %v2578
    %7665 = vmatprep.subr.bf16.mxu0 %v2587
    %7666 = vmatpush1.bf16.msra.mxu0 %v2586
    %7667 = vmatprep.subr.bf16.mxu0 %v2595
    %7668 = vmatpush1.bf16.msra.mxu0 %v2594
    %7669 = vmatprep.subr.bf16.mxu0 %v2603
    %7670 = vmatpush1.bf16.msra.mxu0 %v2602
    %7671 = vmatprep.mubr.bf16.mxu0 %v7515
    %7672 = vmatmul.mubr.bf16.gmra.mrb[0].mxu0 %v7514
    %v7673 = vpop.f32.mrb[0].mxu0
    %v7674 = vadd.f32 0.0, %v7673
    %v7675 = vpop.f32.mrb[0].mxu0
    %v7676 = vadd.f32 0.0, %v7675
    %v7677 = vpop.f32.mrb[0].mxu0
    %v7678 = vpop.f32.mrb[0].mxu0
    %7679 = vdwg.mxu0
    %7680 = vmatprep.subr.bf16.mxu0 %v3281
    %7681 = vmatpush1.bf16.msra.mxu0 %v3280
    %7682 = vmatprep.subr.bf16.mxu0 %v3289
    %7683 = vmatpush1.bf16.msra.mxu0 %v3288
    %7684 = vmatprep.subr.bf16.mxu0 %v3297
    %7685 = vmatpush1.bf16.msra.mxu0 %v3296
    %7686 = vmatprep.subr.bf16.mxu0 %v3305
    %7687 = vmatpush1.bf16.msra.mxu0 %v3304
    %7688 = vmatprep.subr.bf16.mxu0 %v3313
    %7689 = vmatpush1.bf16.msra.mxu0 %v3312
    %7690 = vmatprep.subr.bf16.mxu0 %v3321
    %7691 = vmatpush1.bf16.msra.mxu0 %v3320
    %7692 = vmatprep.subr.bf16.mxu0 %v3329
    %7693 = vmatpush1.bf16.msra.mxu0 %v3328
    %7694 = vmatprep.subr.bf16.mxu0 %v3337
    %7695 = vmatpush1.bf16.msra.mxu0 %v3336
    %7696 = vmatprep.subr.bf16.mxu0 %v3345
    %7697 = vmatpush1.bf16.msra.mxu0 %v3344
    %7698 = vmatprep.subr.bf16.mxu0 %v3353
    %7699 = vmatpush1.bf16.msra.mxu0 %v3352
    %7700 = vmatprep.subr.bf16.mxu0 %v3361
    %7701 = vmatpush1.bf16.msra.mxu0 %v3360
    %7702 = vmatprep.subr.bf16.mxu0 %v3369
    %7703 = vmatpush1.bf16.msra.mxu0 %v3368
    %7704 = vmatprep.subr.bf16.mxu0 %v3377
    %7705 = vmatpush1.bf16.msra.mxu0 %v3376
    %7706 = vmatprep.subr.bf16.mxu0 %v3385
    %7707 = vmatpush1.bf16.msra.mxu0 %v3384
    %7708 = vmatprep.subr.bf16.mxu0 %v3393
    %7709 = vmatpush1.bf16.msra.mxu0 %v3392
    %7710 = vmatprep.subr.bf16.mxu0 %v3401
    %7711 = vmatpush1.bf16.msra.mxu0 %v3400
    %7712 = vmatprep.mubr.bf16.mxu0 %v7297
    %7713 = vmatmul.mubr.bf16.gmra.mrb[0].mxu0 %v7296
    %v7714 = vpop.f32.mrb[0].mxu0
    %v7715 = vadd.f32 %v7551, %v7714
    %v7716 = vpop.f32.mrb[0].mxu0
    %v7717 = vadd.f32 %v7553, %v7716
    %v7718 = vpop.f32.mrb[0].mxu0
    %v7719 = vpop.f32.mrb[0].mxu0
    %7720 = vdwg.mxu0
    %7721 = vmatprep.subr.bf16.mxu0 %v3283
    %7722 = vmatpush1.bf16.msra.mxu0 %v3282
    %7723 = vmatprep.subr.bf16.mxu0 %v3291
    %7724 = vmatpush1.bf16.msra.mxu0 %v3290
    %7725 = vmatprep.subr.bf16.mxu0 %v3299
    %7726 = vmatpush1.bf16.msra.mxu0 %v3298
    %7727 = vmatprep.subr.bf16.mxu0 %v3307
    %7728 = vmatpush1.bf16.msra.mxu0 %v3306
    %7729 = vmatprep.subr.bf16.mxu0 %v3315
    %7730 = vmatpush1.bf16.msra.mxu0 %v3314
    %7731 = vmatprep.subr.bf16.mxu0 %v3323
    %7732 = vmatpush1.bf16.msra.mxu0 %v3322
    %7733 = vmatprep.subr.bf16.mxu0 %v3331
    %7734 = vmatpush1.bf16.msra.mxu0 %v3330
    %7735 = vmatprep.subr.bf16.mxu0 %v3339
    %7736 = vmatpush1.bf16.msra.mxu0 %v3338
    %7737 = vmatprep.subr.bf16.mxu0 %v3347
    %7738 = vmatpush1.bf16.msra.mxu0 %v3346
    %7739 = vmatprep.subr.bf16.mxu0 %v3355
    %7740 = vmatpush1.bf16.msra.mxu0 %v3354
    %7741 = vmatprep.subr.bf16.mxu0 %v3363
    %7742 = vmatpush1.bf16.msra.mxu0 %v3362
    %7743 = vmatprep.subr.bf16.mxu0 %v3371
    %7744 = vmatpush1.bf16.msra.mxu0 %v3370
    %7745 = vmatprep.subr.bf16.mxu0 %v3379
    %7746 = vmatpush1.bf16.msra.mxu0 %v3378
    %7747 = vmatprep.subr.bf16.mxu0 %v3387
    %7748 = vmatpush1.bf16.msra.mxu0 %v3386
    %7749 = vmatprep.subr.bf16.mxu0 %v3395
    %7750 = vmatpush1.bf16.msra.mxu0 %v3394
    %7751 = vmatprep.subr.bf16.mxu0 %v3403
    %7752 = vmatpush1.bf16.msra.mxu0 %v3402
    %7753 = vmatprep.mubr.bf16.mxu0 %v7297
    %7754 = vmatmul.mubr.bf16.gmra.mrb[0].mxu0 %v7296
    %v7755 = vpop.f32.mrb[0].mxu0
    %v7756 = vadd.f32 %v7592, %v7755
    %v7757 = vpop.f32.mrb[0].mxu0
    %v7758 = vadd.f32 %v7594, %v7757
    %v7759 = vpop.f32.mrb[0].mxu0
    %v7760 = vpop.f32.mrb[0].mxu0
    %7761 = vdwg.mxu0
    %7762 = vmatprep.subr.bf16.mxu0 %v3285
    %7763 = vmatpush1.bf16.msra.mxu0 %v3284
    %7764 = vmatprep.subr.bf16.mxu0 %v3293
    %7765 = vmatpush1.bf16.msra.mxu0 %v3292
    %7766 = vmatprep.subr.bf16.mxu0 %v3301
    %7767 = vmatpush1.bf16.msra.mxu0 %v3300
    %7768 = vmatprep.subr.bf16.mxu0 %v3309
    %7769 = vmatpush1.bf16.msra.mxu0 %v3308
    %7770 = vmatprep.subr.bf16.mxu0 %v3317
    %7771 = vmatpush1.bf16.msra.mxu0 %v3316
    %7772 = vmatprep.subr.bf16.mxu0 %v3325
    %7773 = vmatpush1.bf16.msra.mxu0 %v3324
    %7774 = vmatprep.subr.bf16.mxu0 %v3333
    %7775 = vmatpush1.bf16.msra.mxu0 %v3332
    %7776 = vmatprep.subr.bf16.mxu0 %v3341
    %7777 = vmatpush1.bf16.msra.mxu0 %v3340
    %7778 = vmatprep.subr.bf16.mxu0 %v3349
    %7779 = vmatpush1.bf16.msra.mxu0 %v3348
    %7780 = vmatprep.subr.bf16.mxu0 %v3357
    %7781 = vmatpush1.bf16.msra.mxu0 %v3356
    %7782 = vmatprep.subr.bf16.mxu0 %v3365
    %7783 = vmatpush1.bf16.msra.mxu0 %v3364
    %7784 = vmatprep.subr.bf16.mxu0 %v3373
    %7785 = vmatpush1.bf16.msra.mxu0 %v3372
    %7786 = vmatprep.subr.bf16.mxu0 %v3381
    %7787 = vmatpush1.bf16.msra.mxu0 %v3380
    %7788 = vmatprep.subr.bf16.mxu0 %v3389
    %7789 = vmatpush1.bf16.msra.mxu0 %v3388
    %7790 = vmatprep.subr.bf16.mxu0 %v3397
    %7791 = vmatpush1.bf16.msra.mxu0 %v3396
    %7792 = vmatprep.subr.bf16.mxu0 %v3405
    %7793 = vmatpush1.bf16.msra.mxu0 %v3404
    %7794 = vmatprep.mubr.bf16.mxu0 %v7297
    %7795 = vmatmul.mubr.bf16.gmra.mrb[0].mxu0 %v7296
    %v7796 = vpop.f32.mrb[0].mxu0
    %v7797 = vadd.f32 %v7633, %v7796
    %v7798 = vpop.f32.mrb[0].mxu0
    %v7799 = vadd.f32 %v7635, %v7798
    %v7800 = vpop.f32.mrb[0].mxu0
    %v7801 = vpop.f32.mrb[0].mxu0
    %7802 = vdwg.mxu0
    %7803 = vmatprep.subr.bf16.mxu0 %v3287
    %7804 = vmatpush1.bf16.msra.mxu0 %v3286
    %7805 = vmatprep.subr.bf16.mxu0 %v3295
    %7806 = vmatpush1.bf16.msra.mxu0 %v3294
    %7807 = vmatprep.subr.bf16.mxu0 %v3303
    %7808 = vmatpush1.bf16.msra.mxu0 %v3302
    %7809 = vmatprep.subr.bf16.mxu0 %v3311
    %7810 = vmatpush1.bf16.msra.mxu0 %v3310
    %7811 = vmatprep.subr.bf16.mxu0 %v3319
    %7812 = vmatpush1.bf16.msra.mxu0 %v3318
    %7813 = vmatprep.subr.bf16.mxu0 %v3327
    %7814 = vmatpush1.bf16.msra.mxu0 %v3326
    %7815 = vmatprep.subr.bf16.mxu0 %v3335
    %7816 = vmatpush1.bf16.msra.mxu0 %v3334
    %7817 = vmatprep.subr.bf16.mxu0 %v3343
    %7818 = vmatpush1.bf16.msra.mxu0 %v3342
    %7819 = vmatprep.subr.bf16.mxu0 %v3351
    %7820 = vmatpush1.bf16.msra.mxu0 %v3350
    %7821 = vmatprep.subr.bf16.mxu0 %v3359
    %7822 = vmatpush1.bf16.msra.mxu0 %v3358
    %7823 = vmatprep.subr.bf16.mxu0 %v3367
    %7824 = vmatpush1.bf16.msra.mxu0 %v3366
    %7825 = vmatprep.subr.bf16.mxu0 %v3375
    %7826 = vmatpush1.bf16.msra.mxu0 %v3374
    %7827 = vmatprep.subr.bf16.mxu0 %v3383
    %7828 = vmatpush1.bf16.msra.mxu0 %v3382
    %7829 = vmatprep.subr.bf16.mxu0 %v3391
    %7830 = vmatpush1.bf16.msra.mxu0 %v3390
    %7831 = vmatprep.subr.bf16.mxu0 %v3399
    %7832 = vmatpush1.bf16.msra.mxu0 %v3398
    %7833 = vmatprep.subr.bf16.mxu0 %v3407
    %7834 = vmatpush1.bf16.msra.mxu0 %v3406
    %7835 = vmatprep.mubr.bf16.mxu0 %v7297
    %7836 = vmatmul.mubr.bf16.gmra.mrb[0].mxu0 %v7296
    %v7837 = vpop.f32.mrb[0].mxu0
    %v7838 = vadd.f32 %v7674, %v7837
    %v7839 = vpop.f32.mrb[0].mxu0
    %v7840 = vadd.f32 %v7676, %v7839
    %v7841 = vpop.f32.mrb[0].mxu0
    %v7842 = vpop.f32.mrb[0].mxu0
    %7843 = vdwg.mxu0
    %v7844 = vadd.f32 %v7715, %v1197
    %v7845 = vadd.f32 %v7717, %v1201
    %v7846 = vadd.f32 %v7756, %v1205
    %v7847 = vadd.f32 %v7758, %v1209
    %v7848 = vadd.f32 %v7797, %v1213
    %v7849 = vadd.f32 %v7799, %v1217
    %v7850 = vadd.f32 %v7838, %v1221
    %v7851 = vadd.f32 %v7840, %v1225
    %v7852 = vmul.f32 %v7844, 0.5
    %v7853 = vmul.f32 %v7845, 0.5
    %v7854 = vmul.f32 %v7846, 0.5
    %v7855 = vmul.f32 %v7847, 0.5
    %v7856 = vmul.f32 %v7848, 0.5
    %v7857 = vmul.f32 %v7849, 0.5
    %v7858 = vtanh.pop %v7852
    %v7859 = vtanh.pop %v7853
    %v7860 = vtanh.pop %v7854
    %v7861 = vtanh.pop %v7855
    %v7862 = vtanh.pop %v7856
    %v7863 = vtanh.pop %v7857
    %v7864 = vadd.f32 %v7858, 1.0
    %v7865 = vadd.f32 %v7859, 1.0
    %v7866 = vadd.f32 %v7860, 1.0
    %v7867 = vadd.f32 %v7861, 1.0
    %v7868 = vadd.f32 %v7862, 1.0
    %v7869 = vadd.f32 %v7863, 1.0
    %v7870 = vmul.f32 %v7864, 0.5
    %v7871 = vmul.f32 %v7865, 0.5
    %v7872 = vmul.f32 %v7866, 0.5
    %v7873 = vmul.f32 %v7867, 0.5
    %v7874 = vmul.f32 %v7868, 0.5
    %v7875 = vmul.f32 %v7869, 0.5
    %v7876 = vtanh.pop %v7850
    %v7877 = vtanh.pop %v7851
    %v7878 = vmul.f32 %v7872, %v7290
    %v7879 = vmul.f32 %v7873, %v7291
    %v7880 = vmul.f32 %v7870, %v7876
    %v7881 = vmul.f32 %v7871, %v7877
    %v7882 = vadd.f32 %v7878, %v7880
    %v7883 = vadd.f32 %v7879, %v7881
    %v7884 = vtanh.pop %v7882
    %v7885 = vtanh.pop %v7883
    %v7886 = vmul.f32 %v7874, %v7884
    %v7887 = vmul.f32 %v7875, %v7885
    %v7888 = vpack.c.bf16 %v7886, %v7886
    %v7889 = vpack.c.bf16 %v7887, %v7887
    %v7890 = vld [vmem:[#allocation11] sm:$0xf]
    %v7891 = vld [vmem:[#allocation11 + $0x4] sm:$0xf]
    %v7892 = vld [vmem:[#allocation11 + $0x8] sm:$0xf]
    %v7893 = vld [vmem:[#allocation11 + $0xc] sm:$0xf]
    %v7894 = vld [vmem:[#allocation11 + $0x10] sm:$0xf]
    %v7895 = vld [vmem:[#allocation11 + $0x14] sm:$0xf]
    %v7896 = vld [vmem:[#allocation11 + $0x18] sm:$0xf]
    %v7897 = vld [vmem:[#allocation11 + $0x1c] sm:$0xf]
    %v7898 = vld [vmem:[#allocation11 + $0x20] sm:$0xf]
    %v7899 = vld [vmem:[#allocation11 + $0x24] sm:$0xf]
    %v7900 = vld [vmem:[#allocation11 + $0x28] sm:$0xf]
    %v7901 = vld [vmem:[#allocation11 + $0x2c] sm:$0xf]
    %v7902 = vld [vmem:[#allocation11 + $0x30] sm:$0xf]
    %v7903 = vld [vmem:[#allocation11 + $0x34] sm:$0xf]
    %v7904 = vld [vmem:[#allocation11 + $0x38] sm:$0xf]
    %v7905 = vld [vmem:[#allocation11 + $0x3c] sm:$0xf]
    %v7906 = vld [vmem:[#allocation11 + $0x40] sm:$0xf]
    %v7907 = vld [vmem:[#allocation11 + $0x44] sm:$0xf]
    %v7908 = vld [vmem:[#allocation11 + $0x48] sm:$0xf]
    %v7909 = vld [vmem:[#allocation11 + $0x4c] sm:$0xf]
    %v7910 = vld [vmem:[#allocation11 + $0x50] sm:$0xf]
    %v7911 = vld [vmem:[#allocation11 + $0x54] sm:$0xf]
    %v7912 = vld [vmem:[#allocation11 + $0x58] sm:$0xf]
    %v7913 = vld [vmem:[#allocation11 + $0x5c] sm:$0xf]
    %v7914 = vld [vmem:[#allocation11 + $0x60] sm:$0xf]
    %v7915 = vld [vmem:[#allocation11 + $0x64] sm:$0xf]
    %v7916 = vld [vmem:[#allocation11 + $0x68] sm:$0xf]
    %v7917 = vld [vmem:[#allocation11 + $0x6c] sm:$0xf]
    %v7918 = vld [vmem:[#allocation11 + $0x70] sm:$0xf]
    %v7919 = vld [vmem:[#allocation11 + $0x74] sm:$0xf]
    %v7920 = vld [vmem:[#allocation11 + $0x78] sm:$0xf]
    %v7921 = vld [vmem:[#allocation11 + $0x7c] sm:$0xf]
    %v7922 = vld [vmem:[%s7] sm:$0x1]
    %v7924 = vlaneseq
    %v7925 = vshrl.u32 %v7924, 7
    %v7926 = vsub.s32 0, %v7925
    %v7927 = vrot.slane %v7922, %v7926
    %v7961 = vunpack.c.l.b16 %v7890
    %v7962 = vunpack.c.l.b16 %v7891
    %v7963 = vunpack.c.l.b16 %v7892
    %v7964 = vunpack.c.l.b16 %v7893
    %v7965 = vunpack.c.l.b16 %v7894
    %v7966 = vunpack.c.l.b16 %v7895
    %v7967 = vunpack.c.l.b16 %v7896
    %v7968 = vunpack.c.l.b16 %v7897
    %v7969 = vunpack.c.l.b16 %v7898
    %v7970 = vunpack.c.l.b16 %v7899
    %v7971 = vunpack.c.l.b16 %v7900
    %v7972 = vunpack.c.l.b16 %v7901
    %v7973 = vunpack.c.l.b16 %v7902
    %v7974 = vunpack.c.l.b16 %v7903
    %v7975 = vunpack.c.l.b16 %v7904
    %v7976 = vunpack.c.l.b16 %v7905
    %v7977 = vunpack.c.l.b16 %v7906
    %v7978 = vunpack.c.l.b16 %v7907
    %v7979 = vunpack.c.l.b16 %v7908
    %v7980 = vunpack.c.l.b16 %v7909
    %v7981 = vunpack.c.l.b16 %v7910
    %v7982 = vunpack.c.l.b16 %v7911
    %v7983 = vunpack.c.l.b16 %v7912
    %v7984 = vunpack.c.l.b16 %v7913
    %v7985 = vunpack.c.l.b16 %v7914
    %v7986 = vunpack.c.l.b16 %v7915
    %v7987 = vunpack.c.l.b16 %v7916
    %v7988 = vunpack.c.l.b16 %v7917
    %v7989 = vunpack.c.l.b16 %v7918
    %v7990 = vunpack.c.l.b16 %v7919
    %v7991 = vunpack.c.l.b16 %v7920
    %v7992 = vunpack.c.l.b16 %v7921
    %v7993 = vpack.c.b16 %v7962, %v7961
    %v7994 = vpack.c.b16 %v7964, %v7963
    %v7995 = vpack.c.b16 %v7966, %v7965
    %v7996 = vpack.c.b16 %v7968, %v7967
    %v7997 = vpack.c.b16 %v7970, %v7969
    %v7998 = vpack.c.b16 %v7972, %v7971
    %v7999 = vpack.c.b16 %v7974, %v7973
    %v8000 = vpack.c.b16 %v7976, %v7975
    %v8001 = vpack.c.b16 %v7978, %v7977
    %v8002 = vpack.c.b16 %v7980, %v7979
    %v8003 = vpack.c.b16 %v7982, %v7981
    %v8004 = vpack.c.b16 %v7984, %v7983
    %v8005 = vpack.c.b16 %v7986, %v7985
    %v8006 = vpack.c.b16 %v7988, %v7987
    %v8007 = vpack.c.b16 %v7990, %v7989
    %v8008 = vpack.c.b16 %v7992, %v7991
    %8025 = vmatprep.subr.bf16.mxu0 0
    %8026 = vmatpush1.bf16.msra.mxu0 %v7993
    %8027 = vmatprep.subr.bf16.mxu0 0
    %8028 = vmatpush1.bf16.msra.mxu0 %v7994
    %8029 = vmatprep.subr.bf16.mxu0 0
    %8030 = vmatpush1.bf16.msra.mxu0 %v7995
    %8031 = vmatprep.subr.bf16.mxu0 0
    %8032 = vmatpush1.bf16.msra.mxu0 %v7996
    %8033 = vmatprep.subr.bf16.mxu0 0
    %8034 = vmatpush1.bf16.msra.mxu0 %v7997
    %8035 = vmatprep.subr.bf16.mxu0 0
    %8036 = vmatpush1.bf16.msra.mxu0 %v7998
    %8037 = vmatprep.subr.bf16.mxu0 0
    %8038 = vmatpush1.bf16.msra.mxu0 %v7999
    %8039 = vmatprep.subr.bf16.mxu0 0
    %8040 = vmatpush1.bf16.msra.mxu0 %v8000
    %8041 = vmatprep.subr.bf16.mxu0 0
    %8042 = vmatpush1.bf16.msra.mxu0 %v8001
    %8043 = vmatprep.subr.bf16.mxu0 0
    %8044 = vmatpush1.bf16.msra.mxu0 %v8002
    %8045 = vmatprep.subr.bf16.mxu0 0
    %8046 = vmatpush1.bf16.msra.mxu0 %v8003
    %8047 = vmatprep.subr.bf16.mxu0 0
    %8048 = vmatpush1.bf16.msra.mxu0 %v8004
    %8049 = vmatprep.subr.bf16.mxu0 0
    %8050 = vmatpush1.bf16.msra.mxu0 %v8005
    %8051 = vmatprep.subr.bf16.mxu0 0
    %8052 = vmatpush1.bf16.msra.mxu0 %v8006
    %8053 = vmatprep.subr.bf16.mxu0 0
    %8054 = vmatpush1.bf16.msra.mxu0 %v8007
    %8055 = vmatprep.subr.bf16.mxu0 0
    %8056 = vmatpush1.bf16.msra.mxu0 %v8008
    %8057 = vmatprep.mubr.bf16.mxu0 %v7889
    %8058 = vmatmul.mubr.bf16.gmra.mrb[0].mxu0 %v7888
    %v8059 = vpop.f32.mrb[0].mxu0
    %v8060 = vadd.f32 %v7927, %v8059
    %v8061 = vpop.f32.mrb[0].mxu0
    %v8062 = vpop.f32.mrb[0].mxu0
    %v8063 = vpop.f32.mrb[0].mxu0
    %8064 = vdwg.mxu0
    %8065 = vst [vmem:[#allocation12] sm:$0xff] %v8060
    // Predicated region
    $region54: #{tpu_custom_call.1} parent=1 // pred_check
      _
    $region55: #{tpu_custom_call.1} parent=1 // pred_check_branch
      %8067 = sbr.rel (0) target = $region57
    $region56: #{tpu_custom_call.1} parent=1 // pred_region
      %s8069 = ssub.s32 128, 128
      %8070 = vsyncadd [#allocation5], %s8069
      %s8072 = sshll.u32 [#allocation12], 4
      %s8073 = int_to_ptr.vmem [resolvable:$true] %s8072
      %8075 = dma.vmem_to_hbm [thread:$0]  %s8073, 128, %s8, [#allocation5]
    $region57: #{tpu_custom_call.1} parent=1 // pred_fallthru
      _
    // Predicated region
    $region58: #{tpu_custom_call.1} parent=1 // pred_check
      _
    $region59: #{tpu_custom_call.1} parent=1 // pred_check_branch
      %8077 = sbr.rel (0) target = $region61
    $region60: #{tpu_custom_call.1} parent=1 // pred_region
      %8078 = dma.done [#allocation5], 128
    $region61: #{tpu_custom_call.1} parent=1 // pred_fallthru
      _
    %8079 = vsyncpa [#allocation4], 1
    %8080 = vsyncpa [#allocation7], 1
    %8081 = vsyncpa [#allocation10], 1
    %8082 = vsyncpa [#allocation5], 1

</llo_original>
